<compile_context>
chip_gen: v6e
topology: v6e:2x2x1
jax: 0.10.0
libtpu: 0.0.40
codegen_flags: <defaults>
</compile_context>

<pallas_src>
import functools

import numpy as np
import jax
import jax.numpy as jnp
from jax.experimental import pallas as pl
from jax.experimental.pallas import tpu as pltpu


_VMEM_LIMIT_BYTES = 48 * 1024 * 1024  # safe on v5e/v6e (128 MiB) and v7x (64 MiB)


def _compiler_params():
    return pltpu.CompilerParams(
        dimension_semantics=("parallel",),
        vmem_limit_bytes=_VMEM_LIMIT_BYTES)


def _interior_mask(H, W):
    """(1, L) f32 mask over the contiguous 'run' of the padded-flat layout.

    1.0 on real pixels, 0.0 on the interstitial padded-border columns that sit
    inside the run.
    """
    Wp = W + 2
    L = (H - 1) * Wp + W
    q = np.arange(L) + (Wp + 1)
    w = q % Wp
    m = ((w >= 1) & (w <= W)).astype(np.float32)
    return jnp.asarray(m.reshape(1, L))


# ----------------------------------------------------------------------------
# Kernels
# ----------------------------------------------------------------------------
def _conv1x1_kernel(x_ref, w_ref, b_ref, o_ref):
    """1x1 conv: (Cout, Cin) @ (Cin, P) + bias, pixels on the lane axis."""
    acc = jnp.dot(w_ref[...], x_ref[0], preferred_element_type=jnp.float32)
    o_ref[0] = (acc + b_ref[...]).astype(o_ref.dtype)


def _up_block_kernel(up_ref, br_ref, w1u_ref, w1b_ref, b1_ref,
                     w2_ref, b2_ref, wru_ref, wrb_ref, mask_ref,
                     *rest, Wp, L, has_head, has_head_bias):
    """Fully fused UpConvBlockSkipRes (+ optional fused 1x1 head).

    Inputs are in padded-flat layout (C, Pp) with Pp = (H+2)*(W+2) and zeroed
    borders.  Tap (dy, dx) of a 3x3 'same' conv over the interior run of
    length L is the static slice [dy*Wp + dx : dy*Wp + dx + L].
    """
    # ---- unpack optional head weights, outputs, scratch -------------------
    i = 0
    hw_ref = hb_ref = head_ref = None
    if has_head:
        hw_ref = rest[i]; i += 1
        if has_head_bias:
            hb_ref = rest[i]; i += 1
    out_ref = rest[i]; i += 1
    if has_head:
        head_ref = rest[i]; i += 1
    h_scr = rest[i]

    q0 = Wp + 1                       # start of the interior run
    mask = mask_ref[...]              # (1, L)

    # ---- conv1: 3x3 over concat([up, bridge]) without materializing it ----
    acc = None
    for dy in range(3):
        for dx in range(3):
            t = dy * 3 + dx
            s = dy * Wp + dx
            a = jnp.dot(w1u_ref[t], up_ref[0, :, s:s + L],
                        preferred_element_type=jnp.float32)
            a = a + jnp.dot(w1b_ref[t], br_ref[0, :, s:s + L],
                            preferred_element_type=jnp.float32)
            acc = a if acc is None else acc + a
    h_run = jnp.maximum(acc + b1_ref[...], 0.0) * mask      # (Cmid, L)

    # h stays in VMEM scratch in padded-flat layout with zeroed borders.
    cmid = h_scr.shape[0]
    zb = jnp.zeros((cmid, q0), dtype=jnp.float32)
    h_scr[:, 0:q0] = zb
    h_scr[:, q0 + L:] = zb
    h_scr[:, q0:q0 + L] = h_run

    # ---- conv2: 3x3 over h (taps sliced from the VMEM scratch) ------------
    acc2 = None
    for dy in range(3):
        for dx in range(3):
            t = dy * 3 + dx
            s = dy * Wp + dx
            a = jnp.dot(w2_ref[t], h_scr[:, s:s + L],
                        preferred_element_type=jnp.float32)
            acc2 = a if acc2 is None else acc2 + a

    # ---- 1x1 residual shortcut on the concat (centre-tap slices) ----------
    res = jnp.dot(wru_ref[...], up_ref[0, :, q0:q0 + L],
                  preferred_element_type=jnp.float32)
    res = res + jnp.dot(wrb_ref[...], br_ref[0, :, q0:q0 + L],
                        preferred_element_type=jnp.float32)

    out_run = jnp.maximum(acc2 + b2_ref[...] + res, 0.0) * mask   # (Cmid, L)

    zo = jnp.zeros((out_ref.shape[1], q0), dtype=out_ref.dtype)
    out_ref[0, :, 0:q0] = zo
    out_ref[0, :, q0 + L:] = zo
    out_ref[0, :, q0:q0 + L] = out_run.astype(out_ref.dtype)

    # ---- fused 1x1 head (next Predictor or last_layer) on the resident out
    if has_head:
        hd = jnp.dot(hw_ref[...], out_run, preferred_element_type=jnp.float32)
        if has_head_bias:
            hd = hd + hb_ref[...]
        hd = hd * mask
        zh = jnp.zeros((head_ref.shape[1], q0), dtype=head_ref.dtype)
        head_ref[0, :, 0:q0] = zh
        head_ref[0, :, q0 + L:] = zh
        head_ref[0, :, q0:q0 + L] = hd.astype(head_ref.dtype)


# ----------------------------------------------------------------------------
# Wrappers
# ----------------------------------------------------------------------------
def conv1x1(x, w, b):
    """1x1 conv with bias on NCHW input (used for the first Predictor)."""
    N, C, H, W = x.shape
    Cout = w.shape[0]
    P = H * W
    out = pl.pallas_call(
        _conv1x1_kernel,
        out_shape=jax.ShapeDtypeStruct((N, Cout, P), jnp.float32),
        grid=(N,),
        in_specs=[pl.BlockSpec((1, C, P), lambda n: (n, 0, 0)),
                  pl.BlockSpec((Cout, C), lambda n: (0, 0)),
                  pl.BlockSpec((Cout, 1), lambda n: (0, 0))],
        out_specs=pl.BlockSpec((1, Cout, P), lambda n: (n, 0, 0)),
        compiler_params=_compiler_params(),
    )(x.reshape(N, C, P), w.reshape(Cout, C), b.reshape(Cout, 1))
    return out.reshape(N, Cout, H, W)


def up_conv_block_skip_res(p, x, bridge, head_w=None, head_b=None):
    """One fused pallas_call for UpConvBlockSkipRes (+ optional fused head)."""
    N, Cup, Hin, Win = x.shape
    Nb, Cbr, H, W = bridge.shape
    assert Nb == N and H == 2 * Hin and W == 2 * Win
    Cmid = p["w1"].shape[0]
    Hp, Wp = H + 2, W + 2
    Pp = Hp * Wp
    L = (H - 1) * Wp + W

    # XLA glue: nearest-2x upsample + zero pad (see TODO at top).
    up = jnp.repeat(jnp.repeat(x, 2, axis=2), 2, axis=3)
    up_p = jnp.pad(up, ((0, 0), (0, 0), (1, 1), (1, 1))).reshape(N, Cup, Pp)
    br_p = jnp.pad(bridge, ((0, 0), (0, 0), (1, 1), (1, 1))).reshape(N, Cbr, Pp)

    # Per-tap weight matrices, tap-major (ky, kx); channel split avoids concat.
    w1 = p["w1"]                                              # (Cmid, Cup+Cbr, 3, 3)
    w1u = jnp.transpose(w1[:, :Cup], (2, 3, 0, 1)).reshape(9, Cmid, Cup)
    w1b = jnp.transpose(w1[:, Cup:], (2, 3, 0, 1)).reshape(9, Cmid, Cbr)
    w2t = jnp.transpose(p["w2"], (2, 3, 0, 1)).reshape(9, Cmid, Cmid)
    wres = p["wres"].reshape(Cmid, Cup + Cbr)
    wru, wrb = wres[:, :Cup], wres[:, Cup:]
    b1 = p["b1"].reshape(Cmid, 1)
    b2 = p["b2"].reshape(Cmid, 1)
    mask = _interior_mask(H, W)

    has_head = head_w is not None
    has_head_bias = head_b is not None

    args = [up_p, br_p, w1u, w1b, b1, w2t, b2, wru, wrb, mask]
    in_specs = [
        pl.BlockSpec((1, Cup, Pp), lambda n: (n, 0, 0)),
        pl.BlockSpec((1, Cbr, Pp), lambda n: (n, 0, 0)),
        pl.BlockSpec((9, Cmid, Cup), lambda n: (0, 0, 0)),
        pl.BlockSpec((9, Cmid, Cbr), lambda n: (0, 0, 0)),
        pl.BlockSpec((Cmid, 1), lambda n: (0, 0)),
        pl.BlockSpec((9, Cmid, Cmid), lambda n: (0, 0, 0)),
        pl.BlockSpec((Cmid, 1), lambda n: (0, 0)),
        pl.BlockSpec((Cmid, Cup), lambda n: (0, 0)),
        pl.BlockSpec((Cmid, Cbr), lambda n: (0, 0)),
        pl.BlockSpec((1, L), lambda n: (0, 0)),
    ]
    out_shapes = [jax.ShapeDtypeStruct((N, Cmid, Pp), jnp.float32)]
    out_specs = [pl.BlockSpec((1, Cmid, Pp), lambda n: (n, 0, 0))]

    Chead = 0
    if has_head:
        Chead = head_w.shape[0]
        args.append(head_w.reshape(Chead, Cmid))
        in_specs.append(pl.BlockSpec((Chead, Cmid), lambda n: (0, 0)))
        if has_head_bias:
            args.append(head_b.reshape(Chead, 1))
            in_specs.append(pl.BlockSpec((Chead, 1), lambda n: (0, 0)))
        out_shapes.append(jax.ShapeDtypeStruct((N, Chead, Pp), jnp.float32))
        out_specs.append(pl.BlockSpec((1, Chead, Pp), lambda n: (n, 0, 0)))

    kernel = functools.partial(_up_block_kernel, Wp=Wp, L=L,
                               has_head=has_head, has_head_bias=has_head_bias)
    flops = 2 * N * L * Cmid * (9 * (Cup + Cbr) + 9 * Cmid + (Cup + Cbr) + Chead)
    bytes_accessed = 4 * N * Pp * (Cup + Cbr + Cmid + Chead)

    outs = pl.pallas_call(
        kernel,
        out_shape=tuple(out_shapes) if has_head else out_shapes[0],
        grid=(N,),
        in_specs=in_specs,
        out_specs=tuple(out_specs) if has_head else out_specs[0],
        scratch_shapes=[pltpu.VMEM((Cmid, Pp), jnp.float32)],
        compiler_params=_compiler_params(),
        cost_estimate=pl.CostEstimate(flops=int(flops), transcendentals=0,
                                      bytes_accessed=int(bytes_accessed)),
    )(*args)

    if has_head:
        out_p, head_p = outs
    else:
        out_p, head_p = outs, None

    out = out_p.reshape(N, Cmid, Hp, Wp)[:, :, 1:-1, 1:-1]
    head = (head_p.reshape(N, Chead, Hp, Wp)[:, :, 1:-1, 1:-1]
            if has_head else None)
    return out, head


# ----------------------------------------------------------------------------
# MultiScaleResUnetDecoder
# ----------------------------------------------------------------------------
def init_params(key, num_classes, num_filters):
    n = len(num_filters) - 2
    output_dim = num_filters[-1]
    preds, ups = [], []
    for i in range(n, -1, -1):
        input_dim = output_dim + num_filters[i]
        key, kpw, kpb = jax.random.split(key, 3)
        preds.append({
            "w": 0.05 * jax.random.normal(kpw, (1, output_dim, 1, 1), jnp.float32),
            "b": 0.05 * jax.random.normal(kpb, (1,), jnp.float32),
        })
        new_out = num_filters[i]
        key, k1, kb1, k2, kb2, kr = jax.random.split(key, 6)
        ups.append({
            "w1": 0.05 * jax.random.normal(k1, (new_out, input_dim, 3, 3), jnp.float32),
            "b1": 0.05 * jax.random.normal(kb1, (new_out,), jnp.float32),
            "w2": 0.05 * jax.random.normal(k2, (new_out, new_out, 3, 3), jnp.float32),
            "b2": 0.05 * jax.random.normal(kb2, (new_out,), jnp.float32),
            "wres": 0.05 * jax.random.normal(kr, (new_out, input_dim, 1, 1), jnp.float32),
        })
        output_dim = new_out
    key, kl = jax.random.split(key)
    last_w = 0.05 * jax.random.normal(kl, (num_classes, output_dim, 1, 1), jnp.float32)
    return {"preds": preds, "ups": ups, "last_w": last_w}


@functools.partial(jax.jit, static_argnames=("apply_last_layer",))
def multi_scale_res_unet_decoder_forward(params, x, blocks, apply_last_layer=True):
    n_blocks = len(params["ups"])
    # First predictor runs on the caller-provided x; later predictors and the
    # last_layer are fused into the producing block's kernel.
    predictions = [conv1x1(x, params["preds"][0]["w"], params["preds"][0]["b"])]
    head = None
    for i in range(n_blocks):
        is_last = (i == n_blocks - 1)
        if not is_last:
            hw = params["preds"][i + 1]["w"]
            hb = params["preds"][i + 1]["b"]
        elif apply_last_layer:
            hw, hb = params["last_w"], None        # last layer: 1x1, no bias
        else:
            hw, hb = None, None
        x, head = up_conv_block_skip_res(params["ups"][i], x, blocks[-i - 1], hw, hb)
        if not is_last:
            predictions.append(head)
    if apply_last_layer:
        x = head
    predictions.append(x)
    return x, predictions


# ----------------------------------------------------------------------------
# Pure-JAX reference (for a numerical sanity check of the fused kernels)
# ----------------------------------------------------------------------------
def _ref_conv(x, w, b=None, pad=0):
    out = jax.lax.conv_general_dilated(
        x, w, window_strides=(1, 1), padding=[(pad, pad), (pad, pad)],
        dimension_numbers=("NCHW", "OIHW", "NCHW"),
        precision=jax.lax.Precision.HIGHEST)
    if b is not None:
        out = out + b.reshape(1, -1, 1, 1)
    return out


def reference_forward(params, x, blocks, apply_last_layer=True):
    predictions = []
    for i, up in enumerate(params["ups"]):
        pr = params["preds"][i]
        predictions.append(_ref_conv(x, pr["w"], pr["b"]))
        u = jnp.repeat(jnp.repeat(x, 2, axis=2), 2, axis=3)
        cat = jnp.concatenate([u, blocks[-i - 1]], axis=1)
        h = jax.nn.relu(_ref_conv(cat, up["w1"], up["b1"], pad=1))
        res = _ref_conv(cat, up["wres"])
        x = jax.nn.relu(_ref_conv(h, up["w2"], up["b2"], pad=1) + res)
    if apply_last_layer:
        x = _ref_conv(x, params["last_w"])
    predictions.append(x)
    return x, predictions


# ----------------------------------------------------------------------------
if __name__ == "__main__":
    key = jax.random.PRNGKey(0)
    num_filters = [4, 8, 16]
    num_classes = 2
    N, H, W = 2, 4, 4                      # x at deepest scale: (2, 16, 4, 4)

    kx, kb0, kb1, kp = jax.random.split(key, 4)
    x = jax.random.normal(kx, (N, num_filters[-1], H, W), jnp.float32)
    blocks = [
        jax.random.normal(kb0, (N, num_filters[0], H * 4, W * 4), jnp.float32),
        jax.random.normal(kb1, (N, num_filters[1], H * 2, W * 2), jnp.float32),
    ]
    params = init_params(kp, num_classes, num_filters)

    out, preds = multi_scale_res_unet_decoder_forward(params, x, blocks)
    jax.block_until_ready(out)
    for p in preds:
        jax.block_until_ready(p)

    assert out.shape == (N, num_classes, H * 4, W * 4)
    assert preds[0].shape == (N, 1, H, W)
    assert preds[1].shape == (N, 1, H * 2, W * 2)
    assert preds[2].shape == (N, num_classes, H * 4, W * 4)

    # Numerical check against a plain-XLA reference (generous tolerance to be
    # robust to MXU / conv precision-pass differences).
    ref_out, ref_preds = reference_forward(params, x, blocks)
    assert bool(jnp.allclose(out, ref_out, atol=1e-2, rtol=1e-2))
    for a, b in zip(preds, ref_preds):
        assert bool(jnp.allclose(a, b, atol=1e-2, rtol=1e-2))

    print("KERNEL_OK")
</pallas_src>

<mosaic_0001>
module attributes {stable_mosaic.version = 11 : i64} {
  func.func @_up_block_kernel(%arg0: i32, %arg1: memref<1x16x100xf32, #tpu.memory_space<vmem>>, %arg2: memref<1x8x100xf32, #tpu.memory_space<vmem>>, %arg3: memref<9x8x16xf32, #tpu.memory_space<vmem>>, %arg4: memref<9x8x8xf32, #tpu.memory_space<vmem>>, %arg5: memref<8x1xf32, #tpu.memory_space<vmem>>, %arg6: memref<9x8x8xf32, #tpu.memory_space<vmem>>, %arg7: memref<8x1xf32, #tpu.memory_space<vmem>>, %arg8: memref<8x16xf32, #tpu.memory_space<vmem>>, %arg9: memref<8x8xf32, #tpu.memory_space<vmem>>, %arg10: memref<1x78xf32, #tpu.memory_space<vmem>>, %arg11: memref<1x8xf32, #tpu.memory_space<vmem>>, %arg12: memref<1x1xf32, #tpu.memory_space<vmem>>, %arg13: memref<1x8x100xf32, #tpu.memory_space<vmem>>, %arg14: memref<1x1x100xf32, #tpu.memory_space<vmem>>, %arg15: memref<8x100xf32, #tpu.memory_space<vmem>>) attributes {dimension_semantics = [#tpu.dimension_semantics<parallel>], iteration_bounds = array<i64: 2>, scalar_prefetch = 0 : i64, scratch_operands = 1 : i64, tpu.core_type = #tpu.core_type<tc>, window_params = [{transform_indices = @transform_0, window_bounds = array<i64: 1, 16, 100>}, {transform_indices = @transform_1, window_bounds = array<i64: 1, 8, 100>}, {pipeline_mode = #tpu.pipeline_mode<synchronous>, transform_indices = @transform_2, window_bounds = array<i64: 9, 8, 16>}, {pipeline_mode = #tpu.pipeline_mode<synchronous>, transform_indices = @transform_3, window_bounds = array<i64: 9, 8, 8>}, {pipeline_mode = #tpu.pipeline_mode<synchronous>, transform_indices = @transform_4, window_bounds = array<i64: 8, 1>}, {pipeline_mode = #tpu.pipeline_mode<synchronous>, transform_indices = @transform_5, window_bounds = array<i64: 9, 8, 8>}, {pipeline_mode = #tpu.pipeline_mode<synchronous>, transform_indices = @transform_6, window_bounds = array<i64: 8, 1>}, {pipeline_mode = #tpu.pipeline_mode<synchronous>, transform_indices = @transform_7, window_bounds = array<i64: 8, 16>}, {pipeline_mode = #tpu.pipeline_mode<synchronous>, transform_indices = @transform_8, window_bounds = array<i64: 8, 8>}, {pipeline_mode = #tpu.pipeline_mode<synchronous>, transform_indices = @transform_9, window_bounds = array<i64: 1, 78>}, {pipeline_mode = #tpu.pipeline_mode<synchronous>, transform_indices = @transform_10, window_bounds = array<i64: 1, 8>}, {pipeline_mode = #tpu.pipeline_mode<synchronous>, transform_indices = @transform_11, window_bounds = array<i64: 1, 1>}, {transform_indices = @transform_12, window_bounds = array<i64: 1, 8, 100>}, {transform_indices = @transform_13, window_bounds = array<i64: 1, 1, 100>}]} {
    %c0 = arith.constant 0 : index
    %c0_0 = arith.constant 0 : index
    %0 = vector.load %arg10[%c0, %c0_0] : memref<1x78xf32, #tpu.memory_space<vmem>>, vector<1x78xf32>
    %c0_1 = arith.constant 0 : index
    %c0_2 = arith.constant 0 : index
    %c0_3 = arith.constant 0 : index
    %1 = vector.load %arg3[%c0_1, %c0_2, %c0_3] : memref<9x8x16xf32, #tpu.memory_space<vmem>>, vector<1x8x16xf32>
    %2 = vector.shape_cast %1 : vector<1x8x16xf32> to vector<8x16xf32>
    %c0_4 = arith.constant 0 : index
    %c0_5 = arith.constant 0 : index
    %c0_6 = arith.constant 0 : index
    %3 = vector.load %arg1[%c0_4, %c0_5, %c0_6] : memref<1x16x100xf32, #tpu.memory_space<vmem>>, vector<1x16x78xf32>
    %4 = vector.shape_cast %3 : vector<1x16x78xf32> to vector<16x78xf32>
    %cst = arith.constant dense<0.000000e+00> : vector<8x78xf32>
    %5 = tpu.matmul %2, %4, %cst {dimension_numbers = #tpu.dot_dimension_numbers<[1], [0], [0], [1], [0, 0, 1, 1], [], []>} : vector<8x16xf32>, vector<16x78xf32>, vector<8x78xf32> -> vector<8x78xf32>
    %c0_7 = arith.constant 0 : index
    %c0_8 = arith.constant 0 : index
    %c0_9 = arith.constant 0 : index
    %6 = vector.load %arg4[%c0_7, %c0_8, %c0_9] : memref<9x8x8xf32, #tpu.memory_space<vmem>>, vector<1x8x8xf32>
    %7 = vector.shape_cast %6 : vector<1x8x8xf32> to vector<8x8xf32>
    %c0_10 = arith.constant 0 : index
    %c0_11 = arith.constant 0 : index
    %c0_12 = arith.constant 0 : index
    %8 = vector.load %arg2[%c0_10, %c0_11, %c0_12] : memref<1x8x100xf32, #tpu.memory_space<vmem>>, vector<1x8x78xf32>
    %9 = vector.shape_cast %8 : vector<1x8x78xf32> to vector<8x78xf32>
    %cst_13 = arith.constant dense<0.000000e+00> : vector<8x78xf32>
    %10 = tpu.matmul %7, %9, %cst_13 {dimension_numbers = #tpu.dot_dimension_numbers<[1], [0], [0], [1], [0, 0, 1, 1], [], []>} : vector<8x8xf32>, vector<8x78xf32>, vector<8x78xf32> -> vector<8x78xf32>
    %11 = arith.addf %5, %10 : vector<8x78xf32>
    %c1 = arith.constant 1 : index
    %c0_14 = arith.constant 0 : index
    %c0_15 = arith.constant 0 : index
    %12 = vector.load %arg3[%c1, %c0_14, %c0_15] : memref<9x8x16xf32, #tpu.memory_space<vmem>>, vector<1x8x16xf32>
    %13 = vector.shape_cast %12 : vector<1x8x16xf32> to vector<8x16xf32>
    %c0_16 = arith.constant 0 : index
    %c0_17 = arith.constant 0 : index
    %c1_18 = arith.constant 1 : index
    %14 = vector.load %arg1[%c0_16, %c0_17, %c1_18] : memref<1x16x100xf32, #tpu.memory_space<vmem>>, vector<1x16x78xf32>
    %15 = vector.shape_cast %14 : vector<1x16x78xf32> to vector<16x78xf32>
    %cst_19 = arith.constant dense<0.000000e+00> : vector<8x78xf32>
    %16 = tpu.matmul %13, %15, %cst_19 {dimension_numbers = #tpu.dot_dimension_numbers<[1], [0], [0], [1], [0, 0, 1, 1], [], []>} : vector<8x16xf32>, vector<16x78xf32>, vector<8x78xf32> -> vector<8x78xf32>
    %c1_20 = arith.constant 1 : index
    %c0_21 = arith.constant 0 : index
    %c0_22 = arith.constant 0 : index
    %17 = vector.load %arg4[%c1_20, %c0_21, %c0_22] : memref<9x8x8xf32, #tpu.memory_space<vmem>>, vector<1x8x8xf32>
    %18 = vector.shape_cast %17 : vector<1x8x8xf32> to vector<8x8xf32>
    %c0_23 = arith.constant 0 : index
    %c0_24 = arith.constant 0 : index
    %c1_25 = arith.constant 1 : index
    %19 = vector.load %arg2[%c0_23, %c0_24, %c1_25] : memref<1x8x100xf32, #tpu.memory_space<vmem>>, vector<1x8x78xf32>
    %20 = vector.shape_cast %19 : vector<1x8x78xf32> to vector<8x78xf32>
    %cst_26 = arith.constant dense<0.000000e+00> : vector<8x78xf32>
    %21 = tpu.matmul %18, %20, %cst_26 {dimension_numbers = #tpu.dot_dimension_numbers<[1], [0], [0], [1], [0, 0, 1, 1], [], []>} : vector<8x8xf32>, vector<8x78xf32>, vector<8x78xf32> -> vector<8x78xf32>
    %22 = arith.addf %16, %21 : vector<8x78xf32>
    %23 = arith.addf %11, %22 : vector<8x78xf32>
    %c2 = arith.constant 2 : index
    %c0_27 = arith.constant 0 : index
    %c0_28 = arith.constant 0 : index
    %24 = vector.load %arg3[%c2, %c0_27, %c0_28] : memref<9x8x16xf32, #tpu.memory_space<vmem>>, vector<1x8x16xf32>
    %25 = vector.shape_cast %24 : vector<1x8x16xf32> to vector<8x16xf32>
    %c0_29 = arith.constant 0 : index
    %c0_30 = arith.constant 0 : index
    %c2_31 = arith.constant 2 : index
    %26 = vector.load %arg1[%c0_29, %c0_30, %c2_31] : memref<1x16x100xf32, #tpu.memory_space<vmem>>, vector<1x16x78xf32>
    %27 = vector.shape_cast %26 : vector<1x16x78xf32> to vector<16x78xf32>
    %cst_32 = arith.constant dense<0.000000e+00> : vector<8x78xf32>
    %28 = tpu.matmul %25, %27, %cst_32 {dimension_numbers = #tpu.dot_dimension_numbers<[1], [0], [0], [1], [0, 0, 1, 1], [], []>} : vector<8x16xf32>, vector<16x78xf32>, vector<8x78xf32> -> vector<8x78xf32>
    %c2_33 = arith.constant 2 : index
    %c0_34 = arith.constant 0 : index
    %c0_35 = arith.constant 0 : index
    %29 = vector.load %arg4[%c2_33, %c0_34, %c0_35] : memref<9x8x8xf32, #tpu.memory_space<vmem>>, vector<1x8x8xf32>
    %30 = vector.shape_cast %29 : vector<1x8x8xf32> to vector<8x8xf32>
    %c0_36 = arith.constant 0 : index
    %c0_37 = arith.constant 0 : index
    %c2_38 = arith.constant 2 : index
    %31 = vector.load %arg2[%c0_36, %c0_37, %c2_38] : memref<1x8x100xf32, #tpu.memory_space<vmem>>, vector<1x8x78xf32>
    %32 = vector.shape_cast %31 : vector<1x8x78xf32> to vector<8x78xf32>
    %cst_39 = arith.constant dense<0.000000e+00> : vector<8x78xf32>
    %33 = tpu.matmul %30, %32, %cst_39 {dimension_numbers = #tpu.dot_dimension_numbers<[1], [0], [0], [1], [0, 0, 1, 1], [], []>} : vector<8x8xf32>, vector<8x78xf32>, vector<8x78xf32> -> vector<8x78xf32>
    %34 = arith.addf %28, %33 : vector<8x78xf32>
    %35 = arith.addf %23, %34 : vector<8x78xf32>
    %c3 = arith.constant 3 : index
    %c0_40 = arith.constant 0 : index
    %c0_41 = arith.constant 0 : index
    %36 = vector.load %arg3[%c3, %c0_40, %c0_41] : memref<9x8x16xf32, #tpu.memory_space<vmem>>, vector<1x8x16xf32>
    %37 = vector.shape_cast %36 : vector<1x8x16xf32> to vector<8x16xf32>
    %c0_42 = arith.constant 0 : index
    %c0_43 = arith.constant 0 : index
    %c10 = arith.constant 10 : index
    %38 = vector.load %arg1[%c0_42, %c0_43, %c10] : memref<1x16x100xf32, #tpu.memory_space<vmem>>, vector<1x16x78xf32>
    %39 = vector.shape_cast %38 : vector<1x16x78xf32> to vector<16x78xf32>
    %cst_44 = arith.constant dense<0.000000e+00> : vector<8x78xf32>
    %40 = tpu.matmul %37, %39, %cst_44 {dimension_numbers = #tpu.dot_dimension_numbers<[1], [0], [0], [1], [0, 0, 1, 1], [], []>} : vector<8x16xf32>, vector<16x78xf32>, vector<8x78xf32> -> vector<8x78xf32>
    %c3_45 = arith.constant 3 : index
    %c0_46 = arith.constant 0 : index
    %c0_47 = arith.constant 0 : index
    %41 = vector.load %arg4[%c3_45, %c0_46, %c0_47] : memref<9x8x8xf32, #tpu.memory_space<vmem>>, vector<1x8x8xf32>
    %42 = vector.shape_cast %41 : vector<1x8x8xf32> to vector<8x8xf32>
    %c0_48 = arith.constant 0 : index
    %c0_49 = arith.constant 0 : index
    %c10_50 = arith.constant 10 : index
    %43 = vector.load %arg2[%c0_48, %c0_49, %c10_50] : memref<1x8x100xf32, #tpu.memory_space<vmem>>, vector<1x8x78xf32>
    %44 = vector.shape_cast %43 : vector<1x8x78xf32> to vector<8x78xf32>
    %cst_51 = arith.constant dense<0.000000e+00> : vector<8x78xf32>
    %45 = tpu.matmul %42, %44, %cst_51 {dimension_numbers = #tpu.dot_dimension_numbers<[1], [0], [0], [1], [0, 0, 1, 1], [], []>} : vector<8x8xf32>, vector<8x78xf32>, vector<8x78xf32> -> vector<8x78xf32>
    %46 = arith.addf %40, %45 : vector<8x78xf32>
    %47 = arith.addf %35, %46 : vector<8x78xf32>
    %c4 = arith.constant 4 : index
    %c0_52 = arith.constant 0 : index
    %c0_53 = arith.constant 0 : index
    %48 = vector.load %arg3[%c4, %c0_52, %c0_53] : memref<9x8x16xf32, #tpu.memory_space<vmem>>, vector<1x8x16xf32>
    %49 = vector.shape_cast %48 : vector<1x8x16xf32> to vector<8x16xf32>
    %c0_54 = arith.constant 0 : index
    %c0_55 = arith.constant 0 : index
    %c11 = arith.constant 11 : index
    %50 = vector.load %arg1[%c0_54, %c0_55, %c11] : memref<1x16x100xf32, #tpu.memory_space<vmem>>, vector<1x16x78xf32>
    %51 = vector.shape_cast %50 : vector<1x16x78xf32> to vector<16x78xf32>
    %cst_56 = arith.constant dense<0.000000e+00> : vector<8x78xf32>
    %52 = tpu.matmul %49, %51, %cst_56 {dimension_numbers = #tpu.dot_dimension_numbers<[1], [0], [0], [1], [0, 0, 1, 1], [], []>} : vector<8x16xf32>, vector<16x78xf32>, vector<8x78xf32> -> vector<8x78xf32>
    %c4_57 = arith.constant 4 : index
    %c0_58 = arith.constant 0 : index
    %c0_59 = arith.constant 0 : index
    %53 = vector.load %arg4[%c4_57, %c0_58, %c0_59] : memref<9x8x8xf32, #tpu.memory_space<vmem>>, vector<1x8x8xf32>
    %54 = vector.shape_cast %53 : vector<1x8x8xf32> to vector<8x8xf32>
    %c0_60 = arith.constant 0 : index
    %c0_61 = arith.constant 0 : index
    %c11_62 = arith.constant 11 : index
    %55 = vector.load %arg2[%c0_60, %c0_61, %c11_62] : memref<1x8x100xf32, #tpu.memory_space<vmem>>, vector<1x8x78xf32>
    %56 = vector.shape_cast %55 : vector<1x8x78xf32> to vector<8x78xf32>
    %cst_63 = arith.constant dense<0.000000e+00> : vector<8x78xf32>
    %57 = tpu.matmul %54, %56, %cst_63 {dimension_numbers = #tpu.dot_dimension_numbers<[1], [0], [0], [1], [0, 0, 1, 1], [], []>} : vector<8x8xf32>, vector<8x78xf32>, vector<8x78xf32> -> vector<8x78xf32>
    %58 = arith.addf %52, %57 : vector<8x78xf32>
    %59 = arith.addf %47, %58 : vector<8x78xf32>
    %c5 = arith.constant 5 : index
    %c0_64 = arith.constant 0 : index
    %c0_65 = arith.constant 0 : index
    %60 = vector.load %arg3[%c5, %c0_64, %c0_65] : memref<9x8x16xf32, #tpu.memory_space<vmem>>, vector<1x8x16xf32>
    %61 = vector.shape_cast %60 : vector<1x8x16xf32> to vector<8x16xf32>
    %c0_66 = arith.constant 0 : index
    %c0_67 = arith.constant 0 : index
    %c12 = arith.constant 12 : index
    %62 = vector.load %arg1[%c0_66, %c0_67, %c12] : memref<1x16x100xf32, #tpu.memory_space<vmem>>, vector<1x16x78xf32>
    %63 = vector.shape_cast %62 : vector<1x16x78xf32> to vector<16x78xf32>
    %cst_68 = arith.constant dense<0.000000e+00> : vector<8x78xf32>
    %64 = tpu.matmul %61, %63, %cst_68 {dimension_numbers = #tpu.dot_dimension_numbers<[1], [0], [0], [1], [0, 0, 1, 1], [], []>} : vector<8x16xf32>, vector<16x78xf32>, vector<8x78xf32> -> vector<8x78xf32>
    %c5_69 = arith.constant 5 : index
    %c0_70 = arith.constant 0 : index
    %c0_71 = arith.constant 0 : index
    %65 = vector.load %arg4[%c5_69, %c0_70, %c0_71] : memref<9x8x8xf32, #tpu.memory_space<vmem>>, vector<1x8x8xf32>
    %66 = vector.shape_cast %65 : vector<1x8x8xf32> to vector<8x8xf32>
    %c0_72 = arith.constant 0 : index
    %c0_73 = arith.constant 0 : index
    %c12_74 = arith.constant 12 : index
    %67 = vector.load %arg2[%c0_72, %c0_73, %c12_74] : memref<1x8x100xf32, #tpu.memory_space<vmem>>, vector<1x8x78xf32>
    %68 = vector.shape_cast %67 : vector<1x8x78xf32> to vector<8x78xf32>
    %cst_75 = arith.constant dense<0.000000e+00> : vector<8x78xf32>
    %69 = tpu.matmul %66, %68, %cst_75 {dimension_numbers = #tpu.dot_dimension_numbers<[1], [0], [0], [1], [0, 0, 1, 1], [], []>} : vector<8x8xf32>, vector<8x78xf32>, vector<8x78xf32> -> vector<8x78xf32>
    %70 = arith.addf %64, %69 : vector<8x78xf32>
    %71 = arith.addf %59, %70 : vector<8x78xf32>
    %c6 = arith.constant 6 : index
    %c0_76 = arith.constant 0 : index
    %c0_77 = arith.constant 0 : index
    %72 = vector.load %arg3[%c6, %c0_76, %c0_77] : memref<9x8x16xf32, #tpu.memory_space<vmem>>, vector<1x8x16xf32>
    %73 = vector.shape_cast %72 : vector<1x8x16xf32> to vector<8x16xf32>
    %c0_78 = arith.constant 0 : index
    %c0_79 = arith.constant 0 : index
    %c20 = arith.constant 20 : index
    %74 = vector.load %arg1[%c0_78, %c0_79, %c20] : memref<1x16x100xf32, #tpu.memory_space<vmem>>, vector<1x16x78xf32>
    %75 = vector.shape_cast %74 : vector<1x16x78xf32> to vector<16x78xf32>
    %cst_80 = arith.constant dense<0.000000e+00> : vector<8x78xf32>
    %76 = tpu.matmul %73, %75, %cst_80 {dimension_numbers = #tpu.dot_dimension_numbers<[1], [0], [0], [1], [0, 0, 1, 1], [], []>} : vector<8x16xf32>, vector<16x78xf32>, vector<8x78xf32> -> vector<8x78xf32>
    %c6_81 = arith.constant 6 : index
    %c0_82 = arith.constant 0 : index
    %c0_83 = arith.constant 0 : index
    %77 = vector.load %arg4[%c6_81, %c0_82, %c0_83] : memref<9x8x8xf32, #tpu.memory_space<vmem>>, vector<1x8x8xf32>
    %78 = vector.shape_cast %77 : vector<1x8x8xf32> to vector<8x8xf32>
    %c0_84 = arith.constant 0 : index
    %c0_85 = arith.constant 0 : index
    %c20_86 = arith.constant 20 : index
    %79 = vector.load %arg2[%c0_84, %c0_85, %c20_86] : memref<1x8x100xf32, #tpu.memory_space<vmem>>, vector<1x8x78xf32>
    %80 = vector.shape_cast %79 : vector<1x8x78xf32> to vector<8x78xf32>
    %cst_87 = arith.constant dense<0.000000e+00> : vector<8x78xf32>
    %81 = tpu.matmul %78, %80, %cst_87 {dimension_numbers = #tpu.dot_dimension_numbers<[1], [0], [0], [1], [0, 0, 1, 1], [], []>} : vector<8x8xf32>, vector<8x78xf32>, vector<8x78xf32> -> vector<8x78xf32>
    %82 = arith.addf %76, %81 : vector<8x78xf32>
    %83 = arith.addf %71, %82 : vector<8x78xf32>
    %c7 = arith.constant 7 : index
    %c0_88 = arith.constant 0 : index
    %c0_89 = arith.constant 0 : index
    %84 = vector.load %arg3[%c7, %c0_88, %c0_89] : memref<9x8x16xf32, #tpu.memory_space<vmem>>, vector<1x8x16xf32>
    %85 = vector.shape_cast %84 : vector<1x8x16xf32> to vector<8x16xf32>
    %c0_90 = arith.constant 0 : index
    %c0_91 = arith.constant 0 : index
    %c21 = arith.constant 21 : index
    %86 = vector.load %arg1[%c0_90, %c0_91, %c21] : memref<1x16x100xf32, #tpu.memory_space<vmem>>, vector<1x16x78xf32>
    %87 = vector.shape_cast %86 : vector<1x16x78xf32> to vector<16x78xf32>
    %cst_92 = arith.constant dense<0.000000e+00> : vector<8x78xf32>
    %88 = tpu.matmul %85, %87, %cst_92 {dimension_numbers = #tpu.dot_dimension_numbers<[1], [0], [0], [1], [0, 0, 1, 1], [], []>} : vector<8x16xf32>, vector<16x78xf32>, vector<8x78xf32> -> vector<8x78xf32>
    %c7_93 = arith.constant 7 : index
    %c0_94 = arith.constant 0 : index
    %c0_95 = arith.constant 0 : index
    %89 = vector.load %arg4[%c7_93, %c0_94, %c0_95] : memref<9x8x8xf32, #tpu.memory_space<vmem>>, vector<1x8x8xf32>
    %90 = vector.shape_cast %89 : vector<1x8x8xf32> to vector<8x8xf32>
    %c0_96 = arith.constant 0 : index
    %c0_97 = arith.constant 0 : index
    %c21_98 = arith.constant 21 : index
    %91 = vector.load %arg2[%c0_96, %c0_97, %c21_98] : memref<1x8x100xf32, #tpu.memory_space<vmem>>, vector<1x8x78xf32>
    %92 = vector.shape_cast %91 : vector<1x8x78xf32> to vector<8x78xf32>
    %cst_99 = arith.constant dense<0.000000e+00> : vector<8x78xf32>
    %93 = tpu.matmul %90, %92, %cst_99 {dimension_numbers = #tpu.dot_dimension_numbers<[1], [0], [0], [1], [0, 0, 1, 1], [], []>} : vector<8x8xf32>, vector<8x78xf32>, vector<8x78xf32> -> vector<8x78xf32>
    %94 = arith.addf %88, %93 : vector<8x78xf32>
    %95 = arith.addf %83, %94 : vector<8x78xf32>
    %c8 = arith.constant 8 : index
    %c0_100 = arith.constant 0 : index
    %c0_101 = arith.constant 0 : index
    %96 = vector.load %arg3[%c8, %c0_100, %c0_101] : memref<9x8x16xf32, #tpu.memory_space<vmem>>, vector<1x8x16xf32>
    %97 = vector.shape_cast %96 : vector<1x8x16xf32> to vector<8x16xf32>
    %c0_102 = arith.constant 0 : index
    %c0_103 = arith.constant 0 : index
    %c22 = arith.constant 22 : index
    %98 = vector.load %arg1[%c0_102, %c0_103, %c22] : memref<1x16x100xf32, #tpu.memory_space<vmem>>, vector<1x16x78xf32>
    %99 = vector.shape_cast %98 : vector<1x16x78xf32> to vector<16x78xf32>
    %cst_104 = arith.constant dense<0.000000e+00> : vector<8x78xf32>
    %100 = tpu.matmul %97, %99, %cst_104 {dimension_numbers = #tpu.dot_dimension_numbers<[1], [0], [0], [1], [0, 0, 1, 1], [], []>} : vector<8x16xf32>, vector<16x78xf32>, vector<8x78xf32> -> vector<8x78xf32>
    %c8_105 = arith.constant 8 : index
    %c0_106 = arith.constant 0 : index
    %c0_107 = arith.constant 0 : index
    %101 = vector.load %arg4[%c8_105, %c0_106, %c0_107] : memref<9x8x8xf32, #tpu.memory_space<vmem>>, vector<1x8x8xf32>
    %102 = vector.shape_cast %101 : vector<1x8x8xf32> to vector<8x8xf32>
    %c0_108 = arith.constant 0 : index
    %c0_109 = arith.constant 0 : index
    %c22_110 = arith.constant 22 : index
    %103 = vector.load %arg2[%c0_108, %c0_109, %c22_110] : memref<1x8x100xf32, #tpu.memory_space<vmem>>, vector<1x8x78xf32>
    %104 = vector.shape_cast %103 : vector<1x8x78xf32> to vector<8x78xf32>
    %cst_111 = arith.constant dense<0.000000e+00> : vector<8x78xf32>
    %105 = tpu.matmul %102, %104, %cst_111 {dimension_numbers = #tpu.dot_dimension_numbers<[1], [0], [0], [1], [0, 0, 1, 1], [], []>} : vector<8x8xf32>, vector<8x78xf32>, vector<8x78xf32> -> vector<8x78xf32>
    %106 = arith.addf %100, %105 : vector<8x78xf32>
    %107 = arith.addf %95, %106 : vector<8x78xf32>
    %c0_112 = arith.constant 0 : index
    %c0_113 = arith.constant 0 : index
    %108 = vector.load %arg5[%c0_112, %c0_113] : memref<8x1xf32, #tpu.memory_space<vmem>>, vector<8x1xf32>
    %109 = vector.broadcast %108 : vector<8x1xf32> to vector<8x78xf32>
    %110 = arith.addf %107, %109 : vector<8x78xf32>
    %cst_114 = arith.constant 0.000000e+00 : f32
    %111 = vector.broadcast %cst_114 : f32 to vector<8x78xf32>
    %112 = arith.maximumf %110, %111 : vector<8x78xf32>
    %113 = vector.broadcast %0 : vector<1x78xf32> to vector<8x78xf32>
    %114 = arith.mulf %112, %113 : vector<8x78xf32>
    %cst_115 = arith.constant 0.000000e+00 : f32
    %115 = vector.broadcast %cst_115 : f32 to vector<8x11xf32>
    %c0_116 = arith.constant 0 : index
    %c0_117 = arith.constant 0 : index
    %116 = vector.load %arg15[%c0_116, %c0_117] : memref<8x100xf32, #tpu.memory_space<vmem>>, vector<8x11xf32>
    tpu.vector_store %arg15[%c0_116, %c0_117], %115 {strides = array<i32>} : memref<8x100xf32, #tpu.memory_space<vmem>>, vector<8x11xf32>,
    %c0_118 = arith.constant 0 : index
    %c89 = arith.constant 89 : index
    %117 = vector.load %arg15[%c0_118, %c89] : memref<8x100xf32, #tpu.memory_space<vmem>>, vector<8x11xf32>
    tpu.vector_store %arg15[%c0_118, %c89], %115 {strides = array<i32>} : memref<8x100xf32, #tpu.memory_space<vmem>>, vector<8x11xf32>,
    %c0_119 = arith.constant 0 : index
    %c11_120 = arith.constant 11 : index
    %118 = vector.load %arg15[%c0_119, %c11_120] : memref<8x100xf32, #tpu.memory_space<vmem>>, vector<8x78xf32>
    tpu.vector_store %arg15[%c0_119, %c11_120], %114 {strides = array<i32>} : memref<8x100xf32, #tpu.memory_space<vmem>>, vector<8x78xf32>,
    %c0_121 = arith.constant 0 : index
    %c0_122 = arith.constant 0 : index
    %c0_123 = arith.constant 0 : index
    %119 = vector.load %arg6[%c0_121, %c0_122, %c0_123] : memref<9x8x8xf32, #tpu.memory_space<vmem>>, vector<1x8x8xf32>
    %120 = vector.shape_cast %119 : vector<1x8x8xf32> to vector<8x8xf32>
    %c0_124 = arith.constant 0 : index
    %c0_125 = arith.constant 0 : index
    %121 = vector.load %arg15[%c0_124, %c0_125] : memref<8x100xf32, #tpu.memory_space<vmem>>, vector<8x78xf32>
    %cst_126 = arith.constant dense<0.000000e+00> : vector<8x78xf32>
    %122 = tpu.matmul %120, %121, %cst_126 {dimension_numbers = #tpu.dot_dimension_numbers<[1], [0], [0], [1], [0, 0, 1, 1], [], []>} : vector<8x8xf32>, vector<8x78xf32>, vector<8x78xf32> -> vector<8x78xf32>
    %c1_127 = arith.constant 1 : index
    %c0_128 = arith.constant 0 : index
    %c0_129 = arith.constant 0 : index
    %123 = vector.load %arg6[%c1_127, %c0_128, %c0_129] : memref<9x8x8xf32, #tpu.memory_space<vmem>>, vector<1x8x8xf32>
    %124 = vector.shape_cast %123 : vector<1x8x8xf32> to vector<8x8xf32>
    %c0_130 = arith.constant 0 : index
    %c1_131 = arith.constant 1 : index
    %125 = vector.load %arg15[%c0_130, %c1_131] : memref<8x100xf32, #tpu.memory_space<vmem>>, vector<8x78xf32>
    %cst_132 = arith.constant dense<0.000000e+00> : vector<8x78xf32>
    %126 = tpu.matmul %124, %125, %cst_132 {dimension_numbers = #tpu.dot_dimension_numbers<[1], [0], [0], [1], [0, 0, 1, 1], [], []>} : vector<8x8xf32>, vector<8x78xf32>, vector<8x78xf32> -> vector<8x78xf32>
    %127 = arith.addf %122, %126 : vector<8x78xf32>
    %c2_133 = arith.constant 2 : index
    %c0_134 = arith.constant 0 : index
    %c0_135 = arith.constant 0 : index
    %128 = vector.load %arg6[%c2_133, %c0_134, %c0_135] : memref<9x8x8xf32, #tpu.memory_space<vmem>>, vector<1x8x8xf32>
    %129 = vector.shape_cast %128 : vector<1x8x8xf32> to vector<8x8xf32>
    %c0_136 = arith.constant 0 : index
    %c2_137 = arith.constant 2 : index
    %130 = vector.load %arg15[%c0_136, %c2_137] : memref<8x100xf32, #tpu.memory_space<vmem>>, vector<8x78xf32>
    %cst_138 = arith.constant dense<0.000000e+00> : vector<8x78xf32>
    %131 = tpu.matmul %129, %130, %cst_138 {dimension_numbers = #tpu.dot_dimension_numbers<[1], [0], [0], [1], [0, 0, 1, 1], [], []>} : vector<8x8xf32>, vector<8x78xf32>, vector<8x78xf32> -> vector<8x78xf32>
    %132 = arith.addf %127, %131 : vector<8x78xf32>
    %c3_139 = arith.constant 3 : index
    %c0_140 = arith.constant 0 : index
    %c0_141 = arith.constant 0 : index
    %133 = vector.load %arg6[%c3_139, %c0_140, %c0_141] : memref<9x8x8xf32, #tpu.memory_space<vmem>>, vector<1x8x8xf32>
    %134 = vector.shape_cast %133 : vector<1x8x8xf32> to vector<8x8xf32>
    %c0_142 = arith.constant 0 : index
    %c10_143 = arith.constant 10 : index
    %135 = vector.load %arg15[%c0_142, %c10_143] : memref<8x100xf32, #tpu.memory_space<vmem>>, vector<8x78xf32>
    %cst_144 = arith.constant dense<0.000000e+00> : vector<8x78xf32>
    %136 = tpu.matmul %134, %135, %cst_144 {dimension_numbers = #tpu.dot_dimension_numbers<[1], [0], [0], [1], [0, 0, 1, 1], [], []>} : vector<8x8xf32>, vector<8x78xf32>, vector<8x78xf32> -> vector<8x78xf32>
    %137 = arith.addf %132, %136 : vector<8x78xf32>
    %c4_145 = arith.constant 4 : index
    %c0_146 = arith.constant 0 : index
    %c0_147 = arith.constant 0 : index
    %138 = vector.load %arg6[%c4_145, %c0_146, %c0_147] : memref<9x8x8xf32, #tpu.memory_space<vmem>>, vector<1x8x8xf32>
    %139 = vector.shape_cast %138 : vector<1x8x8xf32> to vector<8x8xf32>
    %c0_148 = arith.constant 0 : index
    %c11_149 = arith.constant 11 : index
    %140 = vector.load %arg15[%c0_148, %c11_149] : memref<8x100xf32, #tpu.memory_space<vmem>>, vector<8x78xf32>
    %cst_150 = arith.constant dense<0.000000e+00> : vector<8x78xf32>
    %141 = tpu.matmul %139, %140, %cst_150 {dimension_numbers = #tpu.dot_dimension_numbers<[1], [0], [0], [1], [0, 0, 1, 1], [], []>} : vector<8x8xf32>, vector<8x78xf32>, vector<8x78xf32> -> vector<8x78xf32>
    %142 = arith.addf %137, %141 : vector<8x78xf32>
    %c5_151 = arith.constant 5 : index
    %c0_152 = arith.constant 0 : index
    %c0_153 = arith.constant 0 : index
    %143 = vector.load %arg6[%c5_151, %c0_152, %c0_153] : memref<9x8x8xf32, #tpu.memory_space<vmem>>, vector<1x8x8xf32>
    %144 = vector.shape_cast %143 : vector<1x8x8xf32> to vector<8x8xf32>
    %c0_154 = arith.constant 0 : index
    %c12_155 = arith.constant 12 : index
    %145 = vector.load %arg15[%c0_154, %c12_155] : memref<8x100xf32, #tpu.memory_space<vmem>>, vector<8x78xf32>
    %cst_156 = arith.constant dense<0.000000e+00> : vector<8x78xf32>
    %146 = tpu.matmul %144, %145, %cst_156 {dimension_numbers = #tpu.dot_dimension_numbers<[1], [0], [0], [1], [0, 0, 1, 1], [], []>} : vector<8x8xf32>, vector<8x78xf32>, vector<8x78xf32> -> vector<8x78xf32>
    %147 = arith.addf %142, %146 : vector<8x78xf32>
    %c6_157 = arith.constant 6 : index
    %c0_158 = arith.constant 0 : index
    %c0_159 = arith.constant 0 : index
    %148 = vector.load %arg6[%c6_157, %c0_158, %c0_159] : memref<9x8x8xf32, #tpu.memory_space<vmem>>, vector<1x8x8xf32>
    %149 = vector.shape_cast %148 : vector<1x8x8xf32> to vector<8x8xf32>
    %c0_160 = arith.constant 0 : index
    %c20_161 = arith.constant 20 : index
    %150 = vector.load %arg15[%c0_160, %c20_161] : memref<8x100xf32, #tpu.memory_space<vmem>>, vector<8x78xf32>
    %cst_162 = arith.constant dense<0.000000e+00> : vector<8x78xf32>
    %151 = tpu.matmul %149, %150, %cst_162 {dimension_numbers = #tpu.dot_dimension_numbers<[1], [0], [0], [1], [0, 0, 1, 1], [], []>} : vector<8x8xf32>, vector<8x78xf32>, vector<8x78xf32> -> vector<8x78xf32>
    %152 = arith.addf %147, %151 : vector<8x78xf32>
    %c7_163 = arith.constant 7 : index
    %c0_164 = arith.constant 0 : index
    %c0_165 = arith.constant 0 : index
    %153 = vector.load %arg6[%c7_163, %c0_164, %c0_165] : memref<9x8x8xf32, #tpu.memory_space<vmem>>, vector<1x8x8xf32>
    %154 = vector.shape_cast %153 : vector<1x8x8xf32> to vector<8x8xf32>
    %c0_166 = arith.constant 0 : index
    %c21_167 = arith.constant 21 : index
    %155 = vector.load %arg15[%c0_166, %c21_167] : memref<8x100xf32, #tpu.memory_space<vmem>>, vector<8x78xf32>
    %cst_168 = arith.constant dense<0.000000e+00> : vector<8x78xf32>
    %156 = tpu.matmul %154, %155, %cst_168 {dimension_numbers = #tpu.dot_dimension_numbers<[1], [0], [0], [1], [0, 0, 1, 1], [], []>} : vector<8x8xf32>, vector<8x78xf32>, vector<8x78xf32> -> vector<8x78xf32>
    %157 = arith.addf %152, %156 : vector<8x78xf32>
    %c8_169 = arith.constant 8 : index
    %c0_170 = arith.constant 0 : index
    %c0_171 = arith.constant 0 : index
    %158 = vector.load %arg6[%c8_169, %c0_170, %c0_171] : memref<9x8x8xf32, #tpu.memory_space<vmem>>, vector<1x8x8xf32>
    %159 = vector.shape_cast %158 : vector<1x8x8xf32> to vector<8x8xf32>
    %c0_172 = arith.constant 0 : index
    %c22_173 = arith.constant 22 : index
    %160 = vector.load %arg15[%c0_172, %c22_173] : memref<8x100xf32, #tpu.memory_space<vmem>>, vector<8x78xf32>
    %cst_174 = arith.constant dense<0.000000e+00> : vector<8x78xf32>
    %161 = tpu.matmul %159, %160, %cst_174 {dimension_numbers = #tpu.dot_dimension_numbers<[1], [0], [0], [1], [0, 0, 1, 1], [], []>} : vector<8x8xf32>, vector<8x78xf32>, vector<8x78xf32> -> vector<8x78xf32>
    %162 = arith.addf %157, %161 : vector<8x78xf32>
    %c0_175 = arith.constant 0 : index
    %c0_176 = arith.constant 0 : index
    %163 = vector.load %arg8[%c0_175, %c0_176] : memref<8x16xf32, #tpu.memory_space<vmem>>, vector<8x16xf32>
    %c0_177 = arith.constant 0 : index
    %c0_178 = arith.constant 0 : index
    %c11_179 = arith.constant 11 : index
    %164 = vector.load %arg1[%c0_177, %c0_178, %c11_179] : memref<1x16x100xf32, #tpu.memory_space<vmem>>, vector<1x16x78xf32>
    %165 = vector.shape_cast %164 : vector<1x16x78xf32> to vector<16x78xf32>
    %cst_180 = arith.constant dense<0.000000e+00> : vector<8x78xf32>
    %166 = tpu.matmul %163, %165, %cst_180 {dimension_numbers = #tpu.dot_dimension_numbers<[1], [0], [0], [1], [0, 0, 1, 1], [], []>} : vector<8x16xf32>, vector<16x78xf32>, vector<8x78xf32> -> vector<8x78xf32>
    %c0_181 = arith.constant 0 : index
    %c0_182 = arith.constant 0 : index
    %167 = vector.load %arg9[%c0_181, %c0_182] : memref<8x8xf32, #tpu.memory_space<vmem>>, vector<8x8xf32>
    %c0_183 = arith.constant 0 : index
    %c0_184 = arith.constant 0 : index
    %c11_185 = arith.constant 11 : index
    %168 = vector.load %arg2[%c0_183, %c0_184, %c11_185] : memref<1x8x100xf32, #tpu.memory_space<vmem>>, vector<1x8x78xf32>
    %169 = vector.shape_cast %168 : vector<1x8x78xf32> to vector<8x78xf32>
    %cst_186 = arith.constant dense<0.000000e+00> : vector<8x78xf32>
    %170 = tpu.matmul %167, %169, %cst_186 {dimension_numbers = #tpu.dot_dimension_numbers<[1], [0], [0], [1], [0, 0, 1, 1], [], []>} : vector<8x8xf32>, vector<8x78xf32>, vector<8x78xf32> -> vector<8x78xf32>
    %171 = arith.addf %166, %170 : vector<8x78xf32>
    %c0_187 = arith.constant 0 : index
    %c0_188 = arith.constant 0 : index
    %172 = vector.load %arg7[%c0_187, %c0_188] : memref<8x1xf32, #tpu.memory_space<vmem>>, vector<8x1xf32>
    %173 = vector.broadcast %172 : vector<8x1xf32> to vector<8x78xf32>
    %174 = arith.addf %162, %173 : vector<8x78xf32>
    %175 = arith.addf %174, %171 : vector<8x78xf32>
    %cst_189 = arith.constant 0.000000e+00 : f32
    %176 = vector.broadcast %cst_189 : f32 to vector<8x78xf32>
    %177 = arith.maximumf %175, %176 : vector<8x78xf32>
    %178 = vector.broadcast %0 : vector<1x78xf32> to vector<8x78xf32>
    %179 = arith.mulf %177, %178 : vector<8x78xf32>
    %cst_190 = arith.constant 0.000000e+00 : f32
    %180 = vector.broadcast %cst_190 : f32 to vector<8x11xf32>
    %c0_191 = arith.constant 0 : index
    %c0_192 = arith.constant 0 : index
    %c0_193 = arith.constant 0 : index
    %181 = vector.load %arg13[%c0_191, %c0_192, %c0_193] : memref<1x8x100xf32, #tpu.memory_space<vmem>>, vector<1x8x11xf32>
    %182 = vector.shape_cast %181 : vector<1x8x11xf32> to vector<8x11xf32>
    %183 = vector.shape_cast %180 : vector<8x11xf32> to vector<1x8x11xf32>
    tpu.vector_store %arg13[%c0_191, %c0_192, %c0_193], %183 {strides = array<i32>} : memref<1x8x100xf32, #tpu.memory_space<vmem>>, vector<1x8x11xf32>,
    %c0_194 = arith.constant 0 : index
    %c0_195 = arith.constant 0 : index
    %c89_196 = arith.constant 89 : index
    %184 = vector.load %arg13[%c0_194, %c0_195, %c89_196] : memref<1x8x100xf32, #tpu.memory_space<vmem>>, vector<1x8x11xf32>
    %185 = vector.shape_cast %184 : vector<1x8x11xf32> to vector<8x11xf32>
    %186 = vector.shape_cast %180 : vector<8x11xf32> to vector<1x8x11xf32>
    tpu.vector_store %arg13[%c0_194, %c0_195, %c89_196], %186 {strides = array<i32>} : memref<1x8x100xf32, #tpu.memory_space<vmem>>, vector<1x8x11xf32>,
    %c0_197 = arith.constant 0 : index
    %c0_198 = arith.constant 0 : index
    %c11_199 = arith.constant 11 : index
    %187 = vector.load %arg13[%c0_197, %c0_198, %c11_199] : memref<1x8x100xf32, #tpu.memory_space<vmem>>, vector<1x8x78xf32>
    %188 = vector.shape_cast %187 : vector<1x8x78xf32> to vector<8x78xf32>
    %189 = vector.shape_cast %179 : vector<8x78xf32> to vector<1x8x78xf32>
    tpu.vector_store %arg13[%c0_197, %c0_198, %c11_199], %189 {strides = array<i32>} : memref<1x8x100xf32, #tpu.memory_space<vmem>>, vector<1x8x78xf32>,
    %c0_200 = arith.constant 0 : index
    %c0_201 = arith.constant 0 : index
    %190 = vector.load %arg11[%c0_200, %c0_201] : memref<1x8xf32, #tpu.memory_space<vmem>>, vector<1x8xf32>
    %cst_202 = arith.constant dense<0.000000e+00> : vector<1x78xf32>
    %191 = tpu.matmul %190, %179, %cst_202 {dimension_numbers = #tpu.dot_dimension_numbers<[1], [0], [0], [1], [0, 0, 1, 1], [], []>} : vector<1x8xf32>, vector<8x78xf32>, vector<1x78xf32> -> vector<1x78xf32>
    %c0_203 = arith.constant 0 : index
    %c0_204 = arith.constant 0 : index
    %192 = vector.load %arg12[%c0_203, %c0_204] : memref<1x1xf32, #tpu.memory_space<vmem>>, vector<1x1xf32>
    %193 = vector.broadcast %192 : vector<1x1xf32> to vector<1x78xf32>
    %194 = arith.addf %191, %193 : vector<1x78xf32>
    %195 = arith.mulf %194, %0 : vector<1x78xf32>
    %cst_205 = arith.constant 0.000000e+00 : f32
    %196 = vector.broadcast %cst_205 : f32 to vector<1x11xf32>
    %c0_206 = arith.constant 0 : index
    %c0_207 = arith.constant 0 : index
    %c0_208 = arith.constant 0 : index
    %197 = vector.load %arg14[%c0_206, %c0_207, %c0_208] : memref<1x1x100xf32, #tpu.memory_space<vmem>>, vector<1x1x11xf32>
    %198 = vector.shape_cast %197 : vector<1x1x11xf32> to vector<1x11xf32>
    %199 = vector.shape_cast %196 : vector<1x11xf32> to vector<1x1x11xf32>
    tpu.vector_store %arg14[%c0_206, %c0_207, %c0_208], %199 {strides = array<i32>} : memref<1x1x100xf32, #tpu.memory_space<vmem>>, vector<1x1x11xf32>,
    %c0_209 = arith.constant 0 : index
    %c0_210 = arith.constant 0 : index
    %c89_211 = arith.constant 89 : index
    %200 = vector.load %arg14[%c0_209, %c0_210, %c89_211] : memref<1x1x100xf32, #tpu.memory_space<vmem>>, vector<1x1x11xf32>
    %201 = vector.shape_cast %200 : vector<1x1x11xf32> to vector<1x11xf32>
    %202 = vector.shape_cast %196 : vector<1x11xf32> to vector<1x1x11xf32>
    tpu.vector_store %arg14[%c0_209, %c0_210, %c89_211], %202 {strides = array<i32>} : memref<1x1x100xf32, #tpu.memory_space<vmem>>, vector<1x1x11xf32>,
    %c0_212 = arith.constant 0 : index
    %c0_213 = arith.constant 0 : index
    %c11_214 = arith.constant 11 : index
    %203 = vector.load %arg14[%c0_212, %c0_213, %c11_214] : memref<1x1x100xf32, #tpu.memory_space<vmem>>, vector<1x1x78xf32>
    %204 = vector.shape_cast %203 : vector<1x1x78xf32> to vector<1x78xf32>
    %205 = vector.shape_cast %195 : vector<1x78xf32> to vector<1x1x78xf32>
    tpu.vector_store %arg14[%c0_212, %c0_213, %c11_214], %205 {strides = array<i32>} : memref<1x1x100xf32, #tpu.memory_space<vmem>>, vector<1x1x78xf32>,
    return
  }
  func.func @transform_0(%arg0: i32) -> (i32, i32, i32) {
    %c0_i32 = arith.constant 0 : i32
    %c0_i32_0 = arith.constant 0 : i32
    %c0_i32_1 = arith.constant 0 : i32
    return %arg0, %c0_i32, %c0_i32_0 : i32, i32, i32
  }
  func.func @transform_1(%arg0: i32) -> (i32, i32, i32) {
    %c0_i32 = arith.constant 0 : i32
    %c0_i32_0 = arith.constant 0 : i32
    %c0_i32_1 = arith.constant 0 : i32
    return %arg0, %c0_i32, %c0_i32_0 : i32, i32, i32
  }
  func.func @transform_2(%arg0: i32) -> (i32, i32, i32) {
    %c0_i32 = arith.constant 0 : i32
    %c0_i32_0 = arith.constant 0 : i32
    %c0_i32_1 = arith.constant 0 : i32
    %c0_i32_2 = arith.constant 0 : i32
    return %c0_i32, %c0_i32_0, %c0_i32_1 : i32, i32, i32
  }
  func.func @transform_3(%arg0: i32) -> (i32, i32, i32) {
    %c0_i32 = arith.constant 0 : i32
    %c0_i32_0 = arith.constant 0 : i32
    %c0_i32_1 = arith.constant 0 : i32
    %c0_i32_2 = arith.constant 0 : i32
    return %c0_i32, %c0_i32_0, %c0_i32_1 : i32, i32, i32
  }
  func.func @transform_4(%arg0: i32) -> (i32, i32) {
    %c0_i32 = arith.constant 0 : i32
    %c0_i32_0 = arith.constant 0 : i32
    %c0_i32_1 = arith.constant 0 : i32
    return %c0_i32, %c0_i32_0 : i32, i32
  }
  func.func @transform_5(%arg0: i32) -> (i32, i32, i32) {
    %c0_i32 = arith.constant 0 : i32
    %c0_i32_0 = arith.constant 0 : i32
    %c0_i32_1 = arith.constant 0 : i32
    %c0_i32_2 = arith.constant 0 : i32
    return %c0_i32, %c0_i32_0, %c0_i32_1 : i32, i32, i32
  }
  func.func @transform_6(%arg0: i32) -> (i32, i32) {
    %c0_i32 = arith.constant 0 : i32
    %c0_i32_0 = arith.constant 0 : i32
    %c0_i32_1 = arith.constant 0 : i32
    return %c0_i32, %c0_i32_0 : i32, i32
  }
  func.func @transform_7(%arg0: i32) -> (i32, i32) {
    %c0_i32 = arith.constant 0 : i32
    %c0_i32_0 = arith.constant 0 : i32
    %c0_i32_1 = arith.constant 0 : i32
    return %c0_i32, %c0_i32_0 : i32, i32
  }
  func.func @transform_8(%arg0: i32) -> (i32, i32) {
    %c0_i32 = arith.constant 0 : i32
    %c0_i32_0 = arith.constant 0 : i32
    %c0_i32_1 = arith.constant 0 : i32
    return %c0_i32, %c0_i32_0 : i32, i32
  }
  func.func @transform_9(%arg0: i32) -> (i32, i32) {
    %c0_i32 = arith.constant 0 : i32
    %c0_i32_0 = arith.constant 0 : i32
    %c0_i32_1 = arith.constant 0 : i32
    return %c0_i32, %c0_i32_0 : i32, i32
  }
  func.func @transform_10(%arg0: i32) -> (i32, i32) {
    %c0_i32 = arith.constant 0 : i32
    %c0_i32_0 = arith.constant 0 : i32
    %c0_i32_1 = arith.constant 0 : i32
    return %c0_i32, %c0_i32_0 : i32, i32
  }
  func.func @transform_11(%arg0: i32) -> (i32, i32) {
    %c0_i32 = arith.constant 0 : i32
    %c0_i32_0 = arith.constant 0 : i32
    %c0_i32_1 = arith.constant 0 : i32
    return %c0_i32, %c0_i32_0 : i32, i32
  }
  func.func @transform_12(%arg0: i32) -> (i32, i32, i32) {
    %c0_i32 = arith.constant 0 : i32
    %c0_i32_0 = arith.constant 0 : i32
    %c0_i32_1 = arith.constant 0 : i32
    return %arg0, %c0_i32, %c0_i32_0 : i32, i32, i32
  }
  func.func @transform_13(%arg0: i32) -> (i32, i32, i32) {
    %c0_i32 = arith.constant 0 : i32
    %c0_i32_0 = arith.constant 0 : i32
    %c0_i32_1 = arith.constant 0 : i32
    return %arg0, %c0_i32, %c0_i32_0 : i32, i32, i32
  }
}

module attributes {stable_mosaic.version = 11 : i64} {
  func.func @_up_block_kernel(%arg0: i32, %arg1: memref<1x8x324xf32, #tpu.memory_space<vmem>>, %arg2: memref<1x4x324xf32, #tpu.memory_space<vmem>>, %arg3: memref<9x4x8xf32, #tpu.memory_space<vmem>>, %arg4: memref<9x4x4xf32, #tpu.memory_space<vmem>>, %arg5: memref<4x1xf32, #tpu.memory_space<vmem>>, %arg6: memref<9x4x4xf32, #tpu.memory_space<vmem>>, %arg7: memref<4x1xf32, #tpu.memory_space<vmem>>, %arg8: memref<4x8xf32, #tpu.memory_space<vmem>>, %arg9: memref<4x4xf32, #tpu.memory_space<vmem>>, %arg10: memref<1x286xf32, #tpu.memory_space<vmem>>, %arg11: memref<2x4xf32, #tpu.memory_space<vmem>>, %arg12: memref<1x4x324xf32, #tpu.memory_space<vmem>>, %arg13: memref<1x2x324xf32, #tpu.memory_space<vmem>>, %arg14: memref<4x324xf32, #tpu.memory_space<vmem>>) attributes {dimension_semantics = [#tpu.dimension_semantics<parallel>], iteration_bounds = array<i64: 2>, scalar_prefetch = 0 : i64, scratch_operands = 1 : i64, tpu.core_type = #tpu.core_type<tc>, window_params = [{transform_indices = @transform_0, window_bounds = array<i64: 1, 8, 324>}, {transform_indices = @transform_1, window_bounds = array<i64: 1, 4, 324>}, {pipeline_mode = #tpu.pipeline_mode<synchronous>, transform_indices = @transform_2, window_bounds = array<i64: 9, 4, 8>}, {pipeline_mode = #tpu.pipeline_mode<synchronous>, transform_indices = @transform_3, window_bounds = array<i64: 9, 4, 4>}, {pipeline_mode = #tpu.pipeline_mode<synchronous>, transform_indices = @transform_4, window_bounds = array<i64: 4, 1>}, {pipeline_mode = #tpu.pipeline_mode<synchronous>, transform_indices = @transform_5, window_bounds = array<i64: 9, 4, 4>}, {pipeline_mode = #tpu.pipeline_mode<synchronous>, transform_indices = @transform_6, window_bounds = array<i64: 4, 1>}, {pipeline_mode = #tpu.pipeline_mode<synchronous>, transform_indices = @transform_7, window_bounds = array<i64: 4, 8>}, {pipeline_mode = #tpu.pipeline_mode<synchronous>, transform_indices = @transform_8, window_bounds = array<i64: 4, 4>}, {pipeline_mode = #tpu.pipeline_mode<synchronous>, transform_indices = @transform_9, window_bounds = array<i64: 1, 286>}, {pipeline_mode = #tpu.pipeline_mode<synchronous>, transform_indices = @transform_10, window_bounds = array<i64: 2, 4>}, {transform_indices = @transform_11, window_bounds = array<i64: 1, 4, 324>}, {transform_indices = @transform_12, window_bounds = array<i64: 1, 2, 324>}]} {
    %c0 = arith.constant 0 : index
    %c0_0 = arith.constant 0 : index
    %0 = vector.load %arg10[%c0, %c0_0] : memref<1x286xf32, #tpu.memory_space<vmem>>, vector<1x286xf32>
    %c0_1 = arith.constant 0 : index
    %c0_2 = arith.constant 0 : index
    %c0_3 = arith.constant 0 : index
    %1 = vector.load %arg3[%c0_1, %c0_2, %c0_3] : memref<9x4x8xf32, #tpu.memory_space<vmem>>, vector<1x4x8xf32>
    %2 = vector.shape_cast %1 : vector<1x4x8xf32> to vector<4x8xf32>
    %c0_4 = arith.constant 0 : index
    %c0_5 = arith.constant 0 : index
    %c0_6 = arith.constant 0 : index
    %3 = vector.load %arg1[%c0_4, %c0_5, %c0_6] : memref<1x8x324xf32, #tpu.memory_space<vmem>>, vector<1x8x286xf32>
    %4 = vector.shape_cast %3 : vector<1x8x286xf32> to vector<8x286xf32>
    %cst = arith.constant dense<0.000000e+00> : vector<4x286xf32>
    %5 = tpu.matmul %2, %4, %cst {dimension_numbers = #tpu.dot_dimension_numbers<[1], [0], [0], [1], [0, 0, 1, 1], [], []>} : vector<4x8xf32>, vector<8x286xf32>, vector<4x286xf32> -> vector<4x286xf32>
    %c0_7 = arith.constant 0 : index
    %c0_8 = arith.constant 0 : index
    %c0_9 = arith.constant 0 : index
    %6 = vector.load %arg4[%c0_7, %c0_8, %c0_9] : memref<9x4x4xf32, #tpu.memory_space<vmem>>, vector<1x4x4xf32>
    %7 = vector.shape_cast %6 : vector<1x4x4xf32> to vector<4x4xf32>
    %c0_10 = arith.constant 0 : index
    %c0_11 = arith.constant 0 : index
    %c0_12 = arith.constant 0 : index
    %8 = vector.load %arg2[%c0_10, %c0_11, %c0_12] : memref<1x4x324xf32, #tpu.memory_space<vmem>>, vector<1x4x286xf32>
    %9 = vector.shape_cast %8 : vector<1x4x286xf32> to vector<4x286xf32>
    %cst_13 = arith.constant dense<0.000000e+00> : vector<4x286xf32>
    %10 = tpu.matmul %7, %9, %cst_13 {dimension_numbers = #tpu.dot_dimension_numbers<[1], [0], [0], [1], [0, 0, 1, 1], [], []>} : vector<4x4xf32>, vector<4x286xf32>, vector<4x286xf32> -> vector<4x286xf32>
    %11 = arith.addf %5, %10 : vector<4x286xf32>
    %c1 = arith.constant 1 : index
    %c0_14 = arith.constant 0 : index
    %c0_15 = arith.constant 0 : index
    %12 = vector.load %arg3[%c1, %c0_14, %c0_15] : memref<9x4x8xf32, #tpu.memory_space<vmem>>, vector<1x4x8xf32>
    %13 = vector.shape_cast %12 : vector<1x4x8xf32> to vector<4x8xf32>
    %c0_16 = arith.constant 0 : index
    %c0_17 = arith.constant 0 : index
    %c1_18 = arith.constant 1 : index
    %14 = vector.load %arg1[%c0_16, %c0_17, %c1_18] : memref<1x8x324xf32, #tpu.memory_space<vmem>>, vector<1x8x286xf32>
    %15 = vector.shape_cast %14 : vector<1x8x286xf32> to vector<8x286xf32>
    %cst_19 = arith.constant dense<0.000000e+00> : vector<4x286xf32>
    %16 = tpu.matmul %13, %15, %cst_19 {dimension_numbers = #tpu.dot_dimension_numbers<[1], [0], [0], [1], [0, 0, 1, 1], [], []>} : vector<4x8xf32>, vector<8x286xf32>, vector<4x286xf32> -> vector<4x286xf32>
    %c1_20 = arith.constant 1 : index
    %c0_21 = arith.constant 0 : index
    %c0_22 = arith.constant 0 : index
    %17 = vector.load %arg4[%c1_20, %c0_21, %c0_22] : memref<9x4x4xf32, #tpu.memory_space<vmem>>, vector<1x4x4xf32>
    %18 = vector.shape_cast %17 : vector<1x4x4xf32> to vector<4x4xf32>
    %c0_23 = arith.constant 0 : index
    %c0_24 = arith.constant 0 : index
    %c1_25 = arith.constant 1 : index
    %19 = vector.load %arg2[%c0_23, %c0_24, %c1_25] : memref<1x4x324xf32, #tpu.memory_space<vmem>>, vector<1x4x286xf32>
    %20 = vector.shape_cast %19 : vector<1x4x286xf32> to vector<4x286xf32>
    %cst_26 = arith.constant dense<0.000000e+00> : vector<4x286xf32>
    %21 = tpu.matmul %18, %20, %cst_26 {dimension_numbers = #tpu.dot_dimension_numbers<[1], [0], [0], [1], [0, 0, 1, 1], [], []>} : vector<4x4xf32>, vector<4x286xf32>, vector<4x286xf32> -> vector<4x286xf32>
    %22 = arith.addf %16, %21 : vector<4x286xf32>
    %23 = arith.addf %11, %22 : vector<4x286xf32>
    %c2 = arith.constant 2 : index
    %c0_27 = arith.constant 0 : index
    %c0_28 = arith.constant 0 : index
    %24 = vector.load %arg3[%c2, %c0_27, %c0_28] : memref<9x4x8xf32, #tpu.memory_space<vmem>>, vector<1x4x8xf32>
    %25 = vector.shape_cast %24 : vector<1x4x8xf32> to vector<4x8xf32>
    %c0_29 = arith.constant 0 : index
    %c0_30 = arith.constant 0 : index
    %c2_31 = arith.constant 2 : index
    %26 = vector.load %arg1[%c0_29, %c0_30, %c2_31] : memref<1x8x324xf32, #tpu.memory_space<vmem>>, vector<1x8x286xf32>
    %27 = vector.shape_cast %26 : vector<1x8x286xf32> to vector<8x286xf32>
    %cst_32 = arith.constant dense<0.000000e+00> : vector<4x286xf32>
    %28 = tpu.matmul %25, %27, %cst_32 {dimension_numbers = #tpu.dot_dimension_numbers<[1], [0], [0], [1], [0, 0, 1, 1], [], []>} : vector<4x8xf32>, vector<8x286xf32>, vector<4x286xf32> -> vector<4x286xf32>
    %c2_33 = arith.constant 2 : index
    %c0_34 = arith.constant 0 : index
    %c0_35 = arith.constant 0 : index
    %29 = vector.load %arg4[%c2_33, %c0_34, %c0_35] : memref<9x4x4xf32, #tpu.memory_space<vmem>>, vector<1x4x4xf32>
    %30 = vector.shape_cast %29 : vector<1x4x4xf32> to vector<4x4xf32>
    %c0_36 = arith.constant 0 : index
    %c0_37 = arith.constant 0 : index
    %c2_38 = arith.constant 2 : index
    %31 = vector.load %arg2[%c0_36, %c0_37, %c2_38] : memref<1x4x324xf32, #tpu.memory_space<vmem>>, vector<1x4x286xf32>
    %32 = vector.shape_cast %31 : vector<1x4x286xf32> to vector<4x286xf32>
    %cst_39 = arith.constant dense<0.000000e+00> : vector<4x286xf32>
    %33 = tpu.matmul %30, %32, %cst_39 {dimension_numbers = #tpu.dot_dimension_numbers<[1], [0], [0], [1], [0, 0, 1, 1], [], []>} : vector<4x4xf32>, vector<4x286xf32>, vector<4x286xf32> -> vector<4x286xf32>
    %34 = arith.addf %28, %33 : vector<4x286xf32>
    %35 = arith.addf %23, %34 : vector<4x286xf32>
    %c3 = arith.constant 3 : index
    %c0_40 = arith.constant 0 : index
    %c0_41 = arith.constant 0 : index
    %36 = vector.load %arg3[%c3, %c0_40, %c0_41] : memref<9x4x8xf32, #tpu.memory_space<vmem>>, vector<1x4x8xf32>
    %37 = vector.shape_cast %36 : vector<1x4x8xf32> to vector<4x8xf32>
    %c0_42 = arith.constant 0 : index
    %c0_43 = arith.constant 0 : index
    %c18 = arith.constant 18 : index
    %38 = vector.load %arg1[%c0_42, %c0_43, %c18] : memref<1x8x324xf32, #tpu.memory_space<vmem>>, vector<1x8x286xf32>
    %39 = vector.shape_cast %38 : vector<1x8x286xf32> to vector<8x286xf32>
    %cst_44 = arith.constant dense<0.000000e+00> : vector<4x286xf32>
    %40 = tpu.matmul %37, %39, %cst_44 {dimension_numbers = #tpu.dot_dimension_numbers<[1], [0], [0], [1], [0, 0, 1, 1], [], []>} : vector<4x8xf32>, vector<8x286xf32>, vector<4x286xf32> -> vector<4x286xf32>
    %c3_45 = arith.constant 3 : index
    %c0_46 = arith.constant 0 : index
    %c0_47 = arith.constant 0 : index
    %41 = vector.load %arg4[%c3_45, %c0_46, %c0_47] : memref<9x4x4xf32, #tpu.memory_space<vmem>>, vector<1x4x4xf32>
    %42 = vector.shape_cast %41 : vector<1x4x4xf32> to vector<4x4xf32>
    %c0_48 = arith.constant 0 : index
    %c0_49 = arith.constant 0 : index
    %c18_50 = arith.constant 18 : index
    %43 = vector.load %arg2[%c0_48, %c0_49, %c18_50] : memref<1x4x324xf32, #tpu.memory_space<vmem>>, vector<1x4x286xf32>
    %44 = vector.shape_cast %43 : vector<1x4x286xf32> to vector<4x286xf32>
    %cst_51 = arith.constant dense<0.000000e+00> : vector<4x286xf32>
    %45 = tpu.matmul %42, %44, %cst_51 {dimension_numbers = #tpu.dot_dimension_numbers<[1], [0], [0], [1], [0, 0, 1, 1], [], []>} : vector<4x4xf32>, vector<4x286xf32>, vector<4x286xf32> -> vector<4x286xf32>
    %46 = arith.addf %40, %45 : vector<4x286xf32>
    %47 = arith.addf %35, %46 : vector<4x286xf32>
    %c4 = arith.constant 4 : index
    %c0_52 = arith.constant 0 : index
    %c0_53 = arith.constant 0 : index
    %48 = vector.load %arg3[%c4, %c0_52, %c0_53] : memref<9x4x8xf32, #tpu.memory_space<vmem>>, vector<1x4x8xf32>
    %49 = vector.shape_cast %48 : vector<1x4x8xf32> to vector<4x8xf32>
    %c0_54 = arith.constant 0 : index
    %c0_55 = arith.constant 0 : index
    %c19 = arith.constant 19 : index
    %50 = vector.load %arg1[%c0_54, %c0_55, %c19] : memref<1x8x324xf32, #tpu.memory_space<vmem>>, vector<1x8x286xf32>
    %51 = vector.shape_cast %50 : vector<1x8x286xf32> to vector<8x286xf32>
    %cst_56 = arith.constant dense<0.000000e+00> : vector<4x286xf32>
    %52 = tpu.matmul %49, %51, %cst_56 {dimension_numbers = #tpu.dot_dimension_numbers<[1], [0], [0], [1], [0, 0, 1, 1], [], []>} : vector<4x8xf32>, vector<8x286xf32>, vector<4x286xf32> -> vector<4x286xf32>
    %c4_57 = arith.constant 4 : index
    %c0_58 = arith.constant 0 : index
    %c0_59 = arith.constant 0 : index
    %53 = vector.load %arg4[%c4_57, %c0_58, %c0_59] : memref<9x4x4xf32, #tpu.memory_space<vmem>>, vector<1x4x4xf32>
    %54 = vector.shape_cast %53 : vector<1x4x4xf32> to vector<4x4xf32>
    %c0_60 = arith.constant 0 : index
    %c0_61 = arith.constant 0 : index
    %c19_62 = arith.constant 19 : index
    %55 = vector.load %arg2[%c0_60, %c0_61, %c19_62] : memref<1x4x324xf32, #tpu.memory_space<vmem>>, vector<1x4x286xf32>
    %56 = vector.shape_cast %55 : vector<1x4x286xf32> to vector<4x286xf32>
    %cst_63 = arith.constant dense<0.000000e+00> : vector<4x286xf32>
    %57 = tpu.matmul %54, %56, %cst_63 {dimension_numbers = #tpu.dot_dimension_numbers<[1], [0], [0], [1], [0, 0, 1, 1], [], []>} : vector<4x4xf32>, vector<4x286xf32>, vector<4x286xf32> -> vector<4x286xf32>
    %58 = arith.addf %52, %57 : vector<4x286xf32>
    %59 = arith.addf %47, %58 : vector<4x286xf32>
    %c5 = arith.constant 5 : index
    %c0_64 = arith.constant 0 : index
    %c0_65 = arith.constant 0 : index
    %60 = vector.load %arg3[%c5, %c0_64, %c0_65] : memref<9x4x8xf32, #tpu.memory_space<vmem>>, vector<1x4x8xf32>
    %61 = vector.shape_cast %60 : vector<1x4x8xf32> to vector<4x8xf32>
    %c0_66 = arith.constant 0 : index
    %c0_67 = arith.constant 0 : index
    %c20 = arith.constant 20 : index
    %62 = vector.load %arg1[%c0_66, %c0_67, %c20] : memref<1x8x324xf32, #tpu.memory_space<vmem>>, vector<1x8x286xf32>
    %63 = vector.shape_cast %62 : vector<1x8x286xf32> to vector<8x286xf32>
    %cst_68 = arith.constant dense<0.000000e+00> : vector<4x286xf32>
    %64 = tpu.matmul %61, %63, %cst_68 {dimension_numbers = #tpu.dot_dimension_numbers<[1], [0], [0], [1], [0, 0, 1, 1], [], []>} : vector<4x8xf32>, vector<8x286xf32>, vector<4x286xf32> -> vector<4x286xf32>
    %c5_69 = arith.constant 5 : index
    %c0_70 = arith.constant 0 : index
    %c0_71 = arith.constant 0 : index
    %65 = vector.load %arg4[%c5_69, %c0_70, %c0_71] : memref<9x4x4xf32, #tpu.memory_space<vmem>>, vector<1x4x4xf32>
    %66 = vector.shape_cast %65 : vector<1x4x4xf32> to vector<4x4xf32>
    %c0_72 = arith.constant 0 : index
    %c0_73 = arith.constant 0 : index
    %c20_74 = arith.constant 20 : index
    %67 = vector.load %arg2[%c0_72, %c0_73, %c20_74] : memref<1x4x324xf32, #tpu.memory_space<vmem>>, vector<1x4x286xf32>
    %68 = vector.shape_cast %67 : vector<1x4x286xf32> to vector<4x286xf32>
    %cst_75 = arith.constant dense<0.000000e+00> : vector<4x286xf32>
    %69 = tpu.matmul %66, %68, %cst_75 {dimension_numbers = #tpu.dot_dimension_numbers<[1], [0], [0], [1], [0, 0, 1, 1], [], []>} : vector<4x4xf32>, vector<4x286xf32>, vector<4x286xf32> -> vector<4x286xf32>
    %70 = arith.addf %64, %69 : vector<4x286xf32>
    %71 = arith.addf %59, %70 : vector<4x286xf32>
    %c6 = arith.constant 6 : index
    %c0_76 = arith.constant 0 : index
    %c0_77 = arith.constant 0 : index
    %72 = vector.load %arg3[%c6, %c0_76, %c0_77] : memref<9x4x8xf32, #tpu.memory_space<vmem>>, vector<1x4x8xf32>
    %73 = vector.shape_cast %72 : vector<1x4x8xf32> to vector<4x8xf32>
    %c0_78 = arith.constant 0 : index
    %c0_79 = arith.constant 0 : index
    %c36 = arith.constant 36 : index
    %74 = vector.load %arg1[%c0_78, %c0_79, %c36] : memref<1x8x324xf32, #tpu.memory_space<vmem>>, vector<1x8x286xf32>
    %75 = vector.shape_cast %74 : vector<1x8x286xf32> to vector<8x286xf32>
    %cst_80 = arith.constant dense<0.000000e+00> : vector<4x286xf32>
    %76 = tpu.matmul %73, %75, %cst_80 {dimension_numbers = #tpu.dot_dimension_numbers<[1], [0], [0], [1], [0, 0, 1, 1], [], []>} : vector<4x8xf32>, vector<8x286xf32>, vector<4x286xf32> -> vector<4x286xf32>
    %c6_81 = arith.constant 6 : index
    %c0_82 = arith.constant 0 : index
    %c0_83 = arith.constant 0 : index
    %77 = vector.load %arg4[%c6_81, %c0_82, %c0_83] : memref<9x4x4xf32, #tpu.memory_space<vmem>>, vector<1x4x4xf32>
    %78 = vector.shape_cast %77 : vector<1x4x4xf32> to vector<4x4xf32>
    %c0_84 = arith.constant 0 : index
    %c0_85 = arith.constant 0 : index
    %c36_86 = arith.constant 36 : index
    %79 = vector.load %arg2[%c0_84, %c0_85, %c36_86] : memref<1x4x324xf32, #tpu.memory_space<vmem>>, vector<1x4x286xf32>
    %80 = vector.shape_cast %79 : vector<1x4x286xf32> to vector<4x286xf32>
    %cst_87 = arith.constant dense<0.000000e+00> : vector<4x286xf32>
    %81 = tpu.matmul %78, %80, %cst_87 {dimension_numbers = #tpu.dot_dimension_numbers<[1], [0], [0], [1], [0, 0, 1, 1], [], []>} : vector<4x4xf32>, vector<4x286xf32>, vector<4x286xf32> -> vector<4x286xf32>
    %82 = arith.addf %76, %81 : vector<4x286xf32>
    %83 = arith.addf %71, %82 : vector<4x286xf32>
    %c7 = arith.constant 7 : index
    %c0_88 = arith.constant 0 : index
    %c0_89 = arith.constant 0 : index
    %84 = vector.load %arg3[%c7, %c0_88, %c0_89] : memref<9x4x8xf32, #tpu.memory_space<vmem>>, vector<1x4x8xf32>
    %85 = vector.shape_cast %84 : vector<1x4x8xf32> to vector<4x8xf32>
    %c0_90 = arith.constant 0 : index
    %c0_91 = arith.constant 0 : index
    %c37 = arith.constant 37 : index
    %86 = vector.load %arg1[%c0_90, %c0_91, %c37] : memref<1x8x324xf32, #tpu.memory_space<vmem>>, vector<1x8x286xf32>
    %87 = vector.shape_cast %86 : vector<1x8x286xf32> to vector<8x286xf32>
    %cst_92 = arith.constant dense<0.000000e+00> : vector<4x286xf32>
    %88 = tpu.matmul %85, %87, %cst_92 {dimension_numbers = #tpu.dot_dimension_numbers<[1], [0], [0], [1], [0, 0, 1, 1], [], []>} : vector<4x8xf32>, vector<8x286xf32>, vector<4x286xf32> -> vector<4x286xf32>
    %c7_93 = arith.constant 7 : index
    %c0_94 = arith.constant 0 : index
    %c0_95 = arith.constant 0 : index
    %89 = vector.load %arg4[%c7_93, %c0_94, %c0_95] : memref<9x4x4xf32, #tpu.memory_space<vmem>>, vector<1x4x4xf32>
    %90 = vector.shape_cast %89 : vector<1x4x4xf32> to vector<4x4xf32>
    %c0_96 = arith.constant 0 : index
    %c0_97 = arith.constant 0 : index
    %c37_98 = arith.constant 37 : index
    %91 = vector.load %arg2[%c0_96, %c0_97, %c37_98] : memref<1x4x324xf32, #tpu.memory_space<vmem>>, vector<1x4x286xf32>
    %92 = vector.shape_cast %91 : vector<1x4x286xf32> to vector<4x286xf32>
    %cst_99 = arith.constant dense<0.000000e+00> : vector<4x286xf32>
    %93 = tpu.matmul %90, %92, %cst_99 {dimension_numbers = #tpu.dot_dimension_numbers<[1], [0], [0], [1], [0, 0, 1, 1], [], []>} : vector<4x4xf32>, vector<4x286xf32>, vector<4x286xf32> -> vector<4x286xf32>
    %94 = arith.addf %88, %93 : vector<4x286xf32>
    %95 = arith.addf %83, %94 : vector<4x286xf32>
    %c8 = arith.constant 8 : index
    %c0_100 = arith.constant 0 : index
    %c0_101 = arith.constant 0 : index
    %96 = vector.load %arg3[%c8, %c0_100, %c0_101] : memref<9x4x8xf32, #tpu.memory_space<vmem>>, vector<1x4x8xf32>
    %97 = vector.shape_cast %96 : vector<1x4x8xf32> to vector<4x8xf32>
    %c0_102 = arith.constant 0 : index
    %c0_103 = arith.constant 0 : index
    %c38 = arith.constant 38 : index
    %98 = vector.load %arg1[%c0_102, %c0_103, %c38] : memref<1x8x324xf32, #tpu.memory_space<vmem>>, vector<1x8x286xf32>
    %99 = vector.shape_cast %98 : vector<1x8x286xf32> to vector<8x286xf32>
    %cst_104 = arith.constant dense<0.000000e+00> : vector<4x286xf32>
    %100 = tpu.matmul %97, %99, %cst_104 {dimension_numbers = #tpu.dot_dimension_numbers<[1], [0], [0], [1], [0, 0, 1, 1], [], []>} : vector<4x8xf32>, vector<8x286xf32>, vector<4x286xf32> -> vector<4x286xf32>
    %c8_105 = arith.constant 8 : index
    %c0_106 = arith.constant 0 : index
    %c0_107 = arith.constant 0 : index
    %101 = vector.load %arg4[%c8_105, %c0_106, %c0_107] : memref<9x4x4xf32, #tpu.memory_space<vmem>>, vector<1x4x4xf32>
    %102 = vector.shape_cast %101 : vector<1x4x4xf32> to vector<4x4xf32>
    %c0_108 = arith.constant 0 : index
    %c0_109 = arith.constant 0 : index
    %c38_110 = arith.constant 38 : index
    %103 = vector.load %arg2[%c0_108, %c0_109, %c38_110] : memref<1x4x324xf32, #tpu.memory_space<vmem>>, vector<1x4x286xf32>
    %104 = vector.shape_cast %103 : vector<1x4x286xf32> to vector<4x286xf32>
    %cst_111 = arith.constant dense<0.000000e+00> : vector<4x286xf32>
    %105 = tpu.matmul %102, %104, %cst_111 {dimension_numbers = #tpu.dot_dimension_numbers<[1], [0], [0], [1], [0, 0, 1, 1], [], []>} : vector<4x4xf32>, vector<4x286xf32>, vector<4x286xf32> -> vector<4x286xf32>
    %106 = arith.addf %100, %105 : vector<4x286xf32>
    %107 = arith.addf %95, %106 : vector<4x286xf32>
    %c0_112 = arith.constant 0 : index
    %c0_113 = arith.constant 0 : index
    %108 = vector.load %arg5[%c0_112, %c0_113] : memref<4x1xf32, #tpu.memory_space<vmem>>, vector<4x1xf32>
    %109 = vector.broadcast %108 : vector<4x1xf32> to vector<4x286xf32>
    %110 = arith.addf %107, %109 : vector<4x286xf32>
    %cst_114 = arith.constant 0.000000e+00 : f32
    %111 = vector.broadcast %cst_114 : f32 to vector<4x286xf32>
    %112 = arith.maximumf %110, %111 : vector<4x286xf32>
    %113 = vector.broadcast %0 : vector<1x286xf32> to vector<4x286xf32>
    %114 = arith.mulf %112, %113 : vector<4x286xf32>
    %cst_115 = arith.constant 0.000000e+00 : f32
    %115 = vector.broadcast %cst_115 : f32 to vector<4x19xf32>
    %c0_116 = arith.constant 0 : index
    %c0_117 = arith.constant 0 : index
    %116 = vector.load %arg14[%c0_116, %c0_117] : memref<4x324xf32, #tpu.memory_space<vmem>>, vector<4x19xf32>
    tpu.vector_store %arg14[%c0_116, %c0_117], %115 {strides = array<i32>} : memref<4x324xf32, #tpu.memory_space<vmem>>, vector<4x19xf32>,
    %c0_118 = arith.constant 0 : index
    %c305 = arith.constant 305 : index
    %117 = vector.load %arg14[%c0_118, %c305] : memref<4x324xf32, #tpu.memory_space<vmem>>, vector<4x19xf32>
    tpu.vector_store %arg14[%c0_118, %c305], %115 {strides = array<i32>} : memref<4x324xf32, #tpu.memory_space<vmem>>, vector<4x19xf32>,
    %c0_119 = arith.constant 0 : index
    %c19_120 = arith.constant 19 : index
    %118 = vector.load %arg14[%c0_119, %c19_120] : memref<4x324xf32, #tpu.memory_space<vmem>>, vector<4x286xf32>
    tpu.vector_store %arg14[%c0_119, %c19_120], %114 {strides = array<i32>} : memref<4x324xf32, #tpu.memory_space<vmem>>, vector<4x286xf32>,
    %c0_121 = arith.constant 0 : index
    %c0_122 = arith.constant 0 : index
    %c0_123 = arith.constant 0 : index
    %119 = vector.load %arg6[%c0_121, %c0_122, %c0_123] : memref<9x4x4xf32, #tpu.memory_space<vmem>>, vector<1x4x4xf32>
    %120 = vector.shape_cast %119 : vector<1x4x4xf32> to vector<4x4xf32>
    %c0_124 = arith.constant 0 : index
    %c0_125 = arith.constant 0 : index
    %121 = vector.load %arg14[%c0_124, %c0_125] : memref<4x324xf32, #tpu.memory_space<vmem>>, vector<4x286xf32>
    %cst_126 = arith.constant dense<0.000000e+00> : vector<4x286xf32>
    %122 = tpu.matmul %120, %121, %cst_126 {dimension_numbers = #tpu.dot_dimension_numbers<[1], [0], [0], [1], [0, 0, 1, 1], [], []>} : vector<4x4xf32>, vector<4x286xf32>, vector<4x286xf32> -> vector<4x286xf32>
    %c1_127 = arith.constant 1 : index
    %c0_128 = arith.constant 0 : index
    %c0_129 = arith.constant 0 : index
    %123 = vector.load %arg6[%c1_127, %c0_128, %c0_129] : memref<9x4x4xf32, #tpu.memory_space<vmem>>, vector<1x4x4xf32>
    %124 = vector.shape_cast %123 : vector<1x4x4xf32> to vector<4x4xf32>
    %c0_130 = arith.constant 0 : index
    %c1_131 = arith.constant 1 : index
    %125 = vector.load %arg14[%c0_130, %c1_131] : memref<4x324xf32, #tpu.memory_space<vmem>>, vector<4x286xf32>
    %cst_132 = arith.constant dense<0.000000e+00> : vector<4x286xf32>
    %126 = tpu.matmul %124, %125, %cst_132 {dimension_numbers = #tpu.dot_dimension_numbers<[1], [0], [0], [1], [0, 0, 1, 1], [], []>} : vector<4x4xf32>, vector<4x286xf32>, vector<4x286xf32> -> vector<4x286xf32>
    %127 = arith.addf %122, %126 : vector<4x286xf32>
    %c2_133 = arith.constant 2 : index
    %c0_134 = arith.constant 0 : index
    %c0_135 = arith.constant 0 : index
    %128 = vector.load %arg6[%c2_133, %c0_134, %c0_135] : memref<9x4x4xf32, #tpu.memory_space<vmem>>, vector<1x4x4xf32>
    %129 = vector.shape_cast %128 : vector<1x4x4xf32> to vector<4x4xf32>
    %c0_136 = arith.constant 0 : index
    %c2_137 = arith.constant 2 : index
    %130 = vector.load %arg14[%c0_136, %c2_137] : memref<4x324xf32, #tpu.memory_space<vmem>>, vector<4x286xf32>
    %cst_138 = arith.constant dense<0.000000e+00> : vector<4x286xf32>
    %131 = tpu.matmul %129, %130, %cst_138 {dimension_numbers = #tpu.dot_dimension_numbers<[1], [0], [0], [1], [0, 0, 1, 1], [], []>} : vector<4x4xf32>, vector<4x286xf32>, vector<4x286xf32> -> vector<4x286xf32>
    %132 = arith.addf %127, %131 : vector<4x286xf32>
    %c3_139 = arith.constant 3 : index
    %c0_140 = arith.constant 0 : index
    %c0_141 = arith.constant 0 : index
    %133 = vector.load %arg6[%c3_139, %c0_140, %c0_141] : memref<9x4x4xf32, #tpu.memory_space<vmem>>, vector<1x4x4xf32>
    %134 = vector.shape_cast %133 : vector<1x4x4xf32> to vector<4x4xf32>
    %c0_142 = arith.constant 0 : index
    %c18_143 = arith.constant 18 : index
    %135 = vector.load %arg14[%c0_142, %c18_143] : memref<4x324xf32, #tpu.memory_space<vmem>>, vector<4x286xf32>
    %cst_144 = arith.constant dense<0.000000e+00> : vector<4x286xf32>
    %136 = tpu.matmul %134, %135, %cst_144 {dimension_numbers = #tpu.dot_dimension_numbers<[1], [0], [0], [1], [0, 0, 1, 1], [], []>} : vector<4x4xf32>, vector<4x286xf32>, vector<4x286xf32> -> vector<4x286xf32>
    %137 = arith.addf %132, %136 : vector<4x286xf32>
    %c4_145 = arith.constant 4 : index
    %c0_146 = arith.constant 0 : index
    %c0_147 = arith.constant 0 : index
    %138 = vector.load %arg6[%c4_145, %c0_146, %c0_147] : memref<9x4x4xf32, #tpu.memory_space<vmem>>, vector<1x4x4xf32>
    %139 = vector.shape_cast %138 : vector<1x4x4xf32> to vector<4x4xf32>
    %c0_148 = arith.constant 0 : index
    %c19_149 = arith.constant 19 : index
    %140 = vector.load %arg14[%c0_148, %c19_149] : memref<4x324xf32, #tpu.memory_space<vmem>>, vector<4x286xf32>
    %cst_150 = arith.constant dense<0.000000e+00> : vector<4x286xf32>
    %141 = tpu.matmul %139, %140, %cst_150 {dimension_numbers = #tpu.dot_dimension_numbers<[1], [0], [0], [1], [0, 0, 1, 1], [], []>} : vector<4x4xf32>, vector<4x286xf32>, vector<4x286xf32> -> vector<4x286xf32>
    %142 = arith.addf %137, %141 : vector<4x286xf32>
    %c5_151 = arith.constant 5 : index
    %c0_152 = arith.constant 0 : index
    %c0_153 = arith.constant 0 : index
    %143 = vector.load %arg6[%c5_151, %c0_152, %c0_153] : memref<9x4x4xf32, #tpu.memory_space<vmem>>, vector<1x4x4xf32>
    %144 = vector.shape_cast %143 : vector<1x4x4xf32> to vector<4x4xf32>
    %c0_154 = arith.constant 0 : index
    %c20_155 = arith.constant 20 : index
    %145 = vector.load %arg14[%c0_154, %c20_155] : memref<4x324xf32, #tpu.memory_space<vmem>>, vector<4x286xf32>
    %cst_156 = arith.constant dense<0.000000e+00> : vector<4x286xf32>
    %146 = tpu.matmul %144, %145, %cst_156 {dimension_numbers = #tpu.dot_dimension_numbers<[1], [0], [0], [1], [0, 0, 1, 1], [], []>} : vector<4x4xf32>, vector<4x286xf32>, vector<4x286xf32> -> vector<4x286xf32>
    %147 = arith.addf %142, %146 : vector<4x286xf32>
    %c6_157 = arith.constant 6 : index
    %c0_158 = arith.constant 0 : index
    %c0_159 = arith.constant 0 : index
    %148 = vector.load %arg6[%c6_157, %c0_158, %c0_159] : memref<9x4x4xf32, #tpu.memory_space<vmem>>, vector<1x4x4xf32>
    %149 = vector.shape_cast %148 : vector<1x4x4xf32> to vector<4x4xf32>
    %c0_160 = arith.constant 0 : index
    %c36_161 = arith.constant 36 : index
    %150 = vector.load %arg14[%c0_160, %c36_161] : memref<4x324xf32, #tpu.memory_space<vmem>>, vector<4x286xf32>
    %cst_162 = arith.constant dense<0.000000e+00> : vector<4x286xf32>
    %151 = tpu.matmul %149, %150, %cst_162 {dimension_numbers = #tpu.dot_dimension_numbers<[1], [0], [0], [1], [0, 0, 1, 1], [], []>} : vector<4x4xf32>, vector<4x286xf32>, vector<4x286xf32> -> vector<4x286xf32>
    %152 = arith.addf %147, %151 : vector<4x286xf32>
    %c7_163 = arith.constant 7 : index
    %c0_164 = arith.constant 0 : index
    %c0_165 = arith.constant 0 : index
    %153 = vector.load %arg6[%c7_163, %c0_164, %c0_165] : memref<9x4x4xf32, #tpu.memory_space<vmem>>, vector<1x4x4xf32>
    %154 = vector.shape_cast %153 : vector<1x4x4xf32> to vector<4x4xf32>
    %c0_166 = arith.constant 0 : index
    %c37_167 = arith.constant 37 : index
    %155 = vector.load %arg14[%c0_166, %c37_167] : memref<4x324xf32, #tpu.memory_space<vmem>>, vector<4x286xf32>
    %cst_168 = arith.constant dense<0.000000e+00> : vector<4x286xf32>
    %156 = tpu.matmul %154, %155, %cst_168 {dimension_numbers = #tpu.dot_dimension_numbers<[1], [0], [0], [1], [0, 0, 1, 1], [], []>} : vector<4x4xf32>, vector<4x286xf32>, vector<4x286xf32> -> vector<4x286xf32>
    %157 = arith.addf %152, %156 : vector<4x286xf32>
    %c8_169 = arith.constant 8 : index
    %c0_170 = arith.constant 0 : index
    %c0_171 = arith.constant 0 : index
    %158 = vector.load %arg6[%c8_169, %c0_170, %c0_171] : memref<9x4x4xf32, #tpu.memory_space<vmem>>, vector<1x4x4xf32>
    %159 = vector.shape_cast %158 : vector<1x4x4xf32> to vector<4x4xf32>
    %c0_172 = arith.constant 0 : index
    %c38_173 = arith.constant 38 : index
    %160 = vector.load %arg14[%c0_172, %c38_173] : memref<4x324xf32, #tpu.memory_space<vmem>>, vector<4x286xf32>
    %cst_174 = arith.constant dense<0.000000e+00> : vector<4x286xf32>
    %161 = tpu.matmul %159, %160, %cst_174 {dimension_numbers = #tpu.dot_dimension_numbers<[1], [0], [0], [1], [0, 0, 1, 1], [], []>} : vector<4x4xf32>, vector<4x286xf32>, vector<4x286xf32> -> vector<4x286xf32>
    %162 = arith.addf %157, %161 : vector<4x286xf32>
    %c0_175 = arith.constant 0 : index
    %c0_176 = arith.constant 0 : index
    %163 = vector.load %arg8[%c0_175, %c0_176] : memref<4x8xf32, #tpu.memory_space<vmem>>, vector<4x8xf32>
    %c0_177 = arith.constant 0 : index
    %c0_178 = arith.constant 0 : index
    %c19_179 = arith.constant 19 : index
    %164 = vector.load %arg1[%c0_177, %c0_178, %c19_179] : memref<1x8x324xf32, #tpu.memory_space<vmem>>, vector<1x8x286xf32>
    %165 = vector.shape_cast %164 : vector<1x8x286xf32> to vector<8x286xf32>
    %cst_180 = arith.constant dense<0.000000e+00> : vector<4x286xf32>
    %166 = tpu.matmul %163, %165, %cst_180 {dimension_numbers = #tpu.dot_dimension_numbers<[1], [0], [0], [1], [0, 0, 1, 1], [], []>} : vector<4x8xf32>, vector<8x286xf32>, vector<4x286xf32> -> vector<4x286xf32>
    %c0_181 = arith.constant 0 : index
    %c0_182 = arith.constant 0 : index
    %167 = vector.load %arg9[%c0_181, %c0_182] : memref<4x4xf32, #tpu.memory_space<vmem>>, vector<4x4xf32>
    %c0_183 = arith.constant 0 : index
    %c0_184 = arith.constant 0 : index
    %c19_185 = arith.constant 19 : index
    %168 = vector.load %arg2[%c0_183, %c0_184, %c19_185] : memref<1x4x324xf32, #tpu.memory_space<vmem>>, vector<1x4x286xf32>
    %169 = vector.shape_cast %168 : vector<1x4x286xf32> to vector<4x286xf32>
    %cst_186 = arith.constant dense<0.000000e+00> : vector<4x286xf32>
    %170 = tpu.matmul %167, %169, %cst_186 {dimension_numbers = #tpu.dot_dimension_numbers<[1], [0], [0], [1], [0, 0, 1, 1], [], []>} : vector<4x4xf32>, vector<4x286xf32>, vector<4x286xf32> -> vector<4x286xf32>
    %171 = arith.addf %166, %170 : vector<4x286xf32>
    %c0_187 = arith.constant 0 : index
    %c0_188 = arith.constant 0 : index
    %172 = vector.load %arg7[%c0_187, %c0_188] : memref<4x1xf32, #tpu.memory_space<vmem>>, vector<4x1xf32>
    %173 = vector.broadcast %172 : vector<4x1xf32> to vector<4x286xf32>
    %174 = arith.addf %162, %173 : vector<4x286xf32>
    %175 = arith.addf %174, %171 : vector<4x286xf32>
    %cst_189 = arith.constant 0.000000e+00 : f32
    %176 = vector.broadcast %cst_189 : f32 to vector<4x286xf32>
    %177 = arith.maximumf %175, %176 : vector<4x286xf32>
    %178 = vector.broadcast %0 : vector<1x286xf32> to vector<4x286xf32>
    %179 = arith.mulf %177, %178 : vector<4x286xf32>
    %cst_190 = arith.constant 0.000000e+00 : f32
    %180 = vector.broadcast %cst_190 : f32 to vector<4x19xf32>
    %c0_191 = arith.constant 0 : index
    %c0_192 = arith.constant 0 : index
    %c0_193 = arith.constant 0 : index
    %181 = vector.load %arg12[%c0_191, %c0_192, %c0_193] : memref<1x4x324xf32, #tpu.memory_space<vmem>>, vector<1x4x19xf32>
    %182 = vector.shape_cast %181 : vector<1x4x19xf32> to vector<4x19xf32>
    %183 = vector.shape_cast %180 : vector<4x19xf32> to vector<1x4x19xf32>
    tpu.vector_store %arg12[%c0_191, %c0_192, %c0_193], %183 {strides = array<i32>} : memref<1x4x324xf32, #tpu.memory_space<vmem>>, vector<1x4x19xf32>,
    %c0_194 = arith.constant 0 : index
    %c0_195 = arith.constant 0 : index
    %c305_196 = arith.constant 305 : index
    %184 = vector.load %arg12[%c0_194, %c0_195, %c305_196] : memref<1x4x324xf32, #tpu.memory_space<vmem>>, vector<1x4x19xf32>
    %185 = vector.shape_cast %184 : vector<1x4x19xf32> to vector<4x19xf32>
    %186 = vector.shape_cast %180 : vector<4x19xf32> to vector<1x4x19xf32>
    tpu.vector_store %arg12[%c0_194, %c0_195, %c305_196], %186 {strides = array<i32>} : memref<1x4x324xf32, #tpu.memory_space<vmem>>, vector<1x4x19xf32>,
    %c0_197 = arith.constant 0 : index
    %c0_198 = arith.constant 0 : index
    %c19_199 = arith.constant 19 : index
    %187 = vector.load %arg12[%c0_197, %c0_198, %c19_199] : memref<1x4x324xf32, #tpu.memory_space<vmem>>, vector<1x4x286xf32>
    %188 = vector.shape_cast %187 : vector<1x4x286xf32> to vector<4x286xf32>
    %189 = vector.shape_cast %179 : vector<4x286xf32> to vector<1x4x286xf32>
    tpu.vector_store %arg12[%c0_197, %c0_198, %c19_199], %189 {strides = array<i32>} : memref<1x4x324xf32, #tpu.memory_space<vmem>>, vector<1x4x286xf32>,
    %c0_200 = arith.constant 0 : index
    %c0_201 = arith.constant 0 : index
    %190 = vector.load %arg11[%c0_200, %c0_201] : memref<2x4xf32, #tpu.memory_space<vmem>>, vector<2x4xf32>
    %cst_202 = arith.constant dense<0.000000e+00> : vector<2x286xf32>
    %191 = tpu.matmul %190, %179, %cst_202 {dimension_numbers = #tpu.dot_dimension_numbers<[1], [0], [0], [1], [0, 0, 1, 1], [], []>} : vector<2x4xf32>, vector<4x286xf32>, vector<2x286xf32> -> vector<2x286xf32>
    %192 = vector.broadcast %0 : vector<1x286xf32> to vector<2x286xf32>
    %193 = arith.mulf %191, %192 : vector<2x286xf32>
    %cst_203 = arith.constant 0.000000e+00 : f32
    %194 = vector.broadcast %cst_203 : f32 to vector<2x19xf32>
    %c0_204 = arith.constant 0 : index
    %c0_205 = arith.constant 0 : index
    %c0_206 = arith.constant 0 : index
    %195 = vector.load %arg13[%c0_204, %c0_205, %c0_206] : memref<1x2x324xf32, #tpu.memory_space<vmem>>, vector<1x2x19xf32>
    %196 = vector.shape_cast %195 : vector<1x2x19xf32> to vector<2x19xf32>
    %197 = vector.shape_cast %194 : vector<2x19xf32> to vector<1x2x19xf32>
    tpu.vector_store %arg13[%c0_204, %c0_205, %c0_206], %197 {strides = array<i32>} : memref<1x2x324xf32, #tpu.memory_space<vmem>>, vector<1x2x19xf32>,
    %c0_207 = arith.constant 0 : index
    %c0_208 = arith.constant 0 : index
    %c305_209 = arith.constant 305 : index
    %198 = vector.load %arg13[%c0_207, %c0_208, %c305_209] : memref<1x2x324xf32, #tpu.memory_space<vmem>>, vector<1x2x19xf32>
    %199 = vector.shape_cast %198 : vector<1x2x19xf32> to vector<2x19xf32>
    %200 = vector.shape_cast %194 : vector<2x19xf32> to vector<1x2x19xf32>
    tpu.vector_store %arg13[%c0_207, %c0_208, %c305_209], %200 {strides = array<i32>} : memref<1x2x324xf32, #tpu.memory_space<vmem>>, vector<1x2x19xf32>,
    %c0_210 = arith.constant 0 : index
    %c0_211 = arith.constant 0 : index
    %c19_212 = arith.constant 19 : index
    %201 = vector.load %arg13[%c0_210, %c0_211, %c19_212] : memref<1x2x324xf32, #tpu.memory_space<vmem>>, vector<1x2x286xf32>
    %202 = vector.shape_cast %201 : vector<1x2x286xf32> to vector<2x286xf32>
    %203 = vector.shape_cast %193 : vector<2x286xf32> to vector<1x2x286xf32>
    tpu.vector_store %arg13[%c0_210, %c0_211, %c19_212], %203 {strides = array<i32>} : memref<1x2x324xf32, #tpu.memory_space<vmem>>, vector<1x2x286xf32>,
    return
  }
  func.func @transform_0(%arg0: i32) -> (i32, i32, i32) {
    %c0_i32 = arith.constant 0 : i32
    %c0_i32_0 = arith.constant 0 : i32
    %c0_i32_1 = arith.constant 0 : i32
    return %arg0, %c0_i32, %c0_i32_0 : i32, i32, i32
  }
  func.func @transform_1(%arg0: i32) -> (i32, i32, i32) {
    %c0_i32 = arith.constant 0 : i32
    %c0_i32_0 = arith.constant 0 : i32
    %c0_i32_1 = arith.constant 0 : i32
    return %arg0, %c0_i32, %c0_i32_0 : i32, i32, i32
  }
  func.func @transform_2(%arg0: i32) -> (i32, i32, i32) {
    %c0_i32 = arith.constant 0 : i32
    %c0_i32_0 = arith.constant 0 : i32
    %c0_i32_1 = arith.constant 0 : i32
    %c0_i32_2 = arith.constant 0 : i32
    return %c0_i32, %c0_i32_0, %c0_i32_1 : i32, i32, i32
  }
  func.func @transform_3(%arg0: i32) -> (i32, i32, i32) {
    %c0_i32 = arith.constant 0 : i32
    %c0_i32_0 = arith.constant 0 : i32
    %c0_i32_1 = arith.constant 0 : i32
    %c0_i32_2 = arith.constant 0 : i32
    return %c0_i32, %c0_i32_0, %c0_i32_1 : i32, i32, i32
  }
  func.func @transform_4(%arg0: i32) -> (i32, i32) {
    %c0_i32 = arith.constant 0 : i32
    %c0_i32_0 = arith.constant 0 : i32
    %c0_i32_1 = arith.constant 0 : i32
    return %c0_i32, %c0_i32_0 : i32, i32
  }
  func.func @transform_5(%arg0: i32) -> (i32, i32, i32) {
    %c0_i32 = arith.constant 0 : i32
    %c0_i32_0 = arith.constant 0 : i32
    %c0_i32_1 = arith.constant 0 : i32
    %c0_i32_2 = arith.constant 0 : i32
    return %c0_i32, %c0_i32_0, %c0_i32_1 : i32, i32, i32
  }
  func.func @transform_6(%arg0: i32) -> (i32, i32) {
    %c0_i32 = arith.constant 0 : i32
    %c0_i32_0 = arith.constant 0 : i32
    %c0_i32_1 = arith.constant 0 : i32
    return %c0_i32, %c0_i32_0 : i32, i32
  }
  func.func @transform_7(%arg0: i32) -> (i32, i32) {
    %c0_i32 = arith.constant 0 : i32
    %c0_i32_0 = arith.constant 0 : i32
    %c0_i32_1 = arith.constant 0 : i32
    return %c0_i32, %c0_i32_0 : i32, i32
  }
  func.func @transform_8(%arg0: i32) -> (i32, i32) {
    %c0_i32 = arith.constant 0 : i32
    %c0_i32_0 = arith.constant 0 : i32
    %c0_i32_1 = arith.constant 0 : i32
    return %c0_i32, %c0_i32_0 : i32, i32
  }
  func.func @transform_9(%arg0: i32) -> (i32, i32) {
    %c0_i32 = arith.constant 0 : i32
    %c0_i32_0 = arith.constant 0 : i32
    %c0_i32_1 = arith.constant 0 : i32
    return %c0_i32, %c0_i32_0 : i32, i32
  }
  func.func @transform_10(%arg0: i32) -> (i32, i32) {
    %c0_i32 = arith.constant 0 : i32
    %c0_i32_0 = arith.constant 0 : i32
    %c0_i32_1 = arith.constant 0 : i32
    return %c0_i32, %c0_i32_0 : i32, i32
  }
  func.func @transform_11(%arg0: i32) -> (i32, i32, i32) {
    %c0_i32 = arith.constant 0 : i32
    %c0_i32_0 = arith.constant 0 : i32
    %c0_i32_1 = arith.constant 0 : i32
    return %arg0, %c0_i32, %c0_i32_0 : i32, i32, i32
  }
  func.func @transform_12(%arg0: i32) -> (i32, i32, i32) {
    %c0_i32 = arith.constant 0 : i32
    %c0_i32_0 = arith.constant 0 : i32
    %c0_i32_1 = arith.constant 0 : i32
    return %arg0, %c0_i32, %c0_i32_0 : i32, i32, i32
  }
}

module attributes {stable_mosaic.version = 11 : i64} {
  func.func @_conv1x1_kernel(%arg0: i32, %arg1: memref<1x16x16xf32, #tpu.memory_space<vmem>>, %arg2: memref<1x16xf32, #tpu.memory_space<vmem>>, %arg3: memref<1x1xf32, #tpu.memory_space<vmem>>, %arg4: memref<1x1x16xf32, #tpu.memory_space<vmem>>) attributes {dimension_semantics = [#tpu.dimension_semantics<parallel>], iteration_bounds = array<i64: 2>, scalar_prefetch = 0 : i64, scratch_operands = 0 : i64, tpu.core_type = #tpu.core_type<tc>, window_params = [{transform_indices = @transform_0, window_bounds = array<i64: 1, 16, 16>}, {pipeline_mode = #tpu.pipeline_mode<synchronous>, transform_indices = @transform_1, window_bounds = array<i64: 1, 16>}, {pipeline_mode = #tpu.pipeline_mode<synchronous>, transform_indices = @transform_2, window_bounds = array<i64: 1, 1>}, {transform_indices = @transform_3, window_bounds = array<i64: 1, 1, 16>}]} {
    %c0 = arith.constant 0 : index
    %c0_0 = arith.constant 0 : index
    %0 = vector.load %arg2[%c0, %c0_0] : memref<1x16xf32, #tpu.memory_space<vmem>>, vector<1x16xf32>
    %c0_1 = arith.constant 0 : index
    %c0_2 = arith.constant 0 : index
    %c0_3 = arith.constant 0 : index
    %1 = vector.load %arg1[%c0_1, %c0_2, %c0_3] : memref<1x16x16xf32, #tpu.memory_space<vmem>>, vector<1x16x16xf32>
    %2 = vector.shape_cast %1 : vector<1x16x16xf32> to vector<16x16xf32>
    %cst = arith.constant dense<0.000000e+00> : vector<1x16xf32>
    %3 = tpu.matmul %0, %2, %cst {dimension_numbers = #tpu.dot_dimension_numbers<[1], [0], [0], [1], [0, 0, 1, 1], [], []>} : vector<1x16xf32>, vector<16x16xf32>, vector<1x16xf32> -> vector<1x16xf32>
    %c0_4 = arith.constant 0 : index
    %c0_5 = arith.constant 0 : index
    %4 = vector.load %arg3[%c0_4, %c0_5] : memref<1x1xf32, #tpu.memory_space<vmem>>, vector<1x1xf32>
    %5 = vector.broadcast %4 : vector<1x1xf32> to vector<1x16xf32>
    %6 = arith.addf %3, %5 : vector<1x16xf32>
    %c0_6 = arith.constant 0 : index
    %c0_7 = arith.constant 0 : index
    %c0_8 = arith.constant 0 : index
    %7 = vector.load %arg4[%c0_6, %c0_7, %c0_8] : memref<1x1x16xf32, #tpu.memory_space<vmem>>, vector<1x1x16xf32>
    %8 = vector.shape_cast %7 : vector<1x1x16xf32> to vector<1x16xf32>
    %9 = vector.shape_cast %6 : vector<1x16xf32> to vector<1x1x16xf32>
    tpu.vector_store %arg4[%c0_6, %c0_7, %c0_8], %9 {strides = array<i32>} : memref<1x1x16xf32, #tpu.memory_space<vmem>>, vector<1x1x16xf32>,
    return
  }
  func.func @transform_0(%arg0: i32) -> (i32, i32, i32) {
    %c0_i32 = arith.constant 0 : i32
    %c0_i32_0 = arith.constant 0 : i32
    %c0_i32_1 = arith.constant 0 : i32
    return %arg0, %c0_i32, %c0_i32_0 : i32, i32, i32
  }
  func.func @transform_1(%arg0: i32) -> (i32, i32) {
    %c0_i32 = arith.constant 0 : i32
    %c0_i32_0 = arith.constant 0 : i32
    %c0_i32_1 = arith.constant 0 : i32
    return %c0_i32, %c0_i32_0 : i32, i32
  }
  func.func @transform_2(%arg0: i32) -> (i32, i32) {
    %c0_i32 = arith.constant 0 : i32
    %c0_i32_0 = arith.constant 0 : i32
    %c0_i32_1 = arith.constant 0 : i32
    return %c0_i32, %c0_i32_0 : i32, i32
  }
  func.func @transform_3(%arg0: i32) -> (i32, i32, i32) {
    %c0_i32 = arith.constant 0 : i32
    %c0_i32_0 = arith.constant 0 : i32
    %c0_i32_1 = arith.constant 0 : i32
    return %arg0, %c0_i32, %c0_i32_0 : i32, i32, i32
  }
}

</mosaic_0001>

<llo_original>
// kernel: multi_scale_res_unet_decoder_forward.3
$region0: #{multi_scale_res_unet_decoder_forward.3}
  #allocation0 [shape = 'u32[]', space=smem, size = 0x4, offset = 0x4, fixed_abs, tag = 'smem constant byte address 0x4 - core index']
  #allocation1 [shape = 'u32[144,128]{1,0:T(1,128)}', space=vmem, size = 0x12000, scoped, tag = 'internal scratch']
  #allocation2 [shape = 'f32[1,1]{1,0:T(1,128)S(1)}', space=vmem, size = 0x200, scoped, tag = 'scoped memory for multi_scale_res_unet_decoder_forward.3']
  %s0 = inlined_call_operand.vmem [shape: f32[2,16,16], index: 0, kind: input, shape index: {}]
  %s1 = inlined_call_operand.vmem [shape: f32[1,16], index: 1, kind: input, shape index: {}]
  %s2 = inlined_call_operand.<no memory space> [shape: f32[1,1], index: 2, kind: input, shape index: {}]
  %s3 = inlined_call_operand.vmem [shape: f32[2,1,16], index: 3, kind: output, shape index: {}]
  %s4 = sld [smem:[#allocation0]]
  $region45: #{multi_scale_res_unet_decoder_forward.3} parent=0
    _
  %s6 = ssub.s32 1, %s4
  %s7 = scalar_select 0, %s6, %s4
  %v8 = vstv %s2
  %9 = vst [vmem:[#allocation2] sm:$0x1] %v8
  loop: start=0, step=1, limit=4
  $region2: #{multi_scale_res_unet_decoder_forward.3} parent=0 // loop_pre_header
    _
  $region3: #{multi_scale_res_unet_decoder_forward.3} parent=0 // loop_header
    %s11 = sphi 0, %s15
    %p12 = scmp.ge.s32.totalorder %s11, 4
    %s21 = sphi 0, %s23
    %s24 = sphi 0, %s21
    %s25 = sphi 0, %s24
    %s41 = sphi 0, %s25
    %s45 = sphi 0, %s45
    %s47 = sphi 0, %s45
    %s48 = sphi 0, %s47
    %s62 = sphi 0, %s48
    %s66 = sphi 0, %s66
    %s68 = sphi 0, %s66
    %s69 = sphi 0, %s68
    %s83 = sphi 0, %s69
    %s89 = sphi 0, %s91
    %s92 = sphi 0, %s89
    %s93 = sphi 0, %s92
    %s109 = sphi 0, %s93
  $region4: #{multi_scale_res_unet_decoder_forward.3} parent=0 // loop_header_branch
    %14 = sbr.rel (%p12) target = $region8
  $region5: #{multi_scale_res_unet_decoder_forward.3} parent=0 // loop_body
    %s16 = ssub.s32 %s11, 1
    %s17 = ssub.s32 %s11, 2
    %s18 = sadd.s32 %s11, 1
    %s19 = ssub.s32 %s11, %s18
    %p20 = scmp.eq.s32.totalorder %s19, 0
    %s22 = sadd.s32 %s21, 1
    %s23 = scalar_select %p20, %s21, %s22
    %p26 = pneg %p20
    %p27 = scmp.eq.s32.totalorder %s11, 1
    %p28 = por %p26, %p27
    %p29 = scmp.ne.s32.totalorder %s21, %s24
    %p30 = scmp.eq.s32.totalorder %s11, 0
    %p31 = por %p29, %p30
    %p32 = scmp.ne.s32.totalorder %s21, %s24
    %p33 = scmp.eq.s32.totalorder %s16, 1
    %p34 = por %p32, %p33
    %p35 = scmp.ne.s32.totalorder %s24, %s25
    %p36 = scmp.eq.s32.totalorder %s16, 0
    %p37 = por %p35, %p36
    %p38 = scmp.ne.s32.totalorder %s24, %s25
    %p39 = scmp.eq.s32.totalorder %s17, 1
    %p40 = por %p38, %p39
    %p42 = scmp.ne.s32.totalorder %s25, %s41
    %p43 = scmp.eq.s32.totalorder %s17, 0
    %p44 = por %p42, %p43
    %s46 = sadd.s32 %s45, 1
    %p49 = scmp.eq.s32.totalorder %s11, 1
    %p50 = scmp.ne.s32.totalorder %s45, %s47
    %p51 = scmp.eq.s32.totalorder %s11, 0
    %p52 = por %p50, %p51
    %p53 = scmp.ne.s32.totalorder %s45, %s47
    %p54 = scmp.eq.s32.totalorder %s16, 1
    %p55 = por %p53, %p54
    %p56 = scmp.ne.s32.totalorder %s47, %s48
    %p57 = scmp.eq.s32.totalorder %s16, 0
    %p58 = por %p56, %p57
    %p59 = scmp.ne.s32.totalorder %s47, %s48
    %p60 = scmp.eq.s32.totalorder %s17, 1
    %p61 = por %p59, %p60
    %p63 = scmp.ne.s32.totalorder %s48, %s62
    %p64 = scmp.eq.s32.totalorder %s17, 0
    %p65 = por %p63, %p64
    %s67 = sadd.s32 %s66, 1
    %p70 = scmp.eq.s32.totalorder %s11, 1
    %p71 = scmp.ne.s32.totalorder %s66, %s68
    %p72 = scmp.eq.s32.totalorder %s11, 0
    %p73 = por %p71, %p72
    %p74 = scmp.ne.s32.totalorder %s66, %s68
    %p75 = scmp.eq.s32.totalorder %s16, 1
    %p76 = por %p74, %p75
    %p77 = scmp.ne.s32.totalorder %s68, %s69
    %p78 = scmp.eq.s32.totalorder %s16, 0
    %p79 = por %p77, %p78
    %p80 = scmp.ne.s32.totalorder %s68, %s69
    %p81 = scmp.eq.s32.totalorder %s17, 1
    %p82 = por %p80, %p81
    %p84 = scmp.ne.s32.totalorder %s69, %s83
    %p85 = scmp.eq.s32.totalorder %s17, 0
    %p86 = por %p84, %p85
    %s87 = ssub.s32 %s11, %s18
    %p88 = scmp.eq.s32.totalorder %s87, 0
    %s90 = sadd.s32 %s89, 1
    %s91 = scalar_select %p88, %s89, %s90
    %p94 = pneg %p88
    %p95 = scmp.eq.s32.totalorder %s11, 1
    %p96 = por %p94, %p95
    %p97 = scmp.ne.s32.totalorder %s89, %s92
    %p98 = scmp.eq.s32.totalorder %s11, 0
    %p99 = por %p97, %p98
    %p100 = scmp.ne.s32.totalorder %s89, %s92
    %p101 = scmp.eq.s32.totalorder %s16, 1
    %p102 = por %p100, %p101
    %p103 = scmp.ne.s32.totalorder %s92, %s93
    %p104 = scmp.eq.s32.totalorder %s16, 0
    %p105 = por %p103, %p104
    %p106 = scmp.ne.s32.totalorder %s92, %s93
    %p107 = scmp.eq.s32.totalorder %s17, 1
    %p108 = por %p106, %p107
    %p110 = scmp.ne.s32.totalorder %s93, %s109
    %p111 = scmp.eq.s32.totalorder %s17, 0
    %p112 = por %p110, %p111
    %p113 = scmp.le.s32.totalorder 1, %s11
    %p114 = scmp.lt.s32.totalorder %s11, 3
    %p115 = pnand %p113, %p114
    %p116 = pneg %p115
    // Predicated region
    $region9: #{multi_scale_res_unet_decoder_forward.3} parent=5 // pred_check
      _
    $region10: #{multi_scale_res_unet_decoder_forward.3} parent=5 // pred_check_branch
      %118 = sbr.rel (%p115) target = $region12
    $region11: #{multi_scale_res_unet_decoder_forward.3} parent=5 // pred_region
      %s119 = ssub.s32 %s11, 1
      // Predicated region
      $region13: #{multi_scale_res_unet_decoder_forward.3} parent=11 // pred_check
        %p120 = pneg %p58
      $region14: #{multi_scale_res_unet_decoder_forward.3} parent=11 // pred_check_branch
        %122 = sbr.rel (%p120) target = $region16
      $region15: #{multi_scale_res_unet_decoder_forward.3} parent=11 // pred_region
        _
      $region16: #{multi_scale_res_unet_decoder_forward.3} parent=11 // pred_fallthru
        _
      // Predicated region
      $region17: #{multi_scale_res_unet_decoder_forward.3} parent=11 // pred_check
        %p123 = pneg %p79
      $region18: #{multi_scale_res_unet_decoder_forward.3} parent=11 // pred_check_branch
        %125 = sbr.rel (%p123) target = $region20
      $region19: #{multi_scale_res_unet_decoder_forward.3} parent=11 // pred_region
        _
      $region20: #{multi_scale_res_unet_decoder_forward.3} parent=11 // pred_fallthru
        _
    $region12: #{multi_scale_res_unet_decoder_forward.3} parent=5 // pred_fallthru
      _
    %p126 = scmp.lt.s32.totalorder %s11, 2
    // Predicated region
    $region21: #{multi_scale_res_unet_decoder_forward.3} parent=5 // pred_check
      %p127 = pneg %p126
    $region22: #{multi_scale_res_unet_decoder_forward.3} parent=5 // pred_check_branch
      %129 = sbr.rel (%p127) target = $region24
    $region23: #{multi_scale_res_unet_decoder_forward.3} parent=5 // pred_region
      // Predicated region
      $region25: #{multi_scale_res_unet_decoder_forward.3} parent=23 // pred_check
        %p130 = pneg %p31
      $region26: #{multi_scale_res_unet_decoder_forward.3} parent=23 // pred_check_branch
        %132 = sbr.rel (%p130) target = $region28
      $region27: #{multi_scale_res_unet_decoder_forward.3} parent=23 // pred_region
        %p133 = scmp.lt.s32.totalorder %s11, 1
        %s134 = scalar_select %p133, %s11, 1
        %s135 = smul.addr %s134, 2
        %s136 = smul.addr %s135, 8
        %s137 = scalar_lea.vmem %s0, %s136
      $region28: #{multi_scale_res_unet_decoder_forward.3} parent=23 // pred_fallthru
        _
    $region24: #{multi_scale_res_unet_decoder_forward.3} parent=5 // pred_fallthru
      _
    %p138 = scmp.le.s32.totalorder 1, %s11
    %p139 = scmp.lt.s32.totalorder %s11, 3
    %p140 = pnand %p138, %p139
    %p141 = pneg %p140
    // Predicated region
    $region29: #{multi_scale_res_unet_decoder_forward.3} parent=5 // pred_check
      _
    $region30: #{multi_scale_res_unet_decoder_forward.3} parent=5 // pred_check_branch
      %143 = sbr.rel (%p140) target = $region32
    $region31: #{multi_scale_res_unet_decoder_forward.3} parent=5 // pred_region
      %s144 = ssub.s32 %s11, 1
      %p145 = scmp.lt.s32.totalorder %s16, 1
      %s146 = scalar_select %p145, %s16, 1
      %s147 = smul.addr %s146, 2
      %s148 = smul.addr %s147, 8
      %s149 = scalar_lea.vmem %s0, %s148
      %p150 = pneg %p37
      %p151 = pneg %p34
      %p152 = pneg %p58
      %p153 = pneg %p55
      %p154 = pneg %p79
      %p155 = pneg %p76
      %p156 = pneg %p105
      %p157 = pneg %p102
      %p158 = scmp.lt.s32.totalorder %s16, 1
      %s159 = scalar_select %p158, %s16, 1
      %s160 = scalar_lea.vmem %s3, %s159
      %p161 = scmp.lt.s32.totalorder %s16, 1
      %s162 = scalar_select %p161, %s16, 1
      %s163 = smul.addr %s162, 2
      %s164 = smul.addr %s163, 8
      %s165 = scalar_lea.vmem %s0, %s164
      %p166 = scmp.lt.s32.totalorder %s16, 1
      %s167 = scalar_select %p166, %s16, 1
      %s168 = scalar_lea.vmem %s3, %s167
      %v169 = vld [vmem:[%s1] sm:$0x1]
      %v170 = vld [vmem:[%s165] sm:$0xff]
      %v171 = vld [vmem:[%s165 + $0x8] sm:$0xff]
      %v172 = vld [vmem:[#allocation2] sm:$0x1]
      %174 = vset.pattern.permute.xlu0 0
      %175 = vperm.xlu0 %174, %v172
      %v176 = vpop.permute.xlu0 %175
      %v178 = vlaneseq
      %v179 = vshrl.u32 %v178, 7
      %v180 = vsub.s32 0, %v179
      %v181 = vrot.slane %v176, %v180
      %vm182 = vcmask 130048
      %v184 = vsel %vm182, %v169, 0
      %186 = vmatprep.subr.mxu0 0.0
      %187 = vmatpush1.msra.mxu0 0.0
      %188 = vmatprep.subr.mxu0 0.0
      %189 = vmatpush1.msra.mxu0 0.0
      %190 = vmatprep.subr.mxu0 0.0
      %191 = vmatpush1.msra.mxu0 0.0
      %192 = vmatprep.subr.mxu0 0.0
      %193 = vmatpush1.msra.mxu0 0.0
      %194 = vmatprep.subr.mxu0 0.0
      %195 = vmatpush1.msra.mxu0 0.0
      %196 = vmatprep.subr.mxu0 0.0
      %197 = vmatpush1.msra.mxu0 0.0
      %198 = vmatprep.subr.mxu0 0.0
      %199 = vmatpush1.msra.mxu0 0.0
      %200 = vmatprep.subr.mxu0 0.0
      %201 = vmatpush1.msra.mxu0 0.0
      %202 = vmatprep.subr.mxu0 0.0
      %203 = vmatpush1.msra.mxu0 0.0
      %204 = vmatprep.subr.mxu0 0.0
      %205 = vmatpush1.msra.mxu0 0.0
      %206 = vmatprep.subr.mxu0 0.0
      %207 = vmatpush1.msra.mxu0 0.0
      %208 = vmatprep.subr.mxu0 0.0
      %209 = vmatpush1.msra.mxu0 0.0
      %210 = vmatprep.subr.mxu0 0.0
      %211 = vmatpush1.msra.mxu0 0.0
      %212 = vmatprep.subr.mxu0 0.0
      %213 = vmatpush1.msra.mxu0 0.0
      %214 = vmatprep.subr.mxu0 0.0
      %215 = vmatpush1.msra.mxu0 %v171
      %216 = vmatprep.subr.mxu0 0.0
      %217 = vmatpush1.msra.mxu0 %v170
      %218 = vmatprep.subr.mxu0 0.0
      %219 = vmatpush2.msra.mxu0 0.0
      %220 = vmatprep.subr.mxu0 0.0
      %221 = vmatpush2.msra.mxu0 0.0
      %222 = vmatprep.subr.mxu0 0.0
      %223 = vmatpush2.msra.mxu0 0.0
      %224 = vmatprep.subr.mxu0 0.0
      %225 = vmatpush2.msra.mxu0 0.0
      %226 = vmatprep.subr.mxu0 0.0
      %227 = vmatpush2.msra.mxu0 0.0
      %228 = vmatprep.subr.mxu0 0.0
      %229 = vmatpush2.msra.mxu0 0.0
      %230 = vmatprep.subr.mxu0 0.0
      %231 = vmatpush2.msra.mxu0 0.0
      %232 = vmatprep.subr.mxu0 0.0
      %233 = vmatpush2.msra.mxu0 0.0
      %234 = vmatprep.subr.mxu0 0.0
      %235 = vmatpush2.msra.mxu0 0.0
      %236 = vmatprep.subr.mxu0 0.0
      %237 = vmatpush2.msra.mxu0 0.0
      %238 = vmatprep.subr.mxu0 0.0
      %239 = vmatpush2.msra.mxu0 0.0
      %240 = vmatprep.subr.mxu0 0.0
      %241 = vmatpush2.msra.mxu0 0.0
      %242 = vmatprep.subr.mxu0 0.0
      %243 = vmatpush2.msra.mxu0 0.0
      %244 = vmatprep.subr.mxu0 0.0
      %245 = vmatpush2.msra.mxu0 0.0
      %246 = vmatprep.subr.mxu0 0.0
      %247 = vmatpush2.msra.mxu0 0.0
      %248 = vmatprep.subr.mxu0 0.0
      %249 = vmatpush2.msra.mxu0 0.0
      %250 = vmatprep.mubr.f32.mxu0 0.0
      %251 = vmatmul.mubr.f32.gmra.mxu0 %v184
      %v252 = vpop.f32.mrf.mxu0
      %v253 = vadd.f32 %v181, %v252
      %v254 = vpop.f32.mrf.mxu0
      %255 = vdwg.mxu0
      %vm256 = vcmask 122880
      %257 = vst.msk [vmem:[%s168] sm:$0x1] %vm256, %v253
      %p258 = scmp.lt.s32.totalorder %s16, 1
      %s259 = scalar_select %p258, %s16, 1
      %s260 = scalar_lea.vmem %s3, %s259
      // Predicated region
      $region33: #{multi_scale_res_unet_decoder_forward.3} parent=31 // pred_check
        %p261 = pneg %p102
      $region34: #{multi_scale_res_unet_decoder_forward.3} parent=31 // pred_check_branch
        %263 = sbr.rel (%p261) target = $region36
      $region35: #{multi_scale_res_unet_decoder_forward.3} parent=31 // pred_region
        _
      $region36: #{multi_scale_res_unet_decoder_forward.3} parent=31 // pred_fallthru
        _
    $region32: #{multi_scale_res_unet_decoder_forward.3} parent=5 // pred_fallthru
      _
    %p264 = scmp.le.s32.totalorder 2, %s11
    // Predicated region
    $region37: #{multi_scale_res_unet_decoder_forward.3} parent=5 // pred_check
      %p265 = pneg %p264
    $region38: #{multi_scale_res_unet_decoder_forward.3} parent=5 // pred_check_branch
      %267 = sbr.rel (%p265) target = $region40
    $region39: #{multi_scale_res_unet_decoder_forward.3} parent=5 // pred_region
      %s268 = ssub.s32 %s11, 2
      // Predicated region
      $region41: #{multi_scale_res_unet_decoder_forward.3} parent=39 // pred_check
        %p269 = pneg %p108
      $region42: #{multi_scale_res_unet_decoder_forward.3} parent=39 // pred_check_branch
        %271 = sbr.rel (%p269) target = $region44
      $region43: #{multi_scale_res_unet_decoder_forward.3} parent=39 // pred_region
        %p272 = scmp.lt.s32.totalorder %s17, 1
        %s273 = scalar_select %p272, %s17, 1
        %s274 = scalar_lea.vmem %s3, %s273
      $region44: #{multi_scale_res_unet_decoder_forward.3} parent=39 // pred_fallthru
        _
    $region40: #{multi_scale_res_unet_decoder_forward.3} parent=5 // pred_fallthru
      _
  $region6: #{multi_scale_res_unet_decoder_forward.3} parent=0 // loop_footer
    %s15 = sadd.s32 1, %s11
  $region7: #{multi_scale_res_unet_decoder_forward.3} parent=0 // loop_footer_branch
    %10 = sbr.rel target = $region3
  $region8: #{multi_scale_res_unet_decoder_forward.3} parent=0 // loop_exit
    _

// kernel: multi_scale_res_unet_decoder_forward.4
$region0: #{multi_scale_res_unet_decoder_forward.4}
  #allocation0 [shape = 'u32[]', space=smem, size = 0x4, offset = 0x4, fixed_abs, tag = 'smem constant byte address 0x4 - core index']
  #allocation1 [shape = 'u32[144,128]{1,0:T(1,128)}', space=vmem, size = 0x12000, scoped, tag = 'internal scratch']
  #allocation2 [shape = 'f32[8,100]{1,0:T(8,128)}', space=vmem, size = 0x1000, scoped, tag = 'scratch operand']
  #allocation3 [shape = 'f32[1,1]{1,0:T(1,128)S(1)}', space=vmem, size = 0x200, scoped, tag = 'scoped memory for multi_scale_res_unet_decoder_forward.4']
  %s0 = inlined_call_operand.vmem [shape: f32[2,16,100], index: 0, kind: input, shape index: {}]
  %s1 = inlined_call_operand.vmem [shape: f32[2,8,100], index: 1, kind: input, shape index: {}]
  %s2 = inlined_call_operand.vmem [shape: f32[9,8,16], index: 2, kind: input, shape index: {}]
  %s3 = inlined_call_operand.vmem [shape: f32[9,8,8], index: 3, kind: input, shape index: {}]
  %s4 = inlined_call_operand.vmem [shape: f32[8,1], index: 4, kind: input, shape index: {}]
  %s5 = inlined_call_operand.vmem [shape: f32[9,8,8], index: 5, kind: input, shape index: {}]
  %s6 = inlined_call_operand.vmem [shape: f32[8,1], index: 6, kind: input, shape index: {}]
  %s7 = inlined_call_operand.vmem [shape: f32[8,16], index: 7, kind: input, shape index: {}]
  %s8 = inlined_call_operand.vmem [shape: f32[8,8], index: 8, kind: input, shape index: {}]
  %s9 = inlined_call_operand.vmem [shape: f32[1,78], index: 9, kind: input, shape index: {}]
  %s10 = inlined_call_operand.vmem [shape: f32[1,8], index: 10, kind: input, shape index: {}]
  %s11 = inlined_call_operand.<no memory space> [shape: f32[1,1], index: 11, kind: input, shape index: {}]
  %s12 = inlined_call_operand.vmem [shape: f32[2,8,100], index: 12, kind: output, shape index: {0}]
  %s13 = inlined_call_operand.vmem [shape: f32[2,1,100], index: 13, kind: output, shape index: {1}]
  %14 = xla_tuple %s12, %s13
  %s15 = sld [smem:[#allocation0]]
  $region89: #{multi_scale_res_unet_decoder_forward.4} parent=0
    _
  %s17 = ssub.s32 1, %s15
  %s18 = scalar_select 0, %s17, %s15
  %v19 = vstv %s11
  %20 = vst [vmem:[#allocation3] sm:$0x1] %v19
  loop: start=0, step=1, limit=4
  $region2: #{multi_scale_res_unet_decoder_forward.4} parent=0 // loop_pre_header
    _
  $region3: #{multi_scale_res_unet_decoder_forward.4} parent=0 // loop_header
    %s22 = sphi 0, %s26
    %p23 = scmp.ge.s32.totalorder %s22, 4
    %s32 = sphi 0, %s34
    %s35 = sphi 0, %s32
    %s36 = sphi 0, %s35
    %s52 = sphi 0, %s36
    %s58 = sphi 0, %s60
    %s61 = sphi 0, %s58
    %s62 = sphi 0, %s61
    %s78 = sphi 0, %s62
    %s82 = sphi 0, %s82
    %s84 = sphi 0, %s82
    %s85 = sphi 0, %s84
    %s99 = sphi 0, %s85
    %s103 = sphi 0, %s103
    %s105 = sphi 0, %s103
    %s106 = sphi 0, %s105
    %s120 = sphi 0, %s106
    %s124 = sphi 0, %s124
    %s126 = sphi 0, %s124
    %s127 = sphi 0, %s126
    %s141 = sphi 0, %s127
    %s145 = sphi 0, %s145
    %s147 = sphi 0, %s145
    %s148 = sphi 0, %s147
    %s162 = sphi 0, %s148
    %s166 = sphi 0, %s166
    %s168 = sphi 0, %s166
    %s169 = sphi 0, %s168
    %s183 = sphi 0, %s169
    %s187 = sphi 0, %s187
    %s189 = sphi 0, %s187
    %s190 = sphi 0, %s189
    %s204 = sphi 0, %s190
    %s208 = sphi 0, %s208
    %s210 = sphi 0, %s208
    %s211 = sphi 0, %s210
    %s225 = sphi 0, %s211
    %s229 = sphi 0, %s229
    %s231 = sphi 0, %s229
    %s232 = sphi 0, %s231
    %s246 = sphi 0, %s232
    %s250 = sphi 0, %s250
    %s252 = sphi 0, %s250
    %s253 = sphi 0, %s252
    %s267 = sphi 0, %s253
    %s271 = sphi 0, %s271
    %s273 = sphi 0, %s271
    %s274 = sphi 0, %s273
    %s288 = sphi 0, %s274
    %s294 = sphi 0, %s296
    %s297 = sphi 0, %s294
    %s298 = sphi 0, %s297
    %s314 = sphi 0, %s298
    %s320 = sphi 0, %s322
    %s323 = sphi 0, %s320
    %s324 = sphi 0, %s323
    %s340 = sphi 0, %s324
  $region4: #{multi_scale_res_unet_decoder_forward.4} parent=0 // loop_header_branch
    %25 = sbr.rel (%p23) target = $region8
  $region5: #{multi_scale_res_unet_decoder_forward.4} parent=0 // loop_body
    %s27 = ssub.s32 %s22, 1
    %s28 = ssub.s32 %s22, 2
    %s29 = sadd.s32 %s22, 1
    %s30 = ssub.s32 %s22, %s29
    %p31 = scmp.eq.s32.totalorder %s30, 0
    %s33 = sadd.s32 %s32, 1
    %s34 = scalar_select %p31, %s32, %s33
    %p37 = pneg %p31
    %p38 = scmp.eq.s32.totalorder %s22, 1
    %p39 = por %p37, %p38
    %p40 = scmp.ne.s32.totalorder %s32, %s35
    %p41 = scmp.eq.s32.totalorder %s22, 0
    %p42 = por %p40, %p41
    %p43 = scmp.ne.s32.totalorder %s32, %s35
    %p44 = scmp.eq.s32.totalorder %s27, 1
    %p45 = por %p43, %p44
    %p46 = scmp.ne.s32.totalorder %s35, %s36
    %p47 = scmp.eq.s32.totalorder %s27, 0
    %p48 = por %p46, %p47
    %p49 = scmp.ne.s32.totalorder %s35, %s36
    %p50 = scmp.eq.s32.totalorder %s28, 1
    %p51 = por %p49, %p50
    %p53 = scmp.ne.s32.totalorder %s36, %s52
    %p54 = scmp.eq.s32.totalorder %s28, 0
    %p55 = por %p53, %p54
    %s56 = ssub.s32 %s22, %s29
    %p57 = scmp.eq.s32.totalorder %s56, 0
    %s59 = sadd.s32 %s58, 1
    %s60 = scalar_select %p57, %s58, %s59
    %p63 = pneg %p57
    %p64 = scmp.eq.s32.totalorder %s22, 1
    %p65 = por %p63, %p64
    %p66 = scmp.ne.s32.totalorder %s58, %s61
    %p67 = scmp.eq.s32.totalorder %s22, 0
    %p68 = por %p66, %p67
    %p69 = scmp.ne.s32.totalorder %s58, %s61
    %p70 = scmp.eq.s32.totalorder %s27, 1
    %p71 = por %p69, %p70
    %p72 = scmp.ne.s32.totalorder %s61, %s62
    %p73 = scmp.eq.s32.totalorder %s27, 0
    %p74 = por %p72, %p73
    %p75 = scmp.ne.s32.totalorder %s61, %s62
    %p76 = scmp.eq.s32.totalorder %s28, 1
    %p77 = por %p75, %p76
    %p79 = scmp.ne.s32.totalorder %s62, %s78
    %p80 = scmp.eq.s32.totalorder %s28, 0
    %p81 = por %p79, %p80
    %s83 = sadd.s32 %s82, 1
    %p86 = scmp.eq.s32.totalorder %s22, 1
    %p87 = scmp.ne.s32.totalorder %s82, %s84
    %p88 = scmp.eq.s32.totalorder %s22, 0
    %p89 = por %p87, %p88
    %p90 = scmp.ne.s32.totalorder %s82, %s84
    %p91 = scmp.eq.s32.totalorder %s27, 1
    %p92 = por %p90, %p91
    %p93 = scmp.ne.s32.totalorder %s84, %s85
    %p94 = scmp.eq.s32.totalorder %s27, 0
    %p95 = por %p93, %p94
    %p96 = scmp.ne.s32.totalorder %s84, %s85
    %p97 = scmp.eq.s32.totalorder %s28, 1
    %p98 = por %p96, %p97
    %p100 = scmp.ne.s32.totalorder %s85, %s99
    %p101 = scmp.eq.s32.totalorder %s28, 0
    %p102 = por %p100, %p101
    %s104 = sadd.s32 %s103, 1
    %p107 = scmp.eq.s32.totalorder %s22, 1
    %p108 = scmp.ne.s32.totalorder %s103, %s105
    %p109 = scmp.eq.s32.totalorder %s22, 0
    %p110 = por %p108, %p109
    %p111 = scmp.ne.s32.totalorder %s103, %s105
    %p112 = scmp.eq.s32.totalorder %s27, 1
    %p113 = por %p111, %p112
    %p114 = scmp.ne.s32.totalorder %s105, %s106
    %p115 = scmp.eq.s32.totalorder %s27, 0
    %p116 = por %p114, %p115
    %p117 = scmp.ne.s32.totalorder %s105, %s106
    %p118 = scmp.eq.s32.totalorder %s28, 1
    %p119 = por %p117, %p118
    %p121 = scmp.ne.s32.totalorder %s106, %s120
    %p122 = scmp.eq.s32.totalorder %s28, 0
    %p123 = por %p121, %p122
    %s125 = sadd.s32 %s124, 1
    %p128 = scmp.eq.s32.totalorder %s22, 1
    %p129 = scmp.ne.s32.totalorder %s124, %s126
    %p130 = scmp.eq.s32.totalorder %s22, 0
    %p131 = por %p129, %p130
    %p132 = scmp.ne.s32.totalorder %s124, %s126
    %p133 = scmp.eq.s32.totalorder %s27, 1
    %p134 = por %p132, %p133
    %p135 = scmp.ne.s32.totalorder %s126, %s127
    %p136 = scmp.eq.s32.totalorder %s27, 0
    %p137 = por %p135, %p136
    %p138 = scmp.ne.s32.totalorder %s126, %s127
    %p139 = scmp.eq.s32.totalorder %s28, 1
    %p140 = por %p138, %p139
    %p142 = scmp.ne.s32.totalorder %s127, %s141
    %p143 = scmp.eq.s32.totalorder %s28, 0
    %p144 = por %p142, %p143
    %s146 = sadd.s32 %s145, 1
    %p149 = scmp.eq.s32.totalorder %s22, 1
    %p150 = scmp.ne.s32.totalorder %s145, %s147
    %p151 = scmp.eq.s32.totalorder %s22, 0
    %p152 = por %p150, %p151
    %p153 = scmp.ne.s32.totalorder %s145, %s147
    %p154 = scmp.eq.s32.totalorder %s27, 1
    %p155 = por %p153, %p154
    %p156 = scmp.ne.s32.totalorder %s147, %s148
    %p157 = scmp.eq.s32.totalorder %s27, 0
    %p158 = por %p156, %p157
    %p159 = scmp.ne.s32.totalorder %s147, %s148
    %p160 = scmp.eq.s32.totalorder %s28, 1
    %p161 = por %p159, %p160
    %p163 = scmp.ne.s32.totalorder %s148, %s162
    %p164 = scmp.eq.s32.totalorder %s28, 0
    %p165 = por %p163, %p164
    %s167 = sadd.s32 %s166, 1
    %p170 = scmp.eq.s32.totalorder %s22, 1
    %p171 = scmp.ne.s32.totalorder %s166, %s168
    %p172 = scmp.eq.s32.totalorder %s22, 0
    %p173 = por %p171, %p172
    %p174 = scmp.ne.s32.totalorder %s166, %s168
    %p175 = scmp.eq.s32.totalorder %s27, 1
    %p176 = por %p174, %p175
    %p177 = scmp.ne.s32.totalorder %s168, %s169
    %p178 = scmp.eq.s32.totalorder %s27, 0
    %p179 = por %p177, %p178
    %p180 = scmp.ne.s32.totalorder %s168, %s169
    %p181 = scmp.eq.s32.totalorder %s28, 1
    %p182 = por %p180, %p181
    %p184 = scmp.ne.s32.totalorder %s169, %s183
    %p185 = scmp.eq.s32.totalorder %s28, 0
    %p186 = por %p184, %p185
    %s188 = sadd.s32 %s187, 1
    %p191 = scmp.eq.s32.totalorder %s22, 1
    %p192 = scmp.ne.s32.totalorder %s187, %s189
    %p193 = scmp.eq.s32.totalorder %s22, 0
    %p194 = por %p192, %p193
    %p195 = scmp.ne.s32.totalorder %s187, %s189
    %p196 = scmp.eq.s32.totalorder %s27, 1
    %p197 = por %p195, %p196
    %p198 = scmp.ne.s32.totalorder %s189, %s190
    %p199 = scmp.eq.s32.totalorder %s27, 0
    %p200 = por %p198, %p199
    %p201 = scmp.ne.s32.totalorder %s189, %s190
    %p202 = scmp.eq.s32.totalorder %s28, 1
    %p203 = por %p201, %p202
    %p205 = scmp.ne.s32.totalorder %s190, %s204
    %p206 = scmp.eq.s32.totalorder %s28, 0
    %p207 = por %p205, %p206
    %s209 = sadd.s32 %s208, 1
    %p212 = scmp.eq.s32.totalorder %s22, 1
    %p213 = scmp.ne.s32.totalorder %s208, %s210
    %p214 = scmp.eq.s32.totalorder %s22, 0
    %p215 = por %p213, %p214
    %p216 = scmp.ne.s32.totalorder %s208, %s210
    %p217 = scmp.eq.s32.totalorder %s27, 1
    %p218 = por %p216, %p217
    %p219 = scmp.ne.s32.totalorder %s210, %s211
    %p220 = scmp.eq.s32.totalorder %s27, 0
    %p221 = por %p219, %p220
    %p222 = scmp.ne.s32.totalorder %s210, %s211
    %p223 = scmp.eq.s32.totalorder %s28, 1
    %p224 = por %p222, %p223
    %p226 = scmp.ne.s32.totalorder %s211, %s225
    %p227 = scmp.eq.s32.totalorder %s28, 0
    %p228 = por %p226, %p227
    %s230 = sadd.s32 %s229, 1
    %p233 = scmp.eq.s32.totalorder %s22, 1
    %p234 = scmp.ne.s32.totalorder %s229, %s231
    %p235 = scmp.eq.s32.totalorder %s22, 0
    %p236 = por %p234, %p235
    %p237 = scmp.ne.s32.totalorder %s229, %s231
    %p238 = scmp.eq.s32.totalorder %s27, 1
    %p239 = por %p237, %p238
    %p240 = scmp.ne.s32.totalorder %s231, %s232
    %p241 = scmp.eq.s32.totalorder %s27, 0
    %p242 = por %p240, %p241
    %p243 = scmp.ne.s32.totalorder %s231, %s232
    %p244 = scmp.eq.s32.totalorder %s28, 1
    %p245 = por %p243, %p244
    %p247 = scmp.ne.s32.totalorder %s232, %s246
    %p248 = scmp.eq.s32.totalorder %s28, 0
    %p249 = por %p247, %p248
    %s251 = sadd.s32 %s250, 1
    %p254 = scmp.eq.s32.totalorder %s22, 1
    %p255 = scmp.ne.s32.totalorder %s250, %s252
    %p256 = scmp.eq.s32.totalorder %s22, 0
    %p257 = por %p255, %p256
    %p258 = scmp.ne.s32.totalorder %s250, %s252
    %p259 = scmp.eq.s32.totalorder %s27, 1
    %p260 = por %p258, %p259
    %p261 = scmp.ne.s32.totalorder %s252, %s253
    %p262 = scmp.eq.s32.totalorder %s27, 0
    %p263 = por %p261, %p262
    %p264 = scmp.ne.s32.totalorder %s252, %s253
    %p265 = scmp.eq.s32.totalorder %s28, 1
    %p266 = por %p264, %p265
    %p268 = scmp.ne.s32.totalorder %s253, %s267
    %p269 = scmp.eq.s32.totalorder %s28, 0
    %p270 = por %p268, %p269
    %s272 = sadd.s32 %s271, 1
    %p275 = scmp.eq.s32.totalorder %s22, 1
    %p276 = scmp.ne.s32.totalorder %s271, %s273
    %p277 = scmp.eq.s32.totalorder %s22, 0
    %p278 = por %p276, %p277
    %p279 = scmp.ne.s32.totalorder %s271, %s273
    %p280 = scmp.eq.s32.totalorder %s27, 1
    %p281 = por %p279, %p280
    %p282 = scmp.ne.s32.totalorder %s273, %s274
    %p283 = scmp.eq.s32.totalorder %s27, 0
    %p284 = por %p282, %p283
    %p285 = scmp.ne.s32.totalorder %s273, %s274
    %p286 = scmp.eq.s32.totalorder %s28, 1
    %p287 = por %p285, %p286
    %p289 = scmp.ne.s32.totalorder %s274, %s288
    %p290 = scmp.eq.s32.totalorder %s28, 0
    %p291 = por %p289, %p290
    %s292 = ssub.s32 %s22, %s29
    %p293 = scmp.eq.s32.totalorder %s292, 0
    %s295 = sadd.s32 %s294, 1
    %s296 = scalar_select %p293, %s294, %s295
    %p299 = pneg %p293
    %p300 = scmp.eq.s32.totalorder %s22, 1
    %p301 = por %p299, %p300
    %p302 = scmp.ne.s32.totalorder %s294, %s297
    %p303 = scmp.eq.s32.totalorder %s22, 0
    %p304 = por %p302, %p303
    %p305 = scmp.ne.s32.totalorder %s294, %s297
    %p306 = scmp.eq.s32.totalorder %s27, 1
    %p307 = por %p305, %p306
    %p308 = scmp.ne.s32.totalorder %s297, %s298
    %p309 = scmp.eq.s32.totalorder %s27, 0
    %p310 = por %p308, %p309
    %p311 = scmp.ne.s32.totalorder %s297, %s298
    %p312 = scmp.eq.s32.totalorder %s28, 1
    %p313 = por %p311, %p312
    %p315 = scmp.ne.s32.totalorder %s298, %s314
    %p316 = scmp.eq.s32.totalorder %s28, 0
    %p317 = por %p315, %p316
    %s318 = ssub.s32 %s22, %s29
    %p319 = scmp.eq.s32.totalorder %s318, 0
    %s321 = sadd.s32 %s320, 1
    %s322 = scalar_select %p319, %s320, %s321
    %p325 = pneg %p319
    %p326 = scmp.eq.s32.totalorder %s22, 1
    %p327 = por %p325, %p326
    %p328 = scmp.ne.s32.totalorder %s320, %s323
    %p329 = scmp.eq.s32.totalorder %s22, 0
    %p330 = por %p328, %p329
    %p331 = scmp.ne.s32.totalorder %s320, %s323
    %p332 = scmp.eq.s32.totalorder %s27, 1
    %p333 = por %p331, %p332
    %p334 = scmp.ne.s32.totalorder %s323, %s324
    %p335 = scmp.eq.s32.totalorder %s27, 0
    %p336 = por %p334, %p335
    %p337 = scmp.ne.s32.totalorder %s323, %s324
    %p338 = scmp.eq.s32.totalorder %s28, 1
    %p339 = por %p337, %p338
    %p341 = scmp.ne.s32.totalorder %s324, %s340
    %p342 = scmp.eq.s32.totalorder %s28, 0
    %p343 = por %p341, %p342
    %p344 = scmp.le.s32.totalorder 1, %s22
    %p345 = scmp.lt.s32.totalorder %s22, 3
    %p346 = pnand %p344, %p345
    %p347 = pneg %p346
    // Predicated region
    $region9: #{multi_scale_res_unet_decoder_forward.4} parent=5 // pred_check
      _
    $region10: #{multi_scale_res_unet_decoder_forward.4} parent=5 // pred_check_branch
      %349 = sbr.rel (%p346) target = $region12
    $region11: #{multi_scale_res_unet_decoder_forward.4} parent=5 // pred_region
      %s350 = ssub.s32 %s22, 1
      // Predicated region
      $region13: #{multi_scale_res_unet_decoder_forward.4} parent=11 // pred_check
        %p351 = pneg %p95
      $region14: #{multi_scale_res_unet_decoder_forward.4} parent=11 // pred_check_branch
        %353 = sbr.rel (%p351) target = $region16
      $region15: #{multi_scale_res_unet_decoder_forward.4} parent=11 // pred_region
        _
      $region16: #{multi_scale_res_unet_decoder_forward.4} parent=11 // pred_fallthru
        _
      // Predicated region
      $region17: #{multi_scale_res_unet_decoder_forward.4} parent=11 // pred_check
        %p354 = pneg %p116
      $region18: #{multi_scale_res_unet_decoder_forward.4} parent=11 // pred_check_branch
        %356 = sbr.rel (%p354) target = $region20
      $region19: #{multi_scale_res_unet_decoder_forward.4} parent=11 // pred_region
        _
      $region20: #{multi_scale_res_unet_decoder_forward.4} parent=11 // pred_fallthru
        _
      // Predicated region
      $region21: #{multi_scale_res_unet_decoder_forward.4} parent=11 // pred_check
        %p357 = pneg %p137
      $region22: #{multi_scale_res_unet_decoder_forward.4} parent=11 // pred_check_branch
        %359 = sbr.rel (%p357) target = $region24
      $region23: #{multi_scale_res_unet_decoder_forward.4} parent=11 // pred_region
        _
      $region24: #{multi_scale_res_unet_decoder_forward.4} parent=11 // pred_fallthru
        _
      // Predicated region
      $region25: #{multi_scale_res_unet_decoder_forward.4} parent=11 // pred_check
        %p360 = pneg %p158
      $region26: #{multi_scale_res_unet_decoder_forward.4} parent=11 // pred_check_branch
        %362 = sbr.rel (%p360) target = $region28
      $region27: #{multi_scale_res_unet_decoder_forward.4} parent=11 // pred_region
        _
      $region28: #{multi_scale_res_unet_decoder_forward.4} parent=11 // pred_fallthru
        _
      // Predicated region
      $region29: #{multi_scale_res_unet_decoder_forward.4} parent=11 // pred_check
        %p363 = pneg %p179
      $region30: #{multi_scale_res_unet_decoder_forward.4} parent=11 // pred_check_branch
        %365 = sbr.rel (%p363) target = $region32
      $region31: #{multi_scale_res_unet_decoder_forward.4} parent=11 // pred_region
        _
      $region32: #{multi_scale_res_unet_decoder_forward.4} parent=11 // pred_fallthru
        _
      // Predicated region
      $region33: #{multi_scale_res_unet_decoder_forward.4} parent=11 // pred_check
        %p366 = pneg %p200
      $region34: #{multi_scale_res_unet_decoder_forward.4} parent=11 // pred_check_branch
        %368 = sbr.rel (%p366) target = $region36
      $region35: #{multi_scale_res_unet_decoder_forward.4} parent=11 // pred_region
        _
      $region36: #{multi_scale_res_unet_decoder_forward.4} parent=11 // pred_fallthru
        _
      // Predicated region
      $region37: #{multi_scale_res_unet_decoder_forward.4} parent=11 // pred_check
        %p369 = pneg %p221
      $region38: #{multi_scale_res_unet_decoder_forward.4} parent=11 // pred_check_branch
        %371 = sbr.rel (%p369) target = $region40
      $region39: #{multi_scale_res_unet_decoder_forward.4} parent=11 // pred_region
        _
      $region40: #{multi_scale_res_unet_decoder_forward.4} parent=11 // pred_fallthru
        _
      // Predicated region
      $region41: #{multi_scale_res_unet_decoder_forward.4} parent=11 // pred_check
        %p372 = pneg %p242
      $region42: #{multi_scale_res_unet_decoder_forward.4} parent=11 // pred_check_branch
        %374 = sbr.rel (%p372) target = $region44
      $region43: #{multi_scale_res_unet_decoder_forward.4} parent=11 // pred_region
        _
      $region44: #{multi_scale_res_unet_decoder_forward.4} parent=11 // pred_fallthru
        _
      // Predicated region
      $region45: #{multi_scale_res_unet_decoder_forward.4} parent=11 // pred_check
        %p375 = pneg %p263
      $region46: #{multi_scale_res_unet_decoder_forward.4} parent=11 // pred_check_branch
        %377 = sbr.rel (%p375) target = $region48
      $region47: #{multi_scale_res_unet_decoder_forward.4} parent=11 // pred_region
        _
      $region48: #{multi_scale_res_unet_decoder_forward.4} parent=11 // pred_fallthru
        _
      // Predicated region
      $region49: #{multi_scale_res_unet_decoder_forward.4} parent=11 // pred_check
        %p378 = pneg %p284
      $region50: #{multi_scale_res_unet_decoder_forward.4} parent=11 // pred_check_branch
        %380 = sbr.rel (%p378) target = $region52
      $region51: #{multi_scale_res_unet_decoder_forward.4} parent=11 // pred_region
        _
      $region52: #{multi_scale_res_unet_decoder_forward.4} parent=11 // pred_fallthru
        _
    $region12: #{multi_scale_res_unet_decoder_forward.4} parent=5 // pred_fallthru
      _
    %p381 = scmp.lt.s32.totalorder %s22, 2
    // Predicated region
    $region53: #{multi_scale_res_unet_decoder_forward.4} parent=5 // pred_check
      %p382 = pneg %p381
    $region54: #{multi_scale_res_unet_decoder_forward.4} parent=5 // pred_check_branch
      %384 = sbr.rel (%p382) target = $region56
    $region55: #{multi_scale_res_unet_decoder_forward.4} parent=5 // pred_region
      // Predicated region
      $region57: #{multi_scale_res_unet_decoder_forward.4} parent=55 // pred_check
        %p385 = pneg %p42
      $region58: #{multi_scale_res_unet_decoder_forward.4} parent=55 // pred_check_branch
        %387 = sbr.rel (%p385) target = $region60
      $region59: #{multi_scale_res_unet_decoder_forward.4} parent=55 // pred_region
        %p388 = scmp.lt.s32.totalorder %s22, 1
        %s389 = scalar_select %p388, %s22, 1
        %s390 = smul.addr %s389, 2
        %s391 = smul.addr %s390, 8
        %s392 = scalar_lea.vmem %s0, %s391
      $region60: #{multi_scale_res_unet_decoder_forward.4} parent=55 // pred_fallthru
        _
      // Predicated region
      $region61: #{multi_scale_res_unet_decoder_forward.4} parent=55 // pred_check
        %p393 = pneg %p68
      $region62: #{multi_scale_res_unet_decoder_forward.4} parent=55 // pred_check_branch
        %395 = sbr.rel (%p393) target = $region64
      $region63: #{multi_scale_res_unet_decoder_forward.4} parent=55 // pred_region
        %p396 = scmp.lt.s32.totalorder %s22, 1
        %s397 = scalar_select %p396, %s22, 1
        %s398 = smul.addr %s397, 8
        %s399 = scalar_lea.vmem %s1, %s398
      $region64: #{multi_scale_res_unet_decoder_forward.4} parent=55 // pred_fallthru
        _
    $region56: #{multi_scale_res_unet_decoder_forward.4} parent=5 // pred_fallthru
      _
    %p400 = scmp.le.s32.totalorder 1, %s22
    %p401 = scmp.lt.s32.totalorder %s22, 3
    %p402 = pnand %p400, %p401
    %p403 = pneg %p402
    // Predicated region
    $region65: #{multi_scale_res_unet_decoder_forward.4} parent=5 // pred_check
      _
    $region66: #{multi_scale_res_unet_decoder_forward.4} parent=5 // pred_check_branch
      %405 = sbr.rel (%p402) target = $region68
    $region67: #{multi_scale_res_unet_decoder_forward.4} parent=5 // pred_region
      %s406 = ssub.s32 %s22, 1
      %p407 = scmp.lt.s32.totalorder %s27, 1
      %s408 = scalar_select %p407, %s27, 1
      %s409 = smul.addr %s408, 2
      %s410 = smul.addr %s409, 8
      %s411 = scalar_lea.vmem %s0, %s410
      %p412 = pneg %p48
      %p413 = pneg %p45
      %p414 = scmp.lt.s32.totalorder %s27, 1
      %s415 = scalar_select %p414, %s27, 1
      %s416 = smul.addr %s415, 8
      %s417 = scalar_lea.vmem %s1, %s416
      %p418 = pneg %p74
      %p419 = pneg %p71
      %p420 = pneg %p95
      %p421 = pneg %p92
      %p422 = pneg %p116
      %p423 = pneg %p113
      %p424 = pneg %p137
      %p425 = pneg %p134
      %p426 = pneg %p158
      %p427 = pneg %p155
      %p428 = pneg %p179
      %p429 = pneg %p176
      %p430 = pneg %p200
      %p431 = pneg %p197
      %p432 = pneg %p221
      %p433 = pneg %p218
      %p434 = pneg %p242
      %p435 = pneg %p239
      %p436 = pneg %p263
      %p437 = pneg %p260
      %p438 = pneg %p284
      %p439 = pneg %p281
      %p440 = pneg %p310
      %p441 = pneg %p307
      %p442 = scmp.lt.s32.totalorder %s27, 1
      %s443 = scalar_select %p442, %s27, 1
      %s444 = smul.addr %s443, 8
      %s445 = scalar_lea.vmem %s12, %s444
      %p446 = pneg %p336
      %p447 = pneg %p333
      %p448 = scmp.lt.s32.totalorder %s27, 1
      %s449 = scalar_select %p448, %s27, 1
      %s450 = scalar_lea.vmem %s13, %s449
      %p451 = scmp.lt.s32.totalorder %s27, 1
      %s452 = scalar_select %p451, %s27, 1
      %s453 = smul.addr %s452, 2
      %s454 = smul.addr %s453, 8
      %s455 = scalar_lea.vmem %s0, %s454
      %p456 = scmp.lt.s32.totalorder %s27, 1
      %s457 = scalar_select %p456, %s27, 1
      %s458 = smul.addr %s457, 8
      %s459 = scalar_lea.vmem %s1, %s458
      %p460 = scmp.lt.s32.totalorder %s27, 1
      %s461 = scalar_select %p460, %s27, 1
      %s462 = smul.addr %s461, 8
      %s463 = scalar_lea.vmem %s12, %s462
      %p464 = scmp.lt.s32.totalorder %s27, 1
      %s465 = scalar_select %p464, %s27, 1
      %s466 = scalar_lea.vmem %s13, %s465
      %v467 = vld [vmem:[%s9] sm:$0x1]
      %v468 = vld [vmem:[%s2] sm:$0xff]
      %v469 = vld [vmem:[%s455] sm:$0xff]
      %v470 = vld [vmem:[%s455 + $0x8] sm:$0xff]
      %v471 = vld [vmem:[%s3] sm:$0xff]
      %v472 = vld [vmem:[%s459] sm:$0xff]
      %vm473 = vcmask 64512
      %v475 = vsel %vm473, %v471, 0
      %477 = vmatprep.subr.mxu0 0.0
      %478 = vmatpush1.msra.mxu0 0.0
      %479 = vmatprep.subr.mxu0 0.0
      %480 = vmatpush1.msra.mxu0 0.0
      %481 = vmatprep.subr.mxu0 0.0
      %482 = vmatpush1.msra.mxu0 0.0
      %483 = vmatprep.subr.mxu0 0.0
      %484 = vmatpush1.msra.mxu0 0.0
      %485 = vmatprep.subr.mxu0 0.0
      %486 = vmatpush1.msra.mxu0 0.0
      %487 = vmatprep.subr.mxu0 0.0
      %488 = vmatpush1.msra.mxu0 0.0
      %489 = vmatprep.subr.mxu0 0.0
      %490 = vmatpush1.msra.mxu0 0.0
      %491 = vmatprep.subr.mxu0 0.0
      %492 = vmatpush1.msra.mxu0 0.0
      %493 = vmatprep.subr.mxu0 0.0
      %494 = vmatpush1.msra.mxu0 0.0
      %495 = vmatprep.subr.mxu0 0.0
      %496 = vmatpush1.msra.mxu0 0.0
      %497 = vmatprep.subr.mxu0 0.0
      %498 = vmatpush1.msra.mxu0 0.0
      %499 = vmatprep.subr.mxu0 0.0
      %500 = vmatpush1.msra.mxu0 0.0
      %501 = vmatprep.subr.mxu0 0.0
      %502 = vmatpush1.msra.mxu0 0.0
      %503 = vmatprep.subr.mxu0 0.0
      %504 = vmatpush1.msra.mxu0 0.0
      %505 = vmatprep.subr.mxu0 0.0
      %506 = vmatpush1.msra.mxu0 0.0
      %507 = vmatprep.subr.mxu0 0.0
      %508 = vmatpush1.msra.mxu0 %v472
      %509 = vmatprep.subr.mxu0 0.0
      %510 = vmatpush2.msra.mxu0 0.0
      %511 = vmatprep.subr.mxu0 0.0
      %512 = vmatpush2.msra.mxu0 0.0
      %513 = vmatprep.subr.mxu0 0.0
      %514 = vmatpush2.msra.mxu0 0.0
      %515 = vmatprep.subr.mxu0 0.0
      %516 = vmatpush2.msra.mxu0 0.0
      %517 = vmatprep.subr.mxu0 0.0
      %518 = vmatpush2.msra.mxu0 0.0
      %519 = vmatprep.subr.mxu0 0.0
      %520 = vmatpush2.msra.mxu0 0.0
      %521 = vmatprep.subr.mxu0 0.0
      %522 = vmatpush2.msra.mxu0 0.0
      %523 = vmatprep.subr.mxu0 0.0
      %524 = vmatpush2.msra.mxu0 0.0
      %525 = vmatprep.subr.mxu0 0.0
      %526 = vmatpush2.msra.mxu0 0.0
      %527 = vmatprep.subr.mxu0 0.0
      %528 = vmatpush2.msra.mxu0 0.0
      %529 = vmatprep.subr.mxu0 0.0
      %530 = vmatpush2.msra.mxu0 0.0
      %531 = vmatprep.subr.mxu0 0.0
      %532 = vmatpush2.msra.mxu0 0.0
      %533 = vmatprep.subr.mxu0 0.0
      %534 = vmatpush2.msra.mxu0 0.0
      %535 = vmatprep.subr.mxu0 0.0
      %536 = vmatpush2.msra.mxu0 0.0
      %537 = vmatprep.subr.mxu0 0.0
      %538 = vmatpush2.msra.mxu0 0.0
      %539 = vmatprep.subr.mxu0 0.0
      %540 = vmatpush2.msra.mxu0 0.0
      %541 = vmatprep.mubr.f32.mxu0 0.0
      %542 = vmatmul.mubr.f32.gmra.mxu0 %v475
      %v543 = vpop.f32.mrf.mxu0
      %v544 = vadd.f32 0.0, %v543
      %v545 = vpop.f32.mrf.mxu0
      %546 = vdwg.mxu0
      %vm547 = vcmask 130048
      %v549 = vsel %vm547, %v468, 0
      %551 = vmatprep.subr.mxu0 0.0
      %552 = vmatpush1.msra.mxu0 0.0
      %553 = vmatprep.subr.mxu0 0.0
      %554 = vmatpush1.msra.mxu0 0.0
      %555 = vmatprep.subr.mxu0 0.0
      %556 = vmatpush1.msra.mxu0 0.0
      %557 = vmatprep.subr.mxu0 0.0
      %558 = vmatpush1.msra.mxu0 0.0
      %559 = vmatprep.subr.mxu0 0.0
      %560 = vmatpush1.msra.mxu0 0.0
      %561 = vmatprep.subr.mxu0 0.0
      %562 = vmatpush1.msra.mxu0 0.0
      %563 = vmatprep.subr.mxu0 0.0
      %564 = vmatpush1.msra.mxu0 0.0
      %565 = vmatprep.subr.mxu0 0.0
      %566 = vmatpush1.msra.mxu0 0.0
      %567 = vmatprep.subr.mxu0 0.0
      %568 = vmatpush1.msra.mxu0 0.0
      %569 = vmatprep.subr.mxu0 0.0
      %570 = vmatpush1.msra.mxu0 0.0
      %571 = vmatprep.subr.mxu0 0.0
      %572 = vmatpush1.msra.mxu0 0.0
      %573 = vmatprep.subr.mxu0 0.0
      %574 = vmatpush1.msra.mxu0 0.0
      %575 = vmatprep.subr.mxu0 0.0
      %576 = vmatpush1.msra.mxu0 0.0
      %577 = vmatprep.subr.mxu0 0.0
      %578 = vmatpush1.msra.mxu0 0.0
      %579 = vmatprep.subr.mxu0 0.0
      %580 = vmatpush1.msra.mxu0 %v470
      %581 = vmatprep.subr.mxu0 0.0
      %582 = vmatpush1.msra.mxu0 %v469
      %583 = vmatprep.subr.mxu0 0.0
      %584 = vmatpush2.msra.mxu0 0.0
      %585 = vmatprep.subr.mxu0 0.0
      %586 = vmatpush2.msra.mxu0 0.0
      %587 = vmatprep.subr.mxu0 0.0
      %588 = vmatpush2.msra.mxu0 0.0
      %589 = vmatprep.subr.mxu0 0.0
      %590 = vmatpush2.msra.mxu0 0.0
      %591 = vmatprep.subr.mxu0 0.0
      %592 = vmatpush2.msra.mxu0 0.0
      %593 = vmatprep.subr.mxu0 0.0
      %594 = vmatpush2.msra.mxu0 0.0
      %595 = vmatprep.subr.mxu0 0.0
      %596 = vmatpush2.msra.mxu0 0.0
      %597 = vmatprep.subr.mxu0 0.0
      %598 = vmatpush2.msra.mxu0 0.0
      %599 = vmatprep.subr.mxu0 0.0
      %600 = vmatpush2.msra.mxu0 0.0
      %601 = vmatprep.subr.mxu0 0.0
      %602 = vmatpush2.msra.mxu0 0.0
      %603 = vmatprep.subr.mxu0 0.0
      %604 = vmatpush2.msra.mxu0 0.0
      %605 = vmatprep.subr.mxu0 0.0
      %606 = vmatpush2.msra.mxu0 0.0
      %607 = vmatprep.subr.mxu0 0.0
      %608 = vmatpush2.msra.mxu0 0.0
      %609 = vmatprep.subr.mxu0 0.0
      %610 = vmatpush2.msra.mxu0 0.0
      %611 = vmatprep.subr.mxu0 0.0
      %612 = vmatpush2.msra.mxu0 0.0
      %613 = vmatprep.subr.mxu0 0.0
      %614 = vmatpush2.msra.mxu0 0.0
      %615 = vmatprep.mubr.f32.mxu0 0.0
      %616 = vmatmul.mubr.f32.gmra.mxu0 %v549
      %v617 = vpop.f32.mrf.mxu0
      %v618 = vadd.f32 %v544, %v617
      %v619 = vpop.f32.mrf.mxu0
      %620 = vdwg.mxu0
      %s621 = scalar_lea.vmem %s2, 8
      %v622 = vld [vmem:[%s621] sm:$0xff]
      %s623 = scalar_lea.vmem %s3, 8
      %v624 = vld [vmem:[%s623] sm:$0xff]
      %626 = vrot.lane.b32.xlu0 %v472, 127
      %v627 = vpop.permute.xlu0 %626
      %v630 = vsel %vm473, %v624, 0
      %632 = vmatprep.subr.mxu0 0.0
      %633 = vmatpush1.msra.mxu0 0.0
      %634 = vmatprep.subr.mxu0 0.0
      %635 = vmatpush1.msra.mxu0 0.0
      %636 = vmatprep.subr.mxu0 0.0
      %637 = vmatpush1.msra.mxu0 0.0
      %638 = vmatprep.subr.mxu0 0.0
      %639 = vmatpush1.msra.mxu0 0.0
      %640 = vmatprep.subr.mxu0 0.0
      %641 = vmatpush1.msra.mxu0 0.0
      %642 = vmatprep.subr.mxu0 0.0
      %643 = vmatpush1.msra.mxu0 0.0
      %644 = vmatprep.subr.mxu0 0.0
      %645 = vmatpush1.msra.mxu0 0.0
      %646 = vmatprep.subr.mxu0 0.0
      %647 = vmatpush1.msra.mxu0 0.0
      %648 = vmatprep.subr.mxu0 0.0
      %649 = vmatpush1.msra.mxu0 0.0
      %650 = vmatprep.subr.mxu0 0.0
      %651 = vmatpush1.msra.mxu0 0.0
      %652 = vmatprep.subr.mxu0 0.0
      %653 = vmatpush1.msra.mxu0 0.0
      %654 = vmatprep.subr.mxu0 0.0
      %655 = vmatpush1.msra.mxu0 0.0
      %656 = vmatprep.subr.mxu0 0.0
      %657 = vmatpush1.msra.mxu0 0.0
      %658 = vmatprep.subr.mxu0 0.0
      %659 = vmatpush1.msra.mxu0 0.0
      %660 = vmatprep.subr.mxu0 0.0
      %661 = vmatpush1.msra.mxu0 0.0
      %662 = vmatprep.subr.mxu0 0.0
      %663 = vmatpush1.msra.mxu0 %v627
      %664 = vmatprep.subr.mxu0 0.0
      %665 = vmatpush2.msra.mxu0 0.0
      %666 = vmatprep.subr.mxu0 0.0
      %667 = vmatpush2.msra.mxu0 0.0
      %668 = vmatprep.subr.mxu0 0.0
      %669 = vmatpush2.msra.mxu0 0.0
      %670 = vmatprep.subr.mxu0 0.0
      %671 = vmatpush2.msra.mxu0 0.0
      %672 = vmatprep.subr.mxu0 0.0
      %673 = vmatpush2.msra.mxu0 0.0
      %674 = vmatprep.subr.mxu0 0.0
      %675 = vmatpush2.msra.mxu0 0.0
      %676 = vmatprep.subr.mxu0 0.0
      %677 = vmatpush2.msra.mxu0 0.0
      %678 = vmatprep.subr.mxu0 0.0
      %679 = vmatpush2.msra.mxu0 0.0
      %680 = vmatprep.subr.mxu0 0.0
      %681 = vmatpush2.msra.mxu0 0.0
      %682 = vmatprep.subr.mxu0 0.0
      %683 = vmatpush2.msra.mxu0 0.0
      %684 = vmatprep.subr.mxu0 0.0
      %685 = vmatpush2.msra.mxu0 0.0
      %686 = vmatprep.subr.mxu0 0.0
      %687 = vmatpush2.msra.mxu0 0.0
      %688 = vmatprep.subr.mxu0 0.0
      %689 = vmatpush2.msra.mxu0 0.0
      %690 = vmatprep.subr.mxu0 0.0
      %691 = vmatpush2.msra.mxu0 0.0
      %692 = vmatprep.subr.mxu0 0.0
      %693 = vmatpush2.msra.mxu0 0.0
      %694 = vmatprep.subr.mxu0 0.0
      %695 = vmatpush2.msra.mxu0 0.0
      %696 = vmatprep.mubr.f32.mxu0 0.0
      %697 = vmatmul.mubr.f32.gmra.mxu0 %v630
      %v698 = vpop.f32.mrf.mxu0
      %v699 = vadd.f32 0.0, %v698
      %v700 = vpop.f32.mrf.mxu0
      %701 = vdwg.mxu0
      %704 = vrot.lane.b32.xlu0 %v469, 127
      %v705 = vpop.permute.xlu0 %704
      %706 = vrot.lane.b32.xlu0 %v470, 127
      %v707 = vpop.permute.xlu0 %706
      %v711 = vsel %vm547, %v622, 0
      %713 = vmatprep.subr.mxu0 0.0
      %714 = vmatpush1.msra.mxu0 0.0
      %715 = vmatprep.subr.mxu0 0.0
      %716 = vmatpush1.msra.mxu0 0.0
      %717 = vmatprep.subr.mxu0 0.0
      %718 = vmatpush1.msra.mxu0 0.0
      %719 = vmatprep.subr.mxu0 0.0
      %720 = vmatpush1.msra.mxu0 0.0
      %721 = vmatprep.subr.mxu0 0.0
      %722 = vmatpush1.msra.mxu0 0.0
      %723 = vmatprep.subr.mxu0 0.0
      %724 = vmatpush1.msra.mxu0 0.0
      %725 = vmatprep.subr.mxu0 0.0
      %726 = vmatpush1.msra.mxu0 0.0
      %727 = vmatprep.subr.mxu0 0.0
      %728 = vmatpush1.msra.mxu0 0.0
      %729 = vmatprep.subr.mxu0 0.0
      %730 = vmatpush1.msra.mxu0 0.0
      %731 = vmatprep.subr.mxu0 0.0
      %732 = vmatpush1.msra.mxu0 0.0
      %733 = vmatprep.subr.mxu0 0.0
      %734 = vmatpush1.msra.mxu0 0.0
      %735 = vmatprep.subr.mxu0 0.0
      %736 = vmatpush1.msra.mxu0 0.0
      %737 = vmatprep.subr.mxu0 0.0
      %738 = vmatpush1.msra.mxu0 0.0
      %739 = vmatprep.subr.mxu0 0.0
      %740 = vmatpush1.msra.mxu0 0.0
      %741 = vmatprep.subr.mxu0 0.0
      %742 = vmatpush1.msra.mxu0 %v707
      %743 = vmatprep.subr.mxu0 0.0
      %744 = vmatpush1.msra.mxu0 %v705
      %745 = vmatprep.subr.mxu0 0.0
      %746 = vmatpush2.msra.mxu0 0.0
      %747 = vmatprep.subr.mxu0 0.0
      %748 = vmatpush2.msra.mxu0 0.0
      %749 = vmatprep.subr.mxu0 0.0
      %750 = vmatpush2.msra.mxu0 0.0
      %751 = vmatprep.subr.mxu0 0.0
      %752 = vmatpush2.msra.mxu0 0.0
      %753 = vmatprep.subr.mxu0 0.0
      %754 = vmatpush2.msra.mxu0 0.0
      %755 = vmatprep.subr.mxu0 0.0
      %756 = vmatpush2.msra.mxu0 0.0
      %757 = vmatprep.subr.mxu0 0.0
      %758 = vmatpush2.msra.mxu0 0.0
      %759 = vmatprep.subr.mxu0 0.0
      %760 = vmatpush2.msra.mxu0 0.0
      %761 = vmatprep.subr.mxu0 0.0
      %762 = vmatpush2.msra.mxu0 0.0
      %763 = vmatprep.subr.mxu0 0.0
      %764 = vmatpush2.msra.mxu0 0.0
      %765 = vmatprep.subr.mxu0 0.0
      %766 = vmatpush2.msra.mxu0 0.0
      %767 = vmatprep.subr.mxu0 0.0
      %768 = vmatpush2.msra.mxu0 0.0
      %769 = vmatprep.subr.mxu0 0.0
      %770 = vmatpush2.msra.mxu0 0.0
      %771 = vmatprep.subr.mxu0 0.0
      %772 = vmatpush2.msra.mxu0 0.0
      %773 = vmatprep.subr.mxu0 0.0
      %774 = vmatpush2.msra.mxu0 0.0
      %775 = vmatprep.subr.mxu0 0.0
      %776 = vmatpush2.msra.mxu0 0.0
      %777 = vmatprep.mubr.f32.mxu0 0.0
      %778 = vmatmul.mubr.f32.gmra.mxu0 %v711
      %v779 = vpop.f32.mrf.mxu0
      %v780 = vadd.f32 %v699, %v779
      %v781 = vpop.f32.mrf.mxu0
      %782 = vdwg.mxu0
      %v783 = vadd.f32 %v618, %v780
      %s784 = scalar_lea.vmem %s2, 16
      %v785 = vld [vmem:[%s784] sm:$0xff]
      %s786 = scalar_lea.vmem %s3, 16
      %v787 = vld [vmem:[%s786] sm:$0xff]
      %788 = vrot.lane.b32.xlu0 %v472, 126
      %v789 = vpop.permute.xlu0 %788
      %v792 = vsel %vm473, %v787, 0
      %794 = vmatprep.subr.mxu0 0.0
      %795 = vmatpush1.msra.mxu0 0.0
      %796 = vmatprep.subr.mxu0 0.0
      %797 = vmatpush1.msra.mxu0 0.0
      %798 = vmatprep.subr.mxu0 0.0
      %799 = vmatpush1.msra.mxu0 0.0
      %800 = vmatprep.subr.mxu0 0.0
      %801 = vmatpush1.msra.mxu0 0.0
      %802 = vmatprep.subr.mxu0 0.0
      %803 = vmatpush1.msra.mxu0 0.0
      %804 = vmatprep.subr.mxu0 0.0
      %805 = vmatpush1.msra.mxu0 0.0
      %806 = vmatprep.subr.mxu0 0.0
      %807 = vmatpush1.msra.mxu0 0.0
      %808 = vmatprep.subr.mxu0 0.0
      %809 = vmatpush1.msra.mxu0 0.0
      %810 = vmatprep.subr.mxu0 0.0
      %811 = vmatpush1.msra.mxu0 0.0
      %812 = vmatprep.subr.mxu0 0.0
      %813 = vmatpush1.msra.mxu0 0.0
      %814 = vmatprep.subr.mxu0 0.0
      %815 = vmatpush1.msra.mxu0 0.0
      %816 = vmatprep.subr.mxu0 0.0
      %817 = vmatpush1.msra.mxu0 0.0
      %818 = vmatprep.subr.mxu0 0.0
      %819 = vmatpush1.msra.mxu0 0.0
      %820 = vmatprep.subr.mxu0 0.0
      %821 = vmatpush1.msra.mxu0 0.0
      %822 = vmatprep.subr.mxu0 0.0
      %823 = vmatpush1.msra.mxu0 0.0
      %824 = vmatprep.subr.mxu0 0.0
      %825 = vmatpush1.msra.mxu0 %v789
      %826 = vmatprep.subr.mxu0 0.0
      %827 = vmatpush2.msra.mxu0 0.0
      %828 = vmatprep.subr.mxu0 0.0
      %829 = vmatpush2.msra.mxu0 0.0
      %830 = vmatprep.subr.mxu0 0.0
      %831 = vmatpush2.msra.mxu0 0.0
      %832 = vmatprep.subr.mxu0 0.0
      %833 = vmatpush2.msra.mxu0 0.0
      %834 = vmatprep.subr.mxu0 0.0
      %835 = vmatpush2.msra.mxu0 0.0
      %836 = vmatprep.subr.mxu0 0.0
      %837 = vmatpush2.msra.mxu0 0.0
      %838 = vmatprep.subr.mxu0 0.0
      %839 = vmatpush2.msra.mxu0 0.0
      %840 = vmatprep.subr.mxu0 0.0
      %841 = vmatpush2.msra.mxu0 0.0
      %842 = vmatprep.subr.mxu0 0.0
      %843 = vmatpush2.msra.mxu0 0.0
      %844 = vmatprep.subr.mxu0 0.0
      %845 = vmatpush2.msra.mxu0 0.0
      %846 = vmatprep.subr.mxu0 0.0
      %847 = vmatpush2.msra.mxu0 0.0
      %848 = vmatprep.subr.mxu0 0.0
      %849 = vmatpush2.msra.mxu0 0.0
      %850 = vmatprep.subr.mxu0 0.0
      %851 = vmatpush2.msra.mxu0 0.0
      %852 = vmatprep.subr.mxu0 0.0
      %853 = vmatpush2.msra.mxu0 0.0
      %854 = vmatprep.subr.mxu0 0.0
      %855 = vmatpush2.msra.mxu0 0.0
      %856 = vmatprep.subr.mxu0 0.0
      %857 = vmatpush2.msra.mxu0 0.0
      %858 = vmatprep.mubr.f32.mxu0 0.0
      %859 = vmatmul.mubr.f32.gmra.mxu0 %v792
      %v860 = vpop.f32.mrf.mxu0
      %v861 = vadd.f32 0.0, %v860
      %v862 = vpop.f32.mrf.mxu0
      %863 = vdwg.mxu0
      %864 = vrot.lane.b32.xlu0 %v469, 126
      %v865 = vpop.permute.xlu0 %864
      %866 = vrot.lane.b32.xlu0 %v470, 126
      %v867 = vpop.permute.xlu0 %866
      %v871 = vsel %vm547, %v785, 0
      %873 = vmatprep.subr.mxu0 0.0
      %874 = vmatpush1.msra.mxu0 0.0
      %875 = vmatprep.subr.mxu0 0.0
      %876 = vmatpush1.msra.mxu0 0.0
      %877 = vmatprep.subr.mxu0 0.0
      %878 = vmatpush1.msra.mxu0 0.0
      %879 = vmatprep.subr.mxu0 0.0
      %880 = vmatpush1.msra.mxu0 0.0
      %881 = vmatprep.subr.mxu0 0.0
      %882 = vmatpush1.msra.mxu0 0.0
      %883 = vmatprep.subr.mxu0 0.0
      %884 = vmatpush1.msra.mxu0 0.0
      %885 = vmatprep.subr.mxu0 0.0
      %886 = vmatpush1.msra.mxu0 0.0
      %887 = vmatprep.subr.mxu0 0.0
      %888 = vmatpush1.msra.mxu0 0.0
      %889 = vmatprep.subr.mxu0 0.0
      %890 = vmatpush1.msra.mxu0 0.0
      %891 = vmatprep.subr.mxu0 0.0
      %892 = vmatpush1.msra.mxu0 0.0
      %893 = vmatprep.subr.mxu0 0.0
      %894 = vmatpush1.msra.mxu0 0.0
      %895 = vmatprep.subr.mxu0 0.0
      %896 = vmatpush1.msra.mxu0 0.0
      %897 = vmatprep.subr.mxu0 0.0
      %898 = vmatpush1.msra.mxu0 0.0
      %899 = vmatprep.subr.mxu0 0.0
      %900 = vmatpush1.msra.mxu0 0.0
      %901 = vmatprep.subr.mxu0 0.0
      %902 = vmatpush1.msra.mxu0 %v867
      %903 = vmatprep.subr.mxu0 0.0
      %904 = vmatpush1.msra.mxu0 %v865
      %905 = vmatprep.subr.mxu0 0.0
      %906 = vmatpush2.msra.mxu0 0.0
      %907 = vmatprep.subr.mxu0 0.0
      %908 = vmatpush2.msra.mxu0 0.0
      %909 = vmatprep.subr.mxu0 0.0
      %910 = vmatpush2.msra.mxu0 0.0
      %911 = vmatprep.subr.mxu0 0.0
      %912 = vmatpush2.msra.mxu0 0.0
      %913 = vmatprep.subr.mxu0 0.0
      %914 = vmatpush2.msra.mxu0 0.0
      %915 = vmatprep.subr.mxu0 0.0
      %916 = vmatpush2.msra.mxu0 0.0
      %917 = vmatprep.subr.mxu0 0.0
      %918 = vmatpush2.msra.mxu0 0.0
      %919 = vmatprep.subr.mxu0 0.0
      %920 = vmatpush2.msra.mxu0 0.0
      %921 = vmatprep.subr.mxu0 0.0
      %922 = vmatpush2.msra.mxu0 0.0
      %923 = vmatprep.subr.mxu0 0.0
      %924 = vmatpush2.msra.mxu0 0.0
      %925 = vmatprep.subr.mxu0 0.0
      %926 = vmatpush2.msra.mxu0 0.0
      %927 = vmatprep.subr.mxu0 0.0
      %928 = vmatpush2.msra.mxu0 0.0
      %929 = vmatprep.subr.mxu0 0.0
      %930 = vmatpush2.msra.mxu0 0.0
      %931 = vmatprep.subr.mxu0 0.0
      %932 = vmatpush2.msra.mxu0 0.0
      %933 = vmatprep.subr.mxu0 0.0
      %934 = vmatpush2.msra.mxu0 0.0
      %935 = vmatprep.subr.mxu0 0.0
      %936 = vmatpush2.msra.mxu0 0.0
      %937 = vmatprep.mubr.f32.mxu0 0.0
      %938 = vmatmul.mubr.f32.gmra.mxu0 %v871
      %v939 = vpop.f32.mrf.mxu0
      %v940 = vadd.f32 %v861, %v939
      %v941 = vpop.f32.mrf.mxu0
      %942 = vdwg.mxu0
      %v943 = vadd.f32 %v783, %v940
      %s944 = scalar_lea.vmem %s2, 24
      %v945 = vld [vmem:[%s944] sm:$0xff]
      %s946 = scalar_lea.vmem %s3, 24
      %v947 = vld [vmem:[%s946] sm:$0xff]
      %948 = vrot.lane.b32.xlu0 %v472, 118
      %v949 = vpop.permute.xlu0 %948
      %v952 = vsel %vm473, %v947, 0
      %954 = vmatprep.subr.mxu0 0.0
      %955 = vmatpush1.msra.mxu0 0.0
      %956 = vmatprep.subr.mxu0 0.0
      %957 = vmatpush1.msra.mxu0 0.0
      %958 = vmatprep.subr.mxu0 0.0
      %959 = vmatpush1.msra.mxu0 0.0
      %960 = vmatprep.subr.mxu0 0.0
      %961 = vmatpush1.msra.mxu0 0.0
      %962 = vmatprep.subr.mxu0 0.0
      %963 = vmatpush1.msra.mxu0 0.0
      %964 = vmatprep.subr.mxu0 0.0
      %965 = vmatpush1.msra.mxu0 0.0
      %966 = vmatprep.subr.mxu0 0.0
      %967 = vmatpush1.msra.mxu0 0.0
      %968 = vmatprep.subr.mxu0 0.0
      %969 = vmatpush1.msra.mxu0 0.0
      %970 = vmatprep.subr.mxu0 0.0
      %971 = vmatpush1.msra.mxu0 0.0
      %972 = vmatprep.subr.mxu0 0.0
      %973 = vmatpush1.msra.mxu0 0.0
      %974 = vmatprep.subr.mxu0 0.0
      %975 = vmatpush1.msra.mxu0 0.0
      %976 = vmatprep.subr.mxu0 0.0
      %977 = vmatpush1.msra.mxu0 0.0
      %978 = vmatprep.subr.mxu0 0.0
      %979 = vmatpush1.msra.mxu0 0.0
      %980 = vmatprep.subr.mxu0 0.0
      %981 = vmatpush1.msra.mxu0 0.0
      %982 = vmatprep.subr.mxu0 0.0
      %983 = vmatpush1.msra.mxu0 0.0
      %984 = vmatprep.subr.mxu0 0.0
      %985 = vmatpush1.msra.mxu0 %v949
      %986 = vmatprep.subr.mxu0 0.0
      %987 = vmatpush2.msra.mxu0 0.0
      %988 = vmatprep.subr.mxu0 0.0
      %989 = vmatpush2.msra.mxu0 0.0
      %990 = vmatprep.subr.mxu0 0.0
      %991 = vmatpush2.msra.mxu0 0.0
      %992 = vmatprep.subr.mxu0 0.0
      %993 = vmatpush2.msra.mxu0 0.0
      %994 = vmatprep.subr.mxu0 0.0
      %995 = vmatpush2.msra.mxu0 0.0
      %996 = vmatprep.subr.mxu0 0.0
      %997 = vmatpush2.msra.mxu0 0.0
      %998 = vmatprep.subr.mxu0 0.0
      %999 = vmatpush2.msra.mxu0 0.0
      %1000 = vmatprep.subr.mxu0 0.0
      %1001 = vmatpush2.msra.mxu0 0.0
      %1002 = vmatprep.subr.mxu0 0.0
      %1003 = vmatpush2.msra.mxu0 0.0
      %1004 = vmatprep.subr.mxu0 0.0
      %1005 = vmatpush2.msra.mxu0 0.0
      %1006 = vmatprep.subr.mxu0 0.0
      %1007 = vmatpush2.msra.mxu0 0.0
      %1008 = vmatprep.subr.mxu0 0.0
      %1009 = vmatpush2.msra.mxu0 0.0
      %1010 = vmatprep.subr.mxu0 0.0
      %1011 = vmatpush2.msra.mxu0 0.0
      %1012 = vmatprep.subr.mxu0 0.0
      %1013 = vmatpush2.msra.mxu0 0.0
      %1014 = vmatprep.subr.mxu0 0.0
      %1015 = vmatpush2.msra.mxu0 0.0
      %1016 = vmatprep.subr.mxu0 0.0
      %1017 = vmatpush2.msra.mxu0 0.0
      %1018 = vmatprep.mubr.f32.mxu0 0.0
      %1019 = vmatmul.mubr.f32.gmra.mxu0 %v952
      %v1020 = vpop.f32.mrf.mxu0
      %v1021 = vadd.f32 0.0, %v1020
      %v1022 = vpop.f32.mrf.mxu0
      %1023 = vdwg.mxu0
      %1024 = vrot.lane.b32.xlu0 %v469, 118
      %v1025 = vpop.permute.xlu0 %1024
      %1026 = vrot.lane.b32.xlu0 %v470, 118
      %v1027 = vpop.permute.xlu0 %1026
      %v1031 = vsel %vm547, %v945, 0
      %1033 = vmatprep.subr.mxu0 0.0
      %1034 = vmatpush1.msra.mxu0 0.0
      %1035 = vmatprep.subr.mxu0 0.0
      %1036 = vmatpush1.msra.mxu0 0.0
      %1037 = vmatprep.subr.mxu0 0.0
      %1038 = vmatpush1.msra.mxu0 0.0
      %1039 = vmatprep.subr.mxu0 0.0
      %1040 = vmatpush1.msra.mxu0 0.0
      %1041 = vmatprep.subr.mxu0 0.0
      %1042 = vmatpush1.msra.mxu0 0.0
      %1043 = vmatprep.subr.mxu0 0.0
      %1044 = vmatpush1.msra.mxu0 0.0
      %1045 = vmatprep.subr.mxu0 0.0
      %1046 = vmatpush1.msra.mxu0 0.0
      %1047 = vmatprep.subr.mxu0 0.0
      %1048 = vmatpush1.msra.mxu0 0.0
      %1049 = vmatprep.subr.mxu0 0.0
      %1050 = vmatpush1.msra.mxu0 0.0
      %1051 = vmatprep.subr.mxu0 0.0
      %1052 = vmatpush1.msra.mxu0 0.0
      %1053 = vmatprep.subr.mxu0 0.0
      %1054 = vmatpush1.msra.mxu0 0.0
      %1055 = vmatprep.subr.mxu0 0.0
      %1056 = vmatpush1.msra.mxu0 0.0
      %1057 = vmatprep.subr.mxu0 0.0
      %1058 = vmatpush1.msra.mxu0 0.0
      %1059 = vmatprep.subr.mxu0 0.0
      %1060 = vmatpush1.msra.mxu0 0.0
      %1061 = vmatprep.subr.mxu0 0.0
      %1062 = vmatpush1.msra.mxu0 %v1027
      %1063 = vmatprep.subr.mxu0 0.0
      %1064 = vmatpush1.msra.mxu0 %v1025
      %1065 = vmatprep.subr.mxu0 0.0
      %1066 = vmatpush2.msra.mxu0 0.0
      %1067 = vmatprep.subr.mxu0 0.0
      %1068 = vmatpush2.msra.mxu0 0.0
      %1069 = vmatprep.subr.mxu0 0.0
      %1070 = vmatpush2.msra.mxu0 0.0
      %1071 = vmatprep.subr.mxu0 0.0
      %1072 = vmatpush2.msra.mxu0 0.0
      %1073 = vmatprep.subr.mxu0 0.0
      %1074 = vmatpush2.msra.mxu0 0.0
      %1075 = vmatprep.subr.mxu0 0.0
      %1076 = vmatpush2.msra.mxu0 0.0
      %1077 = vmatprep.subr.mxu0 0.0
      %1078 = vmatpush2.msra.mxu0 0.0
      %1079 = vmatprep.subr.mxu0 0.0
      %1080 = vmatpush2.msra.mxu0 0.0
      %1081 = vmatprep.subr.mxu0 0.0
      %1082 = vmatpush2.msra.mxu0 0.0
      %1083 = vmatprep.subr.mxu0 0.0
      %1084 = vmatpush2.msra.mxu0 0.0
      %1085 = vmatprep.subr.mxu0 0.0
      %1086 = vmatpush2.msra.mxu0 0.0
      %1087 = vmatprep.subr.mxu0 0.0
      %1088 = vmatpush2.msra.mxu0 0.0
      %1089 = vmatprep.subr.mxu0 0.0
      %1090 = vmatpush2.msra.mxu0 0.0
      %1091 = vmatprep.subr.mxu0 0.0
      %1092 = vmatpush2.msra.mxu0 0.0
      %1093 = vmatprep.subr.mxu0 0.0
      %1094 = vmatpush2.msra.mxu0 0.0
      %1095 = vmatprep.subr.mxu0 0.0
      %1096 = vmatpush2.msra.mxu0 0.0
      %1097 = vmatprep.mubr.f32.mxu0 0.0
      %1098 = vmatmul.mubr.f32.gmra.mxu0 %v1031
      %v1099 = vpop.f32.mrf.mxu0
      %v1100 = vadd.f32 %v1021, %v1099
      %v1101 = vpop.f32.mrf.mxu0
      %1102 = vdwg.mxu0
      %v1103 = vadd.f32 %v943, %v1100
      %s1104 = scalar_lea.vmem %s2, 32
      %v1105 = vld [vmem:[%s1104] sm:$0xff]
      %s1106 = scalar_lea.vmem %s3, 32
      %v1107 = vld [vmem:[%s1106] sm:$0xff]
      %1108 = vrot.lane.b32.xlu0 %v472, 117
      %v1109 = vpop.permute.xlu0 %1108
      %v1112 = vsel %vm473, %v1107, 0
      %1114 = vmatprep.subr.mxu0 0.0
      %1115 = vmatpush1.msra.mxu0 0.0
      %1116 = vmatprep.subr.mxu0 0.0
      %1117 = vmatpush1.msra.mxu0 0.0
      %1118 = vmatprep.subr.mxu0 0.0
      %1119 = vmatpush1.msra.mxu0 0.0
      %1120 = vmatprep.subr.mxu0 0.0
      %1121 = vmatpush1.msra.mxu0 0.0
      %1122 = vmatprep.subr.mxu0 0.0
      %1123 = vmatpush1.msra.mxu0 0.0
      %1124 = vmatprep.subr.mxu0 0.0
      %1125 = vmatpush1.msra.mxu0 0.0
      %1126 = vmatprep.subr.mxu0 0.0
      %1127 = vmatpush1.msra.mxu0 0.0
      %1128 = vmatprep.subr.mxu0 0.0
      %1129 = vmatpush1.msra.mxu0 0.0
      %1130 = vmatprep.subr.mxu0 0.0
      %1131 = vmatpush1.msra.mxu0 0.0
      %1132 = vmatprep.subr.mxu0 0.0
      %1133 = vmatpush1.msra.mxu0 0.0
      %1134 = vmatprep.subr.mxu0 0.0
      %1135 = vmatpush1.msra.mxu0 0.0
      %1136 = vmatprep.subr.mxu0 0.0
      %1137 = vmatpush1.msra.mxu0 0.0
      %1138 = vmatprep.subr.mxu0 0.0
      %1139 = vmatpush1.msra.mxu0 0.0
      %1140 = vmatprep.subr.mxu0 0.0
      %1141 = vmatpush1.msra.mxu0 0.0
      %1142 = vmatprep.subr.mxu0 0.0
      %1143 = vmatpush1.msra.mxu0 0.0
      %1144 = vmatprep.subr.mxu0 0.0
      %1145 = vmatpush1.msra.mxu0 %v1109
      %1146 = vmatprep.subr.mxu0 0.0
      %1147 = vmatpush2.msra.mxu0 0.0
      %1148 = vmatprep.subr.mxu0 0.0
      %1149 = vmatpush2.msra.mxu0 0.0
      %1150 = vmatprep.subr.mxu0 0.0
      %1151 = vmatpush2.msra.mxu0 0.0
      %1152 = vmatprep.subr.mxu0 0.0
      %1153 = vmatpush2.msra.mxu0 0.0
      %1154 = vmatprep.subr.mxu0 0.0
      %1155 = vmatpush2.msra.mxu0 0.0
      %1156 = vmatprep.subr.mxu0 0.0
      %1157 = vmatpush2.msra.mxu0 0.0
      %1158 = vmatprep.subr.mxu0 0.0
      %1159 = vmatpush2.msra.mxu0 0.0
      %1160 = vmatprep.subr.mxu0 0.0
      %1161 = vmatpush2.msra.mxu0 0.0
      %1162 = vmatprep.subr.mxu0 0.0
      %1163 = vmatpush2.msra.mxu0 0.0
      %1164 = vmatprep.subr.mxu0 0.0
      %1165 = vmatpush2.msra.mxu0 0.0
      %1166 = vmatprep.subr.mxu0 0.0
      %1167 = vmatpush2.msra.mxu0 0.0
      %1168 = vmatprep.subr.mxu0 0.0
      %1169 = vmatpush2.msra.mxu0 0.0
      %1170 = vmatprep.subr.mxu0 0.0
      %1171 = vmatpush2.msra.mxu0 0.0
      %1172 = vmatprep.subr.mxu0 0.0
      %1173 = vmatpush2.msra.mxu0 0.0
      %1174 = vmatprep.subr.mxu0 0.0
      %1175 = vmatpush2.msra.mxu0 0.0
      %1176 = vmatprep.subr.mxu0 0.0
      %1177 = vmatpush2.msra.mxu0 0.0
      %1178 = vmatprep.mubr.f32.mxu0 0.0
      %1179 = vmatmul.mubr.f32.gmra.mxu0 %v1112
      %v1180 = vpop.f32.mrf.mxu0
      %v1181 = vadd.f32 0.0, %v1180
      %v1182 = vpop.f32.mrf.mxu0
      %1183 = vdwg.mxu0
      %1184 = vrot.lane.b32.xlu0 %v469, 117
      %v1185 = vpop.permute.xlu0 %1184
      %1186 = vrot.lane.b32.xlu0 %v470, 117
      %v1187 = vpop.permute.xlu0 %1186
      %v1191 = vsel %vm547, %v1105, 0
      %1193 = vmatprep.subr.mxu0 0.0
      %1194 = vmatpush1.msra.mxu0 0.0
      %1195 = vmatprep.subr.mxu0 0.0
      %1196 = vmatpush1.msra.mxu0 0.0
      %1197 = vmatprep.subr.mxu0 0.0
      %1198 = vmatpush1.msra.mxu0 0.0
      %1199 = vmatprep.subr.mxu0 0.0
      %1200 = vmatpush1.msra.mxu0 0.0
      %1201 = vmatprep.subr.mxu0 0.0
      %1202 = vmatpush1.msra.mxu0 0.0
      %1203 = vmatprep.subr.mxu0 0.0
      %1204 = vmatpush1.msra.mxu0 0.0
      %1205 = vmatprep.subr.mxu0 0.0
      %1206 = vmatpush1.msra.mxu0 0.0
      %1207 = vmatprep.subr.mxu0 0.0
      %1208 = vmatpush1.msra.mxu0 0.0
      %1209 = vmatprep.subr.mxu0 0.0
      %1210 = vmatpush1.msra.mxu0 0.0
      %1211 = vmatprep.subr.mxu0 0.0
      %1212 = vmatpush1.msra.mxu0 0.0
      %1213 = vmatprep.subr.mxu0 0.0
      %1214 = vmatpush1.msra.mxu0 0.0
      %1215 = vmatprep.subr.mxu0 0.0
      %1216 = vmatpush1.msra.mxu0 0.0
      %1217 = vmatprep.subr.mxu0 0.0
      %1218 = vmatpush1.msra.mxu0 0.0
      %1219 = vmatprep.subr.mxu0 0.0
      %1220 = vmatpush1.msra.mxu0 0.0
      %1221 = vmatprep.subr.mxu0 0.0
      %1222 = vmatpush1.msra.mxu0 %v1187
      %1223 = vmatprep.subr.mxu0 0.0
      %1224 = vmatpush1.msra.mxu0 %v1185
      %1225 = vmatprep.subr.mxu0 0.0
      %1226 = vmatpush2.msra.mxu0 0.0
      %1227 = vmatprep.subr.mxu0 0.0
      %1228 = vmatpush2.msra.mxu0 0.0
      %1229 = vmatprep.subr.mxu0 0.0
      %1230 = vmatpush2.msra.mxu0 0.0
      %1231 = vmatprep.subr.mxu0 0.0
      %1232 = vmatpush2.msra.mxu0 0.0
      %1233 = vmatprep.subr.mxu0 0.0
      %1234 = vmatpush2.msra.mxu0 0.0
      %1235 = vmatprep.subr.mxu0 0.0
      %1236 = vmatpush2.msra.mxu0 0.0
      %1237 = vmatprep.subr.mxu0 0.0
      %1238 = vmatpush2.msra.mxu0 0.0
      %1239 = vmatprep.subr.mxu0 0.0
      %1240 = vmatpush2.msra.mxu0 0.0
      %1241 = vmatprep.subr.mxu0 0.0
      %1242 = vmatpush2.msra.mxu0 0.0
      %1243 = vmatprep.subr.mxu0 0.0
      %1244 = vmatpush2.msra.mxu0 0.0
      %1245 = vmatprep.subr.mxu0 0.0
      %1246 = vmatpush2.msra.mxu0 0.0
      %1247 = vmatprep.subr.mxu0 0.0
      %1248 = vmatpush2.msra.mxu0 0.0
      %1249 = vmatprep.subr.mxu0 0.0
      %1250 = vmatpush2.msra.mxu0 0.0
      %1251 = vmatprep.subr.mxu0 0.0
      %1252 = vmatpush2.msra.mxu0 0.0
      %1253 = vmatprep.subr.mxu0 0.0
      %1254 = vmatpush2.msra.mxu0 0.0
      %1255 = vmatprep.subr.mxu0 0.0
      %1256 = vmatpush2.msra.mxu0 0.0
      %1257 = vmatprep.mubr.f32.mxu0 0.0
      %1258 = vmatmul.mubr.f32.gmra.mxu0 %v1191
      %v1259 = vpop.f32.mrf.mxu0
      %v1260 = vadd.f32 %v1181, %v1259
      %v1261 = vpop.f32.mrf.mxu0
      %1262 = vdwg.mxu0
      %v1263 = vadd.f32 %v1103, %v1260
      %s1264 = scalar_lea.vmem %s2, 40
      %v1265 = vld [vmem:[%s1264] sm:$0xff]
      %s1266 = scalar_lea.vmem %s3, 40
      %v1267 = vld [vmem:[%s1266] sm:$0xff]
      %1268 = vrot.lane.b32.xlu0 %v472, 116
      %v1269 = vpop.permute.xlu0 %1268
      %v1272 = vsel %vm473, %v1267, 0
      %1274 = vmatprep.subr.mxu0 0.0
      %1275 = vmatpush1.msra.mxu0 0.0
      %1276 = vmatprep.subr.mxu0 0.0
      %1277 = vmatpush1.msra.mxu0 0.0
      %1278 = vmatprep.subr.mxu0 0.0
      %1279 = vmatpush1.msra.mxu0 0.0
      %1280 = vmatprep.subr.mxu0 0.0
      %1281 = vmatpush1.msra.mxu0 0.0
      %1282 = vmatprep.subr.mxu0 0.0
      %1283 = vmatpush1.msra.mxu0 0.0
      %1284 = vmatprep.subr.mxu0 0.0
      %1285 = vmatpush1.msra.mxu0 0.0
      %1286 = vmatprep.subr.mxu0 0.0
      %1287 = vmatpush1.msra.mxu0 0.0
      %1288 = vmatprep.subr.mxu0 0.0
      %1289 = vmatpush1.msra.mxu0 0.0
      %1290 = vmatprep.subr.mxu0 0.0
      %1291 = vmatpush1.msra.mxu0 0.0
      %1292 = vmatprep.subr.mxu0 0.0
      %1293 = vmatpush1.msra.mxu0 0.0
      %1294 = vmatprep.subr.mxu0 0.0
      %1295 = vmatpush1.msra.mxu0 0.0
      %1296 = vmatprep.subr.mxu0 0.0
      %1297 = vmatpush1.msra.mxu0 0.0
      %1298 = vmatprep.subr.mxu0 0.0
      %1299 = vmatpush1.msra.mxu0 0.0
      %1300 = vmatprep.subr.mxu0 0.0
      %1301 = vmatpush1.msra.mxu0 0.0
      %1302 = vmatprep.subr.mxu0 0.0
      %1303 = vmatpush1.msra.mxu0 0.0
      %1304 = vmatprep.subr.mxu0 0.0
      %1305 = vmatpush1.msra.mxu0 %v1269
      %1306 = vmatprep.subr.mxu0 0.0
      %1307 = vmatpush2.msra.mxu0 0.0
      %1308 = vmatprep.subr.mxu0 0.0
      %1309 = vmatpush2.msra.mxu0 0.0
      %1310 = vmatprep.subr.mxu0 0.0
      %1311 = vmatpush2.msra.mxu0 0.0
      %1312 = vmatprep.subr.mxu0 0.0
      %1313 = vmatpush2.msra.mxu0 0.0
      %1314 = vmatprep.subr.mxu0 0.0
      %1315 = vmatpush2.msra.mxu0 0.0
      %1316 = vmatprep.subr.mxu0 0.0
      %1317 = vmatpush2.msra.mxu0 0.0
      %1318 = vmatprep.subr.mxu0 0.0
      %1319 = vmatpush2.msra.mxu0 0.0
      %1320 = vmatprep.subr.mxu0 0.0
      %1321 = vmatpush2.msra.mxu0 0.0
      %1322 = vmatprep.subr.mxu0 0.0
      %1323 = vmatpush2.msra.mxu0 0.0
      %1324 = vmatprep.subr.mxu0 0.0
      %1325 = vmatpush2.msra.mxu0 0.0
      %1326 = vmatprep.subr.mxu0 0.0
      %1327 = vmatpush2.msra.mxu0 0.0
      %1328 = vmatprep.subr.mxu0 0.0
      %1329 = vmatpush2.msra.mxu0 0.0
      %1330 = vmatprep.subr.mxu0 0.0
      %1331 = vmatpush2.msra.mxu0 0.0
      %1332 = vmatprep.subr.mxu0 0.0
      %1333 = vmatpush2.msra.mxu0 0.0
      %1334 = vmatprep.subr.mxu0 0.0
      %1335 = vmatpush2.msra.mxu0 0.0
      %1336 = vmatprep.subr.mxu0 0.0
      %1337 = vmatpush2.msra.mxu0 0.0
      %1338 = vmatprep.mubr.f32.mxu0 0.0
      %1339 = vmatmul.mubr.f32.gmra.mxu0 %v1272
      %v1340 = vpop.f32.mrf.mxu0
      %v1341 = vadd.f32 0.0, %v1340
      %v1342 = vpop.f32.mrf.mxu0
      %1343 = vdwg.mxu0
      %1344 = vrot.lane.b32.xlu0 %v469, 116
      %v1345 = vpop.permute.xlu0 %1344
      %1346 = vrot.lane.b32.xlu0 %v470, 116
      %v1347 = vpop.permute.xlu0 %1346
      %v1351 = vsel %vm547, %v1265, 0
      %1353 = vmatprep.subr.mxu0 0.0
      %1354 = vmatpush1.msra.mxu0 0.0
      %1355 = vmatprep.subr.mxu0 0.0
      %1356 = vmatpush1.msra.mxu0 0.0
      %1357 = vmatprep.subr.mxu0 0.0
      %1358 = vmatpush1.msra.mxu0 0.0
      %1359 = vmatprep.subr.mxu0 0.0
      %1360 = vmatpush1.msra.mxu0 0.0
      %1361 = vmatprep.subr.mxu0 0.0
      %1362 = vmatpush1.msra.mxu0 0.0
      %1363 = vmatprep.subr.mxu0 0.0
      %1364 = vmatpush1.msra.mxu0 0.0
      %1365 = vmatprep.subr.mxu0 0.0
      %1366 = vmatpush1.msra.mxu0 0.0
      %1367 = vmatprep.subr.mxu0 0.0
      %1368 = vmatpush1.msra.mxu0 0.0
      %1369 = vmatprep.subr.mxu0 0.0
      %1370 = vmatpush1.msra.mxu0 0.0
      %1371 = vmatprep.subr.mxu0 0.0
      %1372 = vmatpush1.msra.mxu0 0.0
      %1373 = vmatprep.subr.mxu0 0.0
      %1374 = vmatpush1.msra.mxu0 0.0
      %1375 = vmatprep.subr.mxu0 0.0
      %1376 = vmatpush1.msra.mxu0 0.0
      %1377 = vmatprep.subr.mxu0 0.0
      %1378 = vmatpush1.msra.mxu0 0.0
      %1379 = vmatprep.subr.mxu0 0.0
      %1380 = vmatpush1.msra.mxu0 0.0
      %1381 = vmatprep.subr.mxu0 0.0
      %1382 = vmatpush1.msra.mxu0 %v1347
      %1383 = vmatprep.subr.mxu0 0.0
      %1384 = vmatpush1.msra.mxu0 %v1345
      %1385 = vmatprep.subr.mxu0 0.0
      %1386 = vmatpush2.msra.mxu0 0.0
      %1387 = vmatprep.subr.mxu0 0.0
      %1388 = vmatpush2.msra.mxu0 0.0
      %1389 = vmatprep.subr.mxu0 0.0
      %1390 = vmatpush2.msra.mxu0 0.0
      %1391 = vmatprep.subr.mxu0 0.0
      %1392 = vmatpush2.msra.mxu0 0.0
      %1393 = vmatprep.subr.mxu0 0.0
      %1394 = vmatpush2.msra.mxu0 0.0
      %1395 = vmatprep.subr.mxu0 0.0
      %1396 = vmatpush2.msra.mxu0 0.0
      %1397 = vmatprep.subr.mxu0 0.0
      %1398 = vmatpush2.msra.mxu0 0.0
      %1399 = vmatprep.subr.mxu0 0.0
      %1400 = vmatpush2.msra.mxu0 0.0
      %1401 = vmatprep.subr.mxu0 0.0
      %1402 = vmatpush2.msra.mxu0 0.0
      %1403 = vmatprep.subr.mxu0 0.0
      %1404 = vmatpush2.msra.mxu0 0.0
      %1405 = vmatprep.subr.mxu0 0.0
      %1406 = vmatpush2.msra.mxu0 0.0
      %1407 = vmatprep.subr.mxu0 0.0
      %1408 = vmatpush2.msra.mxu0 0.0
      %1409 = vmatprep.subr.mxu0 0.0
      %1410 = vmatpush2.msra.mxu0 0.0
      %1411 = vmatprep.subr.mxu0 0.0
      %1412 = vmatpush2.msra.mxu0 0.0
      %1413 = vmatprep.subr.mxu0 0.0
      %1414 = vmatpush2.msra.mxu0 0.0
      %1415 = vmatprep.subr.mxu0 0.0
      %1416 = vmatpush2.msra.mxu0 0.0
      %1417 = vmatprep.mubr.f32.mxu0 0.0
      %1418 = vmatmul.mubr.f32.gmra.mxu0 %v1351
      %v1419 = vpop.f32.mrf.mxu0
      %v1420 = vadd.f32 %v1341, %v1419
      %v1421 = vpop.f32.mrf.mxu0
      %1422 = vdwg.mxu0
      %v1423 = vadd.f32 %v1263, %v1420
      %s1424 = scalar_lea.vmem %s2, 48
      %v1425 = vld [vmem:[%s1424] sm:$0xff]
      %s1426 = scalar_lea.vmem %s3, 48
      %v1427 = vld [vmem:[%s1426] sm:$0xff]
      %1428 = vrot.lane.b32.xlu0 %v472, 108
      %v1429 = vpop.permute.xlu0 %1428
      %v1432 = vsel %vm473, %v1427, 0
      %1434 = vmatprep.subr.mxu0 0.0
      %1435 = vmatpush1.msra.mxu0 0.0
      %1436 = vmatprep.subr.mxu0 0.0
      %1437 = vmatpush1.msra.mxu0 0.0
      %1438 = vmatprep.subr.mxu0 0.0
      %1439 = vmatpush1.msra.mxu0 0.0
      %1440 = vmatprep.subr.mxu0 0.0
      %1441 = vmatpush1.msra.mxu0 0.0
      %1442 = vmatprep.subr.mxu0 0.0
      %1443 = vmatpush1.msra.mxu0 0.0
      %1444 = vmatprep.subr.mxu0 0.0
      %1445 = vmatpush1.msra.mxu0 0.0
      %1446 = vmatprep.subr.mxu0 0.0
      %1447 = vmatpush1.msra.mxu0 0.0
      %1448 = vmatprep.subr.mxu0 0.0
      %1449 = vmatpush1.msra.mxu0 0.0
      %1450 = vmatprep.subr.mxu0 0.0
      %1451 = vmatpush1.msra.mxu0 0.0
      %1452 = vmatprep.subr.mxu0 0.0
      %1453 = vmatpush1.msra.mxu0 0.0
      %1454 = vmatprep.subr.mxu0 0.0
      %1455 = vmatpush1.msra.mxu0 0.0
      %1456 = vmatprep.subr.mxu0 0.0
      %1457 = vmatpush1.msra.mxu0 0.0
      %1458 = vmatprep.subr.mxu0 0.0
      %1459 = vmatpush1.msra.mxu0 0.0
      %1460 = vmatprep.subr.mxu0 0.0
      %1461 = vmatpush1.msra.mxu0 0.0
      %1462 = vmatprep.subr.mxu0 0.0
      %1463 = vmatpush1.msra.mxu0 0.0
      %1464 = vmatprep.subr.mxu0 0.0
      %1465 = vmatpush1.msra.mxu0 %v1429
      %1466 = vmatprep.subr.mxu0 0.0
      %1467 = vmatpush2.msra.mxu0 0.0
      %1468 = vmatprep.subr.mxu0 0.0
      %1469 = vmatpush2.msra.mxu0 0.0
      %1470 = vmatprep.subr.mxu0 0.0
      %1471 = vmatpush2.msra.mxu0 0.0
      %1472 = vmatprep.subr.mxu0 0.0
      %1473 = vmatpush2.msra.mxu0 0.0
      %1474 = vmatprep.subr.mxu0 0.0
      %1475 = vmatpush2.msra.mxu0 0.0
      %1476 = vmatprep.subr.mxu0 0.0
      %1477 = vmatpush2.msra.mxu0 0.0
      %1478 = vmatprep.subr.mxu0 0.0
      %1479 = vmatpush2.msra.mxu0 0.0
      %1480 = vmatprep.subr.mxu0 0.0
      %1481 = vmatpush2.msra.mxu0 0.0
      %1482 = vmatprep.subr.mxu0 0.0
      %1483 = vmatpush2.msra.mxu0 0.0
      %1484 = vmatprep.subr.mxu0 0.0
      %1485 = vmatpush2.msra.mxu0 0.0
      %1486 = vmatprep.subr.mxu0 0.0
      %1487 = vmatpush2.msra.mxu0 0.0
      %1488 = vmatprep.subr.mxu0 0.0
      %1489 = vmatpush2.msra.mxu0 0.0
      %1490 = vmatprep.subr.mxu0 0.0
      %1491 = vmatpush2.msra.mxu0 0.0
      %1492 = vmatprep.subr.mxu0 0.0
      %1493 = vmatpush2.msra.mxu0 0.0
      %1494 = vmatprep.subr.mxu0 0.0
      %1495 = vmatpush2.msra.mxu0 0.0
      %1496 = vmatprep.subr.mxu0 0.0
      %1497 = vmatpush2.msra.mxu0 0.0
      %1498 = vmatprep.mubr.f32.mxu0 0.0
      %1499 = vmatmul.mubr.f32.gmra.mxu0 %v1432
      %v1500 = vpop.f32.mrf.mxu0
      %v1501 = vadd.f32 0.0, %v1500
      %v1502 = vpop.f32.mrf.mxu0
      %1503 = vdwg.mxu0
      %1504 = vrot.lane.b32.xlu0 %v469, 108
      %v1505 = vpop.permute.xlu0 %1504
      %1506 = vrot.lane.b32.xlu0 %v470, 108
      %v1507 = vpop.permute.xlu0 %1506
      %v1511 = vsel %vm547, %v1425, 0
      %1513 = vmatprep.subr.mxu0 0.0
      %1514 = vmatpush1.msra.mxu0 0.0
      %1515 = vmatprep.subr.mxu0 0.0
      %1516 = vmatpush1.msra.mxu0 0.0
      %1517 = vmatprep.subr.mxu0 0.0
      %1518 = vmatpush1.msra.mxu0 0.0
      %1519 = vmatprep.subr.mxu0 0.0
      %1520 = vmatpush1.msra.mxu0 0.0
      %1521 = vmatprep.subr.mxu0 0.0
      %1522 = vmatpush1.msra.mxu0 0.0
      %1523 = vmatprep.subr.mxu0 0.0
      %1524 = vmatpush1.msra.mxu0 0.0
      %1525 = vmatprep.subr.mxu0 0.0
      %1526 = vmatpush1.msra.mxu0 0.0
      %1527 = vmatprep.subr.mxu0 0.0
      %1528 = vmatpush1.msra.mxu0 0.0
      %1529 = vmatprep.subr.mxu0 0.0
      %1530 = vmatpush1.msra.mxu0 0.0
      %1531 = vmatprep.subr.mxu0 0.0
      %1532 = vmatpush1.msra.mxu0 0.0
      %1533 = vmatprep.subr.mxu0 0.0
      %1534 = vmatpush1.msra.mxu0 0.0
      %1535 = vmatprep.subr.mxu0 0.0
      %1536 = vmatpush1.msra.mxu0 0.0
      %1537 = vmatprep.subr.mxu0 0.0
      %1538 = vmatpush1.msra.mxu0 0.0
      %1539 = vmatprep.subr.mxu0 0.0
      %1540 = vmatpush1.msra.mxu0 0.0
      %1541 = vmatprep.subr.mxu0 0.0
      %1542 = vmatpush1.msra.mxu0 %v1507
      %1543 = vmatprep.subr.mxu0 0.0
      %1544 = vmatpush1.msra.mxu0 %v1505
      %1545 = vmatprep.subr.mxu0 0.0
      %1546 = vmatpush2.msra.mxu0 0.0
      %1547 = vmatprep.subr.mxu0 0.0
      %1548 = vmatpush2.msra.mxu0 0.0
      %1549 = vmatprep.subr.mxu0 0.0
      %1550 = vmatpush2.msra.mxu0 0.0
      %1551 = vmatprep.subr.mxu0 0.0
      %1552 = vmatpush2.msra.mxu0 0.0
      %1553 = vmatprep.subr.mxu0 0.0
      %1554 = vmatpush2.msra.mxu0 0.0
      %1555 = vmatprep.subr.mxu0 0.0
      %1556 = vmatpush2.msra.mxu0 0.0
      %1557 = vmatprep.subr.mxu0 0.0
      %1558 = vmatpush2.msra.mxu0 0.0
      %1559 = vmatprep.subr.mxu0 0.0
      %1560 = vmatpush2.msra.mxu0 0.0
      %1561 = vmatprep.subr.mxu0 0.0
      %1562 = vmatpush2.msra.mxu0 0.0
      %1563 = vmatprep.subr.mxu0 0.0
      %1564 = vmatpush2.msra.mxu0 0.0
      %1565 = vmatprep.subr.mxu0 0.0
      %1566 = vmatpush2.msra.mxu0 0.0
      %1567 = vmatprep.subr.mxu0 0.0
      %1568 = vmatpush2.msra.mxu0 0.0
      %1569 = vmatprep.subr.mxu0 0.0
      %1570 = vmatpush2.msra.mxu0 0.0
      %1571 = vmatprep.subr.mxu0 0.0
      %1572 = vmatpush2.msra.mxu0 0.0
      %1573 = vmatprep.subr.mxu0 0.0
      %1574 = vmatpush2.msra.mxu0 0.0
      %1575 = vmatprep.subr.mxu0 0.0
      %1576 = vmatpush2.msra.mxu0 0.0
      %1577 = vmatprep.mubr.f32.mxu0 0.0
      %1578 = vmatmul.mubr.f32.gmra.mxu0 %v1511
      %v1579 = vpop.f32.mrf.mxu0
      %v1580 = vadd.f32 %v1501, %v1579
      %v1581 = vpop.f32.mrf.mxu0
      %1582 = vdwg.mxu0
      %v1583 = vadd.f32 %v1423, %v1580
      %s1584 = scalar_lea.vmem %s2, 56
      %v1585 = vld [vmem:[%s1584] sm:$0xff]
      %s1586 = scalar_lea.vmem %s3, 56
      %v1587 = vld [vmem:[%s1586] sm:$0xff]
      %1588 = vrot.lane.b32.xlu0 %v472, 107
      %v1589 = vpop.permute.xlu0 %1588
      %v1592 = vsel %vm473, %v1587, 0
      %1594 = vmatprep.subr.mxu0 0.0
      %1595 = vmatpush1.msra.mxu0 0.0
      %1596 = vmatprep.subr.mxu0 0.0
      %1597 = vmatpush1.msra.mxu0 0.0
      %1598 = vmatprep.subr.mxu0 0.0
      %1599 = vmatpush1.msra.mxu0 0.0
      %1600 = vmatprep.subr.mxu0 0.0
      %1601 = vmatpush1.msra.mxu0 0.0
      %1602 = vmatprep.subr.mxu0 0.0
      %1603 = vmatpush1.msra.mxu0 0.0
      %1604 = vmatprep.subr.mxu0 0.0
      %1605 = vmatpush1.msra.mxu0 0.0
      %1606 = vmatprep.subr.mxu0 0.0
      %1607 = vmatpush1.msra.mxu0 0.0
      %1608 = vmatprep.subr.mxu0 0.0
      %1609 = vmatpush1.msra.mxu0 0.0
      %1610 = vmatprep.subr.mxu0 0.0
      %1611 = vmatpush1.msra.mxu0 0.0
      %1612 = vmatprep.subr.mxu0 0.0
      %1613 = vmatpush1.msra.mxu0 0.0
      %1614 = vmatprep.subr.mxu0 0.0
      %1615 = vmatpush1.msra.mxu0 0.0
      %1616 = vmatprep.subr.mxu0 0.0
      %1617 = vmatpush1.msra.mxu0 0.0
      %1618 = vmatprep.subr.mxu0 0.0
      %1619 = vmatpush1.msra.mxu0 0.0
      %1620 = vmatprep.subr.mxu0 0.0
      %1621 = vmatpush1.msra.mxu0 0.0
      %1622 = vmatprep.subr.mxu0 0.0
      %1623 = vmatpush1.msra.mxu0 0.0
      %1624 = vmatprep.subr.mxu0 0.0
      %1625 = vmatpush1.msra.mxu0 %v1589
      %1626 = vmatprep.subr.mxu0 0.0
      %1627 = vmatpush2.msra.mxu0 0.0
      %1628 = vmatprep.subr.mxu0 0.0
      %1629 = vmatpush2.msra.mxu0 0.0
      %1630 = vmatprep.subr.mxu0 0.0
      %1631 = vmatpush2.msra.mxu0 0.0
      %1632 = vmatprep.subr.mxu0 0.0
      %1633 = vmatpush2.msra.mxu0 0.0
      %1634 = vmatprep.subr.mxu0 0.0
      %1635 = vmatpush2.msra.mxu0 0.0
      %1636 = vmatprep.subr.mxu0 0.0
      %1637 = vmatpush2.msra.mxu0 0.0
      %1638 = vmatprep.subr.mxu0 0.0
      %1639 = vmatpush2.msra.mxu0 0.0
      %1640 = vmatprep.subr.mxu0 0.0
      %1641 = vmatpush2.msra.mxu0 0.0
      %1642 = vmatprep.subr.mxu0 0.0
      %1643 = vmatpush2.msra.mxu0 0.0
      %1644 = vmatprep.subr.mxu0 0.0
      %1645 = vmatpush2.msra.mxu0 0.0
      %1646 = vmatprep.subr.mxu0 0.0
      %1647 = vmatpush2.msra.mxu0 0.0
      %1648 = vmatprep.subr.mxu0 0.0
      %1649 = vmatpush2.msra.mxu0 0.0
      %1650 = vmatprep.subr.mxu0 0.0
      %1651 = vmatpush2.msra.mxu0 0.0
      %1652 = vmatprep.subr.mxu0 0.0
      %1653 = vmatpush2.msra.mxu0 0.0
      %1654 = vmatprep.subr.mxu0 0.0
      %1655 = vmatpush2.msra.mxu0 0.0
      %1656 = vmatprep.subr.mxu0 0.0
      %1657 = vmatpush2.msra.mxu0 0.0
      %1658 = vmatprep.mubr.f32.mxu0 0.0
      %1659 = vmatmul.mubr.f32.gmra.mxu0 %v1592
      %v1660 = vpop.f32.mrf.mxu0
      %v1661 = vadd.f32 0.0, %v1660
      %v1662 = vpop.f32.mrf.mxu0
      %1663 = vdwg.mxu0
      %1664 = vrot.lane.b32.xlu0 %v469, 107
      %v1665 = vpop.permute.xlu0 %1664
      %1666 = vrot.lane.b32.xlu0 %v470, 107
      %v1667 = vpop.permute.xlu0 %1666
      %v1671 = vsel %vm547, %v1585, 0
      %1673 = vmatprep.subr.mxu0 0.0
      %1674 = vmatpush1.msra.mxu0 0.0
      %1675 = vmatprep.subr.mxu0 0.0
      %1676 = vmatpush1.msra.mxu0 0.0
      %1677 = vmatprep.subr.mxu0 0.0
      %1678 = vmatpush1.msra.mxu0 0.0
      %1679 = vmatprep.subr.mxu0 0.0
      %1680 = vmatpush1.msra.mxu0 0.0
      %1681 = vmatprep.subr.mxu0 0.0
      %1682 = vmatpush1.msra.mxu0 0.0
      %1683 = vmatprep.subr.mxu0 0.0
      %1684 = vmatpush1.msra.mxu0 0.0
      %1685 = vmatprep.subr.mxu0 0.0
      %1686 = vmatpush1.msra.mxu0 0.0
      %1687 = vmatprep.subr.mxu0 0.0
      %1688 = vmatpush1.msra.mxu0 0.0
      %1689 = vmatprep.subr.mxu0 0.0
      %1690 = vmatpush1.msra.mxu0 0.0
      %1691 = vmatprep.subr.mxu0 0.0
      %1692 = vmatpush1.msra.mxu0 0.0
      %1693 = vmatprep.subr.mxu0 0.0
      %1694 = vmatpush1.msra.mxu0 0.0
      %1695 = vmatprep.subr.mxu0 0.0
      %1696 = vmatpush1.msra.mxu0 0.0
      %1697 = vmatprep.subr.mxu0 0.0
      %1698 = vmatpush1.msra.mxu0 0.0
      %1699 = vmatprep.subr.mxu0 0.0
      %1700 = vmatpush1.msra.mxu0 0.0
      %1701 = vmatprep.subr.mxu0 0.0
      %1702 = vmatpush1.msra.mxu0 %v1667
      %1703 = vmatprep.subr.mxu0 0.0
      %1704 = vmatpush1.msra.mxu0 %v1665
      %1705 = vmatprep.subr.mxu0 0.0
      %1706 = vmatpush2.msra.mxu0 0.0
      %1707 = vmatprep.subr.mxu0 0.0
      %1708 = vmatpush2.msra.mxu0 0.0
      %1709 = vmatprep.subr.mxu0 0.0
      %1710 = vmatpush2.msra.mxu0 0.0
      %1711 = vmatprep.subr.mxu0 0.0
      %1712 = vmatpush2.msra.mxu0 0.0
      %1713 = vmatprep.subr.mxu0 0.0
      %1714 = vmatpush2.msra.mxu0 0.0
      %1715 = vmatprep.subr.mxu0 0.0
      %1716 = vmatpush2.msra.mxu0 0.0
      %1717 = vmatprep.subr.mxu0 0.0
      %1718 = vmatpush2.msra.mxu0 0.0
      %1719 = vmatprep.subr.mxu0 0.0
      %1720 = vmatpush2.msra.mxu0 0.0
      %1721 = vmatprep.subr.mxu0 0.0
      %1722 = vmatpush2.msra.mxu0 0.0
      %1723 = vmatprep.subr.mxu0 0.0
      %1724 = vmatpush2.msra.mxu0 0.0
      %1725 = vmatprep.subr.mxu0 0.0
      %1726 = vmatpush2.msra.mxu0 0.0
      %1727 = vmatprep.subr.mxu0 0.0
      %1728 = vmatpush2.msra.mxu0 0.0
      %1729 = vmatprep.subr.mxu0 0.0
      %1730 = vmatpush2.msra.mxu0 0.0
      %1731 = vmatprep.subr.mxu0 0.0
      %1732 = vmatpush2.msra.mxu0 0.0
      %1733 = vmatprep.subr.mxu0 0.0
      %1734 = vmatpush2.msra.mxu0 0.0
      %1735 = vmatprep.subr.mxu0 0.0
      %1736 = vmatpush2.msra.mxu0 0.0
      %1737 = vmatprep.mubr.f32.mxu0 0.0
      %1738 = vmatmul.mubr.f32.gmra.mxu0 %v1671
      %v1739 = vpop.f32.mrf.mxu0
      %v1740 = vadd.f32 %v1661, %v1739
      %v1741 = vpop.f32.mrf.mxu0
      %1742 = vdwg.mxu0
      %v1743 = vadd.f32 %v1583, %v1740
      %s1744 = scalar_lea.vmem %s2, 64
      %v1745 = vld [vmem:[%s1744] sm:$0xff]
      %s1746 = scalar_lea.vmem %s3, 64
      %v1747 = vld [vmem:[%s1746] sm:$0xff]
      %1748 = vrot.lane.b32.xlu0 %v472, 106
      %v1749 = vpop.permute.xlu0 %1748
      %v1752 = vsel %vm473, %v1747, 0
      %1754 = vmatprep.subr.mxu0 0.0
      %1755 = vmatpush1.msra.mxu0 0.0
      %1756 = vmatprep.subr.mxu0 0.0
      %1757 = vmatpush1.msra.mxu0 0.0
      %1758 = vmatprep.subr.mxu0 0.0
      %1759 = vmatpush1.msra.mxu0 0.0
      %1760 = vmatprep.subr.mxu0 0.0
      %1761 = vmatpush1.msra.mxu0 0.0
      %1762 = vmatprep.subr.mxu0 0.0
      %1763 = vmatpush1.msra.mxu0 0.0
      %1764 = vmatprep.subr.mxu0 0.0
      %1765 = vmatpush1.msra.mxu0 0.0
      %1766 = vmatprep.subr.mxu0 0.0
      %1767 = vmatpush1.msra.mxu0 0.0
      %1768 = vmatprep.subr.mxu0 0.0
      %1769 = vmatpush1.msra.mxu0 0.0
      %1770 = vmatprep.subr.mxu0 0.0
      %1771 = vmatpush1.msra.mxu0 0.0
      %1772 = vmatprep.subr.mxu0 0.0
      %1773 = vmatpush1.msra.mxu0 0.0
      %1774 = vmatprep.subr.mxu0 0.0
      %1775 = vmatpush1.msra.mxu0 0.0
      %1776 = vmatprep.subr.mxu0 0.0
      %1777 = vmatpush1.msra.mxu0 0.0
      %1778 = vmatprep.subr.mxu0 0.0
      %1779 = vmatpush1.msra.mxu0 0.0
      %1780 = vmatprep.subr.mxu0 0.0
      %1781 = vmatpush1.msra.mxu0 0.0
      %1782 = vmatprep.subr.mxu0 0.0
      %1783 = vmatpush1.msra.mxu0 0.0
      %1784 = vmatprep.subr.mxu0 0.0
      %1785 = vmatpush1.msra.mxu0 %v1749
      %1786 = vmatprep.subr.mxu0 0.0
      %1787 = vmatpush2.msra.mxu0 0.0
      %1788 = vmatprep.subr.mxu0 0.0
      %1789 = vmatpush2.msra.mxu0 0.0
      %1790 = vmatprep.subr.mxu0 0.0
      %1791 = vmatpush2.msra.mxu0 0.0
      %1792 = vmatprep.subr.mxu0 0.0
      %1793 = vmatpush2.msra.mxu0 0.0
      %1794 = vmatprep.subr.mxu0 0.0
      %1795 = vmatpush2.msra.mxu0 0.0
      %1796 = vmatprep.subr.mxu0 0.0
      %1797 = vmatpush2.msra.mxu0 0.0
      %1798 = vmatprep.subr.mxu0 0.0
      %1799 = vmatpush2.msra.mxu0 0.0
      %1800 = vmatprep.subr.mxu0 0.0
      %1801 = vmatpush2.msra.mxu0 0.0
      %1802 = vmatprep.subr.mxu0 0.0
      %1803 = vmatpush2.msra.mxu0 0.0
      %1804 = vmatprep.subr.mxu0 0.0
      %1805 = vmatpush2.msra.mxu0 0.0
      %1806 = vmatprep.subr.mxu0 0.0
      %1807 = vmatpush2.msra.mxu0 0.0
      %1808 = vmatprep.subr.mxu0 0.0
      %1809 = vmatpush2.msra.mxu0 0.0
      %1810 = vmatprep.subr.mxu0 0.0
      %1811 = vmatpush2.msra.mxu0 0.0
      %1812 = vmatprep.subr.mxu0 0.0
      %1813 = vmatpush2.msra.mxu0 0.0
      %1814 = vmatprep.subr.mxu0 0.0
      %1815 = vmatpush2.msra.mxu0 0.0
      %1816 = vmatprep.subr.mxu0 0.0
      %1817 = vmatpush2.msra.mxu0 0.0
      %1818 = vmatprep.mubr.f32.mxu0 0.0
      %1819 = vmatmul.mubr.f32.gmra.mxu0 %v1752
      %v1820 = vpop.f32.mrf.mxu0
      %v1821 = vadd.f32 0.0, %v1820
      %v1822 = vpop.f32.mrf.mxu0
      %1823 = vdwg.mxu0
      %1824 = vrot.lane.b32.xlu0 %v469, 106
      %v1825 = vpop.permute.xlu0 %1824
      %1826 = vrot.lane.b32.xlu0 %v470, 106
      %v1827 = vpop.permute.xlu0 %1826
      %v1831 = vsel %vm547, %v1745, 0
      %1833 = vmatprep.subr.mxu0 0.0
      %1834 = vmatpush1.msra.mxu0 0.0
      %1835 = vmatprep.subr.mxu0 0.0
      %1836 = vmatpush1.msra.mxu0 0.0
      %1837 = vmatprep.subr.mxu0 0.0
      %1838 = vmatpush1.msra.mxu0 0.0
      %1839 = vmatprep.subr.mxu0 0.0
      %1840 = vmatpush1.msra.mxu0 0.0
      %1841 = vmatprep.subr.mxu0 0.0
      %1842 = vmatpush1.msra.mxu0 0.0
      %1843 = vmatprep.subr.mxu0 0.0
      %1844 = vmatpush1.msra.mxu0 0.0
      %1845 = vmatprep.subr.mxu0 0.0
      %1846 = vmatpush1.msra.mxu0 0.0
      %1847 = vmatprep.subr.mxu0 0.0
      %1848 = vmatpush1.msra.mxu0 0.0
      %1849 = vmatprep.subr.mxu0 0.0
      %1850 = vmatpush1.msra.mxu0 0.0
      %1851 = vmatprep.subr.mxu0 0.0
      %1852 = vmatpush1.msra.mxu0 0.0
      %1853 = vmatprep.subr.mxu0 0.0
      %1854 = vmatpush1.msra.mxu0 0.0
      %1855 = vmatprep.subr.mxu0 0.0
      %1856 = vmatpush1.msra.mxu0 0.0
      %1857 = vmatprep.subr.mxu0 0.0
      %1858 = vmatpush1.msra.mxu0 0.0
      %1859 = vmatprep.subr.mxu0 0.0
      %1860 = vmatpush1.msra.mxu0 0.0
      %1861 = vmatprep.subr.mxu0 0.0
      %1862 = vmatpush1.msra.mxu0 %v1827
      %1863 = vmatprep.subr.mxu0 0.0
      %1864 = vmatpush1.msra.mxu0 %v1825
      %1865 = vmatprep.subr.mxu0 0.0
      %1866 = vmatpush2.msra.mxu0 0.0
      %1867 = vmatprep.subr.mxu0 0.0
      %1868 = vmatpush2.msra.mxu0 0.0
      %1869 = vmatprep.subr.mxu0 0.0
      %1870 = vmatpush2.msra.mxu0 0.0
      %1871 = vmatprep.subr.mxu0 0.0
      %1872 = vmatpush2.msra.mxu0 0.0
      %1873 = vmatprep.subr.mxu0 0.0
      %1874 = vmatpush2.msra.mxu0 0.0
      %1875 = vmatprep.subr.mxu0 0.0
      %1876 = vmatpush2.msra.mxu0 0.0
      %1877 = vmatprep.subr.mxu0 0.0
      %1878 = vmatpush2.msra.mxu0 0.0
      %1879 = vmatprep.subr.mxu0 0.0
      %1880 = vmatpush2.msra.mxu0 0.0
      %1881 = vmatprep.subr.mxu0 0.0
      %1882 = vmatpush2.msra.mxu0 0.0
      %1883 = vmatprep.subr.mxu0 0.0
      %1884 = vmatpush2.msra.mxu0 0.0
      %1885 = vmatprep.subr.mxu0 0.0
      %1886 = vmatpush2.msra.mxu0 0.0
      %1887 = vmatprep.subr.mxu0 0.0
      %1888 = vmatpush2.msra.mxu0 0.0
      %1889 = vmatprep.subr.mxu0 0.0
      %1890 = vmatpush2.msra.mxu0 0.0
      %1891 = vmatprep.subr.mxu0 0.0
      %1892 = vmatpush2.msra.mxu0 0.0
      %1893 = vmatprep.subr.mxu0 0.0
      %1894 = vmatpush2.msra.mxu0 0.0
      %1895 = vmatprep.subr.mxu0 0.0
      %1896 = vmatpush2.msra.mxu0 0.0
      %1897 = vmatprep.mubr.f32.mxu0 0.0
      %1898 = vmatmul.mubr.f32.gmra.mxu0 %v1831
      %v1899 = vpop.f32.mrf.mxu0
      %v1900 = vadd.f32 %v1821, %v1899
      %v1901 = vpop.f32.mrf.mxu0
      %1902 = vdwg.mxu0
      %v1903 = vadd.f32 %v1743, %v1900
      %v1904 = vld [vmem:[%s4] sm:$0xff]
      %1906 = vset.pattern.permute.xlu0 0
      %1907 = vperm.xlu0 %1906, %v1904
      %v1908 = vpop.permute.xlu0 %1907
      %v1910 = vadd.f32 %v1903, %v1908
      %v1911 = vmax.f32 %v1910, 0.0
      %v1913 = vlaneseq
      %v1914 = vshrl.u32 %v1913, 7
      %v1915 = vsub.s32 0, %v1914
      %v1916 = vrot.slane %v467, %v1915
      %v1918 = vmul.f32 %v1911, %v1916
      %vm1919 = vcmask 89088
      %1920 = vst.msk [vmem:[#allocation2] sm:$0xff] %vm1919, 0.0
      %vm1921 = vcmask 818888
      %1922 = vst.msk [vmem:[#allocation2] sm:$0xff] %vm1921, 0.0
      %1924 = vrot.lane.b32.xlu0 %v1918, 11
      %v1925 = vpop.permute.xlu0 %1924
      %vm1927 = vcmask 728152
      %1928 = vst.msk [vmem:[#allocation2] sm:$0xff] %vm1927, %v1925
      %v1929 = vld [vmem:[%s5] sm:$0xff]
      %v1930 = vld [vmem:[#allocation2] sm:$0xff]
      %s1931 = scalar_lea.vmem %s5, 8
      %v1932 = vld [vmem:[%s1931] sm:$0xff]
      %1934 = vrot.lane.b32.xlu0 %v1930, 127
      %v1935 = vpop.permute.xlu0 %1934
      %v1938 = vsel %vm473, %v1932, 0
      %1940 = vmatprep.subr.mxu0 0.0
      %1941 = vmatpush1.msra.mxu0 0.0
      %1942 = vmatprep.subr.mxu0 0.0
      %1943 = vmatpush1.msra.mxu0 0.0
      %1944 = vmatprep.subr.mxu0 0.0
      %1945 = vmatpush1.msra.mxu0 0.0
      %1946 = vmatprep.subr.mxu0 0.0
      %1947 = vmatpush1.msra.mxu0 0.0
      %1948 = vmatprep.subr.mxu0 0.0
      %1949 = vmatpush1.msra.mxu0 0.0
      %1950 = vmatprep.subr.mxu0 0.0
      %1951 = vmatpush1.msra.mxu0 0.0
      %1952 = vmatprep.subr.mxu0 0.0
      %1953 = vmatpush1.msra.mxu0 0.0
      %1954 = vmatprep.subr.mxu0 0.0
      %1955 = vmatpush1.msra.mxu0 0.0
      %1956 = vmatprep.subr.mxu0 0.0
      %1957 = vmatpush1.msra.mxu0 0.0
      %1958 = vmatprep.subr.mxu0 0.0
      %1959 = vmatpush1.msra.mxu0 0.0
      %1960 = vmatprep.subr.mxu0 0.0
      %1961 = vmatpush1.msra.mxu0 0.0
      %1962 = vmatprep.subr.mxu0 0.0
      %1963 = vmatpush1.msra.mxu0 0.0
      %1964 = vmatprep.subr.mxu0 0.0
      %1965 = vmatpush1.msra.mxu0 0.0
      %1966 = vmatprep.subr.mxu0 0.0
      %1967 = vmatpush1.msra.mxu0 0.0
      %1968 = vmatprep.subr.mxu0 0.0
      %1969 = vmatpush1.msra.mxu0 0.0
      %1970 = vmatprep.subr.mxu0 0.0
      %1971 = vmatpush1.msra.mxu0 %v1935
      %1972 = vmatprep.subr.mxu0 0.0
      %1973 = vmatpush2.msra.mxu0 0.0
      %1974 = vmatprep.subr.mxu0 0.0
      %1975 = vmatpush2.msra.mxu0 0.0
      %1976 = vmatprep.subr.mxu0 0.0
      %1977 = vmatpush2.msra.mxu0 0.0
      %1978 = vmatprep.subr.mxu0 0.0
      %1979 = vmatpush2.msra.mxu0 0.0
      %1980 = vmatprep.subr.mxu0 0.0
      %1981 = vmatpush2.msra.mxu0 0.0
      %1982 = vmatprep.subr.mxu0 0.0
      %1983 = vmatpush2.msra.mxu0 0.0
      %1984 = vmatprep.subr.mxu0 0.0
      %1985 = vmatpush2.msra.mxu0 0.0
      %1986 = vmatprep.subr.mxu0 0.0
      %1987 = vmatpush2.msra.mxu0 0.0
      %1988 = vmatprep.subr.mxu0 0.0
      %1989 = vmatpush2.msra.mxu0 0.0
      %1990 = vmatprep.subr.mxu0 0.0
      %1991 = vmatpush2.msra.mxu0 0.0
      %1992 = vmatprep.subr.mxu0 0.0
      %1993 = vmatpush2.msra.mxu0 0.0
      %1994 = vmatprep.subr.mxu0 0.0
      %1995 = vmatpush2.msra.mxu0 0.0
      %1996 = vmatprep.subr.mxu0 0.0
      %1997 = vmatpush2.msra.mxu0 0.0
      %1998 = vmatprep.subr.mxu0 0.0
      %1999 = vmatpush2.msra.mxu0 0.0
      %2000 = vmatprep.subr.mxu0 0.0
      %2001 = vmatpush2.msra.mxu0 0.0
      %2002 = vmatprep.subr.mxu0 0.0
      %2003 = vmatpush2.msra.mxu0 0.0
      %2004 = vmatprep.mubr.f32.mxu0 0.0
      %2005 = vmatmul.mubr.f32.gmra.mxu0 %v1938
      %v2006 = vpop.f32.mrf.mxu0
      %v2007 = vadd.f32 0.0, %v2006
      %v2008 = vpop.f32.mrf.mxu0
      %2009 = vdwg.mxu0
      %v2011 = vsel %vm473, %v1929, 0
      %2013 = vmatprep.subr.mxu0 0.0
      %2014 = vmatpush1.msra.mxu0 0.0
      %2015 = vmatprep.subr.mxu0 0.0
      %2016 = vmatpush1.msra.mxu0 0.0
      %2017 = vmatprep.subr.mxu0 0.0
      %2018 = vmatpush1.msra.mxu0 0.0
      %2019 = vmatprep.subr.mxu0 0.0
      %2020 = vmatpush1.msra.mxu0 0.0
      %2021 = vmatprep.subr.mxu0 0.0
      %2022 = vmatpush1.msra.mxu0 0.0
      %2023 = vmatprep.subr.mxu0 0.0
      %2024 = vmatpush1.msra.mxu0 0.0
      %2025 = vmatprep.subr.mxu0 0.0
      %2026 = vmatpush1.msra.mxu0 0.0
      %2027 = vmatprep.subr.mxu0 0.0
      %2028 = vmatpush1.msra.mxu0 0.0
      %2029 = vmatprep.subr.mxu0 0.0
      %2030 = vmatpush1.msra.mxu0 0.0
      %2031 = vmatprep.subr.mxu0 0.0
      %2032 = vmatpush1.msra.mxu0 0.0
      %2033 = vmatprep.subr.mxu0 0.0
      %2034 = vmatpush1.msra.mxu0 0.0
      %2035 = vmatprep.subr.mxu0 0.0
      %2036 = vmatpush1.msra.mxu0 0.0
      %2037 = vmatprep.subr.mxu0 0.0
      %2038 = vmatpush1.msra.mxu0 0.0
      %2039 = vmatprep.subr.mxu0 0.0
      %2040 = vmatpush1.msra.mxu0 0.0
      %2041 = vmatprep.subr.mxu0 0.0
      %2042 = vmatpush1.msra.mxu0 0.0
      %2043 = vmatprep.subr.mxu0 0.0
      %2044 = vmatpush1.msra.mxu0 %v1930
      %2045 = vmatprep.subr.mxu0 0.0
      %2046 = vmatpush2.msra.mxu0 0.0
      %2047 = vmatprep.subr.mxu0 0.0
      %2048 = vmatpush2.msra.mxu0 0.0
      %2049 = vmatprep.subr.mxu0 0.0
      %2050 = vmatpush2.msra.mxu0 0.0
      %2051 = vmatprep.subr.mxu0 0.0
      %2052 = vmatpush2.msra.mxu0 0.0
      %2053 = vmatprep.subr.mxu0 0.0
      %2054 = vmatpush2.msra.mxu0 0.0
      %2055 = vmatprep.subr.mxu0 0.0
      %2056 = vmatpush2.msra.mxu0 0.0
      %2057 = vmatprep.subr.mxu0 0.0
      %2058 = vmatpush2.msra.mxu0 0.0
      %2059 = vmatprep.subr.mxu0 0.0
      %2060 = vmatpush2.msra.mxu0 0.0
      %2061 = vmatprep.subr.mxu0 0.0
      %2062 = vmatpush2.msra.mxu0 0.0
      %2063 = vmatprep.subr.mxu0 0.0
      %2064 = vmatpush2.msra.mxu0 0.0
      %2065 = vmatprep.subr.mxu0 0.0
      %2066 = vmatpush2.msra.mxu0 0.0
      %2067 = vmatprep.subr.mxu0 0.0
      %2068 = vmatpush2.msra.mxu0 0.0
      %2069 = vmatprep.subr.mxu0 0.0
      %2070 = vmatpush2.msra.mxu0 0.0
      %2071 = vmatprep.subr.mxu0 0.0
      %2072 = vmatpush2.msra.mxu0 0.0
      %2073 = vmatprep.subr.mxu0 0.0
      %2074 = vmatpush2.msra.mxu0 0.0
      %2075 = vmatprep.subr.mxu0 0.0
      %2076 = vmatpush2.msra.mxu0 0.0
      %2077 = vmatprep.mubr.f32.mxu0 0.0
      %2078 = vmatmul.mubr.f32.gmra.mxu0 %v2011
      %v2079 = vpop.f32.mrf.mxu0
      %v2080 = vadd.f32 %v2007, %v2079
      %v2081 = vpop.f32.mrf.mxu0
      %2082 = vdwg.mxu0
      %s2083 = scalar_lea.vmem %s5, 16
      %v2084 = vld [vmem:[%s2083] sm:$0xff]
      %2085 = vrot.lane.b32.xlu0 %v1930, 126
      %v2086 = vpop.permute.xlu0 %2085
      %v2089 = vsel %vm473, %v2084, 0
      %2091 = vmatprep.subr.mxu0 0.0
      %2092 = vmatpush1.msra.mxu0 0.0
      %2093 = vmatprep.subr.mxu0 0.0
      %2094 = vmatpush1.msra.mxu0 0.0
      %2095 = vmatprep.subr.mxu0 0.0
      %2096 = vmatpush1.msra.mxu0 0.0
      %2097 = vmatprep.subr.mxu0 0.0
      %2098 = vmatpush1.msra.mxu0 0.0
      %2099 = vmatprep.subr.mxu0 0.0
      %2100 = vmatpush1.msra.mxu0 0.0
      %2101 = vmatprep.subr.mxu0 0.0
      %2102 = vmatpush1.msra.mxu0 0.0
      %2103 = vmatprep.subr.mxu0 0.0
      %2104 = vmatpush1.msra.mxu0 0.0
      %2105 = vmatprep.subr.mxu0 0.0
      %2106 = vmatpush1.msra.mxu0 0.0
      %2107 = vmatprep.subr.mxu0 0.0
      %2108 = vmatpush1.msra.mxu0 0.0
      %2109 = vmatprep.subr.mxu0 0.0
      %2110 = vmatpush1.msra.mxu0 0.0
      %2111 = vmatprep.subr.mxu0 0.0
      %2112 = vmatpush1.msra.mxu0 0.0
      %2113 = vmatprep.subr.mxu0 0.0
      %2114 = vmatpush1.msra.mxu0 0.0
      %2115 = vmatprep.subr.mxu0 0.0
      %2116 = vmatpush1.msra.mxu0 0.0
      %2117 = vmatprep.subr.mxu0 0.0
      %2118 = vmatpush1.msra.mxu0 0.0
      %2119 = vmatprep.subr.mxu0 0.0
      %2120 = vmatpush1.msra.mxu0 0.0
      %2121 = vmatprep.subr.mxu0 0.0
      %2122 = vmatpush1.msra.mxu0 %v2086
      %2123 = vmatprep.subr.mxu0 0.0
      %2124 = vmatpush2.msra.mxu0 0.0
      %2125 = vmatprep.subr.mxu0 0.0
      %2126 = vmatpush2.msra.mxu0 0.0
      %2127 = vmatprep.subr.mxu0 0.0
      %2128 = vmatpush2.msra.mxu0 0.0
      %2129 = vmatprep.subr.mxu0 0.0
      %2130 = vmatpush2.msra.mxu0 0.0
      %2131 = vmatprep.subr.mxu0 0.0
      %2132 = vmatpush2.msra.mxu0 0.0
      %2133 = vmatprep.subr.mxu0 0.0
      %2134 = vmatpush2.msra.mxu0 0.0
      %2135 = vmatprep.subr.mxu0 0.0
      %2136 = vmatpush2.msra.mxu0 0.0
      %2137 = vmatprep.subr.mxu0 0.0
      %2138 = vmatpush2.msra.mxu0 0.0
      %2139 = vmatprep.subr.mxu0 0.0
      %2140 = vmatpush2.msra.mxu0 0.0
      %2141 = vmatprep.subr.mxu0 0.0
      %2142 = vmatpush2.msra.mxu0 0.0
      %2143 = vmatprep.subr.mxu0 0.0
      %2144 = vmatpush2.msra.mxu0 0.0
      %2145 = vmatprep.subr.mxu0 0.0
      %2146 = vmatpush2.msra.mxu0 0.0
      %2147 = vmatprep.subr.mxu0 0.0
      %2148 = vmatpush2.msra.mxu0 0.0
      %2149 = vmatprep.subr.mxu0 0.0
      %2150 = vmatpush2.msra.mxu0 0.0
      %2151 = vmatprep.subr.mxu0 0.0
      %2152 = vmatpush2.msra.mxu0 0.0
      %2153 = vmatprep.subr.mxu0 0.0
      %2154 = vmatpush2.msra.mxu0 0.0
      %2155 = vmatprep.mubr.f32.mxu0 0.0
      %2156 = vmatmul.mubr.f32.gmra.mxu0 %v2089
      %v2157 = vpop.f32.mrf.mxu0
      %v2158 = vadd.f32 0.0, %v2157
      %v2159 = vpop.f32.mrf.mxu0
      %2160 = vdwg.mxu0
      %v2161 = vadd.f32 %v2080, %v2158
      %s2162 = scalar_lea.vmem %s5, 24
      %v2163 = vld [vmem:[%s2162] sm:$0xff]
      %2164 = vrot.lane.b32.xlu0 %v1930, 118
      %v2165 = vpop.permute.xlu0 %2164
      %v2168 = vsel %vm473, %v2163, 0
      %2170 = vmatprep.subr.mxu0 0.0
      %2171 = vmatpush1.msra.mxu0 0.0
      %2172 = vmatprep.subr.mxu0 0.0
      %2173 = vmatpush1.msra.mxu0 0.0
      %2174 = vmatprep.subr.mxu0 0.0
      %2175 = vmatpush1.msra.mxu0 0.0
      %2176 = vmatprep.subr.mxu0 0.0
      %2177 = vmatpush1.msra.mxu0 0.0
      %2178 = vmatprep.subr.mxu0 0.0
      %2179 = vmatpush1.msra.mxu0 0.0
      %2180 = vmatprep.subr.mxu0 0.0
      %2181 = vmatpush1.msra.mxu0 0.0
      %2182 = vmatprep.subr.mxu0 0.0
      %2183 = vmatpush1.msra.mxu0 0.0
      %2184 = vmatprep.subr.mxu0 0.0
      %2185 = vmatpush1.msra.mxu0 0.0
      %2186 = vmatprep.subr.mxu0 0.0
      %2187 = vmatpush1.msra.mxu0 0.0
      %2188 = vmatprep.subr.mxu0 0.0
      %2189 = vmatpush1.msra.mxu0 0.0
      %2190 = vmatprep.subr.mxu0 0.0
      %2191 = vmatpush1.msra.mxu0 0.0
      %2192 = vmatprep.subr.mxu0 0.0
      %2193 = vmatpush1.msra.mxu0 0.0
      %2194 = vmatprep.subr.mxu0 0.0
      %2195 = vmatpush1.msra.mxu0 0.0
      %2196 = vmatprep.subr.mxu0 0.0
      %2197 = vmatpush1.msra.mxu0 0.0
      %2198 = vmatprep.subr.mxu0 0.0
      %2199 = vmatpush1.msra.mxu0 0.0
      %2200 = vmatprep.subr.mxu0 0.0
      %2201 = vmatpush1.msra.mxu0 %v2165
      %2202 = vmatprep.subr.mxu0 0.0
      %2203 = vmatpush2.msra.mxu0 0.0
      %2204 = vmatprep.subr.mxu0 0.0
      %2205 = vmatpush2.msra.mxu0 0.0
      %2206 = vmatprep.subr.mxu0 0.0
      %2207 = vmatpush2.msra.mxu0 0.0
      %2208 = vmatprep.subr.mxu0 0.0
      %2209 = vmatpush2.msra.mxu0 0.0
      %2210 = vmatprep.subr.mxu0 0.0
      %2211 = vmatpush2.msra.mxu0 0.0
      %2212 = vmatprep.subr.mxu0 0.0
      %2213 = vmatpush2.msra.mxu0 0.0
      %2214 = vmatprep.subr.mxu0 0.0
      %2215 = vmatpush2.msra.mxu0 0.0
      %2216 = vmatprep.subr.mxu0 0.0
      %2217 = vmatpush2.msra.mxu0 0.0
      %2218 = vmatprep.subr.mxu0 0.0
      %2219 = vmatpush2.msra.mxu0 0.0
      %2220 = vmatprep.subr.mxu0 0.0
      %2221 = vmatpush2.msra.mxu0 0.0
      %2222 = vmatprep.subr.mxu0 0.0
      %2223 = vmatpush2.msra.mxu0 0.0
      %2224 = vmatprep.subr.mxu0 0.0
      %2225 = vmatpush2.msra.mxu0 0.0
      %2226 = vmatprep.subr.mxu0 0.0
      %2227 = vmatpush2.msra.mxu0 0.0
      %2228 = vmatprep.subr.mxu0 0.0
      %2229 = vmatpush2.msra.mxu0 0.0
      %2230 = vmatprep.subr.mxu0 0.0
      %2231 = vmatpush2.msra.mxu0 0.0
      %2232 = vmatprep.subr.mxu0 0.0
      %2233 = vmatpush2.msra.mxu0 0.0
      %2234 = vmatprep.mubr.f32.mxu0 0.0
      %2235 = vmatmul.mubr.f32.gmra.mxu0 %v2168
      %v2236 = vpop.f32.mrf.mxu0
      %v2237 = vadd.f32 0.0, %v2236
      %v2238 = vpop.f32.mrf.mxu0
      %2239 = vdwg.mxu0
      %v2240 = vadd.f32 %v2161, %v2237
      %s2241 = scalar_lea.vmem %s5, 32
      %v2242 = vld [vmem:[%s2241] sm:$0xff]
      %2243 = vrot.lane.b32.xlu0 %v1930, 117
      %v2244 = vpop.permute.xlu0 %2243
      %v2247 = vsel %vm473, %v2242, 0
      %2249 = vmatprep.subr.mxu0 0.0
      %2250 = vmatpush1.msra.mxu0 0.0
      %2251 = vmatprep.subr.mxu0 0.0
      %2252 = vmatpush1.msra.mxu0 0.0
      %2253 = vmatprep.subr.mxu0 0.0
      %2254 = vmatpush1.msra.mxu0 0.0
      %2255 = vmatprep.subr.mxu0 0.0
      %2256 = vmatpush1.msra.mxu0 0.0
      %2257 = vmatprep.subr.mxu0 0.0
      %2258 = vmatpush1.msra.mxu0 0.0
      %2259 = vmatprep.subr.mxu0 0.0
      %2260 = vmatpush1.msra.mxu0 0.0
      %2261 = vmatprep.subr.mxu0 0.0
      %2262 = vmatpush1.msra.mxu0 0.0
      %2263 = vmatprep.subr.mxu0 0.0
      %2264 = vmatpush1.msra.mxu0 0.0
      %2265 = vmatprep.subr.mxu0 0.0
      %2266 = vmatpush1.msra.mxu0 0.0
      %2267 = vmatprep.subr.mxu0 0.0
      %2268 = vmatpush1.msra.mxu0 0.0
      %2269 = vmatprep.subr.mxu0 0.0
      %2270 = vmatpush1.msra.mxu0 0.0
      %2271 = vmatprep.subr.mxu0 0.0
      %2272 = vmatpush1.msra.mxu0 0.0
      %2273 = vmatprep.subr.mxu0 0.0
      %2274 = vmatpush1.msra.mxu0 0.0
      %2275 = vmatprep.subr.mxu0 0.0
      %2276 = vmatpush1.msra.mxu0 0.0
      %2277 = vmatprep.subr.mxu0 0.0
      %2278 = vmatpush1.msra.mxu0 0.0
      %2279 = vmatprep.subr.mxu0 0.0
      %2280 = vmatpush1.msra.mxu0 %v2244
      %2281 = vmatprep.subr.mxu0 0.0
      %2282 = vmatpush2.msra.mxu0 0.0
      %2283 = vmatprep.subr.mxu0 0.0
      %2284 = vmatpush2.msra.mxu0 0.0
      %2285 = vmatprep.subr.mxu0 0.0
      %2286 = vmatpush2.msra.mxu0 0.0
      %2287 = vmatprep.subr.mxu0 0.0
      %2288 = vmatpush2.msra.mxu0 0.0
      %2289 = vmatprep.subr.mxu0 0.0
      %2290 = vmatpush2.msra.mxu0 0.0
      %2291 = vmatprep.subr.mxu0 0.0
      %2292 = vmatpush2.msra.mxu0 0.0
      %2293 = vmatprep.subr.mxu0 0.0
      %2294 = vmatpush2.msra.mxu0 0.0
      %2295 = vmatprep.subr.mxu0 0.0
      %2296 = vmatpush2.msra.mxu0 0.0
      %2297 = vmatprep.subr.mxu0 0.0
      %2298 = vmatpush2.msra.mxu0 0.0
      %2299 = vmatprep.subr.mxu0 0.0
      %2300 = vmatpush2.msra.mxu0 0.0
      %2301 = vmatprep.subr.mxu0 0.0
      %2302 = vmatpush2.msra.mxu0 0.0
      %2303 = vmatprep.subr.mxu0 0.0
      %2304 = vmatpush2.msra.mxu0 0.0
      %2305 = vmatprep.subr.mxu0 0.0
      %2306 = vmatpush2.msra.mxu0 0.0
      %2307 = vmatprep.subr.mxu0 0.0
      %2308 = vmatpush2.msra.mxu0 0.0
      %2309 = vmatprep.subr.mxu0 0.0
      %2310 = vmatpush2.msra.mxu0 0.0
      %2311 = vmatprep.subr.mxu0 0.0
      %2312 = vmatpush2.msra.mxu0 0.0
      %2313 = vmatprep.mubr.f32.mxu0 0.0
      %2314 = vmatmul.mubr.f32.gmra.mxu0 %v2247
      %v2315 = vpop.f32.mrf.mxu0
      %v2316 = vadd.f32 0.0, %v2315
      %v2317 = vpop.f32.mrf.mxu0
      %2318 = vdwg.mxu0
      %v2319 = vadd.f32 %v2240, %v2316
      %s2320 = scalar_lea.vmem %s5, 40
      %v2321 = vld [vmem:[%s2320] sm:$0xff]
      %2322 = vrot.lane.b32.xlu0 %v1930, 116
      %v2323 = vpop.permute.xlu0 %2322
      %v2326 = vsel %vm473, %v2321, 0
      %2328 = vmatprep.subr.mxu0 0.0
      %2329 = vmatpush1.msra.mxu0 0.0
      %2330 = vmatprep.subr.mxu0 0.0
      %2331 = vmatpush1.msra.mxu0 0.0
      %2332 = vmatprep.subr.mxu0 0.0
      %2333 = vmatpush1.msra.mxu0 0.0
      %2334 = vmatprep.subr.mxu0 0.0
      %2335 = vmatpush1.msra.mxu0 0.0
      %2336 = vmatprep.subr.mxu0 0.0
      %2337 = vmatpush1.msra.mxu0 0.0
      %2338 = vmatprep.subr.mxu0 0.0
      %2339 = vmatpush1.msra.mxu0 0.0
      %2340 = vmatprep.subr.mxu0 0.0
      %2341 = vmatpush1.msra.mxu0 0.0
      %2342 = vmatprep.subr.mxu0 0.0
      %2343 = vmatpush1.msra.mxu0 0.0
      %2344 = vmatprep.subr.mxu0 0.0
      %2345 = vmatpush1.msra.mxu0 0.0
      %2346 = vmatprep.subr.mxu0 0.0
      %2347 = vmatpush1.msra.mxu0 0.0
      %2348 = vmatprep.subr.mxu0 0.0
      %2349 = vmatpush1.msra.mxu0 0.0
      %2350 = vmatprep.subr.mxu0 0.0
      %2351 = vmatpush1.msra.mxu0 0.0
      %2352 = vmatprep.subr.mxu0 0.0
      %2353 = vmatpush1.msra.mxu0 0.0
      %2354 = vmatprep.subr.mxu0 0.0
      %2355 = vmatpush1.msra.mxu0 0.0
      %2356 = vmatprep.subr.mxu0 0.0
      %2357 = vmatpush1.msra.mxu0 0.0
      %2358 = vmatprep.subr.mxu0 0.0
      %2359 = vmatpush1.msra.mxu0 %v2323
      %2360 = vmatprep.subr.mxu0 0.0
      %2361 = vmatpush2.msra.mxu0 0.0
      %2362 = vmatprep.subr.mxu0 0.0
      %2363 = vmatpush2.msra.mxu0 0.0
      %2364 = vmatprep.subr.mxu0 0.0
      %2365 = vmatpush2.msra.mxu0 0.0
      %2366 = vmatprep.subr.mxu0 0.0
      %2367 = vmatpush2.msra.mxu0 0.0
      %2368 = vmatprep.subr.mxu0 0.0
      %2369 = vmatpush2.msra.mxu0 0.0
      %2370 = vmatprep.subr.mxu0 0.0
      %2371 = vmatpush2.msra.mxu0 0.0
      %2372 = vmatprep.subr.mxu0 0.0
      %2373 = vmatpush2.msra.mxu0 0.0
      %2374 = vmatprep.subr.mxu0 0.0
      %2375 = vmatpush2.msra.mxu0 0.0
      %2376 = vmatprep.subr.mxu0 0.0
      %2377 = vmatpush2.msra.mxu0 0.0
      %2378 = vmatprep.subr.mxu0 0.0
      %2379 = vmatpush2.msra.mxu0 0.0
      %2380 = vmatprep.subr.mxu0 0.0
      %2381 = vmatpush2.msra.mxu0 0.0
      %2382 = vmatprep.subr.mxu0 0.0
      %2383 = vmatpush2.msra.mxu0 0.0
      %2384 = vmatprep.subr.mxu0 0.0
      %2385 = vmatpush2.msra.mxu0 0.0
      %2386 = vmatprep.subr.mxu0 0.0
      %2387 = vmatpush2.msra.mxu0 0.0
      %2388 = vmatprep.subr.mxu0 0.0
      %2389 = vmatpush2.msra.mxu0 0.0
      %2390 = vmatprep.subr.mxu0 0.0
      %2391 = vmatpush2.msra.mxu0 0.0
      %2392 = vmatprep.mubr.f32.mxu0 0.0
      %2393 = vmatmul.mubr.f32.gmra.mxu0 %v2326
      %v2394 = vpop.f32.mrf.mxu0
      %v2395 = vadd.f32 0.0, %v2394
      %v2396 = vpop.f32.mrf.mxu0
      %2397 = vdwg.mxu0
      %v2398 = vadd.f32 %v2319, %v2395
      %s2399 = scalar_lea.vmem %s5, 48
      %v2400 = vld [vmem:[%s2399] sm:$0xff]
      %2401 = vrot.lane.b32.xlu0 %v1930, 108
      %v2402 = vpop.permute.xlu0 %2401
      %v2405 = vsel %vm473, %v2400, 0
      %2407 = vmatprep.subr.mxu0 0.0
      %2408 = vmatpush1.msra.mxu0 0.0
      %2409 = vmatprep.subr.mxu0 0.0
      %2410 = vmatpush1.msra.mxu0 0.0
      %2411 = vmatprep.subr.mxu0 0.0
      %2412 = vmatpush1.msra.mxu0 0.0
      %2413 = vmatprep.subr.mxu0 0.0
      %2414 = vmatpush1.msra.mxu0 0.0
      %2415 = vmatprep.subr.mxu0 0.0
      %2416 = vmatpush1.msra.mxu0 0.0
      %2417 = vmatprep.subr.mxu0 0.0
      %2418 = vmatpush1.msra.mxu0 0.0
      %2419 = vmatprep.subr.mxu0 0.0
      %2420 = vmatpush1.msra.mxu0 0.0
      %2421 = vmatprep.subr.mxu0 0.0
      %2422 = vmatpush1.msra.mxu0 0.0
      %2423 = vmatprep.subr.mxu0 0.0
      %2424 = vmatpush1.msra.mxu0 0.0
      %2425 = vmatprep.subr.mxu0 0.0
      %2426 = vmatpush1.msra.mxu0 0.0
      %2427 = vmatprep.subr.mxu0 0.0
      %2428 = vmatpush1.msra.mxu0 0.0
      %2429 = vmatprep.subr.mxu0 0.0
      %2430 = vmatpush1.msra.mxu0 0.0
      %2431 = vmatprep.subr.mxu0 0.0
      %2432 = vmatpush1.msra.mxu0 0.0
      %2433 = vmatprep.subr.mxu0 0.0
      %2434 = vmatpush1.msra.mxu0 0.0
      %2435 = vmatprep.subr.mxu0 0.0
      %2436 = vmatpush1.msra.mxu0 0.0
      %2437 = vmatprep.subr.mxu0 0.0
      %2438 = vmatpush1.msra.mxu0 %v2402
      %2439 = vmatprep.subr.mxu0 0.0
      %2440 = vmatpush2.msra.mxu0 0.0
      %2441 = vmatprep.subr.mxu0 0.0
      %2442 = vmatpush2.msra.mxu0 0.0
      %2443 = vmatprep.subr.mxu0 0.0
      %2444 = vmatpush2.msra.mxu0 0.0
      %2445 = vmatprep.subr.mxu0 0.0
      %2446 = vmatpush2.msra.mxu0 0.0
      %2447 = vmatprep.subr.mxu0 0.0
      %2448 = vmatpush2.msra.mxu0 0.0
      %2449 = vmatprep.subr.mxu0 0.0
      %2450 = vmatpush2.msra.mxu0 0.0
      %2451 = vmatprep.subr.mxu0 0.0
      %2452 = vmatpush2.msra.mxu0 0.0
      %2453 = vmatprep.subr.mxu0 0.0
      %2454 = vmatpush2.msra.mxu0 0.0
      %2455 = vmatprep.subr.mxu0 0.0
      %2456 = vmatpush2.msra.mxu0 0.0
      %2457 = vmatprep.subr.mxu0 0.0
      %2458 = vmatpush2.msra.mxu0 0.0
      %2459 = vmatprep.subr.mxu0 0.0
      %2460 = vmatpush2.msra.mxu0 0.0
      %2461 = vmatprep.subr.mxu0 0.0
      %2462 = vmatpush2.msra.mxu0 0.0
      %2463 = vmatprep.subr.mxu0 0.0
      %2464 = vmatpush2.msra.mxu0 0.0
      %2465 = vmatprep.subr.mxu0 0.0
      %2466 = vmatpush2.msra.mxu0 0.0
      %2467 = vmatprep.subr.mxu0 0.0
      %2468 = vmatpush2.msra.mxu0 0.0
      %2469 = vmatprep.subr.mxu0 0.0
      %2470 = vmatpush2.msra.mxu0 0.0
      %2471 = vmatprep.mubr.f32.mxu0 0.0
      %2472 = vmatmul.mubr.f32.gmra.mxu0 %v2405
      %v2473 = vpop.f32.mrf.mxu0
      %v2474 = vadd.f32 0.0, %v2473
      %v2475 = vpop.f32.mrf.mxu0
      %2476 = vdwg.mxu0
      %v2477 = vadd.f32 %v2398, %v2474
      %s2478 = scalar_lea.vmem %s5, 56
      %v2479 = vld [vmem:[%s2478] sm:$0xff]
      %2480 = vrot.lane.b32.xlu0 %v1930, 107
      %v2481 = vpop.permute.xlu0 %2480
      %v2484 = vsel %vm473, %v2479, 0
      %2486 = vmatprep.subr.mxu0 0.0
      %2487 = vmatpush1.msra.mxu0 0.0
      %2488 = vmatprep.subr.mxu0 0.0
      %2489 = vmatpush1.msra.mxu0 0.0
      %2490 = vmatprep.subr.mxu0 0.0
      %2491 = vmatpush1.msra.mxu0 0.0
      %2492 = vmatprep.subr.mxu0 0.0
      %2493 = vmatpush1.msra.mxu0 0.0
      %2494 = vmatprep.subr.mxu0 0.0
      %2495 = vmatpush1.msra.mxu0 0.0
      %2496 = vmatprep.subr.mxu0 0.0
      %2497 = vmatpush1.msra.mxu0 0.0
      %2498 = vmatprep.subr.mxu0 0.0
      %2499 = vmatpush1.msra.mxu0 0.0
      %2500 = vmatprep.subr.mxu0 0.0
      %2501 = vmatpush1.msra.mxu0 0.0
      %2502 = vmatprep.subr.mxu0 0.0
      %2503 = vmatpush1.msra.mxu0 0.0
      %2504 = vmatprep.subr.mxu0 0.0
      %2505 = vmatpush1.msra.mxu0 0.0
      %2506 = vmatprep.subr.mxu0 0.0
      %2507 = vmatpush1.msra.mxu0 0.0
      %2508 = vmatprep.subr.mxu0 0.0
      %2509 = vmatpush1.msra.mxu0 0.0
      %2510 = vmatprep.subr.mxu0 0.0
      %2511 = vmatpush1.msra.mxu0 0.0
      %2512 = vmatprep.subr.mxu0 0.0
      %2513 = vmatpush1.msra.mxu0 0.0
      %2514 = vmatprep.subr.mxu0 0.0
      %2515 = vmatpush1.msra.mxu0 0.0
      %2516 = vmatprep.subr.mxu0 0.0
      %2517 = vmatpush1.msra.mxu0 %v2481
      %2518 = vmatprep.subr.mxu0 0.0
      %2519 = vmatpush2.msra.mxu0 0.0
      %2520 = vmatprep.subr.mxu0 0.0
      %2521 = vmatpush2.msra.mxu0 0.0
      %2522 = vmatprep.subr.mxu0 0.0
      %2523 = vmatpush2.msra.mxu0 0.0
      %2524 = vmatprep.subr.mxu0 0.0
      %2525 = vmatpush2.msra.mxu0 0.0
      %2526 = vmatprep.subr.mxu0 0.0
      %2527 = vmatpush2.msra.mxu0 0.0
      %2528 = vmatprep.subr.mxu0 0.0
      %2529 = vmatpush2.msra.mxu0 0.0
      %2530 = vmatprep.subr.mxu0 0.0
      %2531 = vmatpush2.msra.mxu0 0.0
      %2532 = vmatprep.subr.mxu0 0.0
      %2533 = vmatpush2.msra.mxu0 0.0
      %2534 = vmatprep.subr.mxu0 0.0
      %2535 = vmatpush2.msra.mxu0 0.0
      %2536 = vmatprep.subr.mxu0 0.0
      %2537 = vmatpush2.msra.mxu0 0.0
      %2538 = vmatprep.subr.mxu0 0.0
      %2539 = vmatpush2.msra.mxu0 0.0
      %2540 = vmatprep.subr.mxu0 0.0
      %2541 = vmatpush2.msra.mxu0 0.0
      %2542 = vmatprep.subr.mxu0 0.0
      %2543 = vmatpush2.msra.mxu0 0.0
      %2544 = vmatprep.subr.mxu0 0.0
      %2545 = vmatpush2.msra.mxu0 0.0
      %2546 = vmatprep.subr.mxu0 0.0
      %2547 = vmatpush2.msra.mxu0 0.0
      %2548 = vmatprep.subr.mxu0 0.0
      %2549 = vmatpush2.msra.mxu0 0.0
      %2550 = vmatprep.mubr.f32.mxu0 0.0
      %2551 = vmatmul.mubr.f32.gmra.mxu0 %v2484
      %v2552 = vpop.f32.mrf.mxu0
      %v2553 = vadd.f32 0.0, %v2552
      %v2554 = vpop.f32.mrf.mxu0
      %2555 = vdwg.mxu0
      %v2556 = vadd.f32 %v2477, %v2553
      %s2557 = scalar_lea.vmem %s5, 64
      %v2558 = vld [vmem:[%s2557] sm:$0xff]
      %2559 = vrot.lane.b32.xlu0 %v1930, 106
      %v2560 = vpop.permute.xlu0 %2559
      %v2563 = vsel %vm473, %v2558, 0
      %2565 = vmatprep.subr.mxu0 0.0
      %2566 = vmatpush1.msra.mxu0 0.0
      %2567 = vmatprep.subr.mxu0 0.0
      %2568 = vmatpush1.msra.mxu0 0.0
      %2569 = vmatprep.subr.mxu0 0.0
      %2570 = vmatpush1.msra.mxu0 0.0
      %2571 = vmatprep.subr.mxu0 0.0
      %2572 = vmatpush1.msra.mxu0 0.0
      %2573 = vmatprep.subr.mxu0 0.0
      %2574 = vmatpush1.msra.mxu0 0.0
      %2575 = vmatprep.subr.mxu0 0.0
      %2576 = vmatpush1.msra.mxu0 0.0
      %2577 = vmatprep.subr.mxu0 0.0
      %2578 = vmatpush1.msra.mxu0 0.0
      %2579 = vmatprep.subr.mxu0 0.0
      %2580 = vmatpush1.msra.mxu0 0.0
      %2581 = vmatprep.subr.mxu0 0.0
      %2582 = vmatpush1.msra.mxu0 0.0
      %2583 = vmatprep.subr.mxu0 0.0
      %2584 = vmatpush1.msra.mxu0 0.0
      %2585 = vmatprep.subr.mxu0 0.0
      %2586 = vmatpush1.msra.mxu0 0.0
      %2587 = vmatprep.subr.mxu0 0.0
      %2588 = vmatpush1.msra.mxu0 0.0
      %2589 = vmatprep.subr.mxu0 0.0
      %2590 = vmatpush1.msra.mxu0 0.0
      %2591 = vmatprep.subr.mxu0 0.0
      %2592 = vmatpush1.msra.mxu0 0.0
      %2593 = vmatprep.subr.mxu0 0.0
      %2594 = vmatpush1.msra.mxu0 0.0
      %2595 = vmatprep.subr.mxu0 0.0
      %2596 = vmatpush1.msra.mxu0 %v2560
      %2597 = vmatprep.subr.mxu0 0.0
      %2598 = vmatpush2.msra.mxu0 0.0
      %2599 = vmatprep.subr.mxu0 0.0
      %2600 = vmatpush2.msra.mxu0 0.0
      %2601 = vmatprep.subr.mxu0 0.0
      %2602 = vmatpush2.msra.mxu0 0.0
      %2603 = vmatprep.subr.mxu0 0.0
      %2604 = vmatpush2.msra.mxu0 0.0
      %2605 = vmatprep.subr.mxu0 0.0
      %2606 = vmatpush2.msra.mxu0 0.0
      %2607 = vmatprep.subr.mxu0 0.0
      %2608 = vmatpush2.msra.mxu0 0.0
      %2609 = vmatprep.subr.mxu0 0.0
      %2610 = vmatpush2.msra.mxu0 0.0
      %2611 = vmatprep.subr.mxu0 0.0
      %2612 = vmatpush2.msra.mxu0 0.0
      %2613 = vmatprep.subr.mxu0 0.0
      %2614 = vmatpush2.msra.mxu0 0.0
      %2615 = vmatprep.subr.mxu0 0.0
      %2616 = vmatpush2.msra.mxu0 0.0
      %2617 = vmatprep.subr.mxu0 0.0
      %2618 = vmatpush2.msra.mxu0 0.0
      %2619 = vmatprep.subr.mxu0 0.0
      %2620 = vmatpush2.msra.mxu0 0.0
      %2621 = vmatprep.subr.mxu0 0.0
      %2622 = vmatpush2.msra.mxu0 0.0
      %2623 = vmatprep.subr.mxu0 0.0
      %2624 = vmatpush2.msra.mxu0 0.0
      %2625 = vmatprep.subr.mxu0 0.0
      %2626 = vmatpush2.msra.mxu0 0.0
      %2627 = vmatprep.subr.mxu0 0.0
      %2628 = vmatpush2.msra.mxu0 0.0
      %2629 = vmatprep.mubr.f32.mxu0 0.0
      %2630 = vmatmul.mubr.f32.gmra.mxu0 %v2563
      %v2631 = vpop.f32.mrf.mxu0
      %v2632 = vadd.f32 0.0, %v2631
      %v2633 = vpop.f32.mrf.mxu0
      %2634 = vdwg.mxu0
      %v2635 = vadd.f32 %v2556, %v2632
      %v2636 = vld [vmem:[%s7] sm:$0xff]
      %v2637 = vld [vmem:[%s455] sm:$0xff]
      %v2638 = vld [vmem:[%s455 + $0x8] sm:$0xff]
      %v2639 = vld [vmem:[%s8] sm:$0xff]
      %v2640 = vld [vmem:[%s459] sm:$0xff]
      %2642 = vrot.lane.b32.xlu0 %v2640, 117
      %v2643 = vpop.permute.xlu0 %2642
      %v2646 = vsel %vm473, %v2639, 0
      %2648 = vmatprep.subr.mxu0 0.0
      %2649 = vmatpush1.msra.mxu0 0.0
      %2650 = vmatprep.subr.mxu0 0.0
      %2651 = vmatpush1.msra.mxu0 0.0
      %2652 = vmatprep.subr.mxu0 0.0
      %2653 = vmatpush1.msra.mxu0 0.0
      %2654 = vmatprep.subr.mxu0 0.0
      %2655 = vmatpush1.msra.mxu0 0.0
      %2656 = vmatprep.subr.mxu0 0.0
      %2657 = vmatpush1.msra.mxu0 0.0
      %2658 = vmatprep.subr.mxu0 0.0
      %2659 = vmatpush1.msra.mxu0 0.0
      %2660 = vmatprep.subr.mxu0 0.0
      %2661 = vmatpush1.msra.mxu0 0.0
      %2662 = vmatprep.subr.mxu0 0.0
      %2663 = vmatpush1.msra.mxu0 0.0
      %2664 = vmatprep.subr.mxu0 0.0
      %2665 = vmatpush1.msra.mxu0 0.0
      %2666 = vmatprep.subr.mxu0 0.0
      %2667 = vmatpush1.msra.mxu0 0.0
      %2668 = vmatprep.subr.mxu0 0.0
      %2669 = vmatpush1.msra.mxu0 0.0
      %2670 = vmatprep.subr.mxu0 0.0
      %2671 = vmatpush1.msra.mxu0 0.0
      %2672 = vmatprep.subr.mxu0 0.0
      %2673 = vmatpush1.msra.mxu0 0.0
      %2674 = vmatprep.subr.mxu0 0.0
      %2675 = vmatpush1.msra.mxu0 0.0
      %2676 = vmatprep.subr.mxu0 0.0
      %2677 = vmatpush1.msra.mxu0 0.0
      %2678 = vmatprep.subr.mxu0 0.0
      %2679 = vmatpush1.msra.mxu0 %v2643
      %2680 = vmatprep.subr.mxu0 0.0
      %2681 = vmatpush2.msra.mxu0 0.0
      %2682 = vmatprep.subr.mxu0 0.0
      %2683 = vmatpush2.msra.mxu0 0.0
      %2684 = vmatprep.subr.mxu0 0.0
      %2685 = vmatpush2.msra.mxu0 0.0
      %2686 = vmatprep.subr.mxu0 0.0
      %2687 = vmatpush2.msra.mxu0 0.0
      %2688 = vmatprep.subr.mxu0 0.0
      %2689 = vmatpush2.msra.mxu0 0.0
      %2690 = vmatprep.subr.mxu0 0.0
      %2691 = vmatpush2.msra.mxu0 0.0
      %2692 = vmatprep.subr.mxu0 0.0
      %2693 = vmatpush2.msra.mxu0 0.0
      %2694 = vmatprep.subr.mxu0 0.0
      %2695 = vmatpush2.msra.mxu0 0.0
      %2696 = vmatprep.subr.mxu0 0.0
      %2697 = vmatpush2.msra.mxu0 0.0
      %2698 = vmatprep.subr.mxu0 0.0
      %2699 = vmatpush2.msra.mxu0 0.0
      %2700 = vmatprep.subr.mxu0 0.0
      %2701 = vmatpush2.msra.mxu0 0.0
      %2702 = vmatprep.subr.mxu0 0.0
      %2703 = vmatpush2.msra.mxu0 0.0
      %2704 = vmatprep.subr.mxu0 0.0
      %2705 = vmatpush2.msra.mxu0 0.0
      %2706 = vmatprep.subr.mxu0 0.0
      %2707 = vmatpush2.msra.mxu0 0.0
      %2708 = vmatprep.subr.mxu0 0.0
      %2709 = vmatpush2.msra.mxu0 0.0
      %2710 = vmatprep.subr.mxu0 0.0
      %2711 = vmatpush2.msra.mxu0 0.0
      %2712 = vmatprep.mubr.f32.mxu0 0.0
      %2713 = vmatmul.mubr.f32.gmra.mxu0 %v2646
      %v2714 = vpop.f32.mrf.mxu0
      %v2715 = vadd.f32 0.0, %v2714
      %v2716 = vpop.f32.mrf.mxu0
      %2717 = vdwg.mxu0
      %2720 = vrot.lane.b32.xlu0 %v2637, 117
      %v2721 = vpop.permute.xlu0 %2720
      %2722 = vrot.lane.b32.xlu0 %v2638, 117
      %v2723 = vpop.permute.xlu0 %2722
      %v2727 = vsel %vm547, %v2636, 0
      %2729 = vmatprep.subr.mxu0 0.0
      %2730 = vmatpush1.msra.mxu0 0.0
      %2731 = vmatprep.subr.mxu0 0.0
      %2732 = vmatpush1.msra.mxu0 0.0
      %2733 = vmatprep.subr.mxu0 0.0
      %2734 = vmatpush1.msra.mxu0 0.0
      %2735 = vmatprep.subr.mxu0 0.0
      %2736 = vmatpush1.msra.mxu0 0.0
      %2737 = vmatprep.subr.mxu0 0.0
      %2738 = vmatpush1.msra.mxu0 0.0
      %2739 = vmatprep.subr.mxu0 0.0
      %2740 = vmatpush1.msra.mxu0 0.0
      %2741 = vmatprep.subr.mxu0 0.0
      %2742 = vmatpush1.msra.mxu0 0.0
      %2743 = vmatprep.subr.mxu0 0.0
      %2744 = vmatpush1.msra.mxu0 0.0
      %2745 = vmatprep.subr.mxu0 0.0
      %2746 = vmatpush1.msra.mxu0 0.0
      %2747 = vmatprep.subr.mxu0 0.0
      %2748 = vmatpush1.msra.mxu0 0.0
      %2749 = vmatprep.subr.mxu0 0.0
      %2750 = vmatpush1.msra.mxu0 0.0
      %2751 = vmatprep.subr.mxu0 0.0
      %2752 = vmatpush1.msra.mxu0 0.0
      %2753 = vmatprep.subr.mxu0 0.0
      %2754 = vmatpush1.msra.mxu0 0.0
      %2755 = vmatprep.subr.mxu0 0.0
      %2756 = vmatpush1.msra.mxu0 0.0
      %2757 = vmatprep.subr.mxu0 0.0
      %2758 = vmatpush1.msra.mxu0 %v2723
      %2759 = vmatprep.subr.mxu0 0.0
      %2760 = vmatpush1.msra.mxu0 %v2721
      %2761 = vmatprep.subr.mxu0 0.0
      %2762 = vmatpush2.msra.mxu0 0.0
      %2763 = vmatprep.subr.mxu0 0.0
      %2764 = vmatpush2.msra.mxu0 0.0
      %2765 = vmatprep.subr.mxu0 0.0
      %2766 = vmatpush2.msra.mxu0 0.0
      %2767 = vmatprep.subr.mxu0 0.0
      %2768 = vmatpush2.msra.mxu0 0.0
      %2769 = vmatprep.subr.mxu0 0.0
      %2770 = vmatpush2.msra.mxu0 0.0
      %2771 = vmatprep.subr.mxu0 0.0
      %2772 = vmatpush2.msra.mxu0 0.0
      %2773 = vmatprep.subr.mxu0 0.0
      %2774 = vmatpush2.msra.mxu0 0.0
      %2775 = vmatprep.subr.mxu0 0.0
      %2776 = vmatpush2.msra.mxu0 0.0
      %2777 = vmatprep.subr.mxu0 0.0
      %2778 = vmatpush2.msra.mxu0 0.0
      %2779 = vmatprep.subr.mxu0 0.0
      %2780 = vmatpush2.msra.mxu0 0.0
      %2781 = vmatprep.subr.mxu0 0.0
      %2782 = vmatpush2.msra.mxu0 0.0
      %2783 = vmatprep.subr.mxu0 0.0
      %2784 = vmatpush2.msra.mxu0 0.0
      %2785 = vmatprep.subr.mxu0 0.0
      %2786 = vmatpush2.msra.mxu0 0.0
      %2787 = vmatprep.subr.mxu0 0.0
      %2788 = vmatpush2.msra.mxu0 0.0
      %2789 = vmatprep.subr.mxu0 0.0
      %2790 = vmatpush2.msra.mxu0 0.0
      %2791 = vmatprep.subr.mxu0 0.0
      %2792 = vmatpush2.msra.mxu0 0.0
      %2793 = vmatprep.mubr.f32.mxu0 0.0
      %2794 = vmatmul.mubr.f32.gmra.mxu0 %v2727
      %v2795 = vpop.f32.mrf.mxu0
      %v2796 = vadd.f32 %v2715, %v2795
      %v2797 = vpop.f32.mrf.mxu0
      %2798 = vdwg.mxu0
      %v2799 = vld [vmem:[%s6] sm:$0xff]
      %2801 = vset.pattern.permute.xlu0 0
      %2802 = vperm.xlu0 %2801, %v2799
      %v2803 = vpop.permute.xlu0 %2802
      %v2805 = vadd.f32 %v2635, %v2803
      %v2806 = vadd.f32 %v2805, %v2796
      %v2807 = vmax.f32 %v2806, 0.0
      %v2808 = vmul.f32 %v2807, %v1916
      %2809 = vst.msk [vmem:[%s463] sm:$0xff] %vm1919, 0.0
      %2810 = vst.msk [vmem:[%s463] sm:$0xff] %vm1921, 0.0
      %2812 = vrot.lane.b32.xlu0 %v2808, 11
      %v2813 = vpop.permute.xlu0 %2812
      %2815 = vst.msk [vmem:[%s463] sm:$0xff] %vm1927, %v2813
      %v2816 = vld [vmem:[%s10] sm:$0x1]
      %v2817 = vld [vmem:[#allocation3] sm:$0x1]
      %2819 = vset.pattern.permute.xlu0 0
      %2820 = vperm.xlu0 %2819, %v2817
      %v2821 = vpop.permute.xlu0 %2820
      %v2823 = vlaneseq
      %v2824 = vshrl.u32 %v2823, 7
      %v2825 = vsub.s32 0, %v2824
      %v2826 = vrot.slane %v2821, %v2825
      %v2828 = vsel %vm473, %v2816, 0
      %2830 = vmatprep.subr.mxu0 0.0
      %2831 = vmatpush1.msra.mxu0 0.0
      %2832 = vmatprep.subr.mxu0 0.0
      %2833 = vmatpush1.msra.mxu0 0.0
      %2834 = vmatprep.subr.mxu0 0.0
      %2835 = vmatpush1.msra.mxu0 0.0
      %2836 = vmatprep.subr.mxu0 0.0
      %2837 = vmatpush1.msra.mxu0 0.0
      %2838 = vmatprep.subr.mxu0 0.0
      %2839 = vmatpush1.msra.mxu0 0.0
      %2840 = vmatprep.subr.mxu0 0.0
      %2841 = vmatpush1.msra.mxu0 0.0
      %2842 = vmatprep.subr.mxu0 0.0
      %2843 = vmatpush1.msra.mxu0 0.0
      %2844 = vmatprep.subr.mxu0 0.0
      %2845 = vmatpush1.msra.mxu0 0.0
      %2846 = vmatprep.subr.mxu0 0.0
      %2847 = vmatpush1.msra.mxu0 0.0
      %2848 = vmatprep.subr.mxu0 0.0
      %2849 = vmatpush1.msra.mxu0 0.0
      %2850 = vmatprep.subr.mxu0 0.0
      %2851 = vmatpush1.msra.mxu0 0.0
      %2852 = vmatprep.subr.mxu0 0.0
      %2853 = vmatpush1.msra.mxu0 0.0
      %2854 = vmatprep.subr.mxu0 0.0
      %2855 = vmatpush1.msra.mxu0 0.0
      %2856 = vmatprep.subr.mxu0 0.0
      %2857 = vmatpush1.msra.mxu0 0.0
      %2858 = vmatprep.subr.mxu0 0.0
      %2859 = vmatpush1.msra.mxu0 0.0
      %2860 = vmatprep.subr.mxu0 0.0
      %2861 = vmatpush1.msra.mxu0 %v2808
      %2862 = vmatprep.subr.mxu0 0.0
      %2863 = vmatpush2.msra.mxu0 0.0
      %2864 = vmatprep.subr.mxu0 0.0
      %2865 = vmatpush2.msra.mxu0 0.0
      %2866 = vmatprep.subr.mxu0 0.0
      %2867 = vmatpush2.msra.mxu0 0.0
      %2868 = vmatprep.subr.mxu0 0.0
      %2869 = vmatpush2.msra.mxu0 0.0
      %2870 = vmatprep.subr.mxu0 0.0
      %2871 = vmatpush2.msra.mxu0 0.0
      %2872 = vmatprep.subr.mxu0 0.0
      %2873 = vmatpush2.msra.mxu0 0.0
      %2874 = vmatprep.subr.mxu0 0.0
      %2875 = vmatpush2.msra.mxu0 0.0
      %2876 = vmatprep.subr.mxu0 0.0
      %2877 = vmatpush2.msra.mxu0 0.0
      %2878 = vmatprep.subr.mxu0 0.0
      %2879 = vmatpush2.msra.mxu0 0.0
      %2880 = vmatprep.subr.mxu0 0.0
      %2881 = vmatpush2.msra.mxu0 0.0
      %2882 = vmatprep.subr.mxu0 0.0
      %2883 = vmatpush2.msra.mxu0 0.0
      %2884 = vmatprep.subr.mxu0 0.0
      %2885 = vmatpush2.msra.mxu0 0.0
      %2886 = vmatprep.subr.mxu0 0.0
      %2887 = vmatpush2.msra.mxu0 0.0
      %2888 = vmatprep.subr.mxu0 0.0
      %2889 = vmatpush2.msra.mxu0 0.0
      %2890 = vmatprep.subr.mxu0 0.0
      %2891 = vmatpush2.msra.mxu0 0.0
      %2892 = vmatprep.subr.mxu0 0.0
      %2893 = vmatpush2.msra.mxu0 0.0
      %2894 = vmatprep.mubr.f32.mxu0 0.0
      %2895 = vmatmul.mubr.f32.gmra.mxu0 %v2828
      %v2896 = vpop.f32.mrf.mxu0
      %v2897 = vadd.f32 %v2826, %v2896
      %v2898 = vpop.f32.mrf.mxu0
      %2899 = vdwg.mxu0
      %v2900 = vmul.f32 %v2897, %v467
      %vm2901 = vcmask 81920
      %2902 = vst.msk [vmem:[%s466] sm:$0x1] %vm2901, 0.0
      %vm2903 = vcmask 811720
      %2904 = vst.msk [vmem:[%s466] sm:$0x1] %vm2903, 0.0
      %2906 = vrot.lane.b32.xlu0 %v2900, 11
      %v2907 = vpop.permute.xlu0 %2906
      %vm2909 = vcmask 720984
      %2910 = vst.msk [vmem:[%s466] sm:$0x1] %vm2909, %v2907
      %p2911 = scmp.lt.s32.totalorder %s27, 1
      %s2912 = scalar_select %p2911, %s27, 1
      %s2913 = smul.addr %s2912, 8
      %s2914 = scalar_lea.vmem %s12, %s2913
      %p2915 = scmp.lt.s32.totalorder %s27, 1
      %s2916 = scalar_select %p2915, %s27, 1
      %s2917 = scalar_lea.vmem %s13, %s2916
      // Predicated region
      $region69: #{multi_scale_res_unet_decoder_forward.4} parent=67 // pred_check
        %p2918 = pneg %p307
      $region70: #{multi_scale_res_unet_decoder_forward.4} parent=67 // pred_check_branch
        %2920 = sbr.rel (%p2918) target = $region72
      $region71: #{multi_scale_res_unet_decoder_forward.4} parent=67 // pred_region
        _
      $region72: #{multi_scale_res_unet_decoder_forward.4} parent=67 // pred_fallthru
        _
      // Predicated region
      $region73: #{multi_scale_res_unet_decoder_forward.4} parent=67 // pred_check
        %p2921 = pneg %p333
      $region74: #{multi_scale_res_unet_decoder_forward.4} parent=67 // pred_check_branch
        %2923 = sbr.rel (%p2921) target = $region76
      $region75: #{multi_scale_res_unet_decoder_forward.4} parent=67 // pred_region
        _
      $region76: #{multi_scale_res_unet_decoder_forward.4} parent=67 // pred_fallthru
        _
    $region68: #{multi_scale_res_unet_decoder_forward.4} parent=5 // pred_fallthru
      _
    %p2924 = scmp.le.s32.totalorder 2, %s22
    // Predicated region
    $region77: #{multi_scale_res_unet_decoder_forward.4} parent=5 // pred_check
      %p2925 = pneg %p2924
    $region78: #{multi_scale_res_unet_decoder_forward.4} parent=5 // pred_check_branch
      %2927 = sbr.rel (%p2925) target = $region80
    $region79: #{multi_scale_res_unet_decoder_forward.4} parent=5 // pred_region
      %s2928 = ssub.s32 %s22, 2
      // Predicated region
      $region81: #{multi_scale_res_unet_decoder_forward.4} parent=79 // pred_check
        %p2929 = pneg %p313
      $region82: #{multi_scale_res_unet_decoder_forward.4} parent=79 // pred_check_branch
        %2931 = sbr.rel (%p2929) target = $region84
      $region83: #{multi_scale_res_unet_decoder_forward.4} parent=79 // pred_region
        %p2932 = scmp.lt.s32.totalorder %s28, 1
        %s2933 = scalar_select %p2932, %s28, 1
        %s2934 = smul.addr %s2933, 8
        %s2935 = scalar_lea.vmem %s12, %s2934
      $region84: #{multi_scale_res_unet_decoder_forward.4} parent=79 // pred_fallthru
        _
      // Predicated region
      $region85: #{multi_scale_res_unet_decoder_forward.4} parent=79 // pred_check
        %p2936 = pneg %p339
      $region86: #{multi_scale_res_unet_decoder_forward.4} parent=79 // pred_check_branch
        %2938 = sbr.rel (%p2936) target = $region88
      $region87: #{multi_scale_res_unet_decoder_forward.4} parent=79 // pred_region
        %p2939 = scmp.lt.s32.totalorder %s28, 1
        %s2940 = scalar_select %p2939, %s28, 1
        %s2941 = scalar_lea.vmem %s13, %s2940
      $region88: #{multi_scale_res_unet_decoder_forward.4} parent=79 // pred_fallthru
        _
    $region80: #{multi_scale_res_unet_decoder_forward.4} parent=5 // pred_fallthru
      _
  $region6: #{multi_scale_res_unet_decoder_forward.4} parent=0 // loop_footer
    %s26 = sadd.s32 1, %s22
  $region7: #{multi_scale_res_unet_decoder_forward.4} parent=0 // loop_footer_branch
    %21 = sbr.rel target = $region3
  $region8: #{multi_scale_res_unet_decoder_forward.4} parent=0 // loop_exit
    _

// kernel: multi_scale_res_unet_decoder_forward.5
$region0: #{multi_scale_res_unet_decoder_forward.5}
  #allocation0 [shape = 'u32[]', space=smem, size = 0x4, offset = 0x4, fixed_abs, tag = 'smem constant byte address 0x4 - core index']
  #allocation1 [shape = 'u32[144,128]{1,0:T(1,128)}', space=vmem, size = 0x12000, scoped, tag = 'internal scratch']
  #allocation2 [shape = 'f32[4,324]{1,0:T(4,128)}', space=vmem, size = 0x1800, scoped, tag = 'scratch operand']
  %s0 = inlined_call_operand.vmem [shape: f32[2,8,324], index: 0, kind: input, shape index: {}]
  %s1 = inlined_call_operand.vmem [shape: f32[2,4,324], index: 1, kind: input, shape index: {}]
  %s2 = inlined_call_operand.vmem [shape: f32[9,4,8], index: 2, kind: input, shape index: {}]
  %s3 = inlined_call_operand.vmem [shape: f32[9,4,4], index: 3, kind: input, shape index: {}]
  %s4 = inlined_call_operand.vmem [shape: f32[4,1], index: 4, kind: input, shape index: {}]
  %s5 = inlined_call_operand.vmem [shape: f32[9,4,4], index: 5, kind: input, shape index: {}]
  %s6 = inlined_call_operand.vmem [shape: f32[4,1], index: 6, kind: input, shape index: {}]
  %s7 = inlined_call_operand.vmem [shape: f32[4,8], index: 7, kind: input, shape index: {}]
  %s8 = inlined_call_operand.vmem [shape: f32[4,4], index: 8, kind: input, shape index: {}]
  %s9 = inlined_call_operand.vmem [shape: f32[1,286], index: 9, kind: input, shape index: {}]
  %s10 = inlined_call_operand.vmem [shape: f32[2,4], index: 10, kind: input, shape index: {}]
  %s11 = inlined_call_operand.hbm [shape: f32[2,4,324], index: 11, kind: output, shape index: {0}]
  %s12 = inlined_call_operand.vmem [shape: f32[2,2,324], index: 12, kind: output, shape index: {1}]
  %13 = xla_tuple %s11, %s12
  %s14 = sld [smem:[#allocation0]]
  $region85: #{multi_scale_res_unet_decoder_forward.5} parent=0
    _
  %s16 = ssub.s32 1, %s14
  %s17 = scalar_select 0, %s16, %s14
  $region1: #{multi_scale_res_unet_decoder_forward.5} parent=0
    #allocation3 [shape = 'u8[12288]{0}', space=vmem, size = 0x3000, scoped, tag = 'output window, operand 0']
    #allocation4 [shape = 's32[2]{0}', space=sflag, size = 0x8, scoped, tag = 'scoped memory for multi_scale_res_unet_decoder_forward.5']
    %18 = vsyncpa [#allocation4], 0
    %s19 = scalar_lea.sflag [#allocation4], 1
    %20 = vsyncpa %s19, 0
    loop: start=0, step=1, limit=4
    $region2: #{multi_scale_res_unet_decoder_forward.5} parent=1 // loop_pre_header
      _
    $region3: #{multi_scale_res_unet_decoder_forward.5} parent=1 // loop_header
      %s22 = sphi 0, %s26
      %p23 = scmp.ge.s32.totalorder %s22, 4
      %s32 = sphi 0, %s34
      %s35 = sphi 0, %s32
      %s36 = sphi 0, %s35
      %s52 = sphi 0, %s36
      %s58 = sphi 0, %s60
      %s61 = sphi 0, %s58
      %s62 = sphi 0, %s61
      %s78 = sphi 0, %s62
      %s82 = sphi 0, %s82
      %s84 = sphi 0, %s82
      %s85 = sphi 0, %s84
      %s99 = sphi 0, %s85
      %s103 = sphi 0, %s103
      %s105 = sphi 0, %s103
      %s106 = sphi 0, %s105
      %s120 = sphi 0, %s106
      %s124 = sphi 0, %s124
      %s126 = sphi 0, %s124
      %s127 = sphi 0, %s126
      %s141 = sphi 0, %s127
      %s145 = sphi 0, %s145
      %s147 = sphi 0, %s145
      %s148 = sphi 0, %s147
      %s162 = sphi 0, %s148
      %s166 = sphi 0, %s166
      %s168 = sphi 0, %s166
      %s169 = sphi 0, %s168
      %s183 = sphi 0, %s169
      %s187 = sphi 0, %s187
      %s189 = sphi 0, %s187
      %s190 = sphi 0, %s189
      %s204 = sphi 0, %s190
      %s208 = sphi 0, %s208
      %s210 = sphi 0, %s208
      %s211 = sphi 0, %s210
      %s225 = sphi 0, %s211
      %s229 = sphi 0, %s229
      %s231 = sphi 0, %s229
      %s232 = sphi 0, %s231
      %s246 = sphi 0, %s232
      %s250 = sphi 0, %s250
      %s252 = sphi 0, %s250
      %s253 = sphi 0, %s252
      %s267 = sphi 0, %s253
      %s273 = sphi 0, %s275
      %s276 = sphi 0, %s273
      %s277 = sphi 0, %s276
      %s293 = sphi 0, %s277
      %s299 = sphi 0, %s301
      %s302 = sphi 0, %s299
      %s303 = sphi 0, %s302
      %s319 = sphi 0, %s303
    $region4: #{multi_scale_res_unet_decoder_forward.5} parent=1 // loop_header_branch
      %25 = sbr.rel (%p23) target = $region8
    $region5: #{multi_scale_res_unet_decoder_forward.5} parent=1 // loop_body
      %s27 = ssub.s32 %s22, 1
      %s28 = ssub.s32 %s22, 2
      %s29 = sadd.s32 %s22, 1
      %s30 = ssub.s32 %s22, %s29
      %p31 = scmp.eq.s32.totalorder %s30, 0
      %s33 = sadd.s32 %s32, 1
      %s34 = scalar_select %p31, %s32, %s33
      %p37 = pneg %p31
      %p38 = scmp.eq.s32.totalorder %s22, 1
      %p39 = por %p37, %p38
      %p40 = scmp.ne.s32.totalorder %s32, %s35
      %p41 = scmp.eq.s32.totalorder %s22, 0
      %p42 = por %p40, %p41
      %p43 = scmp.ne.s32.totalorder %s32, %s35
      %p44 = scmp.eq.s32.totalorder %s27, 1
      %p45 = por %p43, %p44
      %p46 = scmp.ne.s32.totalorder %s35, %s36
      %p47 = scmp.eq.s32.totalorder %s27, 0
      %p48 = por %p46, %p47
      %p49 = scmp.ne.s32.totalorder %s35, %s36
      %p50 = scmp.eq.s32.totalorder %s28, 1
      %p51 = por %p49, %p50
      %p53 = scmp.ne.s32.totalorder %s36, %s52
      %p54 = scmp.eq.s32.totalorder %s28, 0
      %p55 = por %p53, %p54
      %s56 = ssub.s32 %s22, %s29
      %p57 = scmp.eq.s32.totalorder %s56, 0
      %s59 = sadd.s32 %s58, 1
      %s60 = scalar_select %p57, %s58, %s59
      %p63 = pneg %p57
      %p64 = scmp.eq.s32.totalorder %s22, 1
      %p65 = por %p63, %p64
      %p66 = scmp.ne.s32.totalorder %s58, %s61
      %p67 = scmp.eq.s32.totalorder %s22, 0
      %p68 = por %p66, %p67
      %p69 = scmp.ne.s32.totalorder %s58, %s61
      %p70 = scmp.eq.s32.totalorder %s27, 1
      %p71 = por %p69, %p70
      %p72 = scmp.ne.s32.totalorder %s61, %s62
      %p73 = scmp.eq.s32.totalorder %s27, 0
      %p74 = por %p72, %p73
      %p75 = scmp.ne.s32.totalorder %s61, %s62
      %p76 = scmp.eq.s32.totalorder %s28, 1
      %p77 = por %p75, %p76
      %p79 = scmp.ne.s32.totalorder %s62, %s78
      %p80 = scmp.eq.s32.totalorder %s28, 0
      %p81 = por %p79, %p80
      %s83 = sadd.s32 %s82, 1
      %p86 = scmp.eq.s32.totalorder %s22, 1
      %p87 = scmp.ne.s32.totalorder %s82, %s84
      %p88 = scmp.eq.s32.totalorder %s22, 0
      %p89 = por %p87, %p88
      %p90 = scmp.ne.s32.totalorder %s82, %s84
      %p91 = scmp.eq.s32.totalorder %s27, 1
      %p92 = por %p90, %p91
      %p93 = scmp.ne.s32.totalorder %s84, %s85
      %p94 = scmp.eq.s32.totalorder %s27, 0
      %p95 = por %p93, %p94
      %p96 = scmp.ne.s32.totalorder %s84, %s85
      %p97 = scmp.eq.s32.totalorder %s28, 1
      %p98 = por %p96, %p97
      %p100 = scmp.ne.s32.totalorder %s85, %s99
      %p101 = scmp.eq.s32.totalorder %s28, 0
      %p102 = por %p100, %p101
      %s104 = sadd.s32 %s103, 1
      %p107 = scmp.eq.s32.totalorder %s22, 1
      %p108 = scmp.ne.s32.totalorder %s103, %s105
      %p109 = scmp.eq.s32.totalorder %s22, 0
      %p110 = por %p108, %p109
      %p111 = scmp.ne.s32.totalorder %s103, %s105
      %p112 = scmp.eq.s32.totalorder %s27, 1
      %p113 = por %p111, %p112
      %p114 = scmp.ne.s32.totalorder %s105, %s106
      %p115 = scmp.eq.s32.totalorder %s27, 0
      %p116 = por %p114, %p115
      %p117 = scmp.ne.s32.totalorder %s105, %s106
      %p118 = scmp.eq.s32.totalorder %s28, 1
      %p119 = por %p117, %p118
      %p121 = scmp.ne.s32.totalorder %s106, %s120
      %p122 = scmp.eq.s32.totalorder %s28, 0
      %p123 = por %p121, %p122
      %s125 = sadd.s32 %s124, 1
      %p128 = scmp.eq.s32.totalorder %s22, 1
      %p129 = scmp.ne.s32.totalorder %s124, %s126
      %p130 = scmp.eq.s32.totalorder %s22, 0
      %p131 = por %p129, %p130
      %p132 = scmp.ne.s32.totalorder %s124, %s126
      %p133 = scmp.eq.s32.totalorder %s27, 1
      %p134 = por %p132, %p133
      %p135 = scmp.ne.s32.totalorder %s126, %s127
      %p136 = scmp.eq.s32.totalorder %s27, 0
      %p137 = por %p135, %p136
      %p138 = scmp.ne.s32.totalorder %s126, %s127
      %p139 = scmp.eq.s32.totalorder %s28, 1
      %p140 = por %p138, %p139
      %p142 = scmp.ne.s32.totalorder %s127, %s141
      %p143 = scmp.eq.s32.totalorder %s28, 0
      %p144 = por %p142, %p143
      %s146 = sadd.s32 %s145, 1
      %p149 = scmp.eq.s32.totalorder %s22, 1
      %p150 = scmp.ne.s32.totalorder %s145, %s147
      %p151 = scmp.eq.s32.totalorder %s22, 0
      %p152 = por %p150, %p151
      %p153 = scmp.ne.s32.totalorder %s145, %s147
      %p154 = scmp.eq.s32.totalorder %s27, 1
      %p155 = por %p153, %p154
      %p156 = scmp.ne.s32.totalorder %s147, %s148
      %p157 = scmp.eq.s32.totalorder %s27, 0
      %p158 = por %p156, %p157
      %p159 = scmp.ne.s32.totalorder %s147, %s148
      %p160 = scmp.eq.s32.totalorder %s28, 1
      %p161 = por %p159, %p160
      %p163 = scmp.ne.s32.totalorder %s148, %s162
      %p164 = scmp.eq.s32.totalorder %s28, 0
      %p165 = por %p163, %p164
      %s167 = sadd.s32 %s166, 1
      %p170 = scmp.eq.s32.totalorder %s22, 1
      %p171 = scmp.ne.s32.totalorder %s166, %s168
      %p172 = scmp.eq.s32.totalorder %s22, 0
      %p173 = por %p171, %p172
      %p174 = scmp.ne.s32.totalorder %s166, %s168
      %p175 = scmp.eq.s32.totalorder %s27, 1
      %p176 = por %p174, %p175
      %p177 = scmp.ne.s32.totalorder %s168, %s169
      %p178 = scmp.eq.s32.totalorder %s27, 0
      %p179 = por %p177, %p178
      %p180 = scmp.ne.s32.totalorder %s168, %s169
      %p181 = scmp.eq.s32.totalorder %s28, 1
      %p182 = por %p180, %p181
      %p184 = scmp.ne.s32.totalorder %s169, %s183
      %p185 = scmp.eq.s32.totalorder %s28, 0
      %p186 = por %p184, %p185
      %s188 = sadd.s32 %s187, 1
      %p191 = scmp.eq.s32.totalorder %s22, 1
      %p192 = scmp.ne.s32.totalorder %s187, %s189
      %p193 = scmp.eq.s32.totalorder %s22, 0
      %p194 = por %p192, %p193
      %p195 = scmp.ne.s32.totalorder %s187, %s189
      %p196 = scmp.eq.s32.totalorder %s27, 1
      %p197 = por %p195, %p196
      %p198 = scmp.ne.s32.totalorder %s189, %s190
      %p199 = scmp.eq.s32.totalorder %s27, 0
      %p200 = por %p198, %p199
      %p201 = scmp.ne.s32.totalorder %s189, %s190
      %p202 = scmp.eq.s32.totalorder %s28, 1
      %p203 = por %p201, %p202
      %p205 = scmp.ne.s32.totalorder %s190, %s204
      %p206 = scmp.eq.s32.totalorder %s28, 0
      %p207 = por %p205, %p206
      %s209 = sadd.s32 %s208, 1
      %p212 = scmp.eq.s32.totalorder %s22, 1
      %p213 = scmp.ne.s32.totalorder %s208, %s210
      %p214 = scmp.eq.s32.totalorder %s22, 0
      %p215 = por %p213, %p214
      %p216 = scmp.ne.s32.totalorder %s208, %s210
      %p217 = scmp.eq.s32.totalorder %s27, 1
      %p218 = por %p216, %p217
      %p219 = scmp.ne.s32.totalorder %s210, %s211
      %p220 = scmp.eq.s32.totalorder %s27, 0
      %p221 = por %p219, %p220
      %p222 = scmp.ne.s32.totalorder %s210, %s211
      %p223 = scmp.eq.s32.totalorder %s28, 1
      %p224 = por %p222, %p223
      %p226 = scmp.ne.s32.totalorder %s211, %s225
      %p227 = scmp.eq.s32.totalorder %s28, 0
      %p228 = por %p226, %p227
      %s230 = sadd.s32 %s229, 1
      %p233 = scmp.eq.s32.totalorder %s22, 1
      %p234 = scmp.ne.s32.totalorder %s229, %s231
      %p235 = scmp.eq.s32.totalorder %s22, 0
      %p236 = por %p234, %p235
      %p237 = scmp.ne.s32.totalorder %s229, %s231
      %p238 = scmp.eq.s32.totalorder %s27, 1
      %p239 = por %p237, %p238
      %p240 = scmp.ne.s32.totalorder %s231, %s232
      %p241 = scmp.eq.s32.totalorder %s27, 0
      %p242 = por %p240, %p241
      %p243 = scmp.ne.s32.totalorder %s231, %s232
      %p244 = scmp.eq.s32.totalorder %s28, 1
      %p245 = por %p243, %p244
      %p247 = scmp.ne.s32.totalorder %s232, %s246
      %p248 = scmp.eq.s32.totalorder %s28, 0
      %p249 = por %p247, %p248
      %s251 = sadd.s32 %s250, 1
      %p254 = scmp.eq.s32.totalorder %s22, 1
      %p255 = scmp.ne.s32.totalorder %s250, %s252
      %p256 = scmp.eq.s32.totalorder %s22, 0
      %p257 = por %p255, %p256
      %p258 = scmp.ne.s32.totalorder %s250, %s252
      %p259 = scmp.eq.s32.totalorder %s27, 1
      %p260 = por %p258, %p259
      %p261 = scmp.ne.s32.totalorder %s252, %s253
      %p262 = scmp.eq.s32.totalorder %s27, 0
      %p263 = por %p261, %p262
      %p264 = scmp.ne.s32.totalorder %s252, %s253
      %p265 = scmp.eq.s32.totalorder %s28, 1
      %p266 = por %p264, %p265
      %p268 = scmp.ne.s32.totalorder %s253, %s267
      %p269 = scmp.eq.s32.totalorder %s28, 0
      %p270 = por %p268, %p269
      %s271 = ssub.s32 %s22, %s29
      %p272 = scmp.eq.s32.totalorder %s271, 0
      %s274 = sadd.s32 %s273, 1
      %s275 = scalar_select %p272, %s273, %s274
      %p278 = pneg %p272
      %p279 = scmp.eq.s32.totalorder %s22, 1
      %p280 = por %p278, %p279
      %p281 = scmp.ne.s32.totalorder %s273, %s276
      %p282 = scmp.eq.s32.totalorder %s22, 0
      %p283 = por %p281, %p282
      %p284 = scmp.ne.s32.totalorder %s273, %s276
      %p285 = scmp.eq.s32.totalorder %s27, 1
      %p286 = por %p284, %p285
      %p287 = scmp.ne.s32.totalorder %s276, %s277
      %p288 = scmp.eq.s32.totalorder %s27, 0
      %p289 = por %p287, %p288
      %p290 = scmp.ne.s32.totalorder %s276, %s277
      %p291 = scmp.eq.s32.totalorder %s28, 1
      %p292 = por %p290, %p291
      %p294 = scmp.ne.s32.totalorder %s277, %s293
      %p295 = scmp.eq.s32.totalorder %s28, 0
      %p296 = por %p294, %p295
      %s297 = ssub.s32 %s22, %s29
      %p298 = scmp.eq.s32.totalorder %s297, 0
      %s300 = sadd.s32 %s299, 1
      %s301 = scalar_select %p298, %s299, %s300
      %p304 = pneg %p298
      %p305 = scmp.eq.s32.totalorder %s22, 1
      %p306 = por %p304, %p305
      %p307 = scmp.ne.s32.totalorder %s299, %s302
      %p308 = scmp.eq.s32.totalorder %s22, 0
      %p309 = por %p307, %p308
      %p310 = scmp.ne.s32.totalorder %s299, %s302
      %p311 = scmp.eq.s32.totalorder %s27, 1
      %p312 = por %p310, %p311
      %p313 = scmp.ne.s32.totalorder %s302, %s303
      %p314 = scmp.eq.s32.totalorder %s27, 0
      %p315 = por %p313, %p314
      %p316 = scmp.ne.s32.totalorder %s302, %s303
      %p317 = scmp.eq.s32.totalorder %s28, 1
      %p318 = por %p316, %p317
      %p320 = scmp.ne.s32.totalorder %s303, %s319
      %p321 = scmp.eq.s32.totalorder %s28, 0
      %p322 = por %p320, %p321
      %p323 = scmp.le.s32.totalorder 1, %s22
      %p324 = scmp.lt.s32.totalorder %s22, 3
      %p325 = pnand %p323, %p324
      %p326 = pneg %p325
      // Predicated region
      $region9: #{multi_scale_res_unet_decoder_forward.5} parent=5 // pred_check
        _
      $region10: #{multi_scale_res_unet_decoder_forward.5} parent=5 // pred_check_branch
        %328 = sbr.rel (%p325) target = $region12
      $region11: #{multi_scale_res_unet_decoder_forward.5} parent=5 // pred_region
        %s329 = ssub.s32 %s22, 1
        // Predicated region
        $region13: #{multi_scale_res_unet_decoder_forward.5} parent=11 // pred_check
          %p330 = pneg %p95
        $region14: #{multi_scale_res_unet_decoder_forward.5} parent=11 // pred_check_branch
          %332 = sbr.rel (%p330) target = $region16
        $region15: #{multi_scale_res_unet_decoder_forward.5} parent=11 // pred_region
          _
        $region16: #{multi_scale_res_unet_decoder_forward.5} parent=11 // pred_fallthru
          _
        // Predicated region
        $region17: #{multi_scale_res_unet_decoder_forward.5} parent=11 // pred_check
          %p333 = pneg %p116
        $region18: #{multi_scale_res_unet_decoder_forward.5} parent=11 // pred_check_branch
          %335 = sbr.rel (%p333) target = $region20
        $region19: #{multi_scale_res_unet_decoder_forward.5} parent=11 // pred_region
          _
        $region20: #{multi_scale_res_unet_decoder_forward.5} parent=11 // pred_fallthru
          _
        // Predicated region
        $region21: #{multi_scale_res_unet_decoder_forward.5} parent=11 // pred_check
          %p336 = pneg %p137
        $region22: #{multi_scale_res_unet_decoder_forward.5} parent=11 // pred_check_branch
          %338 = sbr.rel (%p336) target = $region24
        $region23: #{multi_scale_res_unet_decoder_forward.5} parent=11 // pred_region
          _
        $region24: #{multi_scale_res_unet_decoder_forward.5} parent=11 // pred_fallthru
          _
        // Predicated region
        $region25: #{multi_scale_res_unet_decoder_forward.5} parent=11 // pred_check
          %p339 = pneg %p158
        $region26: #{multi_scale_res_unet_decoder_forward.5} parent=11 // pred_check_branch
          %341 = sbr.rel (%p339) target = $region28
        $region27: #{multi_scale_res_unet_decoder_forward.5} parent=11 // pred_region
          _
        $region28: #{multi_scale_res_unet_decoder_forward.5} parent=11 // pred_fallthru
          _
        // Predicated region
        $region29: #{multi_scale_res_unet_decoder_forward.5} parent=11 // pred_check
          %p342 = pneg %p179
        $region30: #{multi_scale_res_unet_decoder_forward.5} parent=11 // pred_check_branch
          %344 = sbr.rel (%p342) target = $region32
        $region31: #{multi_scale_res_unet_decoder_forward.5} parent=11 // pred_region
          _
        $region32: #{multi_scale_res_unet_decoder_forward.5} parent=11 // pred_fallthru
          _
        // Predicated region
        $region33: #{multi_scale_res_unet_decoder_forward.5} parent=11 // pred_check
          %p345 = pneg %p200
        $region34: #{multi_scale_res_unet_decoder_forward.5} parent=11 // pred_check_branch
          %347 = sbr.rel (%p345) target = $region36
        $region35: #{multi_scale_res_unet_decoder_forward.5} parent=11 // pred_region
          _
        $region36: #{multi_scale_res_unet_decoder_forward.5} parent=11 // pred_fallthru
          _
        // Predicated region
        $region37: #{multi_scale_res_unet_decoder_forward.5} parent=11 // pred_check
          %p348 = pneg %p221
        $region38: #{multi_scale_res_unet_decoder_forward.5} parent=11 // pred_check_branch
          %350 = sbr.rel (%p348) target = $region40
        $region39: #{multi_scale_res_unet_decoder_forward.5} parent=11 // pred_region
          _
        $region40: #{multi_scale_res_unet_decoder_forward.5} parent=11 // pred_fallthru
          _
        // Predicated region
        $region41: #{multi_scale_res_unet_decoder_forward.5} parent=11 // pred_check
          %p351 = pneg %p242
        $region42: #{multi_scale_res_unet_decoder_forward.5} parent=11 // pred_check_branch
          %353 = sbr.rel (%p351) target = $region44
        $region43: #{multi_scale_res_unet_decoder_forward.5} parent=11 // pred_region
          _
        $region44: #{multi_scale_res_unet_decoder_forward.5} parent=11 // pred_fallthru
          _
        // Predicated region
        $region45: #{multi_scale_res_unet_decoder_forward.5} parent=11 // pred_check
          %p354 = pneg %p263
        $region46: #{multi_scale_res_unet_decoder_forward.5} parent=11 // pred_check_branch
          %356 = sbr.rel (%p354) target = $region48
        $region47: #{multi_scale_res_unet_decoder_forward.5} parent=11 // pred_region
          _
        $region48: #{multi_scale_res_unet_decoder_forward.5} parent=11 // pred_fallthru
          _
      $region12: #{multi_scale_res_unet_decoder_forward.5} parent=5 // pred_fallthru
        _
      %p357 = scmp.lt.s32.totalorder %s22, 2
      // Predicated region
      $region49: #{multi_scale_res_unet_decoder_forward.5} parent=5 // pred_check
        %p358 = pneg %p357
      $region50: #{multi_scale_res_unet_decoder_forward.5} parent=5 // pred_check_branch
        %360 = sbr.rel (%p358) target = $region52
      $region51: #{multi_scale_res_unet_decoder_forward.5} parent=5 // pred_region
        // Predicated region
        $region53: #{multi_scale_res_unet_decoder_forward.5} parent=51 // pred_check
          %p361 = pneg %p42
        $region54: #{multi_scale_res_unet_decoder_forward.5} parent=51 // pred_check_branch
          %363 = sbr.rel (%p361) target = $region56
        $region55: #{multi_scale_res_unet_decoder_forward.5} parent=51 // pred_region
          %p364 = scmp.lt.s32.totalorder %s22, 1
          %s365 = scalar_select %p364, %s22, 1
          %s366 = smul.addr %s365, 3
          %s367 = smul.addr %s366, 8
          %s368 = scalar_lea.vmem %s0, %s367
        $region56: #{multi_scale_res_unet_decoder_forward.5} parent=51 // pred_fallthru
          _
        // Predicated region
        $region57: #{multi_scale_res_unet_decoder_forward.5} parent=51 // pred_check
          %p369 = pneg %p68
        $region58: #{multi_scale_res_unet_decoder_forward.5} parent=51 // pred_check_branch
          %371 = sbr.rel (%p369) target = $region60
        $region59: #{multi_scale_res_unet_decoder_forward.5} parent=51 // pred_region
          %p372 = scmp.lt.s32.totalorder %s22, 1
          %s373 = scalar_select %p372, %s22, 1
          %s374 = smul.addr %s373, 3
          %s375 = smul.addr %s374, 4
          %s376 = scalar_lea.vmem %s1, %s375
        $region60: #{multi_scale_res_unet_decoder_forward.5} parent=51 // pred_fallthru
          _
      $region52: #{multi_scale_res_unet_decoder_forward.5} parent=5 // pred_fallthru
        _
      %p377 = scmp.le.s32.totalorder 1, %s22
      %p378 = scmp.lt.s32.totalorder %s22, 3
      %p379 = pnand %p377, %p378
      %p380 = pneg %p379
      // Predicated region
      $region61: #{multi_scale_res_unet_decoder_forward.5} parent=5 // pred_check
        _
      $region62: #{multi_scale_res_unet_decoder_forward.5} parent=5 // pred_check_branch
        %382 = sbr.rel (%p379) target = $region64
      $region63: #{multi_scale_res_unet_decoder_forward.5} parent=5 // pred_region
        %s383 = ssub.s32 %s22, 1
        %p384 = scmp.lt.s32.totalorder %s27, 1
        %s385 = scalar_select %p384, %s27, 1
        %s386 = smul.addr %s385, 3
        %s387 = smul.addr %s386, 8
        %s388 = scalar_lea.vmem %s0, %s387
        %p389 = pneg %p48
        %p390 = pneg %p45
        %p391 = scmp.lt.s32.totalorder %s27, 1
        %s392 = scalar_select %p391, %s27, 1
        %s393 = smul.addr %s392, 3
        %s394 = smul.addr %s393, 4
        %s395 = scalar_lea.vmem %s1, %s394
        %p396 = pneg %p74
        %p397 = pneg %p71
        %p398 = pneg %p95
        %p399 = pneg %p92
        %p400 = pneg %p116
        %p401 = pneg %p113
        %p402 = pneg %p137
        %p403 = pneg %p134
        %p404 = pneg %p158
        %p405 = pneg %p155
        %p406 = pneg %p179
        %p407 = pneg %p176
        %p408 = pneg %p200
        %p409 = pneg %p197
        %p410 = pneg %p221
        %p411 = pneg %p218
        %p412 = pneg %p242
        %p413 = pneg %p239
        %p414 = pneg %p263
        %p415 = pneg %p260
        %p416 = pneg %p289
        %p417 = pneg %p286
        %s418 = sand.u32 %s276, 1
        %s419 = scalar_lea.sflag [#allocation4], %s418
        %s420 = sand.u32 %s276, 1
        %s421 = smul.addr %s420, 12
        %s422 = scalar_lea.vmem [#allocation3], %s421
        %p423 = pneg %p315
        %p424 = pneg %p312
        %p425 = scmp.lt.s32.totalorder %s27, 1
        %s426 = scalar_select %p425, %s27, 1
        %s427 = smul.addr %s426, 3
        %s428 = smul.addr %s427, 2
        %s429 = scalar_lea.vmem %s12, %s428
        %p430 = scmp.lt.s32.totalorder %s27, 1
        %s431 = scalar_select %p430, %s27, 1
        %s432 = smul.addr %s431, 3
        %s433 = smul.addr %s432, 8
        %s434 = scalar_lea.vmem %s0, %s433
        %p435 = scmp.lt.s32.totalorder %s27, 1
        %s436 = scalar_select %p435, %s27, 1
        %s437 = smul.addr %s436, 3
        %s438 = smul.addr %s437, 4
        %s439 = scalar_lea.vmem %s1, %s438
        %p440 = scmp.lt.s32.totalorder %s27, 1
        %s441 = scalar_select %p440, %s27, 1
        %s442 = smul.addr %s441, 3
        %s443 = smul.addr %s442, 2
        %s444 = scalar_lea.vmem %s12, %s443
        %v445 = vld [vmem:[%s9] sm:$0x7]
        %v446 = vld [vmem:[%s2] sm:$0xf]
        %v447 = vld [vmem:[%s434] sm:$0xff]
        %v448 = vld [vmem:[%s434 + $0x8] sm:$0xff]
        %v449 = vld [vmem:[%s434 + $0x10] sm:$0xff]
        %v450 = vld [vmem:[%s3] sm:$0xf]
        %v451 = vld [vmem:[%s439] sm:$0xff]
        %v452 = vld [vmem:[%s439 + $0x8] sm:$0xf]
        %v455 = vcombine.high %v451, %v451
        %vm456 = vcmask 31744
        %v458 = vsel %vm456, %v450, 0
        %vm460 = vcmask 1043456
        %v461 = vsel %vm460, %v451, 0
        %v463 = vsel %vm460, %v455, 0
        %v465 = vsel %vm460, %v452, 0
        %467 = vmatprep.subr.mxu0 0.0
        %468 = vmatpush1.msra.mxu0 0.0
        %469 = vmatprep.subr.mxu0 0.0
        %470 = vmatpush1.msra.mxu0 0.0
        %471 = vmatprep.subr.mxu0 0.0
        %472 = vmatpush1.msra.mxu0 0.0
        %473 = vmatprep.subr.mxu0 0.0
        %474 = vmatpush1.msra.mxu0 0.0
        %475 = vmatprep.subr.mxu0 0.0
        %476 = vmatpush1.msra.mxu0 0.0
        %477 = vmatprep.subr.mxu0 0.0
        %478 = vmatpush1.msra.mxu0 0.0
        %479 = vmatprep.subr.mxu0 0.0
        %480 = vmatpush1.msra.mxu0 0.0
        %481 = vmatprep.subr.mxu0 0.0
        %482 = vmatpush1.msra.mxu0 0.0
        %483 = vmatprep.subr.mxu0 0.0
        %484 = vmatpush1.msra.mxu0 0.0
        %485 = vmatprep.subr.mxu0 0.0
        %486 = vmatpush1.msra.mxu0 0.0
        %487 = vmatprep.subr.mxu0 0.0
        %488 = vmatpush1.msra.mxu0 0.0
        %489 = vmatprep.subr.mxu0 0.0
        %490 = vmatpush1.msra.mxu0 0.0
        %491 = vmatprep.subr.mxu0 0.0
        %492 = vmatpush1.msra.mxu0 0.0
        %493 = vmatprep.subr.mxu0 0.0
        %494 = vmatpush1.msra.mxu0 0.0
        %495 = vmatprep.subr.mxu0 0.0
        %496 = vmatpush1.msra.mxu0 0.0
        %497 = vmatprep.subr.mxu0 %v463
        %498 = vmatpush1.msra.mxu0 %v461
        %499 = vmatprep.subr.mxu0 0.0
        %500 = vmatpush2.msra.mxu0 0.0
        %501 = vmatprep.subr.mxu0 0.0
        %502 = vmatpush2.msra.mxu0 0.0
        %503 = vmatprep.subr.mxu0 0.0
        %504 = vmatpush2.msra.mxu0 0.0
        %505 = vmatprep.subr.mxu0 0.0
        %506 = vmatpush2.msra.mxu0 0.0
        %507 = vmatprep.subr.mxu0 0.0
        %508 = vmatpush2.msra.mxu0 0.0
        %509 = vmatprep.subr.mxu0 0.0
        %510 = vmatpush2.msra.mxu0 0.0
        %511 = vmatprep.subr.mxu0 0.0
        %512 = vmatpush2.msra.mxu0 0.0
        %513 = vmatprep.subr.mxu0 0.0
        %514 = vmatpush2.msra.mxu0 0.0
        %515 = vmatprep.subr.mxu0 0.0
        %516 = vmatpush2.msra.mxu0 0.0
        %517 = vmatprep.subr.mxu0 0.0
        %518 = vmatpush2.msra.mxu0 0.0
        %519 = vmatprep.subr.mxu0 0.0
        %520 = vmatpush2.msra.mxu0 0.0
        %521 = vmatprep.subr.mxu0 0.0
        %522 = vmatpush2.msra.mxu0 0.0
        %523 = vmatprep.subr.mxu0 0.0
        %524 = vmatpush2.msra.mxu0 0.0
        %525 = vmatprep.subr.mxu0 0.0
        %526 = vmatpush2.msra.mxu0 0.0
        %527 = vmatprep.subr.mxu0 0.0
        %528 = vmatpush2.msra.mxu0 0.0
        %529 = vmatprep.subr.mxu0 0.0
        %530 = vmatpush2.msra.mxu0 0.0
        %531 = vmatprep.mubr.f32.mxu0 0.0
        %532 = vmatmul.mubr.f32.gmra.mxu0 %v458
        %v533 = vpop.f32.mrf.mxu0
        %v534 = vadd.f32 0.0, %v533
        %v535 = vpop.f32.mrf.mxu0
        %v536 = vadd.f32 0.0, %v535
        %537 = vdwg.mxu0
        %538 = vmatprep.subr.mxu0 0.0
        %539 = vmatpush1.msra.mxu0 0.0
        %540 = vmatprep.subr.mxu0 0.0
        %541 = vmatpush1.msra.mxu0 0.0
        %542 = vmatprep.subr.mxu0 0.0
        %543 = vmatpush1.msra.mxu0 0.0
        %544 = vmatprep.subr.mxu0 0.0
        %545 = vmatpush1.msra.mxu0 0.0
        %546 = vmatprep.subr.mxu0 0.0
        %547 = vmatpush1.msra.mxu0 0.0
        %548 = vmatprep.subr.mxu0 0.0
        %549 = vmatpush1.msra.mxu0 0.0
        %550 = vmatprep.subr.mxu0 0.0
        %551 = vmatpush1.msra.mxu0 0.0
        %552 = vmatprep.subr.mxu0 0.0
        %553 = vmatpush1.msra.mxu0 0.0
        %554 = vmatprep.subr.mxu0 0.0
        %555 = vmatpush1.msra.mxu0 0.0
        %556 = vmatprep.subr.mxu0 0.0
        %557 = vmatpush1.msra.mxu0 0.0
        %558 = vmatprep.subr.mxu0 0.0
        %559 = vmatpush1.msra.mxu0 0.0
        %560 = vmatprep.subr.mxu0 0.0
        %561 = vmatpush1.msra.mxu0 0.0
        %562 = vmatprep.subr.mxu0 0.0
        %563 = vmatpush1.msra.mxu0 0.0
        %564 = vmatprep.subr.mxu0 0.0
        %565 = vmatpush1.msra.mxu0 0.0
        %566 = vmatprep.subr.mxu0 0.0
        %567 = vmatpush1.msra.mxu0 0.0
        %568 = vmatprep.subr.mxu0 0.0
        %569 = vmatpush1.msra.mxu0 %v465
        %570 = vmatprep.subr.mxu0 0.0
        %571 = vmatpush2.msra.mxu0 0.0
        %572 = vmatprep.subr.mxu0 0.0
        %573 = vmatpush2.msra.mxu0 0.0
        %574 = vmatprep.subr.mxu0 0.0
        %575 = vmatpush2.msra.mxu0 0.0
        %576 = vmatprep.subr.mxu0 0.0
        %577 = vmatpush2.msra.mxu0 0.0
        %578 = vmatprep.subr.mxu0 0.0
        %579 = vmatpush2.msra.mxu0 0.0
        %580 = vmatprep.subr.mxu0 0.0
        %581 = vmatpush2.msra.mxu0 0.0
        %582 = vmatprep.subr.mxu0 0.0
        %583 = vmatpush2.msra.mxu0 0.0
        %584 = vmatprep.subr.mxu0 0.0
        %585 = vmatpush2.msra.mxu0 0.0
        %586 = vmatprep.subr.mxu0 0.0
        %587 = vmatpush2.msra.mxu0 0.0
        %588 = vmatprep.subr.mxu0 0.0
        %589 = vmatpush2.msra.mxu0 0.0
        %590 = vmatprep.subr.mxu0 0.0
        %591 = vmatpush2.msra.mxu0 0.0
        %592 = vmatprep.subr.mxu0 0.0
        %593 = vmatpush2.msra.mxu0 0.0
        %594 = vmatprep.subr.mxu0 0.0
        %595 = vmatpush2.msra.mxu0 0.0
        %596 = vmatprep.subr.mxu0 0.0
        %597 = vmatpush2.msra.mxu0 0.0
        %598 = vmatprep.subr.mxu0 0.0
        %599 = vmatpush2.msra.mxu0 0.0
        %600 = vmatprep.subr.mxu0 0.0
        %601 = vmatpush2.msra.mxu0 0.0
        %602 = vmatprep.mubr.f32.mxu0 0.0
        %603 = vmatmul.mubr.f32.gmra.mxu0 %v458
        %v604 = vpop.f32.mrf.mxu0
        %v605 = vadd.f32 0.0, %v604
        %v606 = vpop.f32.mrf.mxu0
        %607 = vdwg.mxu0
        %vm608 = vcmask 64512
        %v610 = vsel %vm608, %v446, 0
        %612 = vmatprep.subr.mxu0 0.0
        %613 = vmatpush1.msra.mxu0 0.0
        %614 = vmatprep.subr.mxu0 0.0
        %615 = vmatpush1.msra.mxu0 0.0
        %616 = vmatprep.subr.mxu0 0.0
        %617 = vmatpush1.msra.mxu0 0.0
        %618 = vmatprep.subr.mxu0 0.0
        %619 = vmatpush1.msra.mxu0 0.0
        %620 = vmatprep.subr.mxu0 0.0
        %621 = vmatpush1.msra.mxu0 0.0
        %622 = vmatprep.subr.mxu0 0.0
        %623 = vmatpush1.msra.mxu0 0.0
        %624 = vmatprep.subr.mxu0 0.0
        %625 = vmatpush1.msra.mxu0 0.0
        %626 = vmatprep.subr.mxu0 0.0
        %627 = vmatpush1.msra.mxu0 0.0
        %628 = vmatprep.subr.mxu0 0.0
        %629 = vmatpush1.msra.mxu0 0.0
        %630 = vmatprep.subr.mxu0 0.0
        %631 = vmatpush1.msra.mxu0 0.0
        %632 = vmatprep.subr.mxu0 0.0
        %633 = vmatpush1.msra.mxu0 0.0
        %634 = vmatprep.subr.mxu0 0.0
        %635 = vmatpush1.msra.mxu0 0.0
        %636 = vmatprep.subr.mxu0 0.0
        %637 = vmatpush1.msra.mxu0 0.0
        %638 = vmatprep.subr.mxu0 0.0
        %639 = vmatpush1.msra.mxu0 0.0
        %640 = vmatprep.subr.mxu0 0.0
        %641 = vmatpush1.msra.mxu0 0.0
        %642 = vmatprep.subr.mxu0 %v448
        %643 = vmatpush1.msra.mxu0 %v447
        %644 = vmatprep.subr.mxu0 0.0
        %645 = vmatpush2.msra.mxu0 0.0
        %646 = vmatprep.subr.mxu0 0.0
        %647 = vmatpush2.msra.mxu0 0.0
        %648 = vmatprep.subr.mxu0 0.0
        %649 = vmatpush2.msra.mxu0 0.0
        %650 = vmatprep.subr.mxu0 0.0
        %651 = vmatpush2.msra.mxu0 0.0
        %652 = vmatprep.subr.mxu0 0.0
        %653 = vmatpush2.msra.mxu0 0.0
        %654 = vmatprep.subr.mxu0 0.0
        %655 = vmatpush2.msra.mxu0 0.0
        %656 = vmatprep.subr.mxu0 0.0
        %657 = vmatpush2.msra.mxu0 0.0
        %658 = vmatprep.subr.mxu0 0.0
        %659 = vmatpush2.msra.mxu0 0.0
        %660 = vmatprep.subr.mxu0 0.0
        %661 = vmatpush2.msra.mxu0 0.0
        %662 = vmatprep.subr.mxu0 0.0
        %663 = vmatpush2.msra.mxu0 0.0
        %664 = vmatprep.subr.mxu0 0.0
        %665 = vmatpush2.msra.mxu0 0.0
        %666 = vmatprep.subr.mxu0 0.0
        %667 = vmatpush2.msra.mxu0 0.0
        %668 = vmatprep.subr.mxu0 0.0
        %669 = vmatpush2.msra.mxu0 0.0
        %670 = vmatprep.subr.mxu0 0.0
        %671 = vmatpush2.msra.mxu0 0.0
        %672 = vmatprep.subr.mxu0 0.0
        %673 = vmatpush2.msra.mxu0 0.0
        %674 = vmatprep.subr.mxu0 0.0
        %675 = vmatpush2.msra.mxu0 0.0
        %676 = vmatprep.mubr.f32.mxu0 0.0
        %677 = vmatmul.mubr.f32.gmra.mxu0 %v610
        %v678 = vpop.f32.mrf.mxu0
        %v679 = vadd.f32 %v534, %v678
        %v680 = vpop.f32.mrf.mxu0
        %v681 = vadd.f32 %v536, %v680
        %682 = vdwg.mxu0
        %683 = vmatprep.subr.mxu0 0.0
        %684 = vmatpush1.msra.mxu0 0.0
        %685 = vmatprep.subr.mxu0 0.0
        %686 = vmatpush1.msra.mxu0 0.0
        %687 = vmatprep.subr.mxu0 0.0
        %688 = vmatpush1.msra.mxu0 0.0
        %689 = vmatprep.subr.mxu0 0.0
        %690 = vmatpush1.msra.mxu0 0.0
        %691 = vmatprep.subr.mxu0 0.0
        %692 = vmatpush1.msra.mxu0 0.0
        %693 = vmatprep.subr.mxu0 0.0
        %694 = vmatpush1.msra.mxu0 0.0
        %695 = vmatprep.subr.mxu0 0.0
        %696 = vmatpush1.msra.mxu0 0.0
        %697 = vmatprep.subr.mxu0 0.0
        %698 = vmatpush1.msra.mxu0 0.0
        %699 = vmatprep.subr.mxu0 0.0
        %700 = vmatpush1.msra.mxu0 0.0
        %701 = vmatprep.subr.mxu0 0.0
        %702 = vmatpush1.msra.mxu0 0.0
        %703 = vmatprep.subr.mxu0 0.0
        %704 = vmatpush1.msra.mxu0 0.0
        %705 = vmatprep.subr.mxu0 0.0
        %706 = vmatpush1.msra.mxu0 0.0
        %707 = vmatprep.subr.mxu0 0.0
        %708 = vmatpush1.msra.mxu0 0.0
        %709 = vmatprep.subr.mxu0 0.0
        %710 = vmatpush1.msra.mxu0 0.0
        %711 = vmatprep.subr.mxu0 0.0
        %712 = vmatpush1.msra.mxu0 0.0
        %713 = vmatprep.subr.mxu0 0.0
        %714 = vmatpush1.msra.mxu0 %v449
        %715 = vmatprep.subr.mxu0 0.0
        %716 = vmatpush2.msra.mxu0 0.0
        %717 = vmatprep.subr.mxu0 0.0
        %718 = vmatpush2.msra.mxu0 0.0
        %719 = vmatprep.subr.mxu0 0.0
        %720 = vmatpush2.msra.mxu0 0.0
        %721 = vmatprep.subr.mxu0 0.0
        %722 = vmatpush2.msra.mxu0 0.0
        %723 = vmatprep.subr.mxu0 0.0
        %724 = vmatpush2.msra.mxu0 0.0
        %725 = vmatprep.subr.mxu0 0.0
        %726 = vmatpush2.msra.mxu0 0.0
        %727 = vmatprep.subr.mxu0 0.0
        %728 = vmatpush2.msra.mxu0 0.0
        %729 = vmatprep.subr.mxu0 0.0
        %730 = vmatpush2.msra.mxu0 0.0
        %731 = vmatprep.subr.mxu0 0.0
        %732 = vmatpush2.msra.mxu0 0.0
        %733 = vmatprep.subr.mxu0 0.0
        %734 = vmatpush2.msra.mxu0 0.0
        %735 = vmatprep.subr.mxu0 0.0
        %736 = vmatpush2.msra.mxu0 0.0
        %737 = vmatprep.subr.mxu0 0.0
        %738 = vmatpush2.msra.mxu0 0.0
        %739 = vmatprep.subr.mxu0 0.0
        %740 = vmatpush2.msra.mxu0 0.0
        %741 = vmatprep.subr.mxu0 0.0
        %742 = vmatpush2.msra.mxu0 0.0
        %743 = vmatprep.subr.mxu0 0.0
        %744 = vmatpush2.msra.mxu0 0.0
        %745 = vmatprep.subr.mxu0 0.0
        %746 = vmatpush2.msra.mxu0 0.0
        %747 = vmatprep.mubr.f32.mxu0 0.0
        %748 = vmatmul.mubr.f32.gmra.mxu0 %v610
        %v749 = vpop.f32.mrf.mxu0
        %v750 = vadd.f32 %v605, %v749
        %v751 = vpop.f32.mrf.mxu0
        %752 = vdwg.mxu0
        %s753 = scalar_lea.vmem %s2, 4
        %v754 = vld [vmem:[%s753] sm:$0xf]
        %v755 = vld [vmem:[%s434] sm:$0xff]
        %v756 = vld [vmem:[%s434 + $0x8] sm:$0xff]
        %v757 = vld [vmem:[%s434 + $0x10] sm:$0xff]
        %s758 = scalar_lea.vmem %s3, 4
        %v759 = vld [vmem:[%s758] sm:$0xf]
        %v760 = vld [vmem:[%s439] sm:$0xff]
        %v761 = vld [vmem:[%s439 + $0x8] sm:$0xf]
        %v764 = vcombine.high %v760, %v760
        %765 = vrot.lane.b32.xlu0 %v760, 127
        %v766 = vpop.permute.xlu0 %765
        %767 = vrot.lane.b32.xlu0 %v764, 127
        %v768 = vpop.permute.xlu0 %767
        %769 = vrot.lane.b32.xlu0 %v761, 127
        %v770 = vpop.permute.xlu0 %769
        %vm771 = vcmask 1039360
        %v772 = vsel %vm771, %v766, %v768
        %v773 = vsel %vm771, %v768, %v770
        %v775 = vsel %vm456, %v759, 0
        %v777 = vsel %vm460, %v772, 0
        %v779 = vsel %vm460, %v773, 0
        %v781 = vsel %vm460, %v770, 0
        %783 = vmatprep.subr.mxu0 0.0
        %784 = vmatpush1.msra.mxu0 0.0
        %785 = vmatprep.subr.mxu0 0.0
        %786 = vmatpush1.msra.mxu0 0.0
        %787 = vmatprep.subr.mxu0 0.0
        %788 = vmatpush1.msra.mxu0 0.0
        %789 = vmatprep.subr.mxu0 0.0
        %790 = vmatpush1.msra.mxu0 0.0
        %791 = vmatprep.subr.mxu0 0.0
        %792 = vmatpush1.msra.mxu0 0.0
        %793 = vmatprep.subr.mxu0 0.0
        %794 = vmatpush1.msra.mxu0 0.0
        %795 = vmatprep.subr.mxu0 0.0
        %796 = vmatpush1.msra.mxu0 0.0
        %797 = vmatprep.subr.mxu0 0.0
        %798 = vmatpush1.msra.mxu0 0.0
        %799 = vmatprep.subr.mxu0 0.0
        %800 = vmatpush1.msra.mxu0 0.0
        %801 = vmatprep.subr.mxu0 0.0
        %802 = vmatpush1.msra.mxu0 0.0
        %803 = vmatprep.subr.mxu0 0.0
        %804 = vmatpush1.msra.mxu0 0.0
        %805 = vmatprep.subr.mxu0 0.0
        %806 = vmatpush1.msra.mxu0 0.0
        %807 = vmatprep.subr.mxu0 0.0
        %808 = vmatpush1.msra.mxu0 0.0
        %809 = vmatprep.subr.mxu0 0.0
        %810 = vmatpush1.msra.mxu0 0.0
        %811 = vmatprep.subr.mxu0 0.0
        %812 = vmatpush1.msra.mxu0 0.0
        %813 = vmatprep.subr.mxu0 %v779
        %814 = vmatpush1.msra.mxu0 %v777
        %815 = vmatprep.subr.mxu0 0.0
        %816 = vmatpush2.msra.mxu0 0.0
        %817 = vmatprep.subr.mxu0 0.0
        %818 = vmatpush2.msra.mxu0 0.0
        %819 = vmatprep.subr.mxu0 0.0
        %820 = vmatpush2.msra.mxu0 0.0
        %821 = vmatprep.subr.mxu0 0.0
        %822 = vmatpush2.msra.mxu0 0.0
        %823 = vmatprep.subr.mxu0 0.0
        %824 = vmatpush2.msra.mxu0 0.0
        %825 = vmatprep.subr.mxu0 0.0
        %826 = vmatpush2.msra.mxu0 0.0
        %827 = vmatprep.subr.mxu0 0.0
        %828 = vmatpush2.msra.mxu0 0.0
        %829 = vmatprep.subr.mxu0 0.0
        %830 = vmatpush2.msra.mxu0 0.0
        %831 = vmatprep.subr.mxu0 0.0
        %832 = vmatpush2.msra.mxu0 0.0
        %833 = vmatprep.subr.mxu0 0.0
        %834 = vmatpush2.msra.mxu0 0.0
        %835 = vmatprep.subr.mxu0 0.0
        %836 = vmatpush2.msra.mxu0 0.0
        %837 = vmatprep.subr.mxu0 0.0
        %838 = vmatpush2.msra.mxu0 0.0
        %839 = vmatprep.subr.mxu0 0.0
        %840 = vmatpush2.msra.mxu0 0.0
        %841 = vmatprep.subr.mxu0 0.0
        %842 = vmatpush2.msra.mxu0 0.0
        %843 = vmatprep.subr.mxu0 0.0
        %844 = vmatpush2.msra.mxu0 0.0
        %845 = vmatprep.subr.mxu0 0.0
        %846 = vmatpush2.msra.mxu0 0.0
        %847 = vmatprep.mubr.f32.mxu0 0.0
        %848 = vmatmul.mubr.f32.gmra.mxu0 %v775
        %v849 = vpop.f32.mrf.mxu0
        %v850 = vadd.f32 0.0, %v849
        %v851 = vpop.f32.mrf.mxu0
        %v852 = vadd.f32 0.0, %v851
        %853 = vdwg.mxu0
        %854 = vmatprep.subr.mxu0 0.0
        %855 = vmatpush1.msra.mxu0 0.0
        %856 = vmatprep.subr.mxu0 0.0
        %857 = vmatpush1.msra.mxu0 0.0
        %858 = vmatprep.subr.mxu0 0.0
        %859 = vmatpush1.msra.mxu0 0.0
        %860 = vmatprep.subr.mxu0 0.0
        %861 = vmatpush1.msra.mxu0 0.0
        %862 = vmatprep.subr.mxu0 0.0
        %863 = vmatpush1.msra.mxu0 0.0
        %864 = vmatprep.subr.mxu0 0.0
        %865 = vmatpush1.msra.mxu0 0.0
        %866 = vmatprep.subr.mxu0 0.0
        %867 = vmatpush1.msra.mxu0 0.0
        %868 = vmatprep.subr.mxu0 0.0
        %869 = vmatpush1.msra.mxu0 0.0
        %870 = vmatprep.subr.mxu0 0.0
        %871 = vmatpush1.msra.mxu0 0.0
        %872 = vmatprep.subr.mxu0 0.0
        %873 = vmatpush1.msra.mxu0 0.0
        %874 = vmatprep.subr.mxu0 0.0
        %875 = vmatpush1.msra.mxu0 0.0
        %876 = vmatprep.subr.mxu0 0.0
        %877 = vmatpush1.msra.mxu0 0.0
        %878 = vmatprep.subr.mxu0 0.0
        %879 = vmatpush1.msra.mxu0 0.0
        %880 = vmatprep.subr.mxu0 0.0
        %881 = vmatpush1.msra.mxu0 0.0
        %882 = vmatprep.subr.mxu0 0.0
        %883 = vmatpush1.msra.mxu0 0.0
        %884 = vmatprep.subr.mxu0 0.0
        %885 = vmatpush1.msra.mxu0 %v781
        %886 = vmatprep.subr.mxu0 0.0
        %887 = vmatpush2.msra.mxu0 0.0
        %888 = vmatprep.subr.mxu0 0.0
        %889 = vmatpush2.msra.mxu0 0.0
        %890 = vmatprep.subr.mxu0 0.0
        %891 = vmatpush2.msra.mxu0 0.0
        %892 = vmatprep.subr.mxu0 0.0
        %893 = vmatpush2.msra.mxu0 0.0
        %894 = vmatprep.subr.mxu0 0.0
        %895 = vmatpush2.msra.mxu0 0.0
        %896 = vmatprep.subr.mxu0 0.0
        %897 = vmatpush2.msra.mxu0 0.0
        %898 = vmatprep.subr.mxu0 0.0
        %899 = vmatpush2.msra.mxu0 0.0
        %900 = vmatprep.subr.mxu0 0.0
        %901 = vmatpush2.msra.mxu0 0.0
        %902 = vmatprep.subr.mxu0 0.0
        %903 = vmatpush2.msra.mxu0 0.0
        %904 = vmatprep.subr.mxu0 0.0
        %905 = vmatpush2.msra.mxu0 0.0
        %906 = vmatprep.subr.mxu0 0.0
        %907 = vmatpush2.msra.mxu0 0.0
        %908 = vmatprep.subr.mxu0 0.0
        %909 = vmatpush2.msra.mxu0 0.0
        %910 = vmatprep.subr.mxu0 0.0
        %911 = vmatpush2.msra.mxu0 0.0
        %912 = vmatprep.subr.mxu0 0.0
        %913 = vmatpush2.msra.mxu0 0.0
        %914 = vmatprep.subr.mxu0 0.0
        %915 = vmatpush2.msra.mxu0 0.0
        %916 = vmatprep.subr.mxu0 0.0
        %917 = vmatpush2.msra.mxu0 0.0
        %918 = vmatprep.mubr.f32.mxu0 0.0
        %919 = vmatmul.mubr.f32.gmra.mxu0 %v775
        %v920 = vpop.f32.mrf.mxu0
        %v921 = vadd.f32 0.0, %v920
        %v922 = vpop.f32.mrf.mxu0
        %923 = vdwg.mxu0
        %927 = vrot.lane.b32.xlu0 %v755, 127
        %v928 = vpop.permute.xlu0 %927
        %929 = vrot.lane.b32.xlu0 %v756, 127
        %v930 = vpop.permute.xlu0 %929
        %931 = vrot.lane.b32.xlu0 %v757, 127
        %v932 = vpop.permute.xlu0 %931
        %v933 = vsel %vm771, %v928, %v930
        %v934 = vsel %vm771, %v930, %v932
        %v939 = vsel %vm608, %v754, 0
        %941 = vmatprep.subr.mxu0 0.0
        %942 = vmatpush1.msra.mxu0 0.0
        %943 = vmatprep.subr.mxu0 0.0
        %944 = vmatpush1.msra.mxu0 0.0
        %945 = vmatprep.subr.mxu0 0.0
        %946 = vmatpush1.msra.mxu0 0.0
        %947 = vmatprep.subr.mxu0 0.0
        %948 = vmatpush1.msra.mxu0 0.0
        %949 = vmatprep.subr.mxu0 0.0
        %950 = vmatpush1.msra.mxu0 0.0
        %951 = vmatprep.subr.mxu0 0.0
        %952 = vmatpush1.msra.mxu0 0.0
        %953 = vmatprep.subr.mxu0 0.0
        %954 = vmatpush1.msra.mxu0 0.0
        %955 = vmatprep.subr.mxu0 0.0
        %956 = vmatpush1.msra.mxu0 0.0
        %957 = vmatprep.subr.mxu0 0.0
        %958 = vmatpush1.msra.mxu0 0.0
        %959 = vmatprep.subr.mxu0 0.0
        %960 = vmatpush1.msra.mxu0 0.0
        %961 = vmatprep.subr.mxu0 0.0
        %962 = vmatpush1.msra.mxu0 0.0
        %963 = vmatprep.subr.mxu0 0.0
        %964 = vmatpush1.msra.mxu0 0.0
        %965 = vmatprep.subr.mxu0 0.0
        %966 = vmatpush1.msra.mxu0 0.0
        %967 = vmatprep.subr.mxu0 0.0
        %968 = vmatpush1.msra.mxu0 0.0
        %969 = vmatprep.subr.mxu0 0.0
        %970 = vmatpush1.msra.mxu0 0.0
        %971 = vmatprep.subr.mxu0 %v934
        %972 = vmatpush1.msra.mxu0 %v933
        %973 = vmatprep.subr.mxu0 0.0
        %974 = vmatpush2.msra.mxu0 0.0
        %975 = vmatprep.subr.mxu0 0.0
        %976 = vmatpush2.msra.mxu0 0.0
        %977 = vmatprep.subr.mxu0 0.0
        %978 = vmatpush2.msra.mxu0 0.0
        %979 = vmatprep.subr.mxu0 0.0
        %980 = vmatpush2.msra.mxu0 0.0
        %981 = vmatprep.subr.mxu0 0.0
        %982 = vmatpush2.msra.mxu0 0.0
        %983 = vmatprep.subr.mxu0 0.0
        %984 = vmatpush2.msra.mxu0 0.0
        %985 = vmatprep.subr.mxu0 0.0
        %986 = vmatpush2.msra.mxu0 0.0
        %987 = vmatprep.subr.mxu0 0.0
        %988 = vmatpush2.msra.mxu0 0.0
        %989 = vmatprep.subr.mxu0 0.0
        %990 = vmatpush2.msra.mxu0 0.0
        %991 = vmatprep.subr.mxu0 0.0
        %992 = vmatpush2.msra.mxu0 0.0
        %993 = vmatprep.subr.mxu0 0.0
        %994 = vmatpush2.msra.mxu0 0.0
        %995 = vmatprep.subr.mxu0 0.0
        %996 = vmatpush2.msra.mxu0 0.0
        %997 = vmatprep.subr.mxu0 0.0
        %998 = vmatpush2.msra.mxu0 0.0
        %999 = vmatprep.subr.mxu0 0.0
        %1000 = vmatpush2.msra.mxu0 0.0
        %1001 = vmatprep.subr.mxu0 0.0
        %1002 = vmatpush2.msra.mxu0 0.0
        %1003 = vmatprep.subr.mxu0 0.0
        %1004 = vmatpush2.msra.mxu0 0.0
        %1005 = vmatprep.mubr.f32.mxu0 0.0
        %1006 = vmatmul.mubr.f32.gmra.mxu0 %v939
        %v1007 = vpop.f32.mrf.mxu0
        %v1008 = vadd.f32 %v850, %v1007
        %v1009 = vpop.f32.mrf.mxu0
        %v1010 = vadd.f32 %v852, %v1009
        %1011 = vdwg.mxu0
        %1012 = vmatprep.subr.mxu0 0.0
        %1013 = vmatpush1.msra.mxu0 0.0
        %1014 = vmatprep.subr.mxu0 0.0
        %1015 = vmatpush1.msra.mxu0 0.0
        %1016 = vmatprep.subr.mxu0 0.0
        %1017 = vmatpush1.msra.mxu0 0.0
        %1018 = vmatprep.subr.mxu0 0.0
        %1019 = vmatpush1.msra.mxu0 0.0
        %1020 = vmatprep.subr.mxu0 0.0
        %1021 = vmatpush1.msra.mxu0 0.0
        %1022 = vmatprep.subr.mxu0 0.0
        %1023 = vmatpush1.msra.mxu0 0.0
        %1024 = vmatprep.subr.mxu0 0.0
        %1025 = vmatpush1.msra.mxu0 0.0
        %1026 = vmatprep.subr.mxu0 0.0
        %1027 = vmatpush1.msra.mxu0 0.0
        %1028 = vmatprep.subr.mxu0 0.0
        %1029 = vmatpush1.msra.mxu0 0.0
        %1030 = vmatprep.subr.mxu0 0.0
        %1031 = vmatpush1.msra.mxu0 0.0
        %1032 = vmatprep.subr.mxu0 0.0
        %1033 = vmatpush1.msra.mxu0 0.0
        %1034 = vmatprep.subr.mxu0 0.0
        %1035 = vmatpush1.msra.mxu0 0.0
        %1036 = vmatprep.subr.mxu0 0.0
        %1037 = vmatpush1.msra.mxu0 0.0
        %1038 = vmatprep.subr.mxu0 0.0
        %1039 = vmatpush1.msra.mxu0 0.0
        %1040 = vmatprep.subr.mxu0 0.0
        %1041 = vmatpush1.msra.mxu0 0.0
        %1042 = vmatprep.subr.mxu0 0.0
        %1043 = vmatpush1.msra.mxu0 %v932
        %1044 = vmatprep.subr.mxu0 0.0
        %1045 = vmatpush2.msra.mxu0 0.0
        %1046 = vmatprep.subr.mxu0 0.0
        %1047 = vmatpush2.msra.mxu0 0.0
        %1048 = vmatprep.subr.mxu0 0.0
        %1049 = vmatpush2.msra.mxu0 0.0
        %1050 = vmatprep.subr.mxu0 0.0
        %1051 = vmatpush2.msra.mxu0 0.0
        %1052 = vmatprep.subr.mxu0 0.0
        %1053 = vmatpush2.msra.mxu0 0.0
        %1054 = vmatprep.subr.mxu0 0.0
        %1055 = vmatpush2.msra.mxu0 0.0
        %1056 = vmatprep.subr.mxu0 0.0
        %1057 = vmatpush2.msra.mxu0 0.0
        %1058 = vmatprep.subr.mxu0 0.0
        %1059 = vmatpush2.msra.mxu0 0.0
        %1060 = vmatprep.subr.mxu0 0.0
        %1061 = vmatpush2.msra.mxu0 0.0
        %1062 = vmatprep.subr.mxu0 0.0
        %1063 = vmatpush2.msra.mxu0 0.0
        %1064 = vmatprep.subr.mxu0 0.0
        %1065 = vmatpush2.msra.mxu0 0.0
        %1066 = vmatprep.subr.mxu0 0.0
        %1067 = vmatpush2.msra.mxu0 0.0
        %1068 = vmatprep.subr.mxu0 0.0
        %1069 = vmatpush2.msra.mxu0 0.0
        %1070 = vmatprep.subr.mxu0 0.0
        %1071 = vmatpush2.msra.mxu0 0.0
        %1072 = vmatprep.subr.mxu0 0.0
        %1073 = vmatpush2.msra.mxu0 0.0
        %1074 = vmatprep.subr.mxu0 0.0
        %1075 = vmatpush2.msra.mxu0 0.0
        %1076 = vmatprep.mubr.f32.mxu0 0.0
        %1077 = vmatmul.mubr.f32.gmra.mxu0 %v939
        %v1078 = vpop.f32.mrf.mxu0
        %v1079 = vadd.f32 %v921, %v1078
        %v1080 = vpop.f32.mrf.mxu0
        %1081 = vdwg.mxu0
        %v1082 = vadd.f32 %v679, %v1008
        %v1083 = vadd.f32 %v681, %v1010
        %v1084 = vadd.f32 %v750, %v1079
        %s1085 = scalar_lea.vmem %s2, 8
        %v1086 = vld [vmem:[%s1085] sm:$0xf]
        %v1087 = vld [vmem:[%s434] sm:$0xff]
        %v1088 = vld [vmem:[%s434 + $0x8] sm:$0xff]
        %v1089 = vld [vmem:[%s434 + $0x10] sm:$0xff]
        %s1090 = scalar_lea.vmem %s3, 8
        %v1091 = vld [vmem:[%s1090] sm:$0xf]
        %v1092 = vld [vmem:[%s439] sm:$0xff]
        %v1093 = vld [vmem:[%s439 + $0x8] sm:$0xf]
        %v1096 = vcombine.high %v1092, %v1092
        %1097 = vrot.lane.b32.xlu0 %v1092, 126
        %v1098 = vpop.permute.xlu0 %1097
        %1099 = vrot.lane.b32.xlu0 %v1096, 126
        %v1100 = vpop.permute.xlu0 %1099
        %1101 = vrot.lane.b32.xlu0 %v1093, 126
        %v1102 = vpop.permute.xlu0 %1101
        %vm1103 = vcmask 1031168
        %v1104 = vsel %vm1103, %v1098, %v1100
        %v1105 = vsel %vm1103, %v1100, %v1102
        %v1107 = vsel %vm456, %v1091, 0
        %v1109 = vsel %vm460, %v1104, 0
        %v1111 = vsel %vm460, %v1105, 0
        %v1113 = vsel %vm460, %v1102, 0
        %1115 = vmatprep.subr.mxu0 0.0
        %1116 = vmatpush1.msra.mxu0 0.0
        %1117 = vmatprep.subr.mxu0 0.0
        %1118 = vmatpush1.msra.mxu0 0.0
        %1119 = vmatprep.subr.mxu0 0.0
        %1120 = vmatpush1.msra.mxu0 0.0
        %1121 = vmatprep.subr.mxu0 0.0
        %1122 = vmatpush1.msra.mxu0 0.0
        %1123 = vmatprep.subr.mxu0 0.0
        %1124 = vmatpush1.msra.mxu0 0.0
        %1125 = vmatprep.subr.mxu0 0.0
        %1126 = vmatpush1.msra.mxu0 0.0
        %1127 = vmatprep.subr.mxu0 0.0
        %1128 = vmatpush1.msra.mxu0 0.0
        %1129 = vmatprep.subr.mxu0 0.0
        %1130 = vmatpush1.msra.mxu0 0.0
        %1131 = vmatprep.subr.mxu0 0.0
        %1132 = vmatpush1.msra.mxu0 0.0
        %1133 = vmatprep.subr.mxu0 0.0
        %1134 = vmatpush1.msra.mxu0 0.0
        %1135 = vmatprep.subr.mxu0 0.0
        %1136 = vmatpush1.msra.mxu0 0.0
        %1137 = vmatprep.subr.mxu0 0.0
        %1138 = vmatpush1.msra.mxu0 0.0
        %1139 = vmatprep.subr.mxu0 0.0
        %1140 = vmatpush1.msra.mxu0 0.0
        %1141 = vmatprep.subr.mxu0 0.0
        %1142 = vmatpush1.msra.mxu0 0.0
        %1143 = vmatprep.subr.mxu0 0.0
        %1144 = vmatpush1.msra.mxu0 0.0
        %1145 = vmatprep.subr.mxu0 %v1111
        %1146 = vmatpush1.msra.mxu0 %v1109
        %1147 = vmatprep.subr.mxu0 0.0
        %1148 = vmatpush2.msra.mxu0 0.0
        %1149 = vmatprep.subr.mxu0 0.0
        %1150 = vmatpush2.msra.mxu0 0.0
        %1151 = vmatprep.subr.mxu0 0.0
        %1152 = vmatpush2.msra.mxu0 0.0
        %1153 = vmatprep.subr.mxu0 0.0
        %1154 = vmatpush2.msra.mxu0 0.0
        %1155 = vmatprep.subr.mxu0 0.0
        %1156 = vmatpush2.msra.mxu0 0.0
        %1157 = vmatprep.subr.mxu0 0.0
        %1158 = vmatpush2.msra.mxu0 0.0
        %1159 = vmatprep.subr.mxu0 0.0
        %1160 = vmatpush2.msra.mxu0 0.0
        %1161 = vmatprep.subr.mxu0 0.0
        %1162 = vmatpush2.msra.mxu0 0.0
        %1163 = vmatprep.subr.mxu0 0.0
        %1164 = vmatpush2.msra.mxu0 0.0
        %1165 = vmatprep.subr.mxu0 0.0
        %1166 = vmatpush2.msra.mxu0 0.0
        %1167 = vmatprep.subr.mxu0 0.0
        %1168 = vmatpush2.msra.mxu0 0.0
        %1169 = vmatprep.subr.mxu0 0.0
        %1170 = vmatpush2.msra.mxu0 0.0
        %1171 = vmatprep.subr.mxu0 0.0
        %1172 = vmatpush2.msra.mxu0 0.0
        %1173 = vmatprep.subr.mxu0 0.0
        %1174 = vmatpush2.msra.mxu0 0.0
        %1175 = vmatprep.subr.mxu0 0.0
        %1176 = vmatpush2.msra.mxu0 0.0
        %1177 = vmatprep.subr.mxu0 0.0
        %1178 = vmatpush2.msra.mxu0 0.0
        %1179 = vmatprep.mubr.f32.mxu0 0.0
        %1180 = vmatmul.mubr.f32.gmra.mxu0 %v1107
        %v1181 = vpop.f32.mrf.mxu0
        %v1182 = vadd.f32 0.0, %v1181
        %v1183 = vpop.f32.mrf.mxu0
        %v1184 = vadd.f32 0.0, %v1183
        %1185 = vdwg.mxu0
        %1186 = vmatprep.subr.mxu0 0.0
        %1187 = vmatpush1.msra.mxu0 0.0
        %1188 = vmatprep.subr.mxu0 0.0
        %1189 = vmatpush1.msra.mxu0 0.0
        %1190 = vmatprep.subr.mxu0 0.0
        %1191 = vmatpush1.msra.mxu0 0.0
        %1192 = vmatprep.subr.mxu0 0.0
        %1193 = vmatpush1.msra.mxu0 0.0
        %1194 = vmatprep.subr.mxu0 0.0
        %1195 = vmatpush1.msra.mxu0 0.0
        %1196 = vmatprep.subr.mxu0 0.0
        %1197 = vmatpush1.msra.mxu0 0.0
        %1198 = vmatprep.subr.mxu0 0.0
        %1199 = vmatpush1.msra.mxu0 0.0
        %1200 = vmatprep.subr.mxu0 0.0
        %1201 = vmatpush1.msra.mxu0 0.0
        %1202 = vmatprep.subr.mxu0 0.0
        %1203 = vmatpush1.msra.mxu0 0.0
        %1204 = vmatprep.subr.mxu0 0.0
        %1205 = vmatpush1.msra.mxu0 0.0
        %1206 = vmatprep.subr.mxu0 0.0
        %1207 = vmatpush1.msra.mxu0 0.0
        %1208 = vmatprep.subr.mxu0 0.0
        %1209 = vmatpush1.msra.mxu0 0.0
        %1210 = vmatprep.subr.mxu0 0.0
        %1211 = vmatpush1.msra.mxu0 0.0
        %1212 = vmatprep.subr.mxu0 0.0
        %1213 = vmatpush1.msra.mxu0 0.0
        %1214 = vmatprep.subr.mxu0 0.0
        %1215 = vmatpush1.msra.mxu0 0.0
        %1216 = vmatprep.subr.mxu0 0.0
        %1217 = vmatpush1.msra.mxu0 %v1113
        %1218 = vmatprep.subr.mxu0 0.0
        %1219 = vmatpush2.msra.mxu0 0.0
        %1220 = vmatprep.subr.mxu0 0.0
        %1221 = vmatpush2.msra.mxu0 0.0
        %1222 = vmatprep.subr.mxu0 0.0
        %1223 = vmatpush2.msra.mxu0 0.0
        %1224 = vmatprep.subr.mxu0 0.0
        %1225 = vmatpush2.msra.mxu0 0.0
        %1226 = vmatprep.subr.mxu0 0.0
        %1227 = vmatpush2.msra.mxu0 0.0
        %1228 = vmatprep.subr.mxu0 0.0
        %1229 = vmatpush2.msra.mxu0 0.0
        %1230 = vmatprep.subr.mxu0 0.0
        %1231 = vmatpush2.msra.mxu0 0.0
        %1232 = vmatprep.subr.mxu0 0.0
        %1233 = vmatpush2.msra.mxu0 0.0
        %1234 = vmatprep.subr.mxu0 0.0
        %1235 = vmatpush2.msra.mxu0 0.0
        %1236 = vmatprep.subr.mxu0 0.0
        %1237 = vmatpush2.msra.mxu0 0.0
        %1238 = vmatprep.subr.mxu0 0.0
        %1239 = vmatpush2.msra.mxu0 0.0
        %1240 = vmatprep.subr.mxu0 0.0
        %1241 = vmatpush2.msra.mxu0 0.0
        %1242 = vmatprep.subr.mxu0 0.0
        %1243 = vmatpush2.msra.mxu0 0.0
        %1244 = vmatprep.subr.mxu0 0.0
        %1245 = vmatpush2.msra.mxu0 0.0
        %1246 = vmatprep.subr.mxu0 0.0
        %1247 = vmatpush2.msra.mxu0 0.0
        %1248 = vmatprep.subr.mxu0 0.0
        %1249 = vmatpush2.msra.mxu0 0.0
        %1250 = vmatprep.mubr.f32.mxu0 0.0
        %1251 = vmatmul.mubr.f32.gmra.mxu0 %v1107
        %v1252 = vpop.f32.mrf.mxu0
        %v1253 = vadd.f32 0.0, %v1252
        %v1254 = vpop.f32.mrf.mxu0
        %1255 = vdwg.mxu0
        %1259 = vrot.lane.b32.xlu0 %v1087, 126
        %v1260 = vpop.permute.xlu0 %1259
        %1261 = vrot.lane.b32.xlu0 %v1088, 126
        %v1262 = vpop.permute.xlu0 %1261
        %1263 = vrot.lane.b32.xlu0 %v1089, 126
        %v1264 = vpop.permute.xlu0 %1263
        %v1265 = vsel %vm1103, %v1260, %v1262
        %v1266 = vsel %vm1103, %v1262, %v1264
        %v1271 = vsel %vm608, %v1086, 0
        %1273 = vmatprep.subr.mxu0 0.0
        %1274 = vmatpush1.msra.mxu0 0.0
        %1275 = vmatprep.subr.mxu0 0.0
        %1276 = vmatpush1.msra.mxu0 0.0
        %1277 = vmatprep.subr.mxu0 0.0
        %1278 = vmatpush1.msra.mxu0 0.0
        %1279 = vmatprep.subr.mxu0 0.0
        %1280 = vmatpush1.msra.mxu0 0.0
        %1281 = vmatprep.subr.mxu0 0.0
        %1282 = vmatpush1.msra.mxu0 0.0
        %1283 = vmatprep.subr.mxu0 0.0
        %1284 = vmatpush1.msra.mxu0 0.0
        %1285 = vmatprep.subr.mxu0 0.0
        %1286 = vmatpush1.msra.mxu0 0.0
        %1287 = vmatprep.subr.mxu0 0.0
        %1288 = vmatpush1.msra.mxu0 0.0
        %1289 = vmatprep.subr.mxu0 0.0
        %1290 = vmatpush1.msra.mxu0 0.0
        %1291 = vmatprep.subr.mxu0 0.0
        %1292 = vmatpush1.msra.mxu0 0.0
        %1293 = vmatprep.subr.mxu0 0.0
        %1294 = vmatpush1.msra.mxu0 0.0
        %1295 = vmatprep.subr.mxu0 0.0
        %1296 = vmatpush1.msra.mxu0 0.0
        %1297 = vmatprep.subr.mxu0 0.0
        %1298 = vmatpush1.msra.mxu0 0.0
        %1299 = vmatprep.subr.mxu0 0.0
        %1300 = vmatpush1.msra.mxu0 0.0
        %1301 = vmatprep.subr.mxu0 0.0
        %1302 = vmatpush1.msra.mxu0 0.0
        %1303 = vmatprep.subr.mxu0 %v1266
        %1304 = vmatpush1.msra.mxu0 %v1265
        %1305 = vmatprep.subr.mxu0 0.0
        %1306 = vmatpush2.msra.mxu0 0.0
        %1307 = vmatprep.subr.mxu0 0.0
        %1308 = vmatpush2.msra.mxu0 0.0
        %1309 = vmatprep.subr.mxu0 0.0
        %1310 = vmatpush2.msra.mxu0 0.0
        %1311 = vmatprep.subr.mxu0 0.0
        %1312 = vmatpush2.msra.mxu0 0.0
        %1313 = vmatprep.subr.mxu0 0.0
        %1314 = vmatpush2.msra.mxu0 0.0
        %1315 = vmatprep.subr.mxu0 0.0
        %1316 = vmatpush2.msra.mxu0 0.0
        %1317 = vmatprep.subr.mxu0 0.0
        %1318 = vmatpush2.msra.mxu0 0.0
        %1319 = vmatprep.subr.mxu0 0.0
        %1320 = vmatpush2.msra.mxu0 0.0
        %1321 = vmatprep.subr.mxu0 0.0
        %1322 = vmatpush2.msra.mxu0 0.0
        %1323 = vmatprep.subr.mxu0 0.0
        %1324 = vmatpush2.msra.mxu0 0.0
        %1325 = vmatprep.subr.mxu0 0.0
        %1326 = vmatpush2.msra.mxu0 0.0
        %1327 = vmatprep.subr.mxu0 0.0
        %1328 = vmatpush2.msra.mxu0 0.0
        %1329 = vmatprep.subr.mxu0 0.0
        %1330 = vmatpush2.msra.mxu0 0.0
        %1331 = vmatprep.subr.mxu0 0.0
        %1332 = vmatpush2.msra.mxu0 0.0
        %1333 = vmatprep.subr.mxu0 0.0
        %1334 = vmatpush2.msra.mxu0 0.0
        %1335 = vmatprep.subr.mxu0 0.0
        %1336 = vmatpush2.msra.mxu0 0.0
        %1337 = vmatprep.mubr.f32.mxu0 0.0
        %1338 = vmatmul.mubr.f32.gmra.mxu0 %v1271
        %v1339 = vpop.f32.mrf.mxu0
        %v1340 = vadd.f32 %v1182, %v1339
        %v1341 = vpop.f32.mrf.mxu0
        %v1342 = vadd.f32 %v1184, %v1341
        %1343 = vdwg.mxu0
        %1344 = vmatprep.subr.mxu0 0.0
        %1345 = vmatpush1.msra.mxu0 0.0
        %1346 = vmatprep.subr.mxu0 0.0
        %1347 = vmatpush1.msra.mxu0 0.0
        %1348 = vmatprep.subr.mxu0 0.0
        %1349 = vmatpush1.msra.mxu0 0.0
        %1350 = vmatprep.subr.mxu0 0.0
        %1351 = vmatpush1.msra.mxu0 0.0
        %1352 = vmatprep.subr.mxu0 0.0
        %1353 = vmatpush1.msra.mxu0 0.0
        %1354 = vmatprep.subr.mxu0 0.0
        %1355 = vmatpush1.msra.mxu0 0.0
        %1356 = vmatprep.subr.mxu0 0.0
        %1357 = vmatpush1.msra.mxu0 0.0
        %1358 = vmatprep.subr.mxu0 0.0
        %1359 = vmatpush1.msra.mxu0 0.0
        %1360 = vmatprep.subr.mxu0 0.0
        %1361 = vmatpush1.msra.mxu0 0.0
        %1362 = vmatprep.subr.mxu0 0.0
        %1363 = vmatpush1.msra.mxu0 0.0
        %1364 = vmatprep.subr.mxu0 0.0
        %1365 = vmatpush1.msra.mxu0 0.0
        %1366 = vmatprep.subr.mxu0 0.0
        %1367 = vmatpush1.msra.mxu0 0.0
        %1368 = vmatprep.subr.mxu0 0.0
        %1369 = vmatpush1.msra.mxu0 0.0
        %1370 = vmatprep.subr.mxu0 0.0
        %1371 = vmatpush1.msra.mxu0 0.0
        %1372 = vmatprep.subr.mxu0 0.0
        %1373 = vmatpush1.msra.mxu0 0.0
        %1374 = vmatprep.subr.mxu0 0.0
        %1375 = vmatpush1.msra.mxu0 %v1264
        %1376 = vmatprep.subr.mxu0 0.0
        %1377 = vmatpush2.msra.mxu0 0.0
        %1378 = vmatprep.subr.mxu0 0.0
        %1379 = vmatpush2.msra.mxu0 0.0
        %1380 = vmatprep.subr.mxu0 0.0
        %1381 = vmatpush2.msra.mxu0 0.0
        %1382 = vmatprep.subr.mxu0 0.0
        %1383 = vmatpush2.msra.mxu0 0.0
        %1384 = vmatprep.subr.mxu0 0.0
        %1385 = vmatpush2.msra.mxu0 0.0
        %1386 = vmatprep.subr.mxu0 0.0
        %1387 = vmatpush2.msra.mxu0 0.0
        %1388 = vmatprep.subr.mxu0 0.0
        %1389 = vmatpush2.msra.mxu0 0.0
        %1390 = vmatprep.subr.mxu0 0.0
        %1391 = vmatpush2.msra.mxu0 0.0
        %1392 = vmatprep.subr.mxu0 0.0
        %1393 = vmatpush2.msra.mxu0 0.0
        %1394 = vmatprep.subr.mxu0 0.0
        %1395 = vmatpush2.msra.mxu0 0.0
        %1396 = vmatprep.subr.mxu0 0.0
        %1397 = vmatpush2.msra.mxu0 0.0
        %1398 = vmatprep.subr.mxu0 0.0
        %1399 = vmatpush2.msra.mxu0 0.0
        %1400 = vmatprep.subr.mxu0 0.0
        %1401 = vmatpush2.msra.mxu0 0.0
        %1402 = vmatprep.subr.mxu0 0.0
        %1403 = vmatpush2.msra.mxu0 0.0
        %1404 = vmatprep.subr.mxu0 0.0
        %1405 = vmatpush2.msra.mxu0 0.0
        %1406 = vmatprep.subr.mxu0 0.0
        %1407 = vmatpush2.msra.mxu0 0.0
        %1408 = vmatprep.mubr.f32.mxu0 0.0
        %1409 = vmatmul.mubr.f32.gmra.mxu0 %v1271
        %v1410 = vpop.f32.mrf.mxu0
        %v1411 = vadd.f32 %v1253, %v1410
        %v1412 = vpop.f32.mrf.mxu0
        %1413 = vdwg.mxu0
        %v1414 = vadd.f32 %v1082, %v1340
        %v1415 = vadd.f32 %v1083, %v1342
        %v1416 = vadd.f32 %v1084, %v1411
        %s1417 = scalar_lea.vmem %s2, 12
        %v1418 = vld [vmem:[%s1417] sm:$0xf]
        %v1419 = vld [vmem:[%s434] sm:$0xff]
        %v1420 = vld [vmem:[%s434 + $0x8] sm:$0xff]
        %v1421 = vld [vmem:[%s434 + $0x10] sm:$0xff]
        %s1422 = scalar_lea.vmem %s3, 12
        %v1423 = vld [vmem:[%s1422] sm:$0xf]
        %v1424 = vld [vmem:[%s439] sm:$0xff]
        %v1425 = vld [vmem:[%s439 + $0x8] sm:$0xf]
        %v1428 = vcombine.high %v1424, %v1424
        %1429 = vrot.lane.b32.xlu0 %v1424, 110
        %v1430 = vpop.permute.xlu0 %1429
        %1431 = vrot.lane.b32.xlu0 %v1428, 110
        %v1432 = vpop.permute.xlu0 %1431
        %1433 = vrot.lane.b32.xlu0 %v1425, 110
        %v1434 = vpop.permute.xlu0 %1433
        %vm1435 = vcmask 900096
        %v1436 = vsel %vm1435, %v1430, %v1432
        %v1437 = vsel %vm1435, %v1432, %v1434
        %v1439 = vsel %vm456, %v1423, 0
        %v1441 = vsel %vm460, %v1436, 0
        %v1443 = vsel %vm460, %v1437, 0
        %v1445 = vsel %vm460, %v1434, 0
        %1447 = vmatprep.subr.mxu0 0.0
        %1448 = vmatpush1.msra.mxu0 0.0
        %1449 = vmatprep.subr.mxu0 0.0
        %1450 = vmatpush1.msra.mxu0 0.0
        %1451 = vmatprep.subr.mxu0 0.0
        %1452 = vmatpush1.msra.mxu0 0.0
        %1453 = vmatprep.subr.mxu0 0.0
        %1454 = vmatpush1.msra.mxu0 0.0
        %1455 = vmatprep.subr.mxu0 0.0
        %1456 = vmatpush1.msra.mxu0 0.0
        %1457 = vmatprep.subr.mxu0 0.0
        %1458 = vmatpush1.msra.mxu0 0.0
        %1459 = vmatprep.subr.mxu0 0.0
        %1460 = vmatpush1.msra.mxu0 0.0
        %1461 = vmatprep.subr.mxu0 0.0
        %1462 = vmatpush1.msra.mxu0 0.0
        %1463 = vmatprep.subr.mxu0 0.0
        %1464 = vmatpush1.msra.mxu0 0.0
        %1465 = vmatprep.subr.mxu0 0.0
        %1466 = vmatpush1.msra.mxu0 0.0
        %1467 = vmatprep.subr.mxu0 0.0
        %1468 = vmatpush1.msra.mxu0 0.0
        %1469 = vmatprep.subr.mxu0 0.0
        %1470 = vmatpush1.msra.mxu0 0.0
        %1471 = vmatprep.subr.mxu0 0.0
        %1472 = vmatpush1.msra.mxu0 0.0
        %1473 = vmatprep.subr.mxu0 0.0
        %1474 = vmatpush1.msra.mxu0 0.0
        %1475 = vmatprep.subr.mxu0 0.0
        %1476 = vmatpush1.msra.mxu0 0.0
        %1477 = vmatprep.subr.mxu0 %v1443
        %1478 = vmatpush1.msra.mxu0 %v1441
        %1479 = vmatprep.subr.mxu0 0.0
        %1480 = vmatpush2.msra.mxu0 0.0
        %1481 = vmatprep.subr.mxu0 0.0
        %1482 = vmatpush2.msra.mxu0 0.0
        %1483 = vmatprep.subr.mxu0 0.0
        %1484 = vmatpush2.msra.mxu0 0.0
        %1485 = vmatprep.subr.mxu0 0.0
        %1486 = vmatpush2.msra.mxu0 0.0
        %1487 = vmatprep.subr.mxu0 0.0
        %1488 = vmatpush2.msra.mxu0 0.0
        %1489 = vmatprep.subr.mxu0 0.0
        %1490 = vmatpush2.msra.mxu0 0.0
        %1491 = vmatprep.subr.mxu0 0.0
        %1492 = vmatpush2.msra.mxu0 0.0
        %1493 = vmatprep.subr.mxu0 0.0
        %1494 = vmatpush2.msra.mxu0 0.0
        %1495 = vmatprep.subr.mxu0 0.0
        %1496 = vmatpush2.msra.mxu0 0.0
        %1497 = vmatprep.subr.mxu0 0.0
        %1498 = vmatpush2.msra.mxu0 0.0
        %1499 = vmatprep.subr.mxu0 0.0
        %1500 = vmatpush2.msra.mxu0 0.0
        %1501 = vmatprep.subr.mxu0 0.0
        %1502 = vmatpush2.msra.mxu0 0.0
        %1503 = vmatprep.subr.mxu0 0.0
        %1504 = vmatpush2.msra.mxu0 0.0
        %1505 = vmatprep.subr.mxu0 0.0
        %1506 = vmatpush2.msra.mxu0 0.0
        %1507 = vmatprep.subr.mxu0 0.0
        %1508 = vmatpush2.msra.mxu0 0.0
        %1509 = vmatprep.subr.mxu0 0.0
        %1510 = vmatpush2.msra.mxu0 0.0
        %1511 = vmatprep.mubr.f32.mxu0 0.0
        %1512 = vmatmul.mubr.f32.gmra.mxu0 %v1439
        %v1513 = vpop.f32.mrf.mxu0
        %v1514 = vadd.f32 0.0, %v1513
        %v1515 = vpop.f32.mrf.mxu0
        %v1516 = vadd.f32 0.0, %v1515
        %1517 = vdwg.mxu0
        %1518 = vmatprep.subr.mxu0 0.0
        %1519 = vmatpush1.msra.mxu0 0.0
        %1520 = vmatprep.subr.mxu0 0.0
        %1521 = vmatpush1.msra.mxu0 0.0
        %1522 = vmatprep.subr.mxu0 0.0
        %1523 = vmatpush1.msra.mxu0 0.0
        %1524 = vmatprep.subr.mxu0 0.0
        %1525 = vmatpush1.msra.mxu0 0.0
        %1526 = vmatprep.subr.mxu0 0.0
        %1527 = vmatpush1.msra.mxu0 0.0
        %1528 = vmatprep.subr.mxu0 0.0
        %1529 = vmatpush1.msra.mxu0 0.0
        %1530 = vmatprep.subr.mxu0 0.0
        %1531 = vmatpush1.msra.mxu0 0.0
        %1532 = vmatprep.subr.mxu0 0.0
        %1533 = vmatpush1.msra.mxu0 0.0
        %1534 = vmatprep.subr.mxu0 0.0
        %1535 = vmatpush1.msra.mxu0 0.0
        %1536 = vmatprep.subr.mxu0 0.0
        %1537 = vmatpush1.msra.mxu0 0.0
        %1538 = vmatprep.subr.mxu0 0.0
        %1539 = vmatpush1.msra.mxu0 0.0
        %1540 = vmatprep.subr.mxu0 0.0
        %1541 = vmatpush1.msra.mxu0 0.0
        %1542 = vmatprep.subr.mxu0 0.0
        %1543 = vmatpush1.msra.mxu0 0.0
        %1544 = vmatprep.subr.mxu0 0.0
        %1545 = vmatpush1.msra.mxu0 0.0
        %1546 = vmatprep.subr.mxu0 0.0
        %1547 = vmatpush1.msra.mxu0 0.0
        %1548 = vmatprep.subr.mxu0 0.0
        %1549 = vmatpush1.msra.mxu0 %v1445
        %1550 = vmatprep.subr.mxu0 0.0
        %1551 = vmatpush2.msra.mxu0 0.0
        %1552 = vmatprep.subr.mxu0 0.0
        %1553 = vmatpush2.msra.mxu0 0.0
        %1554 = vmatprep.subr.mxu0 0.0
        %1555 = vmatpush2.msra.mxu0 0.0
        %1556 = vmatprep.subr.mxu0 0.0
        %1557 = vmatpush2.msra.mxu0 0.0
        %1558 = vmatprep.subr.mxu0 0.0
        %1559 = vmatpush2.msra.mxu0 0.0
        %1560 = vmatprep.subr.mxu0 0.0
        %1561 = vmatpush2.msra.mxu0 0.0
        %1562 = vmatprep.subr.mxu0 0.0
        %1563 = vmatpush2.msra.mxu0 0.0
        %1564 = vmatprep.subr.mxu0 0.0
        %1565 = vmatpush2.msra.mxu0 0.0
        %1566 = vmatprep.subr.mxu0 0.0
        %1567 = vmatpush2.msra.mxu0 0.0
        %1568 = vmatprep.subr.mxu0 0.0
        %1569 = vmatpush2.msra.mxu0 0.0
        %1570 = vmatprep.subr.mxu0 0.0
        %1571 = vmatpush2.msra.mxu0 0.0
        %1572 = vmatprep.subr.mxu0 0.0
        %1573 = vmatpush2.msra.mxu0 0.0
        %1574 = vmatprep.subr.mxu0 0.0
        %1575 = vmatpush2.msra.mxu0 0.0
        %1576 = vmatprep.subr.mxu0 0.0
        %1577 = vmatpush2.msra.mxu0 0.0
        %1578 = vmatprep.subr.mxu0 0.0
        %1579 = vmatpush2.msra.mxu0 0.0
        %1580 = vmatprep.subr.mxu0 0.0
        %1581 = vmatpush2.msra.mxu0 0.0
        %1582 = vmatprep.mubr.f32.mxu0 0.0
        %1583 = vmatmul.mubr.f32.gmra.mxu0 %v1439
        %v1584 = vpop.f32.mrf.mxu0
        %v1585 = vadd.f32 0.0, %v1584
        %v1586 = vpop.f32.mrf.mxu0
        %1587 = vdwg.mxu0
        %1591 = vrot.lane.b32.xlu0 %v1419, 110
        %v1592 = vpop.permute.xlu0 %1591
        %1593 = vrot.lane.b32.xlu0 %v1420, 110
        %v1594 = vpop.permute.xlu0 %1593
        %1595 = vrot.lane.b32.xlu0 %v1421, 110
        %v1596 = vpop.permute.xlu0 %1595
        %v1597 = vsel %vm1435, %v1592, %v1594
        %v1598 = vsel %vm1435, %v1594, %v1596
        %v1603 = vsel %vm608, %v1418, 0
        %1605 = vmatprep.subr.mxu0 0.0
        %1606 = vmatpush1.msra.mxu0 0.0
        %1607 = vmatprep.subr.mxu0 0.0
        %1608 = vmatpush1.msra.mxu0 0.0
        %1609 = vmatprep.subr.mxu0 0.0
        %1610 = vmatpush1.msra.mxu0 0.0
        %1611 = vmatprep.subr.mxu0 0.0
        %1612 = vmatpush1.msra.mxu0 0.0
        %1613 = vmatprep.subr.mxu0 0.0
        %1614 = vmatpush1.msra.mxu0 0.0
        %1615 = vmatprep.subr.mxu0 0.0
        %1616 = vmatpush1.msra.mxu0 0.0
        %1617 = vmatprep.subr.mxu0 0.0
        %1618 = vmatpush1.msra.mxu0 0.0
        %1619 = vmatprep.subr.mxu0 0.0
        %1620 = vmatpush1.msra.mxu0 0.0
        %1621 = vmatprep.subr.mxu0 0.0
        %1622 = vmatpush1.msra.mxu0 0.0
        %1623 = vmatprep.subr.mxu0 0.0
        %1624 = vmatpush1.msra.mxu0 0.0
        %1625 = vmatprep.subr.mxu0 0.0
        %1626 = vmatpush1.msra.mxu0 0.0
        %1627 = vmatprep.subr.mxu0 0.0
        %1628 = vmatpush1.msra.mxu0 0.0
        %1629 = vmatprep.subr.mxu0 0.0
        %1630 = vmatpush1.msra.mxu0 0.0
        %1631 = vmatprep.subr.mxu0 0.0
        %1632 = vmatpush1.msra.mxu0 0.0
        %1633 = vmatprep.subr.mxu0 0.0
        %1634 = vmatpush1.msra.mxu0 0.0
        %1635 = vmatprep.subr.mxu0 %v1598
        %1636 = vmatpush1.msra.mxu0 %v1597
        %1637 = vmatprep.subr.mxu0 0.0
        %1638 = vmatpush2.msra.mxu0 0.0
        %1639 = vmatprep.subr.mxu0 0.0
        %1640 = vmatpush2.msra.mxu0 0.0
        %1641 = vmatprep.subr.mxu0 0.0
        %1642 = vmatpush2.msra.mxu0 0.0
        %1643 = vmatprep.subr.mxu0 0.0
        %1644 = vmatpush2.msra.mxu0 0.0
        %1645 = vmatprep.subr.mxu0 0.0
        %1646 = vmatpush2.msra.mxu0 0.0
        %1647 = vmatprep.subr.mxu0 0.0
        %1648 = vmatpush2.msra.mxu0 0.0
        %1649 = vmatprep.subr.mxu0 0.0
        %1650 = vmatpush2.msra.mxu0 0.0
        %1651 = vmatprep.subr.mxu0 0.0
        %1652 = vmatpush2.msra.mxu0 0.0
        %1653 = vmatprep.subr.mxu0 0.0
        %1654 = vmatpush2.msra.mxu0 0.0
        %1655 = vmatprep.subr.mxu0 0.0
        %1656 = vmatpush2.msra.mxu0 0.0
        %1657 = vmatprep.subr.mxu0 0.0
        %1658 = vmatpush2.msra.mxu0 0.0
        %1659 = vmatprep.subr.mxu0 0.0
        %1660 = vmatpush2.msra.mxu0 0.0
        %1661 = vmatprep.subr.mxu0 0.0
        %1662 = vmatpush2.msra.mxu0 0.0
        %1663 = vmatprep.subr.mxu0 0.0
        %1664 = vmatpush2.msra.mxu0 0.0
        %1665 = vmatprep.subr.mxu0 0.0
        %1666 = vmatpush2.msra.mxu0 0.0
        %1667 = vmatprep.subr.mxu0 0.0
        %1668 = vmatpush2.msra.mxu0 0.0
        %1669 = vmatprep.mubr.f32.mxu0 0.0
        %1670 = vmatmul.mubr.f32.gmra.mxu0 %v1603
        %v1671 = vpop.f32.mrf.mxu0
        %v1672 = vadd.f32 %v1514, %v1671
        %v1673 = vpop.f32.mrf.mxu0
        %v1674 = vadd.f32 %v1516, %v1673
        %1675 = vdwg.mxu0
        %1676 = vmatprep.subr.mxu0 0.0
        %1677 = vmatpush1.msra.mxu0 0.0
        %1678 = vmatprep.subr.mxu0 0.0
        %1679 = vmatpush1.msra.mxu0 0.0
        %1680 = vmatprep.subr.mxu0 0.0
        %1681 = vmatpush1.msra.mxu0 0.0
        %1682 = vmatprep.subr.mxu0 0.0
        %1683 = vmatpush1.msra.mxu0 0.0
        %1684 = vmatprep.subr.mxu0 0.0
        %1685 = vmatpush1.msra.mxu0 0.0
        %1686 = vmatprep.subr.mxu0 0.0
        %1687 = vmatpush1.msra.mxu0 0.0
        %1688 = vmatprep.subr.mxu0 0.0
        %1689 = vmatpush1.msra.mxu0 0.0
        %1690 = vmatprep.subr.mxu0 0.0
        %1691 = vmatpush1.msra.mxu0 0.0
        %1692 = vmatprep.subr.mxu0 0.0
        %1693 = vmatpush1.msra.mxu0 0.0
        %1694 = vmatprep.subr.mxu0 0.0
        %1695 = vmatpush1.msra.mxu0 0.0
        %1696 = vmatprep.subr.mxu0 0.0
        %1697 = vmatpush1.msra.mxu0 0.0
        %1698 = vmatprep.subr.mxu0 0.0
        %1699 = vmatpush1.msra.mxu0 0.0
        %1700 = vmatprep.subr.mxu0 0.0
        %1701 = vmatpush1.msra.mxu0 0.0
        %1702 = vmatprep.subr.mxu0 0.0
        %1703 = vmatpush1.msra.mxu0 0.0
        %1704 = vmatprep.subr.mxu0 0.0
        %1705 = vmatpush1.msra.mxu0 0.0
        %1706 = vmatprep.subr.mxu0 0.0
        %1707 = vmatpush1.msra.mxu0 %v1596
        %1708 = vmatprep.subr.mxu0 0.0
        %1709 = vmatpush2.msra.mxu0 0.0
        %1710 = vmatprep.subr.mxu0 0.0
        %1711 = vmatpush2.msra.mxu0 0.0
        %1712 = vmatprep.subr.mxu0 0.0
        %1713 = vmatpush2.msra.mxu0 0.0
        %1714 = vmatprep.subr.mxu0 0.0
        %1715 = vmatpush2.msra.mxu0 0.0
        %1716 = vmatprep.subr.mxu0 0.0
        %1717 = vmatpush2.msra.mxu0 0.0
        %1718 = vmatprep.subr.mxu0 0.0
        %1719 = vmatpush2.msra.mxu0 0.0
        %1720 = vmatprep.subr.mxu0 0.0
        %1721 = vmatpush2.msra.mxu0 0.0
        %1722 = vmatprep.subr.mxu0 0.0
        %1723 = vmatpush2.msra.mxu0 0.0
        %1724 = vmatprep.subr.mxu0 0.0
        %1725 = vmatpush2.msra.mxu0 0.0
        %1726 = vmatprep.subr.mxu0 0.0
        %1727 = vmatpush2.msra.mxu0 0.0
        %1728 = vmatprep.subr.mxu0 0.0
        %1729 = vmatpush2.msra.mxu0 0.0
        %1730 = vmatprep.subr.mxu0 0.0
        %1731 = vmatpush2.msra.mxu0 0.0
        %1732 = vmatprep.subr.mxu0 0.0
        %1733 = vmatpush2.msra.mxu0 0.0
        %1734 = vmatprep.subr.mxu0 0.0
        %1735 = vmatpush2.msra.mxu0 0.0
        %1736 = vmatprep.subr.mxu0 0.0
        %1737 = vmatpush2.msra.mxu0 0.0
        %1738 = vmatprep.subr.mxu0 0.0
        %1739 = vmatpush2.msra.mxu0 0.0
        %1740 = vmatprep.mubr.f32.mxu0 0.0
        %1741 = vmatmul.mubr.f32.gmra.mxu0 %v1603
        %v1742 = vpop.f32.mrf.mxu0
        %v1743 = vadd.f32 %v1585, %v1742
        %v1744 = vpop.f32.mrf.mxu0
        %1745 = vdwg.mxu0
        %v1746 = vadd.f32 %v1414, %v1672
        %v1747 = vadd.f32 %v1415, %v1674
        %v1748 = vadd.f32 %v1416, %v1743
        %s1749 = scalar_lea.vmem %s2, 16
        %v1750 = vld [vmem:[%s1749] sm:$0xf]
        %v1751 = vld [vmem:[%s434] sm:$0xff]
        %v1752 = vld [vmem:[%s434 + $0x8] sm:$0xff]
        %v1753 = vld [vmem:[%s434 + $0x10] sm:$0xff]
        %s1754 = scalar_lea.vmem %s3, 16
        %v1755 = vld [vmem:[%s1754] sm:$0xf]
        %v1756 = vld [vmem:[%s439] sm:$0xff]
        %v1757 = vld [vmem:[%s439 + $0x8] sm:$0xf]
        %v1760 = vcombine.high %v1756, %v1756
        %1761 = vrot.lane.b32.xlu0 %v1756, 109
        %v1762 = vpop.permute.xlu0 %1761
        %1763 = vrot.lane.b32.xlu0 %v1760, 109
        %v1764 = vpop.permute.xlu0 %1763
        %1765 = vrot.lane.b32.xlu0 %v1757, 109
        %v1766 = vpop.permute.xlu0 %1765
        %vm1767 = vcmask 891904
        %v1768 = vsel %vm1767, %v1762, %v1764
        %v1769 = vsel %vm1767, %v1764, %v1766
        %v1771 = vsel %vm456, %v1755, 0
        %v1773 = vsel %vm460, %v1768, 0
        %v1775 = vsel %vm460, %v1769, 0
        %v1777 = vsel %vm460, %v1766, 0
        %1779 = vmatprep.subr.mxu0 0.0
        %1780 = vmatpush1.msra.mxu0 0.0
        %1781 = vmatprep.subr.mxu0 0.0
        %1782 = vmatpush1.msra.mxu0 0.0
        %1783 = vmatprep.subr.mxu0 0.0
        %1784 = vmatpush1.msra.mxu0 0.0
        %1785 = vmatprep.subr.mxu0 0.0
        %1786 = vmatpush1.msra.mxu0 0.0
        %1787 = vmatprep.subr.mxu0 0.0
        %1788 = vmatpush1.msra.mxu0 0.0
        %1789 = vmatprep.subr.mxu0 0.0
        %1790 = vmatpush1.msra.mxu0 0.0
        %1791 = vmatprep.subr.mxu0 0.0
        %1792 = vmatpush1.msra.mxu0 0.0
        %1793 = vmatprep.subr.mxu0 0.0
        %1794 = vmatpush1.msra.mxu0 0.0
        %1795 = vmatprep.subr.mxu0 0.0
        %1796 = vmatpush1.msra.mxu0 0.0
        %1797 = vmatprep.subr.mxu0 0.0
        %1798 = vmatpush1.msra.mxu0 0.0
        %1799 = vmatprep.subr.mxu0 0.0
        %1800 = vmatpush1.msra.mxu0 0.0
        %1801 = vmatprep.subr.mxu0 0.0
        %1802 = vmatpush1.msra.mxu0 0.0
        %1803 = vmatprep.subr.mxu0 0.0
        %1804 = vmatpush1.msra.mxu0 0.0
        %1805 = vmatprep.subr.mxu0 0.0
        %1806 = vmatpush1.msra.mxu0 0.0
        %1807 = vmatprep.subr.mxu0 0.0
        %1808 = vmatpush1.msra.mxu0 0.0
        %1809 = vmatprep.subr.mxu0 %v1775
        %1810 = vmatpush1.msra.mxu0 %v1773
        %1811 = vmatprep.subr.mxu0 0.0
        %1812 = vmatpush2.msra.mxu0 0.0
        %1813 = vmatprep.subr.mxu0 0.0
        %1814 = vmatpush2.msra.mxu0 0.0
        %1815 = vmatprep.subr.mxu0 0.0
        %1816 = vmatpush2.msra.mxu0 0.0
        %1817 = vmatprep.subr.mxu0 0.0
        %1818 = vmatpush2.msra.mxu0 0.0
        %1819 = vmatprep.subr.mxu0 0.0
        %1820 = vmatpush2.msra.mxu0 0.0
        %1821 = vmatprep.subr.mxu0 0.0
        %1822 = vmatpush2.msra.mxu0 0.0
        %1823 = vmatprep.subr.mxu0 0.0
        %1824 = vmatpush2.msra.mxu0 0.0
        %1825 = vmatprep.subr.mxu0 0.0
        %1826 = vmatpush2.msra.mxu0 0.0
        %1827 = vmatprep.subr.mxu0 0.0
        %1828 = vmatpush2.msra.mxu0 0.0
        %1829 = vmatprep.subr.mxu0 0.0
        %1830 = vmatpush2.msra.mxu0 0.0
        %1831 = vmatprep.subr.mxu0 0.0
        %1832 = vmatpush2.msra.mxu0 0.0
        %1833 = vmatprep.subr.mxu0 0.0
        %1834 = vmatpush2.msra.mxu0 0.0
        %1835 = vmatprep.subr.mxu0 0.0
        %1836 = vmatpush2.msra.mxu0 0.0
        %1837 = vmatprep.subr.mxu0 0.0
        %1838 = vmatpush2.msra.mxu0 0.0
        %1839 = vmatprep.subr.mxu0 0.0
        %1840 = vmatpush2.msra.mxu0 0.0
        %1841 = vmatprep.subr.mxu0 0.0
        %1842 = vmatpush2.msra.mxu0 0.0
        %1843 = vmatprep.mubr.f32.mxu0 0.0
        %1844 = vmatmul.mubr.f32.gmra.mxu0 %v1771
        %v1845 = vpop.f32.mrf.mxu0
        %v1846 = vadd.f32 0.0, %v1845
        %v1847 = vpop.f32.mrf.mxu0
        %v1848 = vadd.f32 0.0, %v1847
        %1849 = vdwg.mxu0
        %1850 = vmatprep.subr.mxu0 0.0
        %1851 = vmatpush1.msra.mxu0 0.0
        %1852 = vmatprep.subr.mxu0 0.0
        %1853 = vmatpush1.msra.mxu0 0.0
        %1854 = vmatprep.subr.mxu0 0.0
        %1855 = vmatpush1.msra.mxu0 0.0
        %1856 = vmatprep.subr.mxu0 0.0
        %1857 = vmatpush1.msra.mxu0 0.0
        %1858 = vmatprep.subr.mxu0 0.0
        %1859 = vmatpush1.msra.mxu0 0.0
        %1860 = vmatprep.subr.mxu0 0.0
        %1861 = vmatpush1.msra.mxu0 0.0
        %1862 = vmatprep.subr.mxu0 0.0
        %1863 = vmatpush1.msra.mxu0 0.0
        %1864 = vmatprep.subr.mxu0 0.0
        %1865 = vmatpush1.msra.mxu0 0.0
        %1866 = vmatprep.subr.mxu0 0.0
        %1867 = vmatpush1.msra.mxu0 0.0
        %1868 = vmatprep.subr.mxu0 0.0
        %1869 = vmatpush1.msra.mxu0 0.0
        %1870 = vmatprep.subr.mxu0 0.0
        %1871 = vmatpush1.msra.mxu0 0.0
        %1872 = vmatprep.subr.mxu0 0.0
        %1873 = vmatpush1.msra.mxu0 0.0
        %1874 = vmatprep.subr.mxu0 0.0
        %1875 = vmatpush1.msra.mxu0 0.0
        %1876 = vmatprep.subr.mxu0 0.0
        %1877 = vmatpush1.msra.mxu0 0.0
        %1878 = vmatprep.subr.mxu0 0.0
        %1879 = vmatpush1.msra.mxu0 0.0
        %1880 = vmatprep.subr.mxu0 0.0
        %1881 = vmatpush1.msra.mxu0 %v1777
        %1882 = vmatprep.subr.mxu0 0.0
        %1883 = vmatpush2.msra.mxu0 0.0
        %1884 = vmatprep.subr.mxu0 0.0
        %1885 = vmatpush2.msra.mxu0 0.0
        %1886 = vmatprep.subr.mxu0 0.0
        %1887 = vmatpush2.msra.mxu0 0.0
        %1888 = vmatprep.subr.mxu0 0.0
        %1889 = vmatpush2.msra.mxu0 0.0
        %1890 = vmatprep.subr.mxu0 0.0
        %1891 = vmatpush2.msra.mxu0 0.0
        %1892 = vmatprep.subr.mxu0 0.0
        %1893 = vmatpush2.msra.mxu0 0.0
        %1894 = vmatprep.subr.mxu0 0.0
        %1895 = vmatpush2.msra.mxu0 0.0
        %1896 = vmatprep.subr.mxu0 0.0
        %1897 = vmatpush2.msra.mxu0 0.0
        %1898 = vmatprep.subr.mxu0 0.0
        %1899 = vmatpush2.msra.mxu0 0.0
        %1900 = vmatprep.subr.mxu0 0.0
        %1901 = vmatpush2.msra.mxu0 0.0
        %1902 = vmatprep.subr.mxu0 0.0
        %1903 = vmatpush2.msra.mxu0 0.0
        %1904 = vmatprep.subr.mxu0 0.0
        %1905 = vmatpush2.msra.mxu0 0.0
        %1906 = vmatprep.subr.mxu0 0.0
        %1907 = vmatpush2.msra.mxu0 0.0
        %1908 = vmatprep.subr.mxu0 0.0
        %1909 = vmatpush2.msra.mxu0 0.0
        %1910 = vmatprep.subr.mxu0 0.0
        %1911 = vmatpush2.msra.mxu0 0.0
        %1912 = vmatprep.subr.mxu0 0.0
        %1913 = vmatpush2.msra.mxu0 0.0
        %1914 = vmatprep.mubr.f32.mxu0 0.0
        %1915 = vmatmul.mubr.f32.gmra.mxu0 %v1771
        %v1916 = vpop.f32.mrf.mxu0
        %v1917 = vadd.f32 0.0, %v1916
        %v1918 = vpop.f32.mrf.mxu0
        %1919 = vdwg.mxu0
        %1923 = vrot.lane.b32.xlu0 %v1751, 109
        %v1924 = vpop.permute.xlu0 %1923
        %1925 = vrot.lane.b32.xlu0 %v1752, 109
        %v1926 = vpop.permute.xlu0 %1925
        %1927 = vrot.lane.b32.xlu0 %v1753, 109
        %v1928 = vpop.permute.xlu0 %1927
        %v1929 = vsel %vm1767, %v1924, %v1926
        %v1930 = vsel %vm1767, %v1926, %v1928
        %v1935 = vsel %vm608, %v1750, 0
        %1937 = vmatprep.subr.mxu0 0.0
        %1938 = vmatpush1.msra.mxu0 0.0
        %1939 = vmatprep.subr.mxu0 0.0
        %1940 = vmatpush1.msra.mxu0 0.0
        %1941 = vmatprep.subr.mxu0 0.0
        %1942 = vmatpush1.msra.mxu0 0.0
        %1943 = vmatprep.subr.mxu0 0.0
        %1944 = vmatpush1.msra.mxu0 0.0
        %1945 = vmatprep.subr.mxu0 0.0
        %1946 = vmatpush1.msra.mxu0 0.0
        %1947 = vmatprep.subr.mxu0 0.0
        %1948 = vmatpush1.msra.mxu0 0.0
        %1949 = vmatprep.subr.mxu0 0.0
        %1950 = vmatpush1.msra.mxu0 0.0
        %1951 = vmatprep.subr.mxu0 0.0
        %1952 = vmatpush1.msra.mxu0 0.0
        %1953 = vmatprep.subr.mxu0 0.0
        %1954 = vmatpush1.msra.mxu0 0.0
        %1955 = vmatprep.subr.mxu0 0.0
        %1956 = vmatpush1.msra.mxu0 0.0
        %1957 = vmatprep.subr.mxu0 0.0
        %1958 = vmatpush1.msra.mxu0 0.0
        %1959 = vmatprep.subr.mxu0 0.0
        %1960 = vmatpush1.msra.mxu0 0.0
        %1961 = vmatprep.subr.mxu0 0.0
        %1962 = vmatpush1.msra.mxu0 0.0
        %1963 = vmatprep.subr.mxu0 0.0
        %1964 = vmatpush1.msra.mxu0 0.0
        %1965 = vmatprep.subr.mxu0 0.0
        %1966 = vmatpush1.msra.mxu0 0.0
        %1967 = vmatprep.subr.mxu0 %v1930
        %1968 = vmatpush1.msra.mxu0 %v1929
        %1969 = vmatprep.subr.mxu0 0.0
        %1970 = vmatpush2.msra.mxu0 0.0
        %1971 = vmatprep.subr.mxu0 0.0
        %1972 = vmatpush2.msra.mxu0 0.0
        %1973 = vmatprep.subr.mxu0 0.0
        %1974 = vmatpush2.msra.mxu0 0.0
        %1975 = vmatprep.subr.mxu0 0.0
        %1976 = vmatpush2.msra.mxu0 0.0
        %1977 = vmatprep.subr.mxu0 0.0
        %1978 = vmatpush2.msra.mxu0 0.0
        %1979 = vmatprep.subr.mxu0 0.0
        %1980 = vmatpush2.msra.mxu0 0.0
        %1981 = vmatprep.subr.mxu0 0.0
        %1982 = vmatpush2.msra.mxu0 0.0
        %1983 = vmatprep.subr.mxu0 0.0
        %1984 = vmatpush2.msra.mxu0 0.0
        %1985 = vmatprep.subr.mxu0 0.0
        %1986 = vmatpush2.msra.mxu0 0.0
        %1987 = vmatprep.subr.mxu0 0.0
        %1988 = vmatpush2.msra.mxu0 0.0
        %1989 = vmatprep.subr.mxu0 0.0
        %1990 = vmatpush2.msra.mxu0 0.0
        %1991 = vmatprep.subr.mxu0 0.0
        %1992 = vmatpush2.msra.mxu0 0.0
        %1993 = vmatprep.subr.mxu0 0.0
        %1994 = vmatpush2.msra.mxu0 0.0
        %1995 = vmatprep.subr.mxu0 0.0
        %1996 = vmatpush2.msra.mxu0 0.0
        %1997 = vmatprep.subr.mxu0 0.0
        %1998 = vmatpush2.msra.mxu0 0.0
        %1999 = vmatprep.subr.mxu0 0.0
        %2000 = vmatpush2.msra.mxu0 0.0
        %2001 = vmatprep.mubr.f32.mxu0 0.0
        %2002 = vmatmul.mubr.f32.gmra.mxu0 %v1935
        %v2003 = vpop.f32.mrf.mxu0
        %v2004 = vadd.f32 %v1846, %v2003
        %v2005 = vpop.f32.mrf.mxu0
        %v2006 = vadd.f32 %v1848, %v2005
        %2007 = vdwg.mxu0
        %2008 = vmatprep.subr.mxu0 0.0
        %2009 = vmatpush1.msra.mxu0 0.0
        %2010 = vmatprep.subr.mxu0 0.0
        %2011 = vmatpush1.msra.mxu0 0.0
        %2012 = vmatprep.subr.mxu0 0.0
        %2013 = vmatpush1.msra.mxu0 0.0
        %2014 = vmatprep.subr.mxu0 0.0
        %2015 = vmatpush1.msra.mxu0 0.0
        %2016 = vmatprep.subr.mxu0 0.0
        %2017 = vmatpush1.msra.mxu0 0.0
        %2018 = vmatprep.subr.mxu0 0.0
        %2019 = vmatpush1.msra.mxu0 0.0
        %2020 = vmatprep.subr.mxu0 0.0
        %2021 = vmatpush1.msra.mxu0 0.0
        %2022 = vmatprep.subr.mxu0 0.0
        %2023 = vmatpush1.msra.mxu0 0.0
        %2024 = vmatprep.subr.mxu0 0.0
        %2025 = vmatpush1.msra.mxu0 0.0
        %2026 = vmatprep.subr.mxu0 0.0
        %2027 = vmatpush1.msra.mxu0 0.0
        %2028 = vmatprep.subr.mxu0 0.0
        %2029 = vmatpush1.msra.mxu0 0.0
        %2030 = vmatprep.subr.mxu0 0.0
        %2031 = vmatpush1.msra.mxu0 0.0
        %2032 = vmatprep.subr.mxu0 0.0
        %2033 = vmatpush1.msra.mxu0 0.0
        %2034 = vmatprep.subr.mxu0 0.0
        %2035 = vmatpush1.msra.mxu0 0.0
        %2036 = vmatprep.subr.mxu0 0.0
        %2037 = vmatpush1.msra.mxu0 0.0
        %2038 = vmatprep.subr.mxu0 0.0
        %2039 = vmatpush1.msra.mxu0 %v1928
        %2040 = vmatprep.subr.mxu0 0.0
        %2041 = vmatpush2.msra.mxu0 0.0
        %2042 = vmatprep.subr.mxu0 0.0
        %2043 = vmatpush2.msra.mxu0 0.0
        %2044 = vmatprep.subr.mxu0 0.0
        %2045 = vmatpush2.msra.mxu0 0.0
        %2046 = vmatprep.subr.mxu0 0.0
        %2047 = vmatpush2.msra.mxu0 0.0
        %2048 = vmatprep.subr.mxu0 0.0
        %2049 = vmatpush2.msra.mxu0 0.0
        %2050 = vmatprep.subr.mxu0 0.0
        %2051 = vmatpush2.msra.mxu0 0.0
        %2052 = vmatprep.subr.mxu0 0.0
        %2053 = vmatpush2.msra.mxu0 0.0
        %2054 = vmatprep.subr.mxu0 0.0
        %2055 = vmatpush2.msra.mxu0 0.0
        %2056 = vmatprep.subr.mxu0 0.0
        %2057 = vmatpush2.msra.mxu0 0.0
        %2058 = vmatprep.subr.mxu0 0.0
        %2059 = vmatpush2.msra.mxu0 0.0
        %2060 = vmatprep.subr.mxu0 0.0
        %2061 = vmatpush2.msra.mxu0 0.0
        %2062 = vmatprep.subr.mxu0 0.0
        %2063 = vmatpush2.msra.mxu0 0.0
        %2064 = vmatprep.subr.mxu0 0.0
        %2065 = vmatpush2.msra.mxu0 0.0
        %2066 = vmatprep.subr.mxu0 0.0
        %2067 = vmatpush2.msra.mxu0 0.0
        %2068 = vmatprep.subr.mxu0 0.0
        %2069 = vmatpush2.msra.mxu0 0.0
        %2070 = vmatprep.subr.mxu0 0.0
        %2071 = vmatpush2.msra.mxu0 0.0
        %2072 = vmatprep.mubr.f32.mxu0 0.0
        %2073 = vmatmul.mubr.f32.gmra.mxu0 %v1935
        %v2074 = vpop.f32.mrf.mxu0
        %v2075 = vadd.f32 %v1917, %v2074
        %v2076 = vpop.f32.mrf.mxu0
        %2077 = vdwg.mxu0
        %v2078 = vadd.f32 %v1746, %v2004
        %v2079 = vadd.f32 %v1747, %v2006
        %v2080 = vadd.f32 %v1748, %v2075
        %s2081 = scalar_lea.vmem %s2, 20
        %v2082 = vld [vmem:[%s2081] sm:$0xf]
        %v2083 = vld [vmem:[%s434] sm:$0xff]
        %v2084 = vld [vmem:[%s434 + $0x8] sm:$0xff]
        %v2085 = vld [vmem:[%s434 + $0x10] sm:$0xff]
        %s2086 = scalar_lea.vmem %s3, 20
        %v2087 = vld [vmem:[%s2086] sm:$0xf]
        %v2088 = vld [vmem:[%s439] sm:$0xff]
        %v2089 = vld [vmem:[%s439 + $0x8] sm:$0xf]
        %v2092 = vcombine.high %v2088, %v2088
        %2093 = vrot.lane.b32.xlu0 %v2088, 108
        %v2094 = vpop.permute.xlu0 %2093
        %2095 = vrot.lane.b32.xlu0 %v2092, 108
        %v2096 = vpop.permute.xlu0 %2095
        %2097 = vrot.lane.b32.xlu0 %v2089, 108
        %v2098 = vpop.permute.xlu0 %2097
        %vm2099 = vcmask 883712
        %v2100 = vsel %vm2099, %v2094, %v2096
        %v2101 = vsel %vm2099, %v2096, %v2098
        %v2103 = vsel %vm456, %v2087, 0
        %v2105 = vsel %vm460, %v2100, 0
        %v2107 = vsel %vm460, %v2101, 0
        %v2109 = vsel %vm460, %v2098, 0
        %2111 = vmatprep.subr.mxu0 0.0
        %2112 = vmatpush1.msra.mxu0 0.0
        %2113 = vmatprep.subr.mxu0 0.0
        %2114 = vmatpush1.msra.mxu0 0.0
        %2115 = vmatprep.subr.mxu0 0.0
        %2116 = vmatpush1.msra.mxu0 0.0
        %2117 = vmatprep.subr.mxu0 0.0
        %2118 = vmatpush1.msra.mxu0 0.0
        %2119 = vmatprep.subr.mxu0 0.0
        %2120 = vmatpush1.msra.mxu0 0.0
        %2121 = vmatprep.subr.mxu0 0.0
        %2122 = vmatpush1.msra.mxu0 0.0
        %2123 = vmatprep.subr.mxu0 0.0
        %2124 = vmatpush1.msra.mxu0 0.0
        %2125 = vmatprep.subr.mxu0 0.0
        %2126 = vmatpush1.msra.mxu0 0.0
        %2127 = vmatprep.subr.mxu0 0.0
        %2128 = vmatpush1.msra.mxu0 0.0
        %2129 = vmatprep.subr.mxu0 0.0
        %2130 = vmatpush1.msra.mxu0 0.0
        %2131 = vmatprep.subr.mxu0 0.0
        %2132 = vmatpush1.msra.mxu0 0.0
        %2133 = vmatprep.subr.mxu0 0.0
        %2134 = vmatpush1.msra.mxu0 0.0
        %2135 = vmatprep.subr.mxu0 0.0
        %2136 = vmatpush1.msra.mxu0 0.0
        %2137 = vmatprep.subr.mxu0 0.0
        %2138 = vmatpush1.msra.mxu0 0.0
        %2139 = vmatprep.subr.mxu0 0.0
        %2140 = vmatpush1.msra.mxu0 0.0
        %2141 = vmatprep.subr.mxu0 %v2107
        %2142 = vmatpush1.msra.mxu0 %v2105
        %2143 = vmatprep.subr.mxu0 0.0
        %2144 = vmatpush2.msra.mxu0 0.0
        %2145 = vmatprep.subr.mxu0 0.0
        %2146 = vmatpush2.msra.mxu0 0.0
        %2147 = vmatprep.subr.mxu0 0.0
        %2148 = vmatpush2.msra.mxu0 0.0
        %2149 = vmatprep.subr.mxu0 0.0
        %2150 = vmatpush2.msra.mxu0 0.0
        %2151 = vmatprep.subr.mxu0 0.0
        %2152 = vmatpush2.msra.mxu0 0.0
        %2153 = vmatprep.subr.mxu0 0.0
        %2154 = vmatpush2.msra.mxu0 0.0
        %2155 = vmatprep.subr.mxu0 0.0
        %2156 = vmatpush2.msra.mxu0 0.0
        %2157 = vmatprep.subr.mxu0 0.0
        %2158 = vmatpush2.msra.mxu0 0.0
        %2159 = vmatprep.subr.mxu0 0.0
        %2160 = vmatpush2.msra.mxu0 0.0
        %2161 = vmatprep.subr.mxu0 0.0
        %2162 = vmatpush2.msra.mxu0 0.0
        %2163 = vmatprep.subr.mxu0 0.0
        %2164 = vmatpush2.msra.mxu0 0.0
        %2165 = vmatprep.subr.mxu0 0.0
        %2166 = vmatpush2.msra.mxu0 0.0
        %2167 = vmatprep.subr.mxu0 0.0
        %2168 = vmatpush2.msra.mxu0 0.0
        %2169 = vmatprep.subr.mxu0 0.0
        %2170 = vmatpush2.msra.mxu0 0.0
        %2171 = vmatprep.subr.mxu0 0.0
        %2172 = vmatpush2.msra.mxu0 0.0
        %2173 = vmatprep.subr.mxu0 0.0
        %2174 = vmatpush2.msra.mxu0 0.0
        %2175 = vmatprep.mubr.f32.mxu0 0.0
        %2176 = vmatmul.mubr.f32.gmra.mxu0 %v2103
        %v2177 = vpop.f32.mrf.mxu0
        %v2178 = vadd.f32 0.0, %v2177
        %v2179 = vpop.f32.mrf.mxu0
        %v2180 = vadd.f32 0.0, %v2179
        %2181 = vdwg.mxu0
        %2182 = vmatprep.subr.mxu0 0.0
        %2183 = vmatpush1.msra.mxu0 0.0
        %2184 = vmatprep.subr.mxu0 0.0
        %2185 = vmatpush1.msra.mxu0 0.0
        %2186 = vmatprep.subr.mxu0 0.0
        %2187 = vmatpush1.msra.mxu0 0.0
        %2188 = vmatprep.subr.mxu0 0.0
        %2189 = vmatpush1.msra.mxu0 0.0
        %2190 = vmatprep.subr.mxu0 0.0
        %2191 = vmatpush1.msra.mxu0 0.0
        %2192 = vmatprep.subr.mxu0 0.0
        %2193 = vmatpush1.msra.mxu0 0.0
        %2194 = vmatprep.subr.mxu0 0.0
        %2195 = vmatpush1.msra.mxu0 0.0
        %2196 = vmatprep.subr.mxu0 0.0
        %2197 = vmatpush1.msra.mxu0 0.0
        %2198 = vmatprep.subr.mxu0 0.0
        %2199 = vmatpush1.msra.mxu0 0.0
        %2200 = vmatprep.subr.mxu0 0.0
        %2201 = vmatpush1.msra.mxu0 0.0
        %2202 = vmatprep.subr.mxu0 0.0
        %2203 = vmatpush1.msra.mxu0 0.0
        %2204 = vmatprep.subr.mxu0 0.0
        %2205 = vmatpush1.msra.mxu0 0.0
        %2206 = vmatprep.subr.mxu0 0.0
        %2207 = vmatpush1.msra.mxu0 0.0
        %2208 = vmatprep.subr.mxu0 0.0
        %2209 = vmatpush1.msra.mxu0 0.0
        %2210 = vmatprep.subr.mxu0 0.0
        %2211 = vmatpush1.msra.mxu0 0.0
        %2212 = vmatprep.subr.mxu0 0.0
        %2213 = vmatpush1.msra.mxu0 %v2109
        %2214 = vmatprep.subr.mxu0 0.0
        %2215 = vmatpush2.msra.mxu0 0.0
        %2216 = vmatprep.subr.mxu0 0.0
        %2217 = vmatpush2.msra.mxu0 0.0
        %2218 = vmatprep.subr.mxu0 0.0
        %2219 = vmatpush2.msra.mxu0 0.0
        %2220 = vmatprep.subr.mxu0 0.0
        %2221 = vmatpush2.msra.mxu0 0.0
        %2222 = vmatprep.subr.mxu0 0.0
        %2223 = vmatpush2.msra.mxu0 0.0
        %2224 = vmatprep.subr.mxu0 0.0
        %2225 = vmatpush2.msra.mxu0 0.0
        %2226 = vmatprep.subr.mxu0 0.0
        %2227 = vmatpush2.msra.mxu0 0.0
        %2228 = vmatprep.subr.mxu0 0.0
        %2229 = vmatpush2.msra.mxu0 0.0
        %2230 = vmatprep.subr.mxu0 0.0
        %2231 = vmatpush2.msra.mxu0 0.0
        %2232 = vmatprep.subr.mxu0 0.0
        %2233 = vmatpush2.msra.mxu0 0.0
        %2234 = vmatprep.subr.mxu0 0.0
        %2235 = vmatpush2.msra.mxu0 0.0
        %2236 = vmatprep.subr.mxu0 0.0
        %2237 = vmatpush2.msra.mxu0 0.0
        %2238 = vmatprep.subr.mxu0 0.0
        %2239 = vmatpush2.msra.mxu0 0.0
        %2240 = vmatprep.subr.mxu0 0.0
        %2241 = vmatpush2.msra.mxu0 0.0
        %2242 = vmatprep.subr.mxu0 0.0
        %2243 = vmatpush2.msra.mxu0 0.0
        %2244 = vmatprep.subr.mxu0 0.0
        %2245 = vmatpush2.msra.mxu0 0.0
        %2246 = vmatprep.mubr.f32.mxu0 0.0
        %2247 = vmatmul.mubr.f32.gmra.mxu0 %v2103
        %v2248 = vpop.f32.mrf.mxu0
        %v2249 = vadd.f32 0.0, %v2248
        %v2250 = vpop.f32.mrf.mxu0
        %2251 = vdwg.mxu0
        %2255 = vrot.lane.b32.xlu0 %v2083, 108
        %v2256 = vpop.permute.xlu0 %2255
        %2257 = vrot.lane.b32.xlu0 %v2084, 108
        %v2258 = vpop.permute.xlu0 %2257
        %2259 = vrot.lane.b32.xlu0 %v2085, 108
        %v2260 = vpop.permute.xlu0 %2259
        %v2261 = vsel %vm2099, %v2256, %v2258
        %v2262 = vsel %vm2099, %v2258, %v2260
        %v2267 = vsel %vm608, %v2082, 0
        %2269 = vmatprep.subr.mxu0 0.0
        %2270 = vmatpush1.msra.mxu0 0.0
        %2271 = vmatprep.subr.mxu0 0.0
        %2272 = vmatpush1.msra.mxu0 0.0
        %2273 = vmatprep.subr.mxu0 0.0
        %2274 = vmatpush1.msra.mxu0 0.0
        %2275 = vmatprep.subr.mxu0 0.0
        %2276 = vmatpush1.msra.mxu0 0.0
        %2277 = vmatprep.subr.mxu0 0.0
        %2278 = vmatpush1.msra.mxu0 0.0
        %2279 = vmatprep.subr.mxu0 0.0
        %2280 = vmatpush1.msra.mxu0 0.0
        %2281 = vmatprep.subr.mxu0 0.0
        %2282 = vmatpush1.msra.mxu0 0.0
        %2283 = vmatprep.subr.mxu0 0.0
        %2284 = vmatpush1.msra.mxu0 0.0
        %2285 = vmatprep.subr.mxu0 0.0
        %2286 = vmatpush1.msra.mxu0 0.0
        %2287 = vmatprep.subr.mxu0 0.0
        %2288 = vmatpush1.msra.mxu0 0.0
        %2289 = vmatprep.subr.mxu0 0.0
        %2290 = vmatpush1.msra.mxu0 0.0
        %2291 = vmatprep.subr.mxu0 0.0
        %2292 = vmatpush1.msra.mxu0 0.0
        %2293 = vmatprep.subr.mxu0 0.0
        %2294 = vmatpush1.msra.mxu0 0.0
        %2295 = vmatprep.subr.mxu0 0.0
        %2296 = vmatpush1.msra.mxu0 0.0
        %2297 = vmatprep.subr.mxu0 0.0
        %2298 = vmatpush1.msra.mxu0 0.0
        %2299 = vmatprep.subr.mxu0 %v2262
        %2300 = vmatpush1.msra.mxu0 %v2261
        %2301 = vmatprep.subr.mxu0 0.0
        %2302 = vmatpush2.msra.mxu0 0.0
        %2303 = vmatprep.subr.mxu0 0.0
        %2304 = vmatpush2.msra.mxu0 0.0
        %2305 = vmatprep.subr.mxu0 0.0
        %2306 = vmatpush2.msra.mxu0 0.0
        %2307 = vmatprep.subr.mxu0 0.0
        %2308 = vmatpush2.msra.mxu0 0.0
        %2309 = vmatprep.subr.mxu0 0.0
        %2310 = vmatpush2.msra.mxu0 0.0
        %2311 = vmatprep.subr.mxu0 0.0
        %2312 = vmatpush2.msra.mxu0 0.0
        %2313 = vmatprep.subr.mxu0 0.0
        %2314 = vmatpush2.msra.mxu0 0.0
        %2315 = vmatprep.subr.mxu0 0.0
        %2316 = vmatpush2.msra.mxu0 0.0
        %2317 = vmatprep.subr.mxu0 0.0
        %2318 = vmatpush2.msra.mxu0 0.0
        %2319 = vmatprep.subr.mxu0 0.0
        %2320 = vmatpush2.msra.mxu0 0.0
        %2321 = vmatprep.subr.mxu0 0.0
        %2322 = vmatpush2.msra.mxu0 0.0
        %2323 = vmatprep.subr.mxu0 0.0
        %2324 = vmatpush2.msra.mxu0 0.0
        %2325 = vmatprep.subr.mxu0 0.0
        %2326 = vmatpush2.msra.mxu0 0.0
        %2327 = vmatprep.subr.mxu0 0.0
        %2328 = vmatpush2.msra.mxu0 0.0
        %2329 = vmatprep.subr.mxu0 0.0
        %2330 = vmatpush2.msra.mxu0 0.0
        %2331 = vmatprep.subr.mxu0 0.0
        %2332 = vmatpush2.msra.mxu0 0.0
        %2333 = vmatprep.mubr.f32.mxu0 0.0
        %2334 = vmatmul.mubr.f32.gmra.mxu0 %v2267
        %v2335 = vpop.f32.mrf.mxu0
        %v2336 = vadd.f32 %v2178, %v2335
        %v2337 = vpop.f32.mrf.mxu0
        %v2338 = vadd.f32 %v2180, %v2337
        %2339 = vdwg.mxu0
        %2340 = vmatprep.subr.mxu0 0.0
        %2341 = vmatpush1.msra.mxu0 0.0
        %2342 = vmatprep.subr.mxu0 0.0
        %2343 = vmatpush1.msra.mxu0 0.0
        %2344 = vmatprep.subr.mxu0 0.0
        %2345 = vmatpush1.msra.mxu0 0.0
        %2346 = vmatprep.subr.mxu0 0.0
        %2347 = vmatpush1.msra.mxu0 0.0
        %2348 = vmatprep.subr.mxu0 0.0
        %2349 = vmatpush1.msra.mxu0 0.0
        %2350 = vmatprep.subr.mxu0 0.0
        %2351 = vmatpush1.msra.mxu0 0.0
        %2352 = vmatprep.subr.mxu0 0.0
        %2353 = vmatpush1.msra.mxu0 0.0
        %2354 = vmatprep.subr.mxu0 0.0
        %2355 = vmatpush1.msra.mxu0 0.0
        %2356 = vmatprep.subr.mxu0 0.0
        %2357 = vmatpush1.msra.mxu0 0.0
        %2358 = vmatprep.subr.mxu0 0.0
        %2359 = vmatpush1.msra.mxu0 0.0
        %2360 = vmatprep.subr.mxu0 0.0
        %2361 = vmatpush1.msra.mxu0 0.0
        %2362 = vmatprep.subr.mxu0 0.0
        %2363 = vmatpush1.msra.mxu0 0.0
        %2364 = vmatprep.subr.mxu0 0.0
        %2365 = vmatpush1.msra.mxu0 0.0
        %2366 = vmatprep.subr.mxu0 0.0
        %2367 = vmatpush1.msra.mxu0 0.0
        %2368 = vmatprep.subr.mxu0 0.0
        %2369 = vmatpush1.msra.mxu0 0.0
        %2370 = vmatprep.subr.mxu0 0.0
        %2371 = vmatpush1.msra.mxu0 %v2260
        %2372 = vmatprep.subr.mxu0 0.0
        %2373 = vmatpush2.msra.mxu0 0.0
        %2374 = vmatprep.subr.mxu0 0.0
        %2375 = vmatpush2.msra.mxu0 0.0
        %2376 = vmatprep.subr.mxu0 0.0
        %2377 = vmatpush2.msra.mxu0 0.0
        %2378 = vmatprep.subr.mxu0 0.0
        %2379 = vmatpush2.msra.mxu0 0.0
        %2380 = vmatprep.subr.mxu0 0.0
        %2381 = vmatpush2.msra.mxu0 0.0
        %2382 = vmatprep.subr.mxu0 0.0
        %2383 = vmatpush2.msra.mxu0 0.0
        %2384 = vmatprep.subr.mxu0 0.0
        %2385 = vmatpush2.msra.mxu0 0.0
        %2386 = vmatprep.subr.mxu0 0.0
        %2387 = vmatpush2.msra.mxu0 0.0
        %2388 = vmatprep.subr.mxu0 0.0
        %2389 = vmatpush2.msra.mxu0 0.0
        %2390 = vmatprep.subr.mxu0 0.0
        %2391 = vmatpush2.msra.mxu0 0.0
        %2392 = vmatprep.subr.mxu0 0.0
        %2393 = vmatpush2.msra.mxu0 0.0
        %2394 = vmatprep.subr.mxu0 0.0
        %2395 = vmatpush2.msra.mxu0 0.0
        %2396 = vmatprep.subr.mxu0 0.0
        %2397 = vmatpush2.msra.mxu0 0.0
        %2398 = vmatprep.subr.mxu0 0.0
        %2399 = vmatpush2.msra.mxu0 0.0
        %2400 = vmatprep.subr.mxu0 0.0
        %2401 = vmatpush2.msra.mxu0 0.0
        %2402 = vmatprep.subr.mxu0 0.0
        %2403 = vmatpush2.msra.mxu0 0.0
        %2404 = vmatprep.mubr.f32.mxu0 0.0
        %2405 = vmatmul.mubr.f32.gmra.mxu0 %v2267
        %v2406 = vpop.f32.mrf.mxu0
        %v2407 = vadd.f32 %v2249, %v2406
        %v2408 = vpop.f32.mrf.mxu0
        %2409 = vdwg.mxu0
        %v2410 = vadd.f32 %v2078, %v2336
        %v2411 = vadd.f32 %v2079, %v2338
        %v2412 = vadd.f32 %v2080, %v2407
        %s2413 = scalar_lea.vmem %s2, 24
        %v2414 = vld [vmem:[%s2413] sm:$0xf]
        %v2415 = vld [vmem:[%s434] sm:$0xff]
        %v2416 = vld [vmem:[%s434 + $0x8] sm:$0xff]
        %v2417 = vld [vmem:[%s434 + $0x10] sm:$0xff]
        %s2418 = scalar_lea.vmem %s3, 24
        %v2419 = vld [vmem:[%s2418] sm:$0xf]
        %v2420 = vld [vmem:[%s439] sm:$0xff]
        %v2421 = vld [vmem:[%s439 + $0x8] sm:$0xf]
        %v2424 = vcombine.high %v2420, %v2420
        %2425 = vrot.lane.b32.xlu0 %v2420, 92
        %v2426 = vpop.permute.xlu0 %2425
        %2427 = vrot.lane.b32.xlu0 %v2424, 92
        %v2428 = vpop.permute.xlu0 %2427
        %2429 = vrot.lane.b32.xlu0 %v2421, 92
        %v2430 = vpop.permute.xlu0 %2429
        %vm2431 = vcmask 752640
        %v2432 = vsel %vm2431, %v2426, %v2428
        %v2433 = vsel %vm2431, %v2428, %v2430
        %v2435 = vsel %vm456, %v2419, 0
        %v2437 = vsel %vm460, %v2432, 0
        %v2439 = vsel %vm460, %v2433, 0
        %v2441 = vsel %vm460, %v2430, 0
        %2443 = vmatprep.subr.mxu0 0.0
        %2444 = vmatpush1.msra.mxu0 0.0
        %2445 = vmatprep.subr.mxu0 0.0
        %2446 = vmatpush1.msra.mxu0 0.0
        %2447 = vmatprep.subr.mxu0 0.0
        %2448 = vmatpush1.msra.mxu0 0.0
        %2449 = vmatprep.subr.mxu0 0.0
        %2450 = vmatpush1.msra.mxu0 0.0
        %2451 = vmatprep.subr.mxu0 0.0
        %2452 = vmatpush1.msra.mxu0 0.0
        %2453 = vmatprep.subr.mxu0 0.0
        %2454 = vmatpush1.msra.mxu0 0.0
        %2455 = vmatprep.subr.mxu0 0.0
        %2456 = vmatpush1.msra.mxu0 0.0
        %2457 = vmatprep.subr.mxu0 0.0
        %2458 = vmatpush1.msra.mxu0 0.0
        %2459 = vmatprep.subr.mxu0 0.0
        %2460 = vmatpush1.msra.mxu0 0.0
        %2461 = vmatprep.subr.mxu0 0.0
        %2462 = vmatpush1.msra.mxu0 0.0
        %2463 = vmatprep.subr.mxu0 0.0
        %2464 = vmatpush1.msra.mxu0 0.0
        %2465 = vmatprep.subr.mxu0 0.0
        %2466 = vmatpush1.msra.mxu0 0.0
        %2467 = vmatprep.subr.mxu0 0.0
        %2468 = vmatpush1.msra.mxu0 0.0
        %2469 = vmatprep.subr.mxu0 0.0
        %2470 = vmatpush1.msra.mxu0 0.0
        %2471 = vmatprep.subr.mxu0 0.0
        %2472 = vmatpush1.msra.mxu0 0.0
        %2473 = vmatprep.subr.mxu0 %v2439
        %2474 = vmatpush1.msra.mxu0 %v2437
        %2475 = vmatprep.subr.mxu0 0.0
        %2476 = vmatpush2.msra.mxu0 0.0
        %2477 = vmatprep.subr.mxu0 0.0
        %2478 = vmatpush2.msra.mxu0 0.0
        %2479 = vmatprep.subr.mxu0 0.0
        %2480 = vmatpush2.msra.mxu0 0.0
        %2481 = vmatprep.subr.mxu0 0.0
        %2482 = vmatpush2.msra.mxu0 0.0
        %2483 = vmatprep.subr.mxu0 0.0
        %2484 = vmatpush2.msra.mxu0 0.0
        %2485 = vmatprep.subr.mxu0 0.0
        %2486 = vmatpush2.msra.mxu0 0.0
        %2487 = vmatprep.subr.mxu0 0.0
        %2488 = vmatpush2.msra.mxu0 0.0
        %2489 = vmatprep.subr.mxu0 0.0
        %2490 = vmatpush2.msra.mxu0 0.0
        %2491 = vmatprep.subr.mxu0 0.0
        %2492 = vmatpush2.msra.mxu0 0.0
        %2493 = vmatprep.subr.mxu0 0.0
        %2494 = vmatpush2.msra.mxu0 0.0
        %2495 = vmatprep.subr.mxu0 0.0
        %2496 = vmatpush2.msra.mxu0 0.0
        %2497 = vmatprep.subr.mxu0 0.0
        %2498 = vmatpush2.msra.mxu0 0.0
        %2499 = vmatprep.subr.mxu0 0.0
        %2500 = vmatpush2.msra.mxu0 0.0
        %2501 = vmatprep.subr.mxu0 0.0
        %2502 = vmatpush2.msra.mxu0 0.0
        %2503 = vmatprep.subr.mxu0 0.0
        %2504 = vmatpush2.msra.mxu0 0.0
        %2505 = vmatprep.subr.mxu0 0.0
        %2506 = vmatpush2.msra.mxu0 0.0
        %2507 = vmatprep.mubr.f32.mxu0 0.0
        %2508 = vmatmul.mubr.f32.gmra.mxu0 %v2435
        %v2509 = vpop.f32.mrf.mxu0
        %v2510 = vadd.f32 0.0, %v2509
        %v2511 = vpop.f32.mrf.mxu0
        %v2512 = vadd.f32 0.0, %v2511
        %2513 = vdwg.mxu0
        %2514 = vmatprep.subr.mxu0 0.0
        %2515 = vmatpush1.msra.mxu0 0.0
        %2516 = vmatprep.subr.mxu0 0.0
        %2517 = vmatpush1.msra.mxu0 0.0
        %2518 = vmatprep.subr.mxu0 0.0
        %2519 = vmatpush1.msra.mxu0 0.0
        %2520 = vmatprep.subr.mxu0 0.0
        %2521 = vmatpush1.msra.mxu0 0.0
        %2522 = vmatprep.subr.mxu0 0.0
        %2523 = vmatpush1.msra.mxu0 0.0
        %2524 = vmatprep.subr.mxu0 0.0
        %2525 = vmatpush1.msra.mxu0 0.0
        %2526 = vmatprep.subr.mxu0 0.0
        %2527 = vmatpush1.msra.mxu0 0.0
        %2528 = vmatprep.subr.mxu0 0.0
        %2529 = vmatpush1.msra.mxu0 0.0
        %2530 = vmatprep.subr.mxu0 0.0
        %2531 = vmatpush1.msra.mxu0 0.0
        %2532 = vmatprep.subr.mxu0 0.0
        %2533 = vmatpush1.msra.mxu0 0.0
        %2534 = vmatprep.subr.mxu0 0.0
        %2535 = vmatpush1.msra.mxu0 0.0
        %2536 = vmatprep.subr.mxu0 0.0
        %2537 = vmatpush1.msra.mxu0 0.0
        %2538 = vmatprep.subr.mxu0 0.0
        %2539 = vmatpush1.msra.mxu0 0.0
        %2540 = vmatprep.subr.mxu0 0.0
        %2541 = vmatpush1.msra.mxu0 0.0
        %2542 = vmatprep.subr.mxu0 0.0
        %2543 = vmatpush1.msra.mxu0 0.0
        %2544 = vmatprep.subr.mxu0 0.0
        %2545 = vmatpush1.msra.mxu0 %v2441
        %2546 = vmatprep.subr.mxu0 0.0
        %2547 = vmatpush2.msra.mxu0 0.0
        %2548 = vmatprep.subr.mxu0 0.0
        %2549 = vmatpush2.msra.mxu0 0.0
        %2550 = vmatprep.subr.mxu0 0.0
        %2551 = vmatpush2.msra.mxu0 0.0
        %2552 = vmatprep.subr.mxu0 0.0
        %2553 = vmatpush2.msra.mxu0 0.0
        %2554 = vmatprep.subr.mxu0 0.0
        %2555 = vmatpush2.msra.mxu0 0.0
        %2556 = vmatprep.subr.mxu0 0.0
        %2557 = vmatpush2.msra.mxu0 0.0
        %2558 = vmatprep.subr.mxu0 0.0
        %2559 = vmatpush2.msra.mxu0 0.0
        %2560 = vmatprep.subr.mxu0 0.0
        %2561 = vmatpush2.msra.mxu0 0.0
        %2562 = vmatprep.subr.mxu0 0.0
        %2563 = vmatpush2.msra.mxu0 0.0
        %2564 = vmatprep.subr.mxu0 0.0
        %2565 = vmatpush2.msra.mxu0 0.0
        %2566 = vmatprep.subr.mxu0 0.0
        %2567 = vmatpush2.msra.mxu0 0.0
        %2568 = vmatprep.subr.mxu0 0.0
        %2569 = vmatpush2.msra.mxu0 0.0
        %2570 = vmatprep.subr.mxu0 0.0
        %2571 = vmatpush2.msra.mxu0 0.0
        %2572 = vmatprep.subr.mxu0 0.0
        %2573 = vmatpush2.msra.mxu0 0.0
        %2574 = vmatprep.subr.mxu0 0.0
        %2575 = vmatpush2.msra.mxu0 0.0
        %2576 = vmatprep.subr.mxu0 0.0
        %2577 = vmatpush2.msra.mxu0 0.0
        %2578 = vmatprep.mubr.f32.mxu0 0.0
        %2579 = vmatmul.mubr.f32.gmra.mxu0 %v2435
        %v2580 = vpop.f32.mrf.mxu0
        %v2581 = vadd.f32 0.0, %v2580
        %v2582 = vpop.f32.mrf.mxu0
        %2583 = vdwg.mxu0
        %2587 = vrot.lane.b32.xlu0 %v2415, 92
        %v2588 = vpop.permute.xlu0 %2587
        %2589 = vrot.lane.b32.xlu0 %v2416, 92
        %v2590 = vpop.permute.xlu0 %2589
        %2591 = vrot.lane.b32.xlu0 %v2417, 92
        %v2592 = vpop.permute.xlu0 %2591
        %v2593 = vsel %vm2431, %v2588, %v2590
        %v2594 = vsel %vm2431, %v2590, %v2592
        %v2599 = vsel %vm608, %v2414, 0
        %2601 = vmatprep.subr.mxu0 0.0
        %2602 = vmatpush1.msra.mxu0 0.0
        %2603 = vmatprep.subr.mxu0 0.0
        %2604 = vmatpush1.msra.mxu0 0.0
        %2605 = vmatprep.subr.mxu0 0.0
        %2606 = vmatpush1.msra.mxu0 0.0
        %2607 = vmatprep.subr.mxu0 0.0
        %2608 = vmatpush1.msra.mxu0 0.0
        %2609 = vmatprep.subr.mxu0 0.0
        %2610 = vmatpush1.msra.mxu0 0.0
        %2611 = vmatprep.subr.mxu0 0.0
        %2612 = vmatpush1.msra.mxu0 0.0
        %2613 = vmatprep.subr.mxu0 0.0
        %2614 = vmatpush1.msra.mxu0 0.0
        %2615 = vmatprep.subr.mxu0 0.0
        %2616 = vmatpush1.msra.mxu0 0.0
        %2617 = vmatprep.subr.mxu0 0.0
        %2618 = vmatpush1.msra.mxu0 0.0
        %2619 = vmatprep.subr.mxu0 0.0
        %2620 = vmatpush1.msra.mxu0 0.0
        %2621 = vmatprep.subr.mxu0 0.0
        %2622 = vmatpush1.msra.mxu0 0.0
        %2623 = vmatprep.subr.mxu0 0.0
        %2624 = vmatpush1.msra.mxu0 0.0
        %2625 = vmatprep.subr.mxu0 0.0
        %2626 = vmatpush1.msra.mxu0 0.0
        %2627 = vmatprep.subr.mxu0 0.0
        %2628 = vmatpush1.msra.mxu0 0.0
        %2629 = vmatprep.subr.mxu0 0.0
        %2630 = vmatpush1.msra.mxu0 0.0
        %2631 = vmatprep.subr.mxu0 %v2594
        %2632 = vmatpush1.msra.mxu0 %v2593
        %2633 = vmatprep.subr.mxu0 0.0
        %2634 = vmatpush2.msra.mxu0 0.0
        %2635 = vmatprep.subr.mxu0 0.0
        %2636 = vmatpush2.msra.mxu0 0.0
        %2637 = vmatprep.subr.mxu0 0.0
        %2638 = vmatpush2.msra.mxu0 0.0
        %2639 = vmatprep.subr.mxu0 0.0
        %2640 = vmatpush2.msra.mxu0 0.0
        %2641 = vmatprep.subr.mxu0 0.0
        %2642 = vmatpush2.msra.mxu0 0.0
        %2643 = vmatprep.subr.mxu0 0.0
        %2644 = vmatpush2.msra.mxu0 0.0
        %2645 = vmatprep.subr.mxu0 0.0
        %2646 = vmatpush2.msra.mxu0 0.0
        %2647 = vmatprep.subr.mxu0 0.0
        %2648 = vmatpush2.msra.mxu0 0.0
        %2649 = vmatprep.subr.mxu0 0.0
        %2650 = vmatpush2.msra.mxu0 0.0
        %2651 = vmatprep.subr.mxu0 0.0
        %2652 = vmatpush2.msra.mxu0 0.0
        %2653 = vmatprep.subr.mxu0 0.0
        %2654 = vmatpush2.msra.mxu0 0.0
        %2655 = vmatprep.subr.mxu0 0.0
        %2656 = vmatpush2.msra.mxu0 0.0
        %2657 = vmatprep.subr.mxu0 0.0
        %2658 = vmatpush2.msra.mxu0 0.0
        %2659 = vmatprep.subr.mxu0 0.0
        %2660 = vmatpush2.msra.mxu0 0.0
        %2661 = vmatprep.subr.mxu0 0.0
        %2662 = vmatpush2.msra.mxu0 0.0
        %2663 = vmatprep.subr.mxu0 0.0
        %2664 = vmatpush2.msra.mxu0 0.0
        %2665 = vmatprep.mubr.f32.mxu0 0.0
        %2666 = vmatmul.mubr.f32.gmra.mxu0 %v2599
        %v2667 = vpop.f32.mrf.mxu0
        %v2668 = vadd.f32 %v2510, %v2667
        %v2669 = vpop.f32.mrf.mxu0
        %v2670 = vadd.f32 %v2512, %v2669
        %2671 = vdwg.mxu0
        %2672 = vmatprep.subr.mxu0 0.0
        %2673 = vmatpush1.msra.mxu0 0.0
        %2674 = vmatprep.subr.mxu0 0.0
        %2675 = vmatpush1.msra.mxu0 0.0
        %2676 = vmatprep.subr.mxu0 0.0
        %2677 = vmatpush1.msra.mxu0 0.0
        %2678 = vmatprep.subr.mxu0 0.0
        %2679 = vmatpush1.msra.mxu0 0.0
        %2680 = vmatprep.subr.mxu0 0.0
        %2681 = vmatpush1.msra.mxu0 0.0
        %2682 = vmatprep.subr.mxu0 0.0
        %2683 = vmatpush1.msra.mxu0 0.0
        %2684 = vmatprep.subr.mxu0 0.0
        %2685 = vmatpush1.msra.mxu0 0.0
        %2686 = vmatprep.subr.mxu0 0.0
        %2687 = vmatpush1.msra.mxu0 0.0
        %2688 = vmatprep.subr.mxu0 0.0
        %2689 = vmatpush1.msra.mxu0 0.0
        %2690 = vmatprep.subr.mxu0 0.0
        %2691 = vmatpush1.msra.mxu0 0.0
        %2692 = vmatprep.subr.mxu0 0.0
        %2693 = vmatpush1.msra.mxu0 0.0
        %2694 = vmatprep.subr.mxu0 0.0
        %2695 = vmatpush1.msra.mxu0 0.0
        %2696 = vmatprep.subr.mxu0 0.0
        %2697 = vmatpush1.msra.mxu0 0.0
        %2698 = vmatprep.subr.mxu0 0.0
        %2699 = vmatpush1.msra.mxu0 0.0
        %2700 = vmatprep.subr.mxu0 0.0
        %2701 = vmatpush1.msra.mxu0 0.0
        %2702 = vmatprep.subr.mxu0 0.0
        %2703 = vmatpush1.msra.mxu0 %v2592
        %2704 = vmatprep.subr.mxu0 0.0
        %2705 = vmatpush2.msra.mxu0 0.0
        %2706 = vmatprep.subr.mxu0 0.0
        %2707 = vmatpush2.msra.mxu0 0.0
        %2708 = vmatprep.subr.mxu0 0.0
        %2709 = vmatpush2.msra.mxu0 0.0
        %2710 = vmatprep.subr.mxu0 0.0
        %2711 = vmatpush2.msra.mxu0 0.0
        %2712 = vmatprep.subr.mxu0 0.0
        %2713 = vmatpush2.msra.mxu0 0.0
        %2714 = vmatprep.subr.mxu0 0.0
        %2715 = vmatpush2.msra.mxu0 0.0
        %2716 = vmatprep.subr.mxu0 0.0
        %2717 = vmatpush2.msra.mxu0 0.0
        %2718 = vmatprep.subr.mxu0 0.0
        %2719 = vmatpush2.msra.mxu0 0.0
        %2720 = vmatprep.subr.mxu0 0.0
        %2721 = vmatpush2.msra.mxu0 0.0
        %2722 = vmatprep.subr.mxu0 0.0
        %2723 = vmatpush2.msra.mxu0 0.0
        %2724 = vmatprep.subr.mxu0 0.0
        %2725 = vmatpush2.msra.mxu0 0.0
        %2726 = vmatprep.subr.mxu0 0.0
        %2727 = vmatpush2.msra.mxu0 0.0
        %2728 = vmatprep.subr.mxu0 0.0
        %2729 = vmatpush2.msra.mxu0 0.0
        %2730 = vmatprep.subr.mxu0 0.0
        %2731 = vmatpush2.msra.mxu0 0.0
        %2732 = vmatprep.subr.mxu0 0.0
        %2733 = vmatpush2.msra.mxu0 0.0
        %2734 = vmatprep.subr.mxu0 0.0
        %2735 = vmatpush2.msra.mxu0 0.0
        %2736 = vmatprep.mubr.f32.mxu0 0.0
        %2737 = vmatmul.mubr.f32.gmra.mxu0 %v2599
        %v2738 = vpop.f32.mrf.mxu0
        %v2739 = vadd.f32 %v2581, %v2738
        %v2740 = vpop.f32.mrf.mxu0
        %2741 = vdwg.mxu0
        %v2742 = vadd.f32 %v2410, %v2668
        %v2743 = vadd.f32 %v2411, %v2670
        %v2744 = vadd.f32 %v2412, %v2739
        %s2745 = scalar_lea.vmem %s2, 28
        %v2746 = vld [vmem:[%s2745] sm:$0xf]
        %v2747 = vld [vmem:[%s434] sm:$0xff]
        %v2748 = vld [vmem:[%s434 + $0x8] sm:$0xff]
        %v2749 = vld [vmem:[%s434 + $0x10] sm:$0xff]
        %s2750 = scalar_lea.vmem %s3, 28
        %v2751 = vld [vmem:[%s2750] sm:$0xf]
        %v2752 = vld [vmem:[%s439] sm:$0xff]
        %v2753 = vld [vmem:[%s439 + $0x8] sm:$0xf]
        %v2756 = vcombine.high %v2752, %v2752
        %2757 = vrot.lane.b32.xlu0 %v2752, 91
        %v2758 = vpop.permute.xlu0 %2757
        %2759 = vrot.lane.b32.xlu0 %v2756, 91
        %v2760 = vpop.permute.xlu0 %2759
        %2761 = vrot.lane.b32.xlu0 %v2753, 91
        %v2762 = vpop.permute.xlu0 %2761
        %vm2763 = vcmask 744448
        %v2764 = vsel %vm2763, %v2758, %v2760
        %v2765 = vsel %vm2763, %v2760, %v2762
        %v2767 = vsel %vm456, %v2751, 0
        %v2769 = vsel %vm460, %v2764, 0
        %v2771 = vsel %vm460, %v2765, 0
        %v2773 = vsel %vm460, %v2762, 0
        %2775 = vmatprep.subr.mxu0 0.0
        %2776 = vmatpush1.msra.mxu0 0.0
        %2777 = vmatprep.subr.mxu0 0.0
        %2778 = vmatpush1.msra.mxu0 0.0
        %2779 = vmatprep.subr.mxu0 0.0
        %2780 = vmatpush1.msra.mxu0 0.0
        %2781 = vmatprep.subr.mxu0 0.0
        %2782 = vmatpush1.msra.mxu0 0.0
        %2783 = vmatprep.subr.mxu0 0.0
        %2784 = vmatpush1.msra.mxu0 0.0
        %2785 = vmatprep.subr.mxu0 0.0
        %2786 = vmatpush1.msra.mxu0 0.0
        %2787 = vmatprep.subr.mxu0 0.0
        %2788 = vmatpush1.msra.mxu0 0.0
        %2789 = vmatprep.subr.mxu0 0.0
        %2790 = vmatpush1.msra.mxu0 0.0
        %2791 = vmatprep.subr.mxu0 0.0
        %2792 = vmatpush1.msra.mxu0 0.0
        %2793 = vmatprep.subr.mxu0 0.0
        %2794 = vmatpush1.msra.mxu0 0.0
        %2795 = vmatprep.subr.mxu0 0.0
        %2796 = vmatpush1.msra.mxu0 0.0
        %2797 = vmatprep.subr.mxu0 0.0
        %2798 = vmatpush1.msra.mxu0 0.0
        %2799 = vmatprep.subr.mxu0 0.0
        %2800 = vmatpush1.msra.mxu0 0.0
        %2801 = vmatprep.subr.mxu0 0.0
        %2802 = vmatpush1.msra.mxu0 0.0
        %2803 = vmatprep.subr.mxu0 0.0
        %2804 = vmatpush1.msra.mxu0 0.0
        %2805 = vmatprep.subr.mxu0 %v2771
        %2806 = vmatpush1.msra.mxu0 %v2769
        %2807 = vmatprep.subr.mxu0 0.0
        %2808 = vmatpush2.msra.mxu0 0.0
        %2809 = vmatprep.subr.mxu0 0.0
        %2810 = vmatpush2.msra.mxu0 0.0
        %2811 = vmatprep.subr.mxu0 0.0
        %2812 = vmatpush2.msra.mxu0 0.0
        %2813 = vmatprep.subr.mxu0 0.0
        %2814 = vmatpush2.msra.mxu0 0.0
        %2815 = vmatprep.subr.mxu0 0.0
        %2816 = vmatpush2.msra.mxu0 0.0
        %2817 = vmatprep.subr.mxu0 0.0
        %2818 = vmatpush2.msra.mxu0 0.0
        %2819 = vmatprep.subr.mxu0 0.0
        %2820 = vmatpush2.msra.mxu0 0.0
        %2821 = vmatprep.subr.mxu0 0.0
        %2822 = vmatpush2.msra.mxu0 0.0
        %2823 = vmatprep.subr.mxu0 0.0
        %2824 = vmatpush2.msra.mxu0 0.0
        %2825 = vmatprep.subr.mxu0 0.0
        %2826 = vmatpush2.msra.mxu0 0.0
        %2827 = vmatprep.subr.mxu0 0.0
        %2828 = vmatpush2.msra.mxu0 0.0
        %2829 = vmatprep.subr.mxu0 0.0
        %2830 = vmatpush2.msra.mxu0 0.0
        %2831 = vmatprep.subr.mxu0 0.0
        %2832 = vmatpush2.msra.mxu0 0.0
        %2833 = vmatprep.subr.mxu0 0.0
        %2834 = vmatpush2.msra.mxu0 0.0
        %2835 = vmatprep.subr.mxu0 0.0
        %2836 = vmatpush2.msra.mxu0 0.0
        %2837 = vmatprep.subr.mxu0 0.0
        %2838 = vmatpush2.msra.mxu0 0.0
        %2839 = vmatprep.mubr.f32.mxu0 0.0
        %2840 = vmatmul.mubr.f32.gmra.mxu0 %v2767
        %v2841 = vpop.f32.mrf.mxu0
        %v2842 = vadd.f32 0.0, %v2841
        %v2843 = vpop.f32.mrf.mxu0
        %v2844 = vadd.f32 0.0, %v2843
        %2845 = vdwg.mxu0
        %2846 = vmatprep.subr.mxu0 0.0
        %2847 = vmatpush1.msra.mxu0 0.0
        %2848 = vmatprep.subr.mxu0 0.0
        %2849 = vmatpush1.msra.mxu0 0.0
        %2850 = vmatprep.subr.mxu0 0.0
        %2851 = vmatpush1.msra.mxu0 0.0
        %2852 = vmatprep.subr.mxu0 0.0
        %2853 = vmatpush1.msra.mxu0 0.0
        %2854 = vmatprep.subr.mxu0 0.0
        %2855 = vmatpush1.msra.mxu0 0.0
        %2856 = vmatprep.subr.mxu0 0.0
        %2857 = vmatpush1.msra.mxu0 0.0
        %2858 = vmatprep.subr.mxu0 0.0
        %2859 = vmatpush1.msra.mxu0 0.0
        %2860 = vmatprep.subr.mxu0 0.0
        %2861 = vmatpush1.msra.mxu0 0.0
        %2862 = vmatprep.subr.mxu0 0.0
        %2863 = vmatpush1.msra.mxu0 0.0
        %2864 = vmatprep.subr.mxu0 0.0
        %2865 = vmatpush1.msra.mxu0 0.0
        %2866 = vmatprep.subr.mxu0 0.0
        %2867 = vmatpush1.msra.mxu0 0.0
        %2868 = vmatprep.subr.mxu0 0.0
        %2869 = vmatpush1.msra.mxu0 0.0
        %2870 = vmatprep.subr.mxu0 0.0
        %2871 = vmatpush1.msra.mxu0 0.0
        %2872 = vmatprep.subr.mxu0 0.0
        %2873 = vmatpush1.msra.mxu0 0.0
        %2874 = vmatprep.subr.mxu0 0.0
        %2875 = vmatpush1.msra.mxu0 0.0
        %2876 = vmatprep.subr.mxu0 0.0
        %2877 = vmatpush1.msra.mxu0 %v2773
        %2878 = vmatprep.subr.mxu0 0.0
        %2879 = vmatpush2.msra.mxu0 0.0
        %2880 = vmatprep.subr.mxu0 0.0
        %2881 = vmatpush2.msra.mxu0 0.0
        %2882 = vmatprep.subr.mxu0 0.0
        %2883 = vmatpush2.msra.mxu0 0.0
        %2884 = vmatprep.subr.mxu0 0.0
        %2885 = vmatpush2.msra.mxu0 0.0
        %2886 = vmatprep.subr.mxu0 0.0
        %2887 = vmatpush2.msra.mxu0 0.0
        %2888 = vmatprep.subr.mxu0 0.0
        %2889 = vmatpush2.msra.mxu0 0.0
        %2890 = vmatprep.subr.mxu0 0.0
        %2891 = vmatpush2.msra.mxu0 0.0
        %2892 = vmatprep.subr.mxu0 0.0
        %2893 = vmatpush2.msra.mxu0 0.0
        %2894 = vmatprep.subr.mxu0 0.0
        %2895 = vmatpush2.msra.mxu0 0.0
        %2896 = vmatprep.subr.mxu0 0.0
        %2897 = vmatpush2.msra.mxu0 0.0
        %2898 = vmatprep.subr.mxu0 0.0
        %2899 = vmatpush2.msra.mxu0 0.0
        %2900 = vmatprep.subr.mxu0 0.0
        %2901 = vmatpush2.msra.mxu0 0.0
        %2902 = vmatprep.subr.mxu0 0.0
        %2903 = vmatpush2.msra.mxu0 0.0
        %2904 = vmatprep.subr.mxu0 0.0
        %2905 = vmatpush2.msra.mxu0 0.0
        %2906 = vmatprep.subr.mxu0 0.0
        %2907 = vmatpush2.msra.mxu0 0.0
        %2908 = vmatprep.subr.mxu0 0.0
        %2909 = vmatpush2.msra.mxu0 0.0
        %2910 = vmatprep.mubr.f32.mxu0 0.0
        %2911 = vmatmul.mubr.f32.gmra.mxu0 %v2767
        %v2912 = vpop.f32.mrf.mxu0
        %v2913 = vadd.f32 0.0, %v2912
        %v2914 = vpop.f32.mrf.mxu0
        %2915 = vdwg.mxu0
        %2919 = vrot.lane.b32.xlu0 %v2747, 91
        %v2920 = vpop.permute.xlu0 %2919
        %2921 = vrot.lane.b32.xlu0 %v2748, 91
        %v2922 = vpop.permute.xlu0 %2921
        %2923 = vrot.lane.b32.xlu0 %v2749, 91
        %v2924 = vpop.permute.xlu0 %2923
        %v2925 = vsel %vm2763, %v2920, %v2922
        %v2926 = vsel %vm2763, %v2922, %v2924
        %v2931 = vsel %vm608, %v2746, 0
        %2933 = vmatprep.subr.mxu0 0.0
        %2934 = vmatpush1.msra.mxu0 0.0
        %2935 = vmatprep.subr.mxu0 0.0
        %2936 = vmatpush1.msra.mxu0 0.0
        %2937 = vmatprep.subr.mxu0 0.0
        %2938 = vmatpush1.msra.mxu0 0.0
        %2939 = vmatprep.subr.mxu0 0.0
        %2940 = vmatpush1.msra.mxu0 0.0
        %2941 = vmatprep.subr.mxu0 0.0
        %2942 = vmatpush1.msra.mxu0 0.0
        %2943 = vmatprep.subr.mxu0 0.0
        %2944 = vmatpush1.msra.mxu0 0.0
        %2945 = vmatprep.subr.mxu0 0.0
        %2946 = vmatpush1.msra.mxu0 0.0
        %2947 = vmatprep.subr.mxu0 0.0
        %2948 = vmatpush1.msra.mxu0 0.0
        %2949 = vmatprep.subr.mxu0 0.0
        %2950 = vmatpush1.msra.mxu0 0.0
        %2951 = vmatprep.subr.mxu0 0.0
        %2952 = vmatpush1.msra.mxu0 0.0
        %2953 = vmatprep.subr.mxu0 0.0
        %2954 = vmatpush1.msra.mxu0 0.0
        %2955 = vmatprep.subr.mxu0 0.0
        %2956 = vmatpush1.msra.mxu0 0.0
        %2957 = vmatprep.subr.mxu0 0.0
        %2958 = vmatpush1.msra.mxu0 0.0
        %2959 = vmatprep.subr.mxu0 0.0
        %2960 = vmatpush1.msra.mxu0 0.0
        %2961 = vmatprep.subr.mxu0 0.0
        %2962 = vmatpush1.msra.mxu0 0.0
        %2963 = vmatprep.subr.mxu0 %v2926
        %2964 = vmatpush1.msra.mxu0 %v2925
        %2965 = vmatprep.subr.mxu0 0.0
        %2966 = vmatpush2.msra.mxu0 0.0
        %2967 = vmatprep.subr.mxu0 0.0
        %2968 = vmatpush2.msra.mxu0 0.0
        %2969 = vmatprep.subr.mxu0 0.0
        %2970 = vmatpush2.msra.mxu0 0.0
        %2971 = vmatprep.subr.mxu0 0.0
        %2972 = vmatpush2.msra.mxu0 0.0
        %2973 = vmatprep.subr.mxu0 0.0
        %2974 = vmatpush2.msra.mxu0 0.0
        %2975 = vmatprep.subr.mxu0 0.0
        %2976 = vmatpush2.msra.mxu0 0.0
        %2977 = vmatprep.subr.mxu0 0.0
        %2978 = vmatpush2.msra.mxu0 0.0
        %2979 = vmatprep.subr.mxu0 0.0
        %2980 = vmatpush2.msra.mxu0 0.0
        %2981 = vmatprep.subr.mxu0 0.0
        %2982 = vmatpush2.msra.mxu0 0.0
        %2983 = vmatprep.subr.mxu0 0.0
        %2984 = vmatpush2.msra.mxu0 0.0
        %2985 = vmatprep.subr.mxu0 0.0
        %2986 = vmatpush2.msra.mxu0 0.0
        %2987 = vmatprep.subr.mxu0 0.0
        %2988 = vmatpush2.msra.mxu0 0.0
        %2989 = vmatprep.subr.mxu0 0.0
        %2990 = vmatpush2.msra.mxu0 0.0
        %2991 = vmatprep.subr.mxu0 0.0
        %2992 = vmatpush2.msra.mxu0 0.0
        %2993 = vmatprep.subr.mxu0 0.0
        %2994 = vmatpush2.msra.mxu0 0.0
        %2995 = vmatprep.subr.mxu0 0.0
        %2996 = vmatpush2.msra.mxu0 0.0
        %2997 = vmatprep.mubr.f32.mxu0 0.0
        %2998 = vmatmul.mubr.f32.gmra.mxu0 %v2931
        %v2999 = vpop.f32.mrf.mxu0
        %v3000 = vadd.f32 %v2842, %v2999
        %v3001 = vpop.f32.mrf.mxu0
        %v3002 = vadd.f32 %v2844, %v3001
        %3003 = vdwg.mxu0
        %3004 = vmatprep.subr.mxu0 0.0
        %3005 = vmatpush1.msra.mxu0 0.0
        %3006 = vmatprep.subr.mxu0 0.0
        %3007 = vmatpush1.msra.mxu0 0.0
        %3008 = vmatprep.subr.mxu0 0.0
        %3009 = vmatpush1.msra.mxu0 0.0
        %3010 = vmatprep.subr.mxu0 0.0
        %3011 = vmatpush1.msra.mxu0 0.0
        %3012 = vmatprep.subr.mxu0 0.0
        %3013 = vmatpush1.msra.mxu0 0.0
        %3014 = vmatprep.subr.mxu0 0.0
        %3015 = vmatpush1.msra.mxu0 0.0
        %3016 = vmatprep.subr.mxu0 0.0
        %3017 = vmatpush1.msra.mxu0 0.0
        %3018 = vmatprep.subr.mxu0 0.0
        %3019 = vmatpush1.msra.mxu0 0.0
        %3020 = vmatprep.subr.mxu0 0.0
        %3021 = vmatpush1.msra.mxu0 0.0
        %3022 = vmatprep.subr.mxu0 0.0
        %3023 = vmatpush1.msra.mxu0 0.0
        %3024 = vmatprep.subr.mxu0 0.0
        %3025 = vmatpush1.msra.mxu0 0.0
        %3026 = vmatprep.subr.mxu0 0.0
        %3027 = vmatpush1.msra.mxu0 0.0
        %3028 = vmatprep.subr.mxu0 0.0
        %3029 = vmatpush1.msra.mxu0 0.0
        %3030 = vmatprep.subr.mxu0 0.0
        %3031 = vmatpush1.msra.mxu0 0.0
        %3032 = vmatprep.subr.mxu0 0.0
        %3033 = vmatpush1.msra.mxu0 0.0
        %3034 = vmatprep.subr.mxu0 0.0
        %3035 = vmatpush1.msra.mxu0 %v2924
        %3036 = vmatprep.subr.mxu0 0.0
        %3037 = vmatpush2.msra.mxu0 0.0
        %3038 = vmatprep.subr.mxu0 0.0
        %3039 = vmatpush2.msra.mxu0 0.0
        %3040 = vmatprep.subr.mxu0 0.0
        %3041 = vmatpush2.msra.mxu0 0.0
        %3042 = vmatprep.subr.mxu0 0.0
        %3043 = vmatpush2.msra.mxu0 0.0
        %3044 = vmatprep.subr.mxu0 0.0
        %3045 = vmatpush2.msra.mxu0 0.0
        %3046 = vmatprep.subr.mxu0 0.0
        %3047 = vmatpush2.msra.mxu0 0.0
        %3048 = vmatprep.subr.mxu0 0.0
        %3049 = vmatpush2.msra.mxu0 0.0
        %3050 = vmatprep.subr.mxu0 0.0
        %3051 = vmatpush2.msra.mxu0 0.0
        %3052 = vmatprep.subr.mxu0 0.0
        %3053 = vmatpush2.msra.mxu0 0.0
        %3054 = vmatprep.subr.mxu0 0.0
        %3055 = vmatpush2.msra.mxu0 0.0
        %3056 = vmatprep.subr.mxu0 0.0
        %3057 = vmatpush2.msra.mxu0 0.0
        %3058 = vmatprep.subr.mxu0 0.0
        %3059 = vmatpush2.msra.mxu0 0.0
        %3060 = vmatprep.subr.mxu0 0.0
        %3061 = vmatpush2.msra.mxu0 0.0
        %3062 = vmatprep.subr.mxu0 0.0
        %3063 = vmatpush2.msra.mxu0 0.0
        %3064 = vmatprep.subr.mxu0 0.0
        %3065 = vmatpush2.msra.mxu0 0.0
        %3066 = vmatprep.subr.mxu0 0.0
        %3067 = vmatpush2.msra.mxu0 0.0
        %3068 = vmatprep.mubr.f32.mxu0 0.0
        %3069 = vmatmul.mubr.f32.gmra.mxu0 %v2931
        %v3070 = vpop.f32.mrf.mxu0
        %v3071 = vadd.f32 %v2913, %v3070
        %v3072 = vpop.f32.mrf.mxu0
        %3073 = vdwg.mxu0
        %v3074 = vadd.f32 %v2742, %v3000
        %v3075 = vadd.f32 %v2743, %v3002
        %v3076 = vadd.f32 %v2744, %v3071
        %s3077 = scalar_lea.vmem %s2, 32
        %v3078 = vld [vmem:[%s3077] sm:$0xf]
        %v3079 = vld [vmem:[%s434] sm:$0xff]
        %v3080 = vld [vmem:[%s434 + $0x8] sm:$0xff]
        %v3081 = vld [vmem:[%s434 + $0x10] sm:$0xff]
        %s3082 = scalar_lea.vmem %s3, 32
        %v3083 = vld [vmem:[%s3082] sm:$0xf]
        %v3084 = vld [vmem:[%s439] sm:$0xff]
        %v3085 = vld [vmem:[%s439 + $0x8] sm:$0xf]
        %v3088 = vcombine.high %v3084, %v3084
        %3089 = vrot.lane.b32.xlu0 %v3084, 90
        %v3090 = vpop.permute.xlu0 %3089
        %3091 = vrot.lane.b32.xlu0 %v3088, 90
        %v3092 = vpop.permute.xlu0 %3091
        %3093 = vrot.lane.b32.xlu0 %v3085, 90
        %v3094 = vpop.permute.xlu0 %3093
        %vm3095 = vcmask 736256
        %v3096 = vsel %vm3095, %v3090, %v3092
        %v3097 = vsel %vm3095, %v3092, %v3094
        %v3099 = vsel %vm456, %v3083, 0
        %v3101 = vsel %vm460, %v3096, 0
        %v3103 = vsel %vm460, %v3097, 0
        %v3105 = vsel %vm460, %v3094, 0
        %3107 = vmatprep.subr.mxu0 0.0
        %3108 = vmatpush1.msra.mxu0 0.0
        %3109 = vmatprep.subr.mxu0 0.0
        %3110 = vmatpush1.msra.mxu0 0.0
        %3111 = vmatprep.subr.mxu0 0.0
        %3112 = vmatpush1.msra.mxu0 0.0
        %3113 = vmatprep.subr.mxu0 0.0
        %3114 = vmatpush1.msra.mxu0 0.0
        %3115 = vmatprep.subr.mxu0 0.0
        %3116 = vmatpush1.msra.mxu0 0.0
        %3117 = vmatprep.subr.mxu0 0.0
        %3118 = vmatpush1.msra.mxu0 0.0
        %3119 = vmatprep.subr.mxu0 0.0
        %3120 = vmatpush1.msra.mxu0 0.0
        %3121 = vmatprep.subr.mxu0 0.0
        %3122 = vmatpush1.msra.mxu0 0.0
        %3123 = vmatprep.subr.mxu0 0.0
        %3124 = vmatpush1.msra.mxu0 0.0
        %3125 = vmatprep.subr.mxu0 0.0
        %3126 = vmatpush1.msra.mxu0 0.0
        %3127 = vmatprep.subr.mxu0 0.0
        %3128 = vmatpush1.msra.mxu0 0.0
        %3129 = vmatprep.subr.mxu0 0.0
        %3130 = vmatpush1.msra.mxu0 0.0
        %3131 = vmatprep.subr.mxu0 0.0
        %3132 = vmatpush1.msra.mxu0 0.0
        %3133 = vmatprep.subr.mxu0 0.0
        %3134 = vmatpush1.msra.mxu0 0.0
        %3135 = vmatprep.subr.mxu0 0.0
        %3136 = vmatpush1.msra.mxu0 0.0
        %3137 = vmatprep.subr.mxu0 %v3103
        %3138 = vmatpush1.msra.mxu0 %v3101
        %3139 = vmatprep.subr.mxu0 0.0
        %3140 = vmatpush2.msra.mxu0 0.0
        %3141 = vmatprep.subr.mxu0 0.0
        %3142 = vmatpush2.msra.mxu0 0.0
        %3143 = vmatprep.subr.mxu0 0.0
        %3144 = vmatpush2.msra.mxu0 0.0
        %3145 = vmatprep.subr.mxu0 0.0
        %3146 = vmatpush2.msra.mxu0 0.0
        %3147 = vmatprep.subr.mxu0 0.0
        %3148 = vmatpush2.msra.mxu0 0.0
        %3149 = vmatprep.subr.mxu0 0.0
        %3150 = vmatpush2.msra.mxu0 0.0
        %3151 = vmatprep.subr.mxu0 0.0
        %3152 = vmatpush2.msra.mxu0 0.0
        %3153 = vmatprep.subr.mxu0 0.0
        %3154 = vmatpush2.msra.mxu0 0.0
        %3155 = vmatprep.subr.mxu0 0.0
        %3156 = vmatpush2.msra.mxu0 0.0
        %3157 = vmatprep.subr.mxu0 0.0
        %3158 = vmatpush2.msra.mxu0 0.0
        %3159 = vmatprep.subr.mxu0 0.0
        %3160 = vmatpush2.msra.mxu0 0.0
        %3161 = vmatprep.subr.mxu0 0.0
        %3162 = vmatpush2.msra.mxu0 0.0
        %3163 = vmatprep.subr.mxu0 0.0
        %3164 = vmatpush2.msra.mxu0 0.0
        %3165 = vmatprep.subr.mxu0 0.0
        %3166 = vmatpush2.msra.mxu0 0.0
        %3167 = vmatprep.subr.mxu0 0.0
        %3168 = vmatpush2.msra.mxu0 0.0
        %3169 = vmatprep.subr.mxu0 0.0
        %3170 = vmatpush2.msra.mxu0 0.0
        %3171 = vmatprep.mubr.f32.mxu0 0.0
        %3172 = vmatmul.mubr.f32.gmra.mxu0 %v3099
        %v3173 = vpop.f32.mrf.mxu0
        %v3174 = vadd.f32 0.0, %v3173
        %v3175 = vpop.f32.mrf.mxu0
        %v3176 = vadd.f32 0.0, %v3175
        %3177 = vdwg.mxu0
        %3178 = vmatprep.subr.mxu0 0.0
        %3179 = vmatpush1.msra.mxu0 0.0
        %3180 = vmatprep.subr.mxu0 0.0
        %3181 = vmatpush1.msra.mxu0 0.0
        %3182 = vmatprep.subr.mxu0 0.0
        %3183 = vmatpush1.msra.mxu0 0.0
        %3184 = vmatprep.subr.mxu0 0.0
        %3185 = vmatpush1.msra.mxu0 0.0
        %3186 = vmatprep.subr.mxu0 0.0
        %3187 = vmatpush1.msra.mxu0 0.0
        %3188 = vmatprep.subr.mxu0 0.0
        %3189 = vmatpush1.msra.mxu0 0.0
        %3190 = vmatprep.subr.mxu0 0.0
        %3191 = vmatpush1.msra.mxu0 0.0
        %3192 = vmatprep.subr.mxu0 0.0
        %3193 = vmatpush1.msra.mxu0 0.0
        %3194 = vmatprep.subr.mxu0 0.0
        %3195 = vmatpush1.msra.mxu0 0.0
        %3196 = vmatprep.subr.mxu0 0.0
        %3197 = vmatpush1.msra.mxu0 0.0
        %3198 = vmatprep.subr.mxu0 0.0
        %3199 = vmatpush1.msra.mxu0 0.0
        %3200 = vmatprep.subr.mxu0 0.0
        %3201 = vmatpush1.msra.mxu0 0.0
        %3202 = vmatprep.subr.mxu0 0.0
        %3203 = vmatpush1.msra.mxu0 0.0
        %3204 = vmatprep.subr.mxu0 0.0
        %3205 = vmatpush1.msra.mxu0 0.0
        %3206 = vmatprep.subr.mxu0 0.0
        %3207 = vmatpush1.msra.mxu0 0.0
        %3208 = vmatprep.subr.mxu0 0.0
        %3209 = vmatpush1.msra.mxu0 %v3105
        %3210 = vmatprep.subr.mxu0 0.0
        %3211 = vmatpush2.msra.mxu0 0.0
        %3212 = vmatprep.subr.mxu0 0.0
        %3213 = vmatpush2.msra.mxu0 0.0
        %3214 = vmatprep.subr.mxu0 0.0
        %3215 = vmatpush2.msra.mxu0 0.0
        %3216 = vmatprep.subr.mxu0 0.0
        %3217 = vmatpush2.msra.mxu0 0.0
        %3218 = vmatprep.subr.mxu0 0.0
        %3219 = vmatpush2.msra.mxu0 0.0
        %3220 = vmatprep.subr.mxu0 0.0
        %3221 = vmatpush2.msra.mxu0 0.0
        %3222 = vmatprep.subr.mxu0 0.0
        %3223 = vmatpush2.msra.mxu0 0.0
        %3224 = vmatprep.subr.mxu0 0.0
        %3225 = vmatpush2.msra.mxu0 0.0
        %3226 = vmatprep.subr.mxu0 0.0
        %3227 = vmatpush2.msra.mxu0 0.0
        %3228 = vmatprep.subr.mxu0 0.0
        %3229 = vmatpush2.msra.mxu0 0.0
        %3230 = vmatprep.subr.mxu0 0.0
        %3231 = vmatpush2.msra.mxu0 0.0
        %3232 = vmatprep.subr.mxu0 0.0
        %3233 = vmatpush2.msra.mxu0 0.0
        %3234 = vmatprep.subr.mxu0 0.0
        %3235 = vmatpush2.msra.mxu0 0.0
        %3236 = vmatprep.subr.mxu0 0.0
        %3237 = vmatpush2.msra.mxu0 0.0
        %3238 = vmatprep.subr.mxu0 0.0
        %3239 = vmatpush2.msra.mxu0 0.0
        %3240 = vmatprep.subr.mxu0 0.0
        %3241 = vmatpush2.msra.mxu0 0.0
        %3242 = vmatprep.mubr.f32.mxu0 0.0
        %3243 = vmatmul.mubr.f32.gmra.mxu0 %v3099
        %v3244 = vpop.f32.mrf.mxu0
        %v3245 = vadd.f32 0.0, %v3244
        %v3246 = vpop.f32.mrf.mxu0
        %3247 = vdwg.mxu0
        %3251 = vrot.lane.b32.xlu0 %v3079, 90
        %v3252 = vpop.permute.xlu0 %3251
        %3253 = vrot.lane.b32.xlu0 %v3080, 90
        %v3254 = vpop.permute.xlu0 %3253
        %3255 = vrot.lane.b32.xlu0 %v3081, 90
        %v3256 = vpop.permute.xlu0 %3255
        %v3257 = vsel %vm3095, %v3252, %v3254
        %v3258 = vsel %vm3095, %v3254, %v3256
        %v3263 = vsel %vm608, %v3078, 0
        %3265 = vmatprep.subr.mxu0 0.0
        %3266 = vmatpush1.msra.mxu0 0.0
        %3267 = vmatprep.subr.mxu0 0.0
        %3268 = vmatpush1.msra.mxu0 0.0
        %3269 = vmatprep.subr.mxu0 0.0
        %3270 = vmatpush1.msra.mxu0 0.0
        %3271 = vmatprep.subr.mxu0 0.0
        %3272 = vmatpush1.msra.mxu0 0.0
        %3273 = vmatprep.subr.mxu0 0.0
        %3274 = vmatpush1.msra.mxu0 0.0
        %3275 = vmatprep.subr.mxu0 0.0
        %3276 = vmatpush1.msra.mxu0 0.0
        %3277 = vmatprep.subr.mxu0 0.0
        %3278 = vmatpush1.msra.mxu0 0.0
        %3279 = vmatprep.subr.mxu0 0.0
        %3280 = vmatpush1.msra.mxu0 0.0
        %3281 = vmatprep.subr.mxu0 0.0
        %3282 = vmatpush1.msra.mxu0 0.0
        %3283 = vmatprep.subr.mxu0 0.0
        %3284 = vmatpush1.msra.mxu0 0.0
        %3285 = vmatprep.subr.mxu0 0.0
        %3286 = vmatpush1.msra.mxu0 0.0
        %3287 = vmatprep.subr.mxu0 0.0
        %3288 = vmatpush1.msra.mxu0 0.0
        %3289 = vmatprep.subr.mxu0 0.0
        %3290 = vmatpush1.msra.mxu0 0.0
        %3291 = vmatprep.subr.mxu0 0.0
        %3292 = vmatpush1.msra.mxu0 0.0
        %3293 = vmatprep.subr.mxu0 0.0
        %3294 = vmatpush1.msra.mxu0 0.0
        %3295 = vmatprep.subr.mxu0 %v3258
        %3296 = vmatpush1.msra.mxu0 %v3257
        %3297 = vmatprep.subr.mxu0 0.0
        %3298 = vmatpush2.msra.mxu0 0.0
        %3299 = vmatprep.subr.mxu0 0.0
        %3300 = vmatpush2.msra.mxu0 0.0
        %3301 = vmatprep.subr.mxu0 0.0
        %3302 = vmatpush2.msra.mxu0 0.0
        %3303 = vmatprep.subr.mxu0 0.0
        %3304 = vmatpush2.msra.mxu0 0.0
        %3305 = vmatprep.subr.mxu0 0.0
        %3306 = vmatpush2.msra.mxu0 0.0
        %3307 = vmatprep.subr.mxu0 0.0
        %3308 = vmatpush2.msra.mxu0 0.0
        %3309 = vmatprep.subr.mxu0 0.0
        %3310 = vmatpush2.msra.mxu0 0.0
        %3311 = vmatprep.subr.mxu0 0.0
        %3312 = vmatpush2.msra.mxu0 0.0
        %3313 = vmatprep.subr.mxu0 0.0
        %3314 = vmatpush2.msra.mxu0 0.0
        %3315 = vmatprep.subr.mxu0 0.0
        %3316 = vmatpush2.msra.mxu0 0.0
        %3317 = vmatprep.subr.mxu0 0.0
        %3318 = vmatpush2.msra.mxu0 0.0
        %3319 = vmatprep.subr.mxu0 0.0
        %3320 = vmatpush2.msra.mxu0 0.0
        %3321 = vmatprep.subr.mxu0 0.0
        %3322 = vmatpush2.msra.mxu0 0.0
        %3323 = vmatprep.subr.mxu0 0.0
        %3324 = vmatpush2.msra.mxu0 0.0
        %3325 = vmatprep.subr.mxu0 0.0
        %3326 = vmatpush2.msra.mxu0 0.0
        %3327 = vmatprep.subr.mxu0 0.0
        %3328 = vmatpush2.msra.mxu0 0.0
        %3329 = vmatprep.mubr.f32.mxu0 0.0
        %3330 = vmatmul.mubr.f32.gmra.mxu0 %v3263
        %v3331 = vpop.f32.mrf.mxu0
        %v3332 = vadd.f32 %v3174, %v3331
        %v3333 = vpop.f32.mrf.mxu0
        %v3334 = vadd.f32 %v3176, %v3333
        %3335 = vdwg.mxu0
        %3336 = vmatprep.subr.mxu0 0.0
        %3337 = vmatpush1.msra.mxu0 0.0
        %3338 = vmatprep.subr.mxu0 0.0
        %3339 = vmatpush1.msra.mxu0 0.0
        %3340 = vmatprep.subr.mxu0 0.0
        %3341 = vmatpush1.msra.mxu0 0.0
        %3342 = vmatprep.subr.mxu0 0.0
        %3343 = vmatpush1.msra.mxu0 0.0
        %3344 = vmatprep.subr.mxu0 0.0
        %3345 = vmatpush1.msra.mxu0 0.0
        %3346 = vmatprep.subr.mxu0 0.0
        %3347 = vmatpush1.msra.mxu0 0.0
        %3348 = vmatprep.subr.mxu0 0.0
        %3349 = vmatpush1.msra.mxu0 0.0
        %3350 = vmatprep.subr.mxu0 0.0
        %3351 = vmatpush1.msra.mxu0 0.0
        %3352 = vmatprep.subr.mxu0 0.0
        %3353 = vmatpush1.msra.mxu0 0.0
        %3354 = vmatprep.subr.mxu0 0.0
        %3355 = vmatpush1.msra.mxu0 0.0
        %3356 = vmatprep.subr.mxu0 0.0
        %3357 = vmatpush1.msra.mxu0 0.0
        %3358 = vmatprep.subr.mxu0 0.0
        %3359 = vmatpush1.msra.mxu0 0.0
        %3360 = vmatprep.subr.mxu0 0.0
        %3361 = vmatpush1.msra.mxu0 0.0
        %3362 = vmatprep.subr.mxu0 0.0
        %3363 = vmatpush1.msra.mxu0 0.0
        %3364 = vmatprep.subr.mxu0 0.0
        %3365 = vmatpush1.msra.mxu0 0.0
        %3366 = vmatprep.subr.mxu0 0.0
        %3367 = vmatpush1.msra.mxu0 %v3256
        %3368 = vmatprep.subr.mxu0 0.0
        %3369 = vmatpush2.msra.mxu0 0.0
        %3370 = vmatprep.subr.mxu0 0.0
        %3371 = vmatpush2.msra.mxu0 0.0
        %3372 = vmatprep.subr.mxu0 0.0
        %3373 = vmatpush2.msra.mxu0 0.0
        %3374 = vmatprep.subr.mxu0 0.0
        %3375 = vmatpush2.msra.mxu0 0.0
        %3376 = vmatprep.subr.mxu0 0.0
        %3377 = vmatpush2.msra.mxu0 0.0
        %3378 = vmatprep.subr.mxu0 0.0
        %3379 = vmatpush2.msra.mxu0 0.0
        %3380 = vmatprep.subr.mxu0 0.0
        %3381 = vmatpush2.msra.mxu0 0.0
        %3382 = vmatprep.subr.mxu0 0.0
        %3383 = vmatpush2.msra.mxu0 0.0
        %3384 = vmatprep.subr.mxu0 0.0
        %3385 = vmatpush2.msra.mxu0 0.0
        %3386 = vmatprep.subr.mxu0 0.0
        %3387 = vmatpush2.msra.mxu0 0.0
        %3388 = vmatprep.subr.mxu0 0.0
        %3389 = vmatpush2.msra.mxu0 0.0
        %3390 = vmatprep.subr.mxu0 0.0
        %3391 = vmatpush2.msra.mxu0 0.0
        %3392 = vmatprep.subr.mxu0 0.0
        %3393 = vmatpush2.msra.mxu0 0.0
        %3394 = vmatprep.subr.mxu0 0.0
        %3395 = vmatpush2.msra.mxu0 0.0
        %3396 = vmatprep.subr.mxu0 0.0
        %3397 = vmatpush2.msra.mxu0 0.0
        %3398 = vmatprep.subr.mxu0 0.0
        %3399 = vmatpush2.msra.mxu0 0.0
        %3400 = vmatprep.mubr.f32.mxu0 0.0
        %3401 = vmatmul.mubr.f32.gmra.mxu0 %v3263
        %v3402 = vpop.f32.mrf.mxu0
        %v3403 = vadd.f32 %v3245, %v3402
        %v3404 = vpop.f32.mrf.mxu0
        %3405 = vdwg.mxu0
        %v3406 = vadd.f32 %v3074, %v3332
        %v3407 = vadd.f32 %v3075, %v3334
        %v3408 = vadd.f32 %v3076, %v3403
        %v3409 = vld [vmem:[%s4] sm:$0xf]
        %3411 = vset.pattern.permute.xlu0 0
        %3412 = vperm.xlu0 %3411, %v3409
        %v3413 = vpop.permute.xlu0 %3412
        %v3415 = vadd.f32 %v3406, %v3413
        %v3416 = vadd.f32 %v3407, %v3413
        %v3417 = vadd.f32 %v3408, %v3413
        %v3418 = vmax.f32 %v3415, 0.0
        %v3419 = vmax.f32 %v3416, 0.0
        %v3420 = vmax.f32 %v3417, 0.0
        %v3422 = vlaneseq
        %v3423 = vshrl.u32 %v3422, 7
        %v3424 = vsub.s32 0, %v3423
        %v3425 = vrot.slane %v445, %v3424
        %v3426 = vlaneseq
        %v3427 = vshrl.u32 %v3426, 7
        %v3428 = vsub.s32 1, %v3427
        %v3429 = vrot.slane %v445, %v3428
        %v3430 = vlaneseq
        %v3431 = vshrl.u32 %v3430, 7
        %v3432 = vsub.s32 2, %v3431
        %v3433 = vrot.slane %v445, %v3432
        %v3437 = vmul.f32 %v3418, %v3425
        %v3438 = vmul.f32 %v3419, %v3429
        %v3439 = vmul.f32 %v3420, %v3433
        %vm3440 = vcmask 150528
        %3441 = vst.msk [vmem:[#allocation2] sm:$0xf] %vm3440, 0.0
        %vm3442 = vcmask 552328
        %3443 = vst.msk [vmem:[#allocation2 + $0x8] sm:$0xf] %vm3442, 0.0
        %v3447 = vcombine.low %v3437, %v3438
        %3448 = vrot.lane.b32.xlu0 %v3447, 19
        %v3449 = vpop.permute.xlu0 %3448
        %3450 = vrot.lane.b32.xlu0 %v3439, 19
        %v3451 = vpop.permute.xlu0 %3450
        %v3452 = vrot.slane %v3449, 4
        %vm3453 = vcmask 154624
        %v3454 = vsel %vm3453, %v3452, %v3449
        %v3455 = vsel %vm3453, %v3452, %v3451
        %vm3458 = vcmask 1043608
        %vm3459 = vcmask 1047556
        %vm3460 = vmor %vm3459, %vm3458
        %3461 = vst.msk [vmem:[#allocation2] sm:$0xff] %vm3460, %v3454
        %vm3462 = vcmask 396288
        %3463 = vst.msk [vmem:[#allocation2 + $0x8] sm:$0xf] %vm3462, %v3455
        %v3464 = vld [vmem:[%s5] sm:$0xf]
        %v3465 = vld [vmem:[#allocation2] sm:$0xff]
        %v3466 = vld [vmem:[#allocation2 + $0x8] sm:$0xf]
        %s3467 = scalar_lea.vmem %s5, 4
        %v3468 = vld [vmem:[%s3467] sm:$0xf]
        %v3471 = vcombine.high %v3465, %v3465
        %3472 = vrot.lane.b32.xlu0 %v3465, 127
        %v3473 = vpop.permute.xlu0 %3472
        %3474 = vrot.lane.b32.xlu0 %v3471, 127
        %v3475 = vpop.permute.xlu0 %3474
        %3476 = vrot.lane.b32.xlu0 %v3466, 127
        %v3477 = vpop.permute.xlu0 %3476
        %v3478 = vsel %vm771, %v3473, %v3475
        %v3479 = vsel %vm771, %v3475, %v3477
        %v3481 = vsel %vm456, %v3468, 0
        %v3483 = vsel %vm460, %v3478, 0
        %v3485 = vsel %vm460, %v3479, 0
        %v3487 = vsel %vm460, %v3477, 0
        %3489 = vmatprep.subr.mxu0 0.0
        %3490 = vmatpush1.msra.mxu0 0.0
        %3491 = vmatprep.subr.mxu0 0.0
        %3492 = vmatpush1.msra.mxu0 0.0
        %3493 = vmatprep.subr.mxu0 0.0
        %3494 = vmatpush1.msra.mxu0 0.0
        %3495 = vmatprep.subr.mxu0 0.0
        %3496 = vmatpush1.msra.mxu0 0.0
        %3497 = vmatprep.subr.mxu0 0.0
        %3498 = vmatpush1.msra.mxu0 0.0
        %3499 = vmatprep.subr.mxu0 0.0
        %3500 = vmatpush1.msra.mxu0 0.0
        %3501 = vmatprep.subr.mxu0 0.0
        %3502 = vmatpush1.msra.mxu0 0.0
        %3503 = vmatprep.subr.mxu0 0.0
        %3504 = vmatpush1.msra.mxu0 0.0
        %3505 = vmatprep.subr.mxu0 0.0
        %3506 = vmatpush1.msra.mxu0 0.0
        %3507 = vmatprep.subr.mxu0 0.0
        %3508 = vmatpush1.msra.mxu0 0.0
        %3509 = vmatprep.subr.mxu0 0.0
        %3510 = vmatpush1.msra.mxu0 0.0
        %3511 = vmatprep.subr.mxu0 0.0
        %3512 = vmatpush1.msra.mxu0 0.0
        %3513 = vmatprep.subr.mxu0 0.0
        %3514 = vmatpush1.msra.mxu0 0.0
        %3515 = vmatprep.subr.mxu0 0.0
        %3516 = vmatpush1.msra.mxu0 0.0
        %3517 = vmatprep.subr.mxu0 0.0
        %3518 = vmatpush1.msra.mxu0 0.0
        %3519 = vmatprep.subr.mxu0 %v3485
        %3520 = vmatpush1.msra.mxu0 %v3483
        %3521 = vmatprep.subr.mxu0 0.0
        %3522 = vmatpush2.msra.mxu0 0.0
        %3523 = vmatprep.subr.mxu0 0.0
        %3524 = vmatpush2.msra.mxu0 0.0
        %3525 = vmatprep.subr.mxu0 0.0
        %3526 = vmatpush2.msra.mxu0 0.0
        %3527 = vmatprep.subr.mxu0 0.0
        %3528 = vmatpush2.msra.mxu0 0.0
        %3529 = vmatprep.subr.mxu0 0.0
        %3530 = vmatpush2.msra.mxu0 0.0
        %3531 = vmatprep.subr.mxu0 0.0
        %3532 = vmatpush2.msra.mxu0 0.0
        %3533 = vmatprep.subr.mxu0 0.0
        %3534 = vmatpush2.msra.mxu0 0.0
        %3535 = vmatprep.subr.mxu0 0.0
        %3536 = vmatpush2.msra.mxu0 0.0
        %3537 = vmatprep.subr.mxu0 0.0
        %3538 = vmatpush2.msra.mxu0 0.0
        %3539 = vmatprep.subr.mxu0 0.0
        %3540 = vmatpush2.msra.mxu0 0.0
        %3541 = vmatprep.subr.mxu0 0.0
        %3542 = vmatpush2.msra.mxu0 0.0
        %3543 = vmatprep.subr.mxu0 0.0
        %3544 = vmatpush2.msra.mxu0 0.0
        %3545 = vmatprep.subr.mxu0 0.0
        %3546 = vmatpush2.msra.mxu0 0.0
        %3547 = vmatprep.subr.mxu0 0.0
        %3548 = vmatpush2.msra.mxu0 0.0
        %3549 = vmatprep.subr.mxu0 0.0
        %3550 = vmatpush2.msra.mxu0 0.0
        %3551 = vmatprep.subr.mxu0 0.0
        %3552 = vmatpush2.msra.mxu0 0.0
        %3553 = vmatprep.mubr.f32.mxu0 0.0
        %3554 = vmatmul.mubr.f32.gmra.mxu0 %v3481
        %v3555 = vpop.f32.mrf.mxu0
        %v3556 = vadd.f32 0.0, %v3555
        %v3557 = vpop.f32.mrf.mxu0
        %v3558 = vadd.f32 0.0, %v3557
        %3559 = vdwg.mxu0
        %3560 = vmatprep.subr.mxu0 0.0
        %3561 = vmatpush1.msra.mxu0 0.0
        %3562 = vmatprep.subr.mxu0 0.0
        %3563 = vmatpush1.msra.mxu0 0.0
        %3564 = vmatprep.subr.mxu0 0.0
        %3565 = vmatpush1.msra.mxu0 0.0
        %3566 = vmatprep.subr.mxu0 0.0
        %3567 = vmatpush1.msra.mxu0 0.0
        %3568 = vmatprep.subr.mxu0 0.0
        %3569 = vmatpush1.msra.mxu0 0.0
        %3570 = vmatprep.subr.mxu0 0.0
        %3571 = vmatpush1.msra.mxu0 0.0
        %3572 = vmatprep.subr.mxu0 0.0
        %3573 = vmatpush1.msra.mxu0 0.0
        %3574 = vmatprep.subr.mxu0 0.0
        %3575 = vmatpush1.msra.mxu0 0.0
        %3576 = vmatprep.subr.mxu0 0.0
        %3577 = vmatpush1.msra.mxu0 0.0
        %3578 = vmatprep.subr.mxu0 0.0
        %3579 = vmatpush1.msra.mxu0 0.0
        %3580 = vmatprep.subr.mxu0 0.0
        %3581 = vmatpush1.msra.mxu0 0.0
        %3582 = vmatprep.subr.mxu0 0.0
        %3583 = vmatpush1.msra.mxu0 0.0
        %3584 = vmatprep.subr.mxu0 0.0
        %3585 = vmatpush1.msra.mxu0 0.0
        %3586 = vmatprep.subr.mxu0 0.0
        %3587 = vmatpush1.msra.mxu0 0.0
        %3588 = vmatprep.subr.mxu0 0.0
        %3589 = vmatpush1.msra.mxu0 0.0
        %3590 = vmatprep.subr.mxu0 0.0
        %3591 = vmatpush1.msra.mxu0 %v3487
        %3592 = vmatprep.subr.mxu0 0.0
        %3593 = vmatpush2.msra.mxu0 0.0
        %3594 = vmatprep.subr.mxu0 0.0
        %3595 = vmatpush2.msra.mxu0 0.0
        %3596 = vmatprep.subr.mxu0 0.0
        %3597 = vmatpush2.msra.mxu0 0.0
        %3598 = vmatprep.subr.mxu0 0.0
        %3599 = vmatpush2.msra.mxu0 0.0
        %3600 = vmatprep.subr.mxu0 0.0
        %3601 = vmatpush2.msra.mxu0 0.0
        %3602 = vmatprep.subr.mxu0 0.0
        %3603 = vmatpush2.msra.mxu0 0.0
        %3604 = vmatprep.subr.mxu0 0.0
        %3605 = vmatpush2.msra.mxu0 0.0
        %3606 = vmatprep.subr.mxu0 0.0
        %3607 = vmatpush2.msra.mxu0 0.0
        %3608 = vmatprep.subr.mxu0 0.0
        %3609 = vmatpush2.msra.mxu0 0.0
        %3610 = vmatprep.subr.mxu0 0.0
        %3611 = vmatpush2.msra.mxu0 0.0
        %3612 = vmatprep.subr.mxu0 0.0
        %3613 = vmatpush2.msra.mxu0 0.0
        %3614 = vmatprep.subr.mxu0 0.0
        %3615 = vmatpush2.msra.mxu0 0.0
        %3616 = vmatprep.subr.mxu0 0.0
        %3617 = vmatpush2.msra.mxu0 0.0
        %3618 = vmatprep.subr.mxu0 0.0
        %3619 = vmatpush2.msra.mxu0 0.0
        %3620 = vmatprep.subr.mxu0 0.0
        %3621 = vmatpush2.msra.mxu0 0.0
        %3622 = vmatprep.subr.mxu0 0.0
        %3623 = vmatpush2.msra.mxu0 0.0
        %3624 = vmatprep.mubr.f32.mxu0 0.0
        %3625 = vmatmul.mubr.f32.gmra.mxu0 %v3481
        %v3626 = vpop.f32.mrf.mxu0
        %v3627 = vadd.f32 0.0, %v3626
        %v3628 = vpop.f32.mrf.mxu0
        %3629 = vdwg.mxu0
        %v3631 = vsel %vm456, %v3464, 0
        %v3633 = vsel %vm460, %v3465, 0
        %v3635 = vsel %vm460, %v3471, 0
        %v3637 = vsel %vm460, %v3466, 0
        %3639 = vmatprep.subr.mxu0 0.0
        %3640 = vmatpush1.msra.mxu0 0.0
        %3641 = vmatprep.subr.mxu0 0.0
        %3642 = vmatpush1.msra.mxu0 0.0
        %3643 = vmatprep.subr.mxu0 0.0
        %3644 = vmatpush1.msra.mxu0 0.0
        %3645 = vmatprep.subr.mxu0 0.0
        %3646 = vmatpush1.msra.mxu0 0.0
        %3647 = vmatprep.subr.mxu0 0.0
        %3648 = vmatpush1.msra.mxu0 0.0
        %3649 = vmatprep.subr.mxu0 0.0
        %3650 = vmatpush1.msra.mxu0 0.0
        %3651 = vmatprep.subr.mxu0 0.0
        %3652 = vmatpush1.msra.mxu0 0.0
        %3653 = vmatprep.subr.mxu0 0.0
        %3654 = vmatpush1.msra.mxu0 0.0
        %3655 = vmatprep.subr.mxu0 0.0
        %3656 = vmatpush1.msra.mxu0 0.0
        %3657 = vmatprep.subr.mxu0 0.0
        %3658 = vmatpush1.msra.mxu0 0.0
        %3659 = vmatprep.subr.mxu0 0.0
        %3660 = vmatpush1.msra.mxu0 0.0
        %3661 = vmatprep.subr.mxu0 0.0
        %3662 = vmatpush1.msra.mxu0 0.0
        %3663 = vmatprep.subr.mxu0 0.0
        %3664 = vmatpush1.msra.mxu0 0.0
        %3665 = vmatprep.subr.mxu0 0.0
        %3666 = vmatpush1.msra.mxu0 0.0
        %3667 = vmatprep.subr.mxu0 0.0
        %3668 = vmatpush1.msra.mxu0 0.0
        %3669 = vmatprep.subr.mxu0 %v3635
        %3670 = vmatpush1.msra.mxu0 %v3633
        %3671 = vmatprep.subr.mxu0 0.0
        %3672 = vmatpush2.msra.mxu0 0.0
        %3673 = vmatprep.subr.mxu0 0.0
        %3674 = vmatpush2.msra.mxu0 0.0
        %3675 = vmatprep.subr.mxu0 0.0
        %3676 = vmatpush2.msra.mxu0 0.0
        %3677 = vmatprep.subr.mxu0 0.0
        %3678 = vmatpush2.msra.mxu0 0.0
        %3679 = vmatprep.subr.mxu0 0.0
        %3680 = vmatpush2.msra.mxu0 0.0
        %3681 = vmatprep.subr.mxu0 0.0
        %3682 = vmatpush2.msra.mxu0 0.0
        %3683 = vmatprep.subr.mxu0 0.0
        %3684 = vmatpush2.msra.mxu0 0.0
        %3685 = vmatprep.subr.mxu0 0.0
        %3686 = vmatpush2.msra.mxu0 0.0
        %3687 = vmatprep.subr.mxu0 0.0
        %3688 = vmatpush2.msra.mxu0 0.0
        %3689 = vmatprep.subr.mxu0 0.0
        %3690 = vmatpush2.msra.mxu0 0.0
        %3691 = vmatprep.subr.mxu0 0.0
        %3692 = vmatpush2.msra.mxu0 0.0
        %3693 = vmatprep.subr.mxu0 0.0
        %3694 = vmatpush2.msra.mxu0 0.0
        %3695 = vmatprep.subr.mxu0 0.0
        %3696 = vmatpush2.msra.mxu0 0.0
        %3697 = vmatprep.subr.mxu0 0.0
        %3698 = vmatpush2.msra.mxu0 0.0
        %3699 = vmatprep.subr.mxu0 0.0
        %3700 = vmatpush2.msra.mxu0 0.0
        %3701 = vmatprep.subr.mxu0 0.0
        %3702 = vmatpush2.msra.mxu0 0.0
        %3703 = vmatprep.mubr.f32.mxu0 0.0
        %3704 = vmatmul.mubr.f32.gmra.mxu0 %v3631
        %v3705 = vpop.f32.mrf.mxu0
        %v3706 = vadd.f32 %v3556, %v3705
        %v3707 = vpop.f32.mrf.mxu0
        %v3708 = vadd.f32 %v3558, %v3707
        %3709 = vdwg.mxu0
        %3710 = vmatprep.subr.mxu0 0.0
        %3711 = vmatpush1.msra.mxu0 0.0
        %3712 = vmatprep.subr.mxu0 0.0
        %3713 = vmatpush1.msra.mxu0 0.0
        %3714 = vmatprep.subr.mxu0 0.0
        %3715 = vmatpush1.msra.mxu0 0.0
        %3716 = vmatprep.subr.mxu0 0.0
        %3717 = vmatpush1.msra.mxu0 0.0
        %3718 = vmatprep.subr.mxu0 0.0
        %3719 = vmatpush1.msra.mxu0 0.0
        %3720 = vmatprep.subr.mxu0 0.0
        %3721 = vmatpush1.msra.mxu0 0.0
        %3722 = vmatprep.subr.mxu0 0.0
        %3723 = vmatpush1.msra.mxu0 0.0
        %3724 = vmatprep.subr.mxu0 0.0
        %3725 = vmatpush1.msra.mxu0 0.0
        %3726 = vmatprep.subr.mxu0 0.0
        %3727 = vmatpush1.msra.mxu0 0.0
        %3728 = vmatprep.subr.mxu0 0.0
        %3729 = vmatpush1.msra.mxu0 0.0
        %3730 = vmatprep.subr.mxu0 0.0
        %3731 = vmatpush1.msra.mxu0 0.0
        %3732 = vmatprep.subr.mxu0 0.0
        %3733 = vmatpush1.msra.mxu0 0.0
        %3734 = vmatprep.subr.mxu0 0.0
        %3735 = vmatpush1.msra.mxu0 0.0
        %3736 = vmatprep.subr.mxu0 0.0
        %3737 = vmatpush1.msra.mxu0 0.0
        %3738 = vmatprep.subr.mxu0 0.0
        %3739 = vmatpush1.msra.mxu0 0.0
        %3740 = vmatprep.subr.mxu0 0.0
        %3741 = vmatpush1.msra.mxu0 %v3637
        %3742 = vmatprep.subr.mxu0 0.0
        %3743 = vmatpush2.msra.mxu0 0.0
        %3744 = vmatprep.subr.mxu0 0.0
        %3745 = vmatpush2.msra.mxu0 0.0
        %3746 = vmatprep.subr.mxu0 0.0
        %3747 = vmatpush2.msra.mxu0 0.0
        %3748 = vmatprep.subr.mxu0 0.0
        %3749 = vmatpush2.msra.mxu0 0.0
        %3750 = vmatprep.subr.mxu0 0.0
        %3751 = vmatpush2.msra.mxu0 0.0
        %3752 = vmatprep.subr.mxu0 0.0
        %3753 = vmatpush2.msra.mxu0 0.0
        %3754 = vmatprep.subr.mxu0 0.0
        %3755 = vmatpush2.msra.mxu0 0.0
        %3756 = vmatprep.subr.mxu0 0.0
        %3757 = vmatpush2.msra.mxu0 0.0
        %3758 = vmatprep.subr.mxu0 0.0
        %3759 = vmatpush2.msra.mxu0 0.0
        %3760 = vmatprep.subr.mxu0 0.0
        %3761 = vmatpush2.msra.mxu0 0.0
        %3762 = vmatprep.subr.mxu0 0.0
        %3763 = vmatpush2.msra.mxu0 0.0
        %3764 = vmatprep.subr.mxu0 0.0
        %3765 = vmatpush2.msra.mxu0 0.0
        %3766 = vmatprep.subr.mxu0 0.0
        %3767 = vmatpush2.msra.mxu0 0.0
        %3768 = vmatprep.subr.mxu0 0.0
        %3769 = vmatpush2.msra.mxu0 0.0
        %3770 = vmatprep.subr.mxu0 0.0
        %3771 = vmatpush2.msra.mxu0 0.0
        %3772 = vmatprep.subr.mxu0 0.0
        %3773 = vmatpush2.msra.mxu0 0.0
        %3774 = vmatprep.mubr.f32.mxu0 0.0
        %3775 = vmatmul.mubr.f32.gmra.mxu0 %v3631
        %v3776 = vpop.f32.mrf.mxu0
        %v3777 = vadd.f32 %v3627, %v3776
        %v3778 = vpop.f32.mrf.mxu0
        %3779 = vdwg.mxu0
        %s3780 = scalar_lea.vmem %s5, 8
        %v3781 = vld [vmem:[%s3780] sm:$0xf]
        %v3782 = vld [vmem:[#allocation2] sm:$0xff]
        %v3783 = vld [vmem:[#allocation2 + $0x8] sm:$0xf]
        %v3786 = vcombine.high %v3782, %v3782
        %3787 = vrot.lane.b32.xlu0 %v3782, 126
        %v3788 = vpop.permute.xlu0 %3787
        %3789 = vrot.lane.b32.xlu0 %v3786, 126
        %v3790 = vpop.permute.xlu0 %3789
        %3791 = vrot.lane.b32.xlu0 %v3783, 126
        %v3792 = vpop.permute.xlu0 %3791
        %v3793 = vsel %vm1103, %v3788, %v3790
        %v3794 = vsel %vm1103, %v3790, %v3792
        %v3796 = vsel %vm456, %v3781, 0
        %v3798 = vsel %vm460, %v3793, 0
        %v3800 = vsel %vm460, %v3794, 0
        %v3802 = vsel %vm460, %v3792, 0
        %3804 = vmatprep.subr.mxu0 0.0
        %3805 = vmatpush1.msra.mxu0 0.0
        %3806 = vmatprep.subr.mxu0 0.0
        %3807 = vmatpush1.msra.mxu0 0.0
        %3808 = vmatprep.subr.mxu0 0.0
        %3809 = vmatpush1.msra.mxu0 0.0
        %3810 = vmatprep.subr.mxu0 0.0
        %3811 = vmatpush1.msra.mxu0 0.0
        %3812 = vmatprep.subr.mxu0 0.0
        %3813 = vmatpush1.msra.mxu0 0.0
        %3814 = vmatprep.subr.mxu0 0.0
        %3815 = vmatpush1.msra.mxu0 0.0
        %3816 = vmatprep.subr.mxu0 0.0
        %3817 = vmatpush1.msra.mxu0 0.0
        %3818 = vmatprep.subr.mxu0 0.0
        %3819 = vmatpush1.msra.mxu0 0.0
        %3820 = vmatprep.subr.mxu0 0.0
        %3821 = vmatpush1.msra.mxu0 0.0
        %3822 = vmatprep.subr.mxu0 0.0
        %3823 = vmatpush1.msra.mxu0 0.0
        %3824 = vmatprep.subr.mxu0 0.0
        %3825 = vmatpush1.msra.mxu0 0.0
        %3826 = vmatprep.subr.mxu0 0.0
        %3827 = vmatpush1.msra.mxu0 0.0
        %3828 = vmatprep.subr.mxu0 0.0
        %3829 = vmatpush1.msra.mxu0 0.0
        %3830 = vmatprep.subr.mxu0 0.0
        %3831 = vmatpush1.msra.mxu0 0.0
        %3832 = vmatprep.subr.mxu0 0.0
        %3833 = vmatpush1.msra.mxu0 0.0
        %3834 = vmatprep.subr.mxu0 %v3800
        %3835 = vmatpush1.msra.mxu0 %v3798
        %3836 = vmatprep.subr.mxu0 0.0
        %3837 = vmatpush2.msra.mxu0 0.0
        %3838 = vmatprep.subr.mxu0 0.0
        %3839 = vmatpush2.msra.mxu0 0.0
        %3840 = vmatprep.subr.mxu0 0.0
        %3841 = vmatpush2.msra.mxu0 0.0
        %3842 = vmatprep.subr.mxu0 0.0
        %3843 = vmatpush2.msra.mxu0 0.0
        %3844 = vmatprep.subr.mxu0 0.0
        %3845 = vmatpush2.msra.mxu0 0.0
        %3846 = vmatprep.subr.mxu0 0.0
        %3847 = vmatpush2.msra.mxu0 0.0
        %3848 = vmatprep.subr.mxu0 0.0
        %3849 = vmatpush2.msra.mxu0 0.0
        %3850 = vmatprep.subr.mxu0 0.0
        %3851 = vmatpush2.msra.mxu0 0.0
        %3852 = vmatprep.subr.mxu0 0.0
        %3853 = vmatpush2.msra.mxu0 0.0
        %3854 = vmatprep.subr.mxu0 0.0
        %3855 = vmatpush2.msra.mxu0 0.0
        %3856 = vmatprep.subr.mxu0 0.0
        %3857 = vmatpush2.msra.mxu0 0.0
        %3858 = vmatprep.subr.mxu0 0.0
        %3859 = vmatpush2.msra.mxu0 0.0
        %3860 = vmatprep.subr.mxu0 0.0
        %3861 = vmatpush2.msra.mxu0 0.0
        %3862 = vmatprep.subr.mxu0 0.0
        %3863 = vmatpush2.msra.mxu0 0.0
        %3864 = vmatprep.subr.mxu0 0.0
        %3865 = vmatpush2.msra.mxu0 0.0
        %3866 = vmatprep.subr.mxu0 0.0
        %3867 = vmatpush2.msra.mxu0 0.0
        %3868 = vmatprep.mubr.f32.mxu0 0.0
        %3869 = vmatmul.mubr.f32.gmra.mxu0 %v3796
        %v3870 = vpop.f32.mrf.mxu0
        %v3871 = vadd.f32 0.0, %v3870
        %v3872 = vpop.f32.mrf.mxu0
        %v3873 = vadd.f32 0.0, %v3872
        %3874 = vdwg.mxu0
        %3875 = vmatprep.subr.mxu0 0.0
        %3876 = vmatpush1.msra.mxu0 0.0
        %3877 = vmatprep.subr.mxu0 0.0
        %3878 = vmatpush1.msra.mxu0 0.0
        %3879 = vmatprep.subr.mxu0 0.0
        %3880 = vmatpush1.msra.mxu0 0.0
        %3881 = vmatprep.subr.mxu0 0.0
        %3882 = vmatpush1.msra.mxu0 0.0
        %3883 = vmatprep.subr.mxu0 0.0
        %3884 = vmatpush1.msra.mxu0 0.0
        %3885 = vmatprep.subr.mxu0 0.0
        %3886 = vmatpush1.msra.mxu0 0.0
        %3887 = vmatprep.subr.mxu0 0.0
        %3888 = vmatpush1.msra.mxu0 0.0
        %3889 = vmatprep.subr.mxu0 0.0
        %3890 = vmatpush1.msra.mxu0 0.0
        %3891 = vmatprep.subr.mxu0 0.0
        %3892 = vmatpush1.msra.mxu0 0.0
        %3893 = vmatprep.subr.mxu0 0.0
        %3894 = vmatpush1.msra.mxu0 0.0
        %3895 = vmatprep.subr.mxu0 0.0
        %3896 = vmatpush1.msra.mxu0 0.0
        %3897 = vmatprep.subr.mxu0 0.0
        %3898 = vmatpush1.msra.mxu0 0.0
        %3899 = vmatprep.subr.mxu0 0.0
        %3900 = vmatpush1.msra.mxu0 0.0
        %3901 = vmatprep.subr.mxu0 0.0
        %3902 = vmatpush1.msra.mxu0 0.0
        %3903 = vmatprep.subr.mxu0 0.0
        %3904 = vmatpush1.msra.mxu0 0.0
        %3905 = vmatprep.subr.mxu0 0.0
        %3906 = vmatpush1.msra.mxu0 %v3802
        %3907 = vmatprep.subr.mxu0 0.0
        %3908 = vmatpush2.msra.mxu0 0.0
        %3909 = vmatprep.subr.mxu0 0.0
        %3910 = vmatpush2.msra.mxu0 0.0
        %3911 = vmatprep.subr.mxu0 0.0
        %3912 = vmatpush2.msra.mxu0 0.0
        %3913 = vmatprep.subr.mxu0 0.0
        %3914 = vmatpush2.msra.mxu0 0.0
        %3915 = vmatprep.subr.mxu0 0.0
        %3916 = vmatpush2.msra.mxu0 0.0
        %3917 = vmatprep.subr.mxu0 0.0
        %3918 = vmatpush2.msra.mxu0 0.0
        %3919 = vmatprep.subr.mxu0 0.0
        %3920 = vmatpush2.msra.mxu0 0.0
        %3921 = vmatprep.subr.mxu0 0.0
        %3922 = vmatpush2.msra.mxu0 0.0
        %3923 = vmatprep.subr.mxu0 0.0
        %3924 = vmatpush2.msra.mxu0 0.0
        %3925 = vmatprep.subr.mxu0 0.0
        %3926 = vmatpush2.msra.mxu0 0.0
        %3927 = vmatprep.subr.mxu0 0.0
        %3928 = vmatpush2.msra.mxu0 0.0
        %3929 = vmatprep.subr.mxu0 0.0
        %3930 = vmatpush2.msra.mxu0 0.0
        %3931 = vmatprep.subr.mxu0 0.0
        %3932 = vmatpush2.msra.mxu0 0.0
        %3933 = vmatprep.subr.mxu0 0.0
        %3934 = vmatpush2.msra.mxu0 0.0
        %3935 = vmatprep.subr.mxu0 0.0
        %3936 = vmatpush2.msra.mxu0 0.0
        %3937 = vmatprep.subr.mxu0 0.0
        %3938 = vmatpush2.msra.mxu0 0.0
        %3939 = vmatprep.mubr.f32.mxu0 0.0
        %3940 = vmatmul.mubr.f32.gmra.mxu0 %v3796
        %v3941 = vpop.f32.mrf.mxu0
        %v3942 = vadd.f32 0.0, %v3941
        %v3943 = vpop.f32.mrf.mxu0
        %3944 = vdwg.mxu0
        %v3945 = vadd.f32 %v3706, %v3871
        %v3946 = vadd.f32 %v3708, %v3873
        %v3947 = vadd.f32 %v3777, %v3942
        %s3948 = scalar_lea.vmem %s5, 12
        %v3949 = vld [vmem:[%s3948] sm:$0xf]
        %v3950 = vld [vmem:[#allocation2] sm:$0xff]
        %v3951 = vld [vmem:[#allocation2 + $0x8] sm:$0xf]
        %v3954 = vcombine.high %v3950, %v3950
        %3955 = vrot.lane.b32.xlu0 %v3950, 110
        %v3956 = vpop.permute.xlu0 %3955
        %3957 = vrot.lane.b32.xlu0 %v3954, 110
        %v3958 = vpop.permute.xlu0 %3957
        %3959 = vrot.lane.b32.xlu0 %v3951, 110
        %v3960 = vpop.permute.xlu0 %3959
        %v3961 = vsel %vm1435, %v3956, %v3958
        %v3962 = vsel %vm1435, %v3958, %v3960
        %v3964 = vsel %vm456, %v3949, 0
        %v3966 = vsel %vm460, %v3961, 0
        %v3968 = vsel %vm460, %v3962, 0
        %v3970 = vsel %vm460, %v3960, 0
        %3972 = vmatprep.subr.mxu0 0.0
        %3973 = vmatpush1.msra.mxu0 0.0
        %3974 = vmatprep.subr.mxu0 0.0
        %3975 = vmatpush1.msra.mxu0 0.0
        %3976 = vmatprep.subr.mxu0 0.0
        %3977 = vmatpush1.msra.mxu0 0.0
        %3978 = vmatprep.subr.mxu0 0.0
        %3979 = vmatpush1.msra.mxu0 0.0
        %3980 = vmatprep.subr.mxu0 0.0
        %3981 = vmatpush1.msra.mxu0 0.0
        %3982 = vmatprep.subr.mxu0 0.0
        %3983 = vmatpush1.msra.mxu0 0.0
        %3984 = vmatprep.subr.mxu0 0.0
        %3985 = vmatpush1.msra.mxu0 0.0
        %3986 = vmatprep.subr.mxu0 0.0
        %3987 = vmatpush1.msra.mxu0 0.0
        %3988 = vmatprep.subr.mxu0 0.0
        %3989 = vmatpush1.msra.mxu0 0.0
        %3990 = vmatprep.subr.mxu0 0.0
        %3991 = vmatpush1.msra.mxu0 0.0
        %3992 = vmatprep.subr.mxu0 0.0
        %3993 = vmatpush1.msra.mxu0 0.0
        %3994 = vmatprep.subr.mxu0 0.0
        %3995 = vmatpush1.msra.mxu0 0.0
        %3996 = vmatprep.subr.mxu0 0.0
        %3997 = vmatpush1.msra.mxu0 0.0
        %3998 = vmatprep.subr.mxu0 0.0
        %3999 = vmatpush1.msra.mxu0 0.0
        %4000 = vmatprep.subr.mxu0 0.0
        %4001 = vmatpush1.msra.mxu0 0.0
        %4002 = vmatprep.subr.mxu0 %v3968
        %4003 = vmatpush1.msra.mxu0 %v3966
        %4004 = vmatprep.subr.mxu0 0.0
        %4005 = vmatpush2.msra.mxu0 0.0
        %4006 = vmatprep.subr.mxu0 0.0
        %4007 = vmatpush2.msra.mxu0 0.0
        %4008 = vmatprep.subr.mxu0 0.0
        %4009 = vmatpush2.msra.mxu0 0.0
        %4010 = vmatprep.subr.mxu0 0.0
        %4011 = vmatpush2.msra.mxu0 0.0
        %4012 = vmatprep.subr.mxu0 0.0
        %4013 = vmatpush2.msra.mxu0 0.0
        %4014 = vmatprep.subr.mxu0 0.0
        %4015 = vmatpush2.msra.mxu0 0.0
        %4016 = vmatprep.subr.mxu0 0.0
        %4017 = vmatpush2.msra.mxu0 0.0
        %4018 = vmatprep.subr.mxu0 0.0
        %4019 = vmatpush2.msra.mxu0 0.0
        %4020 = vmatprep.subr.mxu0 0.0
        %4021 = vmatpush2.msra.mxu0 0.0
        %4022 = vmatprep.subr.mxu0 0.0
        %4023 = vmatpush2.msra.mxu0 0.0
        %4024 = vmatprep.subr.mxu0 0.0
        %4025 = vmatpush2.msra.mxu0 0.0
        %4026 = vmatprep.subr.mxu0 0.0
        %4027 = vmatpush2.msra.mxu0 0.0
        %4028 = vmatprep.subr.mxu0 0.0
        %4029 = vmatpush2.msra.mxu0 0.0
        %4030 = vmatprep.subr.mxu0 0.0
        %4031 = vmatpush2.msra.mxu0 0.0
        %4032 = vmatprep.subr.mxu0 0.0
        %4033 = vmatpush2.msra.mxu0 0.0
        %4034 = vmatprep.subr.mxu0 0.0
        %4035 = vmatpush2.msra.mxu0 0.0
        %4036 = vmatprep.mubr.f32.mxu0 0.0
        %4037 = vmatmul.mubr.f32.gmra.mxu0 %v3964
        %v4038 = vpop.f32.mrf.mxu0
        %v4039 = vadd.f32 0.0, %v4038
        %v4040 = vpop.f32.mrf.mxu0
        %v4041 = vadd.f32 0.0, %v4040
        %4042 = vdwg.mxu0
        %4043 = vmatprep.subr.mxu0 0.0
        %4044 = vmatpush1.msra.mxu0 0.0
        %4045 = vmatprep.subr.mxu0 0.0
        %4046 = vmatpush1.msra.mxu0 0.0
        %4047 = vmatprep.subr.mxu0 0.0
        %4048 = vmatpush1.msra.mxu0 0.0
        %4049 = vmatprep.subr.mxu0 0.0
        %4050 = vmatpush1.msra.mxu0 0.0
        %4051 = vmatprep.subr.mxu0 0.0
        %4052 = vmatpush1.msra.mxu0 0.0
        %4053 = vmatprep.subr.mxu0 0.0
        %4054 = vmatpush1.msra.mxu0 0.0
        %4055 = vmatprep.subr.mxu0 0.0
        %4056 = vmatpush1.msra.mxu0 0.0
        %4057 = vmatprep.subr.mxu0 0.0
        %4058 = vmatpush1.msra.mxu0 0.0
        %4059 = vmatprep.subr.mxu0 0.0
        %4060 = vmatpush1.msra.mxu0 0.0
        %4061 = vmatprep.subr.mxu0 0.0
        %4062 = vmatpush1.msra.mxu0 0.0
        %4063 = vmatprep.subr.mxu0 0.0
        %4064 = vmatpush1.msra.mxu0 0.0
        %4065 = vmatprep.subr.mxu0 0.0
        %4066 = vmatpush1.msra.mxu0 0.0
        %4067 = vmatprep.subr.mxu0 0.0
        %4068 = vmatpush1.msra.mxu0 0.0
        %4069 = vmatprep.subr.mxu0 0.0
        %4070 = vmatpush1.msra.mxu0 0.0
        %4071 = vmatprep.subr.mxu0 0.0
        %4072 = vmatpush1.msra.mxu0 0.0
        %4073 = vmatprep.subr.mxu0 0.0
        %4074 = vmatpush1.msra.mxu0 %v3970
        %4075 = vmatprep.subr.mxu0 0.0
        %4076 = vmatpush2.msra.mxu0 0.0
        %4077 = vmatprep.subr.mxu0 0.0
        %4078 = vmatpush2.msra.mxu0 0.0
        %4079 = vmatprep.subr.mxu0 0.0
        %4080 = vmatpush2.msra.mxu0 0.0
        %4081 = vmatprep.subr.mxu0 0.0
        %4082 = vmatpush2.msra.mxu0 0.0
        %4083 = vmatprep.subr.mxu0 0.0
        %4084 = vmatpush2.msra.mxu0 0.0
        %4085 = vmatprep.subr.mxu0 0.0
        %4086 = vmatpush2.msra.mxu0 0.0
        %4087 = vmatprep.subr.mxu0 0.0
        %4088 = vmatpush2.msra.mxu0 0.0
        %4089 = vmatprep.subr.mxu0 0.0
        %4090 = vmatpush2.msra.mxu0 0.0
        %4091 = vmatprep.subr.mxu0 0.0
        %4092 = vmatpush2.msra.mxu0 0.0
        %4093 = vmatprep.subr.mxu0 0.0
        %4094 = vmatpush2.msra.mxu0 0.0
        %4095 = vmatprep.subr.mxu0 0.0
        %4096 = vmatpush2.msra.mxu0 0.0
        %4097 = vmatprep.subr.mxu0 0.0
        %4098 = vmatpush2.msra.mxu0 0.0
        %4099 = vmatprep.subr.mxu0 0.0
        %4100 = vmatpush2.msra.mxu0 0.0
        %4101 = vmatprep.subr.mxu0 0.0
        %4102 = vmatpush2.msra.mxu0 0.0
        %4103 = vmatprep.subr.mxu0 0.0
        %4104 = vmatpush2.msra.mxu0 0.0
        %4105 = vmatprep.subr.mxu0 0.0
        %4106 = vmatpush2.msra.mxu0 0.0
        %4107 = vmatprep.mubr.f32.mxu0 0.0
        %4108 = vmatmul.mubr.f32.gmra.mxu0 %v3964
        %v4109 = vpop.f32.mrf.mxu0
        %v4110 = vadd.f32 0.0, %v4109
        %v4111 = vpop.f32.mrf.mxu0
        %4112 = vdwg.mxu0
        %v4113 = vadd.f32 %v3945, %v4039
        %v4114 = vadd.f32 %v3946, %v4041
        %v4115 = vadd.f32 %v3947, %v4110
        %s4116 = scalar_lea.vmem %s5, 16
        %v4117 = vld [vmem:[%s4116] sm:$0xf]
        %v4118 = vld [vmem:[#allocation2] sm:$0xff]
        %v4119 = vld [vmem:[#allocation2 + $0x8] sm:$0xf]
        %v4122 = vcombine.high %v4118, %v4118
        %4123 = vrot.lane.b32.xlu0 %v4118, 109
        %v4124 = vpop.permute.xlu0 %4123
        %4125 = vrot.lane.b32.xlu0 %v4122, 109
        %v4126 = vpop.permute.xlu0 %4125
        %4127 = vrot.lane.b32.xlu0 %v4119, 109
        %v4128 = vpop.permute.xlu0 %4127
        %v4129 = vsel %vm1767, %v4124, %v4126
        %v4130 = vsel %vm1767, %v4126, %v4128
        %v4132 = vsel %vm456, %v4117, 0
        %v4134 = vsel %vm460, %v4129, 0
        %v4136 = vsel %vm460, %v4130, 0
        %v4138 = vsel %vm460, %v4128, 0
        %4140 = vmatprep.subr.mxu0 0.0
        %4141 = vmatpush1.msra.mxu0 0.0
        %4142 = vmatprep.subr.mxu0 0.0
        %4143 = vmatpush1.msra.mxu0 0.0
        %4144 = vmatprep.subr.mxu0 0.0
        %4145 = vmatpush1.msra.mxu0 0.0
        %4146 = vmatprep.subr.mxu0 0.0
        %4147 = vmatpush1.msra.mxu0 0.0
        %4148 = vmatprep.subr.mxu0 0.0
        %4149 = vmatpush1.msra.mxu0 0.0
        %4150 = vmatprep.subr.mxu0 0.0
        %4151 = vmatpush1.msra.mxu0 0.0
        %4152 = vmatprep.subr.mxu0 0.0
        %4153 = vmatpush1.msra.mxu0 0.0
        %4154 = vmatprep.subr.mxu0 0.0
        %4155 = vmatpush1.msra.mxu0 0.0
        %4156 = vmatprep.subr.mxu0 0.0
        %4157 = vmatpush1.msra.mxu0 0.0
        %4158 = vmatprep.subr.mxu0 0.0
        %4159 = vmatpush1.msra.mxu0 0.0
        %4160 = vmatprep.subr.mxu0 0.0
        %4161 = vmatpush1.msra.mxu0 0.0
        %4162 = vmatprep.subr.mxu0 0.0
        %4163 = vmatpush1.msra.mxu0 0.0
        %4164 = vmatprep.subr.mxu0 0.0
        %4165 = vmatpush1.msra.mxu0 0.0
        %4166 = vmatprep.subr.mxu0 0.0
        %4167 = vmatpush1.msra.mxu0 0.0
        %4168 = vmatprep.subr.mxu0 0.0
        %4169 = vmatpush1.msra.mxu0 0.0
        %4170 = vmatprep.subr.mxu0 %v4136
        %4171 = vmatpush1.msra.mxu0 %v4134
        %4172 = vmatprep.subr.mxu0 0.0
        %4173 = vmatpush2.msra.mxu0 0.0
        %4174 = vmatprep.subr.mxu0 0.0
        %4175 = vmatpush2.msra.mxu0 0.0
        %4176 = vmatprep.subr.mxu0 0.0
        %4177 = vmatpush2.msra.mxu0 0.0
        %4178 = vmatprep.subr.mxu0 0.0
        %4179 = vmatpush2.msra.mxu0 0.0
        %4180 = vmatprep.subr.mxu0 0.0
        %4181 = vmatpush2.msra.mxu0 0.0
        %4182 = vmatprep.subr.mxu0 0.0
        %4183 = vmatpush2.msra.mxu0 0.0
        %4184 = vmatprep.subr.mxu0 0.0
        %4185 = vmatpush2.msra.mxu0 0.0
        %4186 = vmatprep.subr.mxu0 0.0
        %4187 = vmatpush2.msra.mxu0 0.0
        %4188 = vmatprep.subr.mxu0 0.0
        %4189 = vmatpush2.msra.mxu0 0.0
        %4190 = vmatprep.subr.mxu0 0.0
        %4191 = vmatpush2.msra.mxu0 0.0
        %4192 = vmatprep.subr.mxu0 0.0
        %4193 = vmatpush2.msra.mxu0 0.0
        %4194 = vmatprep.subr.mxu0 0.0
        %4195 = vmatpush2.msra.mxu0 0.0
        %4196 = vmatprep.subr.mxu0 0.0
        %4197 = vmatpush2.msra.mxu0 0.0
        %4198 = vmatprep.subr.mxu0 0.0
        %4199 = vmatpush2.msra.mxu0 0.0
        %4200 = vmatprep.subr.mxu0 0.0
        %4201 = vmatpush2.msra.mxu0 0.0
        %4202 = vmatprep.subr.mxu0 0.0
        %4203 = vmatpush2.msra.mxu0 0.0
        %4204 = vmatprep.mubr.f32.mxu0 0.0
        %4205 = vmatmul.mubr.f32.gmra.mxu0 %v4132
        %v4206 = vpop.f32.mrf.mxu0
        %v4207 = vadd.f32 0.0, %v4206
        %v4208 = vpop.f32.mrf.mxu0
        %v4209 = vadd.f32 0.0, %v4208
        %4210 = vdwg.mxu0
        %4211 = vmatprep.subr.mxu0 0.0
        %4212 = vmatpush1.msra.mxu0 0.0
        %4213 = vmatprep.subr.mxu0 0.0
        %4214 = vmatpush1.msra.mxu0 0.0
        %4215 = vmatprep.subr.mxu0 0.0
        %4216 = vmatpush1.msra.mxu0 0.0
        %4217 = vmatprep.subr.mxu0 0.0
        %4218 = vmatpush1.msra.mxu0 0.0
        %4219 = vmatprep.subr.mxu0 0.0
        %4220 = vmatpush1.msra.mxu0 0.0
        %4221 = vmatprep.subr.mxu0 0.0
        %4222 = vmatpush1.msra.mxu0 0.0
        %4223 = vmatprep.subr.mxu0 0.0
        %4224 = vmatpush1.msra.mxu0 0.0
        %4225 = vmatprep.subr.mxu0 0.0
        %4226 = vmatpush1.msra.mxu0 0.0
        %4227 = vmatprep.subr.mxu0 0.0
        %4228 = vmatpush1.msra.mxu0 0.0
        %4229 = vmatprep.subr.mxu0 0.0
        %4230 = vmatpush1.msra.mxu0 0.0
        %4231 = vmatprep.subr.mxu0 0.0
        %4232 = vmatpush1.msra.mxu0 0.0
        %4233 = vmatprep.subr.mxu0 0.0
        %4234 = vmatpush1.msra.mxu0 0.0
        %4235 = vmatprep.subr.mxu0 0.0
        %4236 = vmatpush1.msra.mxu0 0.0
        %4237 = vmatprep.subr.mxu0 0.0
        %4238 = vmatpush1.msra.mxu0 0.0
        %4239 = vmatprep.subr.mxu0 0.0
        %4240 = vmatpush1.msra.mxu0 0.0
        %4241 = vmatprep.subr.mxu0 0.0
        %4242 = vmatpush1.msra.mxu0 %v4138
        %4243 = vmatprep.subr.mxu0 0.0
        %4244 = vmatpush2.msra.mxu0 0.0
        %4245 = vmatprep.subr.mxu0 0.0
        %4246 = vmatpush2.msra.mxu0 0.0
        %4247 = vmatprep.subr.mxu0 0.0
        %4248 = vmatpush2.msra.mxu0 0.0
        %4249 = vmatprep.subr.mxu0 0.0
        %4250 = vmatpush2.msra.mxu0 0.0
        %4251 = vmatprep.subr.mxu0 0.0
        %4252 = vmatpush2.msra.mxu0 0.0
        %4253 = vmatprep.subr.mxu0 0.0
        %4254 = vmatpush2.msra.mxu0 0.0
        %4255 = vmatprep.subr.mxu0 0.0
        %4256 = vmatpush2.msra.mxu0 0.0
        %4257 = vmatprep.subr.mxu0 0.0
        %4258 = vmatpush2.msra.mxu0 0.0
        %4259 = vmatprep.subr.mxu0 0.0
        %4260 = vmatpush2.msra.mxu0 0.0
        %4261 = vmatprep.subr.mxu0 0.0
        %4262 = vmatpush2.msra.mxu0 0.0
        %4263 = vmatprep.subr.mxu0 0.0
        %4264 = vmatpush2.msra.mxu0 0.0
        %4265 = vmatprep.subr.mxu0 0.0
        %4266 = vmatpush2.msra.mxu0 0.0
        %4267 = vmatprep.subr.mxu0 0.0
        %4268 = vmatpush2.msra.mxu0 0.0
        %4269 = vmatprep.subr.mxu0 0.0
        %4270 = vmatpush2.msra.mxu0 0.0
        %4271 = vmatprep.subr.mxu0 0.0
        %4272 = vmatpush2.msra.mxu0 0.0
        %4273 = vmatprep.subr.mxu0 0.0
        %4274 = vmatpush2.msra.mxu0 0.0
        %4275 = vmatprep.mubr.f32.mxu0 0.0
        %4276 = vmatmul.mubr.f32.gmra.mxu0 %v4132
        %v4277 = vpop.f32.mrf.mxu0
        %v4278 = vadd.f32 0.0, %v4277
        %v4279 = vpop.f32.mrf.mxu0
        %4280 = vdwg.mxu0
        %v4281 = vadd.f32 %v4113, %v4207
        %v4282 = vadd.f32 %v4114, %v4209
        %v4283 = vadd.f32 %v4115, %v4278
        %s4284 = scalar_lea.vmem %s5, 20
        %v4285 = vld [vmem:[%s4284] sm:$0xf]
        %v4286 = vld [vmem:[#allocation2] sm:$0xff]
        %v4287 = vld [vmem:[#allocation2 + $0x8] sm:$0xf]
        %v4290 = vcombine.high %v4286, %v4286
        %4291 = vrot.lane.b32.xlu0 %v4286, 108
        %v4292 = vpop.permute.xlu0 %4291
        %4293 = vrot.lane.b32.xlu0 %v4290, 108
        %v4294 = vpop.permute.xlu0 %4293
        %4295 = vrot.lane.b32.xlu0 %v4287, 108
        %v4296 = vpop.permute.xlu0 %4295
        %v4297 = vsel %vm2099, %v4292, %v4294
        %v4298 = vsel %vm2099, %v4294, %v4296
        %v4300 = vsel %vm456, %v4285, 0
        %v4302 = vsel %vm460, %v4297, 0
        %v4304 = vsel %vm460, %v4298, 0
        %v4306 = vsel %vm460, %v4296, 0
        %4308 = vmatprep.subr.mxu0 0.0
        %4309 = vmatpush1.msra.mxu0 0.0
        %4310 = vmatprep.subr.mxu0 0.0
        %4311 = vmatpush1.msra.mxu0 0.0
        %4312 = vmatprep.subr.mxu0 0.0
        %4313 = vmatpush1.msra.mxu0 0.0
        %4314 = vmatprep.subr.mxu0 0.0
        %4315 = vmatpush1.msra.mxu0 0.0
        %4316 = vmatprep.subr.mxu0 0.0
        %4317 = vmatpush1.msra.mxu0 0.0
        %4318 = vmatprep.subr.mxu0 0.0
        %4319 = vmatpush1.msra.mxu0 0.0
        %4320 = vmatprep.subr.mxu0 0.0
        %4321 = vmatpush1.msra.mxu0 0.0
        %4322 = vmatprep.subr.mxu0 0.0
        %4323 = vmatpush1.msra.mxu0 0.0
        %4324 = vmatprep.subr.mxu0 0.0
        %4325 = vmatpush1.msra.mxu0 0.0
        %4326 = vmatprep.subr.mxu0 0.0
        %4327 = vmatpush1.msra.mxu0 0.0
        %4328 = vmatprep.subr.mxu0 0.0
        %4329 = vmatpush1.msra.mxu0 0.0
        %4330 = vmatprep.subr.mxu0 0.0
        %4331 = vmatpush1.msra.mxu0 0.0
        %4332 = vmatprep.subr.mxu0 0.0
        %4333 = vmatpush1.msra.mxu0 0.0
        %4334 = vmatprep.subr.mxu0 0.0
        %4335 = vmatpush1.msra.mxu0 0.0
        %4336 = vmatprep.subr.mxu0 0.0
        %4337 = vmatpush1.msra.mxu0 0.0
        %4338 = vmatprep.subr.mxu0 %v4304
        %4339 = vmatpush1.msra.mxu0 %v4302
        %4340 = vmatprep.subr.mxu0 0.0
        %4341 = vmatpush2.msra.mxu0 0.0
        %4342 = vmatprep.subr.mxu0 0.0
        %4343 = vmatpush2.msra.mxu0 0.0
        %4344 = vmatprep.subr.mxu0 0.0
        %4345 = vmatpush2.msra.mxu0 0.0
        %4346 = vmatprep.subr.mxu0 0.0
        %4347 = vmatpush2.msra.mxu0 0.0
        %4348 = vmatprep.subr.mxu0 0.0
        %4349 = vmatpush2.msra.mxu0 0.0
        %4350 = vmatprep.subr.mxu0 0.0
        %4351 = vmatpush2.msra.mxu0 0.0
        %4352 = vmatprep.subr.mxu0 0.0
        %4353 = vmatpush2.msra.mxu0 0.0
        %4354 = vmatprep.subr.mxu0 0.0
        %4355 = vmatpush2.msra.mxu0 0.0
        %4356 = vmatprep.subr.mxu0 0.0
        %4357 = vmatpush2.msra.mxu0 0.0
        %4358 = vmatprep.subr.mxu0 0.0
        %4359 = vmatpush2.msra.mxu0 0.0
        %4360 = vmatprep.subr.mxu0 0.0
        %4361 = vmatpush2.msra.mxu0 0.0
        %4362 = vmatprep.subr.mxu0 0.0
        %4363 = vmatpush2.msra.mxu0 0.0
        %4364 = vmatprep.subr.mxu0 0.0
        %4365 = vmatpush2.msra.mxu0 0.0
        %4366 = vmatprep.subr.mxu0 0.0
        %4367 = vmatpush2.msra.mxu0 0.0
        %4368 = vmatprep.subr.mxu0 0.0
        %4369 = vmatpush2.msra.mxu0 0.0
        %4370 = vmatprep.subr.mxu0 0.0
        %4371 = vmatpush2.msra.mxu0 0.0
        %4372 = vmatprep.mubr.f32.mxu0 0.0
        %4373 = vmatmul.mubr.f32.gmra.mxu0 %v4300
        %v4374 = vpop.f32.mrf.mxu0
        %v4375 = vadd.f32 0.0, %v4374
        %v4376 = vpop.f32.mrf.mxu0
        %v4377 = vadd.f32 0.0, %v4376
        %4378 = vdwg.mxu0
        %4379 = vmatprep.subr.mxu0 0.0
        %4380 = vmatpush1.msra.mxu0 0.0
        %4381 = vmatprep.subr.mxu0 0.0
        %4382 = vmatpush1.msra.mxu0 0.0
        %4383 = vmatprep.subr.mxu0 0.0
        %4384 = vmatpush1.msra.mxu0 0.0
        %4385 = vmatprep.subr.mxu0 0.0
        %4386 = vmatpush1.msra.mxu0 0.0
        %4387 = vmatprep.subr.mxu0 0.0
        %4388 = vmatpush1.msra.mxu0 0.0
        %4389 = vmatprep.subr.mxu0 0.0
        %4390 = vmatpush1.msra.mxu0 0.0
        %4391 = vmatprep.subr.mxu0 0.0
        %4392 = vmatpush1.msra.mxu0 0.0
        %4393 = vmatprep.subr.mxu0 0.0
        %4394 = vmatpush1.msra.mxu0 0.0
        %4395 = vmatprep.subr.mxu0 0.0
        %4396 = vmatpush1.msra.mxu0 0.0
        %4397 = vmatprep.subr.mxu0 0.0
        %4398 = vmatpush1.msra.mxu0 0.0
        %4399 = vmatprep.subr.mxu0 0.0
        %4400 = vmatpush1.msra.mxu0 0.0
        %4401 = vmatprep.subr.mxu0 0.0
        %4402 = vmatpush1.msra.mxu0 0.0
        %4403 = vmatprep.subr.mxu0 0.0
        %4404 = vmatpush1.msra.mxu0 0.0
        %4405 = vmatprep.subr.mxu0 0.0
        %4406 = vmatpush1.msra.mxu0 0.0
        %4407 = vmatprep.subr.mxu0 0.0
        %4408 = vmatpush1.msra.mxu0 0.0
        %4409 = vmatprep.subr.mxu0 0.0
        %4410 = vmatpush1.msra.mxu0 %v4306
        %4411 = vmatprep.subr.mxu0 0.0
        %4412 = vmatpush2.msra.mxu0 0.0
        %4413 = vmatprep.subr.mxu0 0.0
        %4414 = vmatpush2.msra.mxu0 0.0
        %4415 = vmatprep.subr.mxu0 0.0
        %4416 = vmatpush2.msra.mxu0 0.0
        %4417 = vmatprep.subr.mxu0 0.0
        %4418 = vmatpush2.msra.mxu0 0.0
        %4419 = vmatprep.subr.mxu0 0.0
        %4420 = vmatpush2.msra.mxu0 0.0
        %4421 = vmatprep.subr.mxu0 0.0
        %4422 = vmatpush2.msra.mxu0 0.0
        %4423 = vmatprep.subr.mxu0 0.0
        %4424 = vmatpush2.msra.mxu0 0.0
        %4425 = vmatprep.subr.mxu0 0.0
        %4426 = vmatpush2.msra.mxu0 0.0
        %4427 = vmatprep.subr.mxu0 0.0
        %4428 = vmatpush2.msra.mxu0 0.0
        %4429 = vmatprep.subr.mxu0 0.0
        %4430 = vmatpush2.msra.mxu0 0.0
        %4431 = vmatprep.subr.mxu0 0.0
        %4432 = vmatpush2.msra.mxu0 0.0
        %4433 = vmatprep.subr.mxu0 0.0
        %4434 = vmatpush2.msra.mxu0 0.0
        %4435 = vmatprep.subr.mxu0 0.0
        %4436 = vmatpush2.msra.mxu0 0.0
        %4437 = vmatprep.subr.mxu0 0.0
        %4438 = vmatpush2.msra.mxu0 0.0
        %4439 = vmatprep.subr.mxu0 0.0
        %4440 = vmatpush2.msra.mxu0 0.0
        %4441 = vmatprep.subr.mxu0 0.0
        %4442 = vmatpush2.msra.mxu0 0.0
        %4443 = vmatprep.mubr.f32.mxu0 0.0
        %4444 = vmatmul.mubr.f32.gmra.mxu0 %v4300
        %v4445 = vpop.f32.mrf.mxu0
        %v4446 = vadd.f32 0.0, %v4445
        %v4447 = vpop.f32.mrf.mxu0
        %4448 = vdwg.mxu0
        %v4449 = vadd.f32 %v4281, %v4375
        %v4450 = vadd.f32 %v4282, %v4377
        %v4451 = vadd.f32 %v4283, %v4446
        %s4452 = scalar_lea.vmem %s5, 24
        %v4453 = vld [vmem:[%s4452] sm:$0xf]
        %v4454 = vld [vmem:[#allocation2] sm:$0xff]
        %v4455 = vld [vmem:[#allocation2 + $0x8] sm:$0xf]
        %v4458 = vcombine.high %v4454, %v4454
        %4459 = vrot.lane.b32.xlu0 %v4454, 92
        %v4460 = vpop.permute.xlu0 %4459
        %4461 = vrot.lane.b32.xlu0 %v4458, 92
        %v4462 = vpop.permute.xlu0 %4461
        %4463 = vrot.lane.b32.xlu0 %v4455, 92
        %v4464 = vpop.permute.xlu0 %4463
        %v4465 = vsel %vm2431, %v4460, %v4462
        %v4466 = vsel %vm2431, %v4462, %v4464
        %v4468 = vsel %vm456, %v4453, 0
        %v4470 = vsel %vm460, %v4465, 0
        %v4472 = vsel %vm460, %v4466, 0
        %v4474 = vsel %vm460, %v4464, 0
        %4476 = vmatprep.subr.mxu0 0.0
        %4477 = vmatpush1.msra.mxu0 0.0
        %4478 = vmatprep.subr.mxu0 0.0
        %4479 = vmatpush1.msra.mxu0 0.0
        %4480 = vmatprep.subr.mxu0 0.0
        %4481 = vmatpush1.msra.mxu0 0.0
        %4482 = vmatprep.subr.mxu0 0.0
        %4483 = vmatpush1.msra.mxu0 0.0
        %4484 = vmatprep.subr.mxu0 0.0
        %4485 = vmatpush1.msra.mxu0 0.0
        %4486 = vmatprep.subr.mxu0 0.0
        %4487 = vmatpush1.msra.mxu0 0.0
        %4488 = vmatprep.subr.mxu0 0.0
        %4489 = vmatpush1.msra.mxu0 0.0
        %4490 = vmatprep.subr.mxu0 0.0
        %4491 = vmatpush1.msra.mxu0 0.0
        %4492 = vmatprep.subr.mxu0 0.0
        %4493 = vmatpush1.msra.mxu0 0.0
        %4494 = vmatprep.subr.mxu0 0.0
        %4495 = vmatpush1.msra.mxu0 0.0
        %4496 = vmatprep.subr.mxu0 0.0
        %4497 = vmatpush1.msra.mxu0 0.0
        %4498 = vmatprep.subr.mxu0 0.0
        %4499 = vmatpush1.msra.mxu0 0.0
        %4500 = vmatprep.subr.mxu0 0.0
        %4501 = vmatpush1.msra.mxu0 0.0
        %4502 = vmatprep.subr.mxu0 0.0
        %4503 = vmatpush1.msra.mxu0 0.0
        %4504 = vmatprep.subr.mxu0 0.0
        %4505 = vmatpush1.msra.mxu0 0.0
        %4506 = vmatprep.subr.mxu0 %v4472
        %4507 = vmatpush1.msra.mxu0 %v4470
        %4508 = vmatprep.subr.mxu0 0.0
        %4509 = vmatpush2.msra.mxu0 0.0
        %4510 = vmatprep.subr.mxu0 0.0
        %4511 = vmatpush2.msra.mxu0 0.0
        %4512 = vmatprep.subr.mxu0 0.0
        %4513 = vmatpush2.msra.mxu0 0.0
        %4514 = vmatprep.subr.mxu0 0.0
        %4515 = vmatpush2.msra.mxu0 0.0
        %4516 = vmatprep.subr.mxu0 0.0
        %4517 = vmatpush2.msra.mxu0 0.0
        %4518 = vmatprep.subr.mxu0 0.0
        %4519 = vmatpush2.msra.mxu0 0.0
        %4520 = vmatprep.subr.mxu0 0.0
        %4521 = vmatpush2.msra.mxu0 0.0
        %4522 = vmatprep.subr.mxu0 0.0
        %4523 = vmatpush2.msra.mxu0 0.0
        %4524 = vmatprep.subr.mxu0 0.0
        %4525 = vmatpush2.msra.mxu0 0.0
        %4526 = vmatprep.subr.mxu0 0.0
        %4527 = vmatpush2.msra.mxu0 0.0
        %4528 = vmatprep.subr.mxu0 0.0
        %4529 = vmatpush2.msra.mxu0 0.0
        %4530 = vmatprep.subr.mxu0 0.0
        %4531 = vmatpush2.msra.mxu0 0.0
        %4532 = vmatprep.subr.mxu0 0.0
        %4533 = vmatpush2.msra.mxu0 0.0
        %4534 = vmatprep.subr.mxu0 0.0
        %4535 = vmatpush2.msra.mxu0 0.0
        %4536 = vmatprep.subr.mxu0 0.0
        %4537 = vmatpush2.msra.mxu0 0.0
        %4538 = vmatprep.subr.mxu0 0.0
        %4539 = vmatpush2.msra.mxu0 0.0
        %4540 = vmatprep.mubr.f32.mxu0 0.0
        %4541 = vmatmul.mubr.f32.gmra.mxu0 %v4468
        %v4542 = vpop.f32.mrf.mxu0
        %v4543 = vadd.f32 0.0, %v4542
        %v4544 = vpop.f32.mrf.mxu0
        %v4545 = vadd.f32 0.0, %v4544
        %4546 = vdwg.mxu0
        %4547 = vmatprep.subr.mxu0 0.0
        %4548 = vmatpush1.msra.mxu0 0.0
        %4549 = vmatprep.subr.mxu0 0.0
        %4550 = vmatpush1.msra.mxu0 0.0
        %4551 = vmatprep.subr.mxu0 0.0
        %4552 = vmatpush1.msra.mxu0 0.0
        %4553 = vmatprep.subr.mxu0 0.0
        %4554 = vmatpush1.msra.mxu0 0.0
        %4555 = vmatprep.subr.mxu0 0.0
        %4556 = vmatpush1.msra.mxu0 0.0
        %4557 = vmatprep.subr.mxu0 0.0
        %4558 = vmatpush1.msra.mxu0 0.0
        %4559 = vmatprep.subr.mxu0 0.0
        %4560 = vmatpush1.msra.mxu0 0.0
        %4561 = vmatprep.subr.mxu0 0.0
        %4562 = vmatpush1.msra.mxu0 0.0
        %4563 = vmatprep.subr.mxu0 0.0
        %4564 = vmatpush1.msra.mxu0 0.0
        %4565 = vmatprep.subr.mxu0 0.0
        %4566 = vmatpush1.msra.mxu0 0.0
        %4567 = vmatprep.subr.mxu0 0.0
        %4568 = vmatpush1.msra.mxu0 0.0
        %4569 = vmatprep.subr.mxu0 0.0
        %4570 = vmatpush1.msra.mxu0 0.0
        %4571 = vmatprep.subr.mxu0 0.0
        %4572 = vmatpush1.msra.mxu0 0.0
        %4573 = vmatprep.subr.mxu0 0.0
        %4574 = vmatpush1.msra.mxu0 0.0
        %4575 = vmatprep.subr.mxu0 0.0
        %4576 = vmatpush1.msra.mxu0 0.0
        %4577 = vmatprep.subr.mxu0 0.0
        %4578 = vmatpush1.msra.mxu0 %v4474
        %4579 = vmatprep.subr.mxu0 0.0
        %4580 = vmatpush2.msra.mxu0 0.0
        %4581 = vmatprep.subr.mxu0 0.0
        %4582 = vmatpush2.msra.mxu0 0.0
        %4583 = vmatprep.subr.mxu0 0.0
        %4584 = vmatpush2.msra.mxu0 0.0
        %4585 = vmatprep.subr.mxu0 0.0
        %4586 = vmatpush2.msra.mxu0 0.0
        %4587 = vmatprep.subr.mxu0 0.0
        %4588 = vmatpush2.msra.mxu0 0.0
        %4589 = vmatprep.subr.mxu0 0.0
        %4590 = vmatpush2.msra.mxu0 0.0
        %4591 = vmatprep.subr.mxu0 0.0
        %4592 = vmatpush2.msra.mxu0 0.0
        %4593 = vmatprep.subr.mxu0 0.0
        %4594 = vmatpush2.msra.mxu0 0.0
        %4595 = vmatprep.subr.mxu0 0.0
        %4596 = vmatpush2.msra.mxu0 0.0
        %4597 = vmatprep.subr.mxu0 0.0
        %4598 = vmatpush2.msra.mxu0 0.0
        %4599 = vmatprep.subr.mxu0 0.0
        %4600 = vmatpush2.msra.mxu0 0.0
        %4601 = vmatprep.subr.mxu0 0.0
        %4602 = vmatpush2.msra.mxu0 0.0
        %4603 = vmatprep.subr.mxu0 0.0
        %4604 = vmatpush2.msra.mxu0 0.0
        %4605 = vmatprep.subr.mxu0 0.0
        %4606 = vmatpush2.msra.mxu0 0.0
        %4607 = vmatprep.subr.mxu0 0.0
        %4608 = vmatpush2.msra.mxu0 0.0
        %4609 = vmatprep.subr.mxu0 0.0
        %4610 = vmatpush2.msra.mxu0 0.0
        %4611 = vmatprep.mubr.f32.mxu0 0.0
        %4612 = vmatmul.mubr.f32.gmra.mxu0 %v4468
        %v4613 = vpop.f32.mrf.mxu0
        %v4614 = vadd.f32 0.0, %v4613
        %v4615 = vpop.f32.mrf.mxu0
        %4616 = vdwg.mxu0
        %v4617 = vadd.f32 %v4449, %v4543
        %v4618 = vadd.f32 %v4450, %v4545
        %v4619 = vadd.f32 %v4451, %v4614
        %s4620 = scalar_lea.vmem %s5, 28
        %v4621 = vld [vmem:[%s4620] sm:$0xf]
        %v4622 = vld [vmem:[#allocation2] sm:$0xff]
        %v4623 = vld [vmem:[#allocation2 + $0x8] sm:$0xf]
        %v4626 = vcombine.high %v4622, %v4622
        %4627 = vrot.lane.b32.xlu0 %v4622, 91
        %v4628 = vpop.permute.xlu0 %4627
        %4629 = vrot.lane.b32.xlu0 %v4626, 91
        %v4630 = vpop.permute.xlu0 %4629
        %4631 = vrot.lane.b32.xlu0 %v4623, 91
        %v4632 = vpop.permute.xlu0 %4631
        %v4633 = vsel %vm2763, %v4628, %v4630
        %v4634 = vsel %vm2763, %v4630, %v4632
        %v4636 = vsel %vm456, %v4621, 0
        %v4638 = vsel %vm460, %v4633, 0
        %v4640 = vsel %vm460, %v4634, 0
        %v4642 = vsel %vm460, %v4632, 0
        %4644 = vmatprep.subr.mxu0 0.0
        %4645 = vmatpush1.msra.mxu0 0.0
        %4646 = vmatprep.subr.mxu0 0.0
        %4647 = vmatpush1.msra.mxu0 0.0
        %4648 = vmatprep.subr.mxu0 0.0
        %4649 = vmatpush1.msra.mxu0 0.0
        %4650 = vmatprep.subr.mxu0 0.0
        %4651 = vmatpush1.msra.mxu0 0.0
        %4652 = vmatprep.subr.mxu0 0.0
        %4653 = vmatpush1.msra.mxu0 0.0
        %4654 = vmatprep.subr.mxu0 0.0
        %4655 = vmatpush1.msra.mxu0 0.0
        %4656 = vmatprep.subr.mxu0 0.0
        %4657 = vmatpush1.msra.mxu0 0.0
        %4658 = vmatprep.subr.mxu0 0.0
        %4659 = vmatpush1.msra.mxu0 0.0
        %4660 = vmatprep.subr.mxu0 0.0
        %4661 = vmatpush1.msra.mxu0 0.0
        %4662 = vmatprep.subr.mxu0 0.0
        %4663 = vmatpush1.msra.mxu0 0.0
        %4664 = vmatprep.subr.mxu0 0.0
        %4665 = vmatpush1.msra.mxu0 0.0
        %4666 = vmatprep.subr.mxu0 0.0
        %4667 = vmatpush1.msra.mxu0 0.0
        %4668 = vmatprep.subr.mxu0 0.0
        %4669 = vmatpush1.msra.mxu0 0.0
        %4670 = vmatprep.subr.mxu0 0.0
        %4671 = vmatpush1.msra.mxu0 0.0
        %4672 = vmatprep.subr.mxu0 0.0
        %4673 = vmatpush1.msra.mxu0 0.0
        %4674 = vmatprep.subr.mxu0 %v4640
        %4675 = vmatpush1.msra.mxu0 %v4638
        %4676 = vmatprep.subr.mxu0 0.0
        %4677 = vmatpush2.msra.mxu0 0.0
        %4678 = vmatprep.subr.mxu0 0.0
        %4679 = vmatpush2.msra.mxu0 0.0
        %4680 = vmatprep.subr.mxu0 0.0
        %4681 = vmatpush2.msra.mxu0 0.0
        %4682 = vmatprep.subr.mxu0 0.0
        %4683 = vmatpush2.msra.mxu0 0.0
        %4684 = vmatprep.subr.mxu0 0.0
        %4685 = vmatpush2.msra.mxu0 0.0
        %4686 = vmatprep.subr.mxu0 0.0
        %4687 = vmatpush2.msra.mxu0 0.0
        %4688 = vmatprep.subr.mxu0 0.0
        %4689 = vmatpush2.msra.mxu0 0.0
        %4690 = vmatprep.subr.mxu0 0.0
        %4691 = vmatpush2.msra.mxu0 0.0
        %4692 = vmatprep.subr.mxu0 0.0
        %4693 = vmatpush2.msra.mxu0 0.0
        %4694 = vmatprep.subr.mxu0 0.0
        %4695 = vmatpush2.msra.mxu0 0.0
        %4696 = vmatprep.subr.mxu0 0.0
        %4697 = vmatpush2.msra.mxu0 0.0
        %4698 = vmatprep.subr.mxu0 0.0
        %4699 = vmatpush2.msra.mxu0 0.0
        %4700 = vmatprep.subr.mxu0 0.0
        %4701 = vmatpush2.msra.mxu0 0.0
        %4702 = vmatprep.subr.mxu0 0.0
        %4703 = vmatpush2.msra.mxu0 0.0
        %4704 = vmatprep.subr.mxu0 0.0
        %4705 = vmatpush2.msra.mxu0 0.0
        %4706 = vmatprep.subr.mxu0 0.0
        %4707 = vmatpush2.msra.mxu0 0.0
        %4708 = vmatprep.mubr.f32.mxu0 0.0
        %4709 = vmatmul.mubr.f32.gmra.mxu0 %v4636
        %v4710 = vpop.f32.mrf.mxu0
        %v4711 = vadd.f32 0.0, %v4710
        %v4712 = vpop.f32.mrf.mxu0
        %v4713 = vadd.f32 0.0, %v4712
        %4714 = vdwg.mxu0
        %4715 = vmatprep.subr.mxu0 0.0
        %4716 = vmatpush1.msra.mxu0 0.0
        %4717 = vmatprep.subr.mxu0 0.0
        %4718 = vmatpush1.msra.mxu0 0.0
        %4719 = vmatprep.subr.mxu0 0.0
        %4720 = vmatpush1.msra.mxu0 0.0
        %4721 = vmatprep.subr.mxu0 0.0
        %4722 = vmatpush1.msra.mxu0 0.0
        %4723 = vmatprep.subr.mxu0 0.0
        %4724 = vmatpush1.msra.mxu0 0.0
        %4725 = vmatprep.subr.mxu0 0.0
        %4726 = vmatpush1.msra.mxu0 0.0
        %4727 = vmatprep.subr.mxu0 0.0
        %4728 = vmatpush1.msra.mxu0 0.0
        %4729 = vmatprep.subr.mxu0 0.0
        %4730 = vmatpush1.msra.mxu0 0.0
        %4731 = vmatprep.subr.mxu0 0.0
        %4732 = vmatpush1.msra.mxu0 0.0
        %4733 = vmatprep.subr.mxu0 0.0
        %4734 = vmatpush1.msra.mxu0 0.0
        %4735 = vmatprep.subr.mxu0 0.0
        %4736 = vmatpush1.msra.mxu0 0.0
        %4737 = vmatprep.subr.mxu0 0.0
        %4738 = vmatpush1.msra.mxu0 0.0
        %4739 = vmatprep.subr.mxu0 0.0
        %4740 = vmatpush1.msra.mxu0 0.0
        %4741 = vmatprep.subr.mxu0 0.0
        %4742 = vmatpush1.msra.mxu0 0.0
        %4743 = vmatprep.subr.mxu0 0.0
        %4744 = vmatpush1.msra.mxu0 0.0
        %4745 = vmatprep.subr.mxu0 0.0
        %4746 = vmatpush1.msra.mxu0 %v4642
        %4747 = vmatprep.subr.mxu0 0.0
        %4748 = vmatpush2.msra.mxu0 0.0
        %4749 = vmatprep.subr.mxu0 0.0
        %4750 = vmatpush2.msra.mxu0 0.0
        %4751 = vmatprep.subr.mxu0 0.0
        %4752 = vmatpush2.msra.mxu0 0.0
        %4753 = vmatprep.subr.mxu0 0.0
        %4754 = vmatpush2.msra.mxu0 0.0
        %4755 = vmatprep.subr.mxu0 0.0
        %4756 = vmatpush2.msra.mxu0 0.0
        %4757 = vmatprep.subr.mxu0 0.0
        %4758 = vmatpush2.msra.mxu0 0.0
        %4759 = vmatprep.subr.mxu0 0.0
        %4760 = vmatpush2.msra.mxu0 0.0
        %4761 = vmatprep.subr.mxu0 0.0
        %4762 = vmatpush2.msra.mxu0 0.0
        %4763 = vmatprep.subr.mxu0 0.0
        %4764 = vmatpush2.msra.mxu0 0.0
        %4765 = vmatprep.subr.mxu0 0.0
        %4766 = vmatpush2.msra.mxu0 0.0
        %4767 = vmatprep.subr.mxu0 0.0
        %4768 = vmatpush2.msra.mxu0 0.0
        %4769 = vmatprep.subr.mxu0 0.0
        %4770 = vmatpush2.msra.mxu0 0.0
        %4771 = vmatprep.subr.mxu0 0.0
        %4772 = vmatpush2.msra.mxu0 0.0
        %4773 = vmatprep.subr.mxu0 0.0
        %4774 = vmatpush2.msra.mxu0 0.0
        %4775 = vmatprep.subr.mxu0 0.0
        %4776 = vmatpush2.msra.mxu0 0.0
        %4777 = vmatprep.subr.mxu0 0.0
        %4778 = vmatpush2.msra.mxu0 0.0
        %4779 = vmatprep.mubr.f32.mxu0 0.0
        %4780 = vmatmul.mubr.f32.gmra.mxu0 %v4636
        %v4781 = vpop.f32.mrf.mxu0
        %v4782 = vadd.f32 0.0, %v4781
        %v4783 = vpop.f32.mrf.mxu0
        %4784 = vdwg.mxu0
        %v4785 = vadd.f32 %v4617, %v4711
        %v4786 = vadd.f32 %v4618, %v4713
        %v4787 = vadd.f32 %v4619, %v4782
        %s4788 = scalar_lea.vmem %s5, 32
        %v4789 = vld [vmem:[%s4788] sm:$0xf]
        %v4790 = vld [vmem:[#allocation2] sm:$0xff]
        %v4791 = vld [vmem:[#allocation2 + $0x8] sm:$0xf]
        %v4794 = vcombine.high %v4790, %v4790
        %4795 = vrot.lane.b32.xlu0 %v4790, 90
        %v4796 = vpop.permute.xlu0 %4795
        %4797 = vrot.lane.b32.xlu0 %v4794, 90
        %v4798 = vpop.permute.xlu0 %4797
        %4799 = vrot.lane.b32.xlu0 %v4791, 90
        %v4800 = vpop.permute.xlu0 %4799
        %v4801 = vsel %vm3095, %v4796, %v4798
        %v4802 = vsel %vm3095, %v4798, %v4800
        %v4804 = vsel %vm456, %v4789, 0
        %v4806 = vsel %vm460, %v4801, 0
        %v4808 = vsel %vm460, %v4802, 0
        %v4810 = vsel %vm460, %v4800, 0
        %4812 = vmatprep.subr.mxu0 0.0
        %4813 = vmatpush1.msra.mxu0 0.0
        %4814 = vmatprep.subr.mxu0 0.0
        %4815 = vmatpush1.msra.mxu0 0.0
        %4816 = vmatprep.subr.mxu0 0.0
        %4817 = vmatpush1.msra.mxu0 0.0
        %4818 = vmatprep.subr.mxu0 0.0
        %4819 = vmatpush1.msra.mxu0 0.0
        %4820 = vmatprep.subr.mxu0 0.0
        %4821 = vmatpush1.msra.mxu0 0.0
        %4822 = vmatprep.subr.mxu0 0.0
        %4823 = vmatpush1.msra.mxu0 0.0
        %4824 = vmatprep.subr.mxu0 0.0
        %4825 = vmatpush1.msra.mxu0 0.0
        %4826 = vmatprep.subr.mxu0 0.0
        %4827 = vmatpush1.msra.mxu0 0.0
        %4828 = vmatprep.subr.mxu0 0.0
        %4829 = vmatpush1.msra.mxu0 0.0
        %4830 = vmatprep.subr.mxu0 0.0
        %4831 = vmatpush1.msra.mxu0 0.0
        %4832 = vmatprep.subr.mxu0 0.0
        %4833 = vmatpush1.msra.mxu0 0.0
        %4834 = vmatprep.subr.mxu0 0.0
        %4835 = vmatpush1.msra.mxu0 0.0
        %4836 = vmatprep.subr.mxu0 0.0
        %4837 = vmatpush1.msra.mxu0 0.0
        %4838 = vmatprep.subr.mxu0 0.0
        %4839 = vmatpush1.msra.mxu0 0.0
        %4840 = vmatprep.subr.mxu0 0.0
        %4841 = vmatpush1.msra.mxu0 0.0
        %4842 = vmatprep.subr.mxu0 %v4808
        %4843 = vmatpush1.msra.mxu0 %v4806
        %4844 = vmatprep.subr.mxu0 0.0
        %4845 = vmatpush2.msra.mxu0 0.0
        %4846 = vmatprep.subr.mxu0 0.0
        %4847 = vmatpush2.msra.mxu0 0.0
        %4848 = vmatprep.subr.mxu0 0.0
        %4849 = vmatpush2.msra.mxu0 0.0
        %4850 = vmatprep.subr.mxu0 0.0
        %4851 = vmatpush2.msra.mxu0 0.0
        %4852 = vmatprep.subr.mxu0 0.0
        %4853 = vmatpush2.msra.mxu0 0.0
        %4854 = vmatprep.subr.mxu0 0.0
        %4855 = vmatpush2.msra.mxu0 0.0
        %4856 = vmatprep.subr.mxu0 0.0
        %4857 = vmatpush2.msra.mxu0 0.0
        %4858 = vmatprep.subr.mxu0 0.0
        %4859 = vmatpush2.msra.mxu0 0.0
        %4860 = vmatprep.subr.mxu0 0.0
        %4861 = vmatpush2.msra.mxu0 0.0
        %4862 = vmatprep.subr.mxu0 0.0
        %4863 = vmatpush2.msra.mxu0 0.0
        %4864 = vmatprep.subr.mxu0 0.0
        %4865 = vmatpush2.msra.mxu0 0.0
        %4866 = vmatprep.subr.mxu0 0.0
        %4867 = vmatpush2.msra.mxu0 0.0
        %4868 = vmatprep.subr.mxu0 0.0
        %4869 = vmatpush2.msra.mxu0 0.0
        %4870 = vmatprep.subr.mxu0 0.0
        %4871 = vmatpush2.msra.mxu0 0.0
        %4872 = vmatprep.subr.mxu0 0.0
        %4873 = vmatpush2.msra.mxu0 0.0
        %4874 = vmatprep.subr.mxu0 0.0
        %4875 = vmatpush2.msra.mxu0 0.0
        %4876 = vmatprep.mubr.f32.mxu0 0.0
        %4877 = vmatmul.mubr.f32.gmra.mxu0 %v4804
        %v4878 = vpop.f32.mrf.mxu0
        %v4879 = vadd.f32 0.0, %v4878
        %v4880 = vpop.f32.mrf.mxu0
        %v4881 = vadd.f32 0.0, %v4880
        %4882 = vdwg.mxu0
        %4883 = vmatprep.subr.mxu0 0.0
        %4884 = vmatpush1.msra.mxu0 0.0
        %4885 = vmatprep.subr.mxu0 0.0
        %4886 = vmatpush1.msra.mxu0 0.0
        %4887 = vmatprep.subr.mxu0 0.0
        %4888 = vmatpush1.msra.mxu0 0.0
        %4889 = vmatprep.subr.mxu0 0.0
        %4890 = vmatpush1.msra.mxu0 0.0
        %4891 = vmatprep.subr.mxu0 0.0
        %4892 = vmatpush1.msra.mxu0 0.0
        %4893 = vmatprep.subr.mxu0 0.0
        %4894 = vmatpush1.msra.mxu0 0.0
        %4895 = vmatprep.subr.mxu0 0.0
        %4896 = vmatpush1.msra.mxu0 0.0
        %4897 = vmatprep.subr.mxu0 0.0
        %4898 = vmatpush1.msra.mxu0 0.0
        %4899 = vmatprep.subr.mxu0 0.0
        %4900 = vmatpush1.msra.mxu0 0.0
        %4901 = vmatprep.subr.mxu0 0.0
        %4902 = vmatpush1.msra.mxu0 0.0
        %4903 = vmatprep.subr.mxu0 0.0
        %4904 = vmatpush1.msra.mxu0 0.0
        %4905 = vmatprep.subr.mxu0 0.0
        %4906 = vmatpush1.msra.mxu0 0.0
        %4907 = vmatprep.subr.mxu0 0.0
        %4908 = vmatpush1.msra.mxu0 0.0
        %4909 = vmatprep.subr.mxu0 0.0
        %4910 = vmatpush1.msra.mxu0 0.0
        %4911 = vmatprep.subr.mxu0 0.0
        %4912 = vmatpush1.msra.mxu0 0.0
        %4913 = vmatprep.subr.mxu0 0.0
        %4914 = vmatpush1.msra.mxu0 %v4810
        %4915 = vmatprep.subr.mxu0 0.0
        %4916 = vmatpush2.msra.mxu0 0.0
        %4917 = vmatprep.subr.mxu0 0.0
        %4918 = vmatpush2.msra.mxu0 0.0
        %4919 = vmatprep.subr.mxu0 0.0
        %4920 = vmatpush2.msra.mxu0 0.0
        %4921 = vmatprep.subr.mxu0 0.0
        %4922 = vmatpush2.msra.mxu0 0.0
        %4923 = vmatprep.subr.mxu0 0.0
        %4924 = vmatpush2.msra.mxu0 0.0
        %4925 = vmatprep.subr.mxu0 0.0
        %4926 = vmatpush2.msra.mxu0 0.0
        %4927 = vmatprep.subr.mxu0 0.0
        %4928 = vmatpush2.msra.mxu0 0.0
        %4929 = vmatprep.subr.mxu0 0.0
        %4930 = vmatpush2.msra.mxu0 0.0
        %4931 = vmatprep.subr.mxu0 0.0
        %4932 = vmatpush2.msra.mxu0 0.0
        %4933 = vmatprep.subr.mxu0 0.0
        %4934 = vmatpush2.msra.mxu0 0.0
        %4935 = vmatprep.subr.mxu0 0.0
        %4936 = vmatpush2.msra.mxu0 0.0
        %4937 = vmatprep.subr.mxu0 0.0
        %4938 = vmatpush2.msra.mxu0 0.0
        %4939 = vmatprep.subr.mxu0 0.0
        %4940 = vmatpush2.msra.mxu0 0.0
        %4941 = vmatprep.subr.mxu0 0.0
        %4942 = vmatpush2.msra.mxu0 0.0
        %4943 = vmatprep.subr.mxu0 0.0
        %4944 = vmatpush2.msra.mxu0 0.0
        %4945 = vmatprep.subr.mxu0 0.0
        %4946 = vmatpush2.msra.mxu0 0.0
        %4947 = vmatprep.mubr.f32.mxu0 0.0
        %4948 = vmatmul.mubr.f32.gmra.mxu0 %v4804
        %v4949 = vpop.f32.mrf.mxu0
        %v4950 = vadd.f32 0.0, %v4949
        %v4951 = vpop.f32.mrf.mxu0
        %4952 = vdwg.mxu0
        %v4953 = vadd.f32 %v4785, %v4879
        %v4954 = vadd.f32 %v4786, %v4881
        %v4955 = vadd.f32 %v4787, %v4950
        %v4956 = vld [vmem:[%s7] sm:$0xf]
        %v4957 = vld [vmem:[%s434] sm:$0xff]
        %v4958 = vld [vmem:[%s434 + $0x8] sm:$0xff]
        %v4959 = vld [vmem:[%s434 + $0x10] sm:$0xff]
        %v4960 = vld [vmem:[%s8] sm:$0xf]
        %v4961 = vld [vmem:[%s439] sm:$0xff]
        %v4962 = vld [vmem:[%s439 + $0x8] sm:$0xf]
        %v4965 = vcombine.high %v4961, %v4961
        %4966 = vrot.lane.b32.xlu0 %v4961, 109
        %v4967 = vpop.permute.xlu0 %4966
        %4968 = vrot.lane.b32.xlu0 %v4965, 109
        %v4969 = vpop.permute.xlu0 %4968
        %4970 = vrot.lane.b32.xlu0 %v4962, 109
        %v4971 = vpop.permute.xlu0 %4970
        %v4972 = vsel %vm1767, %v4967, %v4969
        %v4973 = vsel %vm1767, %v4969, %v4971
        %v4975 = vsel %vm456, %v4960, 0
        %v4977 = vsel %vm460, %v4972, 0
        %v4979 = vsel %vm460, %v4973, 0
        %v4981 = vsel %vm460, %v4971, 0
        %4983 = vmatprep.subr.mxu0 0.0
        %4984 = vmatpush1.msra.mxu0 0.0
        %4985 = vmatprep.subr.mxu0 0.0
        %4986 = vmatpush1.msra.mxu0 0.0
        %4987 = vmatprep.subr.mxu0 0.0
        %4988 = vmatpush1.msra.mxu0 0.0
        %4989 = vmatprep.subr.mxu0 0.0
        %4990 = vmatpush1.msra.mxu0 0.0
        %4991 = vmatprep.subr.mxu0 0.0
        %4992 = vmatpush1.msra.mxu0 0.0
        %4993 = vmatprep.subr.mxu0 0.0
        %4994 = vmatpush1.msra.mxu0 0.0
        %4995 = vmatprep.subr.mxu0 0.0
        %4996 = vmatpush1.msra.mxu0 0.0
        %4997 = vmatprep.subr.mxu0 0.0
        %4998 = vmatpush1.msra.mxu0 0.0
        %4999 = vmatprep.subr.mxu0 0.0
        %5000 = vmatpush1.msra.mxu0 0.0
        %5001 = vmatprep.subr.mxu0 0.0
        %5002 = vmatpush1.msra.mxu0 0.0
        %5003 = vmatprep.subr.mxu0 0.0
        %5004 = vmatpush1.msra.mxu0 0.0
        %5005 = vmatprep.subr.mxu0 0.0
        %5006 = vmatpush1.msra.mxu0 0.0
        %5007 = vmatprep.subr.mxu0 0.0
        %5008 = vmatpush1.msra.mxu0 0.0
        %5009 = vmatprep.subr.mxu0 0.0
        %5010 = vmatpush1.msra.mxu0 0.0
        %5011 = vmatprep.subr.mxu0 0.0
        %5012 = vmatpush1.msra.mxu0 0.0
        %5013 = vmatprep.subr.mxu0 %v4979
        %5014 = vmatpush1.msra.mxu0 %v4977
        %5015 = vmatprep.subr.mxu0 0.0
        %5016 = vmatpush2.msra.mxu0 0.0
        %5017 = vmatprep.subr.mxu0 0.0
        %5018 = vmatpush2.msra.mxu0 0.0
        %5019 = vmatprep.subr.mxu0 0.0
        %5020 = vmatpush2.msra.mxu0 0.0
        %5021 = vmatprep.subr.mxu0 0.0
        %5022 = vmatpush2.msra.mxu0 0.0
        %5023 = vmatprep.subr.mxu0 0.0
        %5024 = vmatpush2.msra.mxu0 0.0
        %5025 = vmatprep.subr.mxu0 0.0
        %5026 = vmatpush2.msra.mxu0 0.0
        %5027 = vmatprep.subr.mxu0 0.0
        %5028 = vmatpush2.msra.mxu0 0.0
        %5029 = vmatprep.subr.mxu0 0.0
        %5030 = vmatpush2.msra.mxu0 0.0
        %5031 = vmatprep.subr.mxu0 0.0
        %5032 = vmatpush2.msra.mxu0 0.0
        %5033 = vmatprep.subr.mxu0 0.0
        %5034 = vmatpush2.msra.mxu0 0.0
        %5035 = vmatprep.subr.mxu0 0.0
        %5036 = vmatpush2.msra.mxu0 0.0
        %5037 = vmatprep.subr.mxu0 0.0
        %5038 = vmatpush2.msra.mxu0 0.0
        %5039 = vmatprep.subr.mxu0 0.0
        %5040 = vmatpush2.msra.mxu0 0.0
        %5041 = vmatprep.subr.mxu0 0.0
        %5042 = vmatpush2.msra.mxu0 0.0
        %5043 = vmatprep.subr.mxu0 0.0
        %5044 = vmatpush2.msra.mxu0 0.0
        %5045 = vmatprep.subr.mxu0 0.0
        %5046 = vmatpush2.msra.mxu0 0.0
        %5047 = vmatprep.mubr.f32.mxu0 0.0
        %5048 = vmatmul.mubr.f32.gmra.mxu0 %v4975
        %v5049 = vpop.f32.mrf.mxu0
        %v5050 = vadd.f32 0.0, %v5049
        %v5051 = vpop.f32.mrf.mxu0
        %v5052 = vadd.f32 0.0, %v5051
        %5053 = vdwg.mxu0
        %5054 = vmatprep.subr.mxu0 0.0
        %5055 = vmatpush1.msra.mxu0 0.0
        %5056 = vmatprep.subr.mxu0 0.0
        %5057 = vmatpush1.msra.mxu0 0.0
        %5058 = vmatprep.subr.mxu0 0.0
        %5059 = vmatpush1.msra.mxu0 0.0
        %5060 = vmatprep.subr.mxu0 0.0
        %5061 = vmatpush1.msra.mxu0 0.0
        %5062 = vmatprep.subr.mxu0 0.0
        %5063 = vmatpush1.msra.mxu0 0.0
        %5064 = vmatprep.subr.mxu0 0.0
        %5065 = vmatpush1.msra.mxu0 0.0
        %5066 = vmatprep.subr.mxu0 0.0
        %5067 = vmatpush1.msra.mxu0 0.0
        %5068 = vmatprep.subr.mxu0 0.0
        %5069 = vmatpush1.msra.mxu0 0.0
        %5070 = vmatprep.subr.mxu0 0.0
        %5071 = vmatpush1.msra.mxu0 0.0
        %5072 = vmatprep.subr.mxu0 0.0
        %5073 = vmatpush1.msra.mxu0 0.0
        %5074 = vmatprep.subr.mxu0 0.0
        %5075 = vmatpush1.msra.mxu0 0.0
        %5076 = vmatprep.subr.mxu0 0.0
        %5077 = vmatpush1.msra.mxu0 0.0
        %5078 = vmatprep.subr.mxu0 0.0
        %5079 = vmatpush1.msra.mxu0 0.0
        %5080 = vmatprep.subr.mxu0 0.0
        %5081 = vmatpush1.msra.mxu0 0.0
        %5082 = vmatprep.subr.mxu0 0.0
        %5083 = vmatpush1.msra.mxu0 0.0
        %5084 = vmatprep.subr.mxu0 0.0
        %5085 = vmatpush1.msra.mxu0 %v4981
        %5086 = vmatprep.subr.mxu0 0.0
        %5087 = vmatpush2.msra.mxu0 0.0
        %5088 = vmatprep.subr.mxu0 0.0
        %5089 = vmatpush2.msra.mxu0 0.0
        %5090 = vmatprep.subr.mxu0 0.0
        %5091 = vmatpush2.msra.mxu0 0.0
        %5092 = vmatprep.subr.mxu0 0.0
        %5093 = vmatpush2.msra.mxu0 0.0
        %5094 = vmatprep.subr.mxu0 0.0
        %5095 = vmatpush2.msra.mxu0 0.0
        %5096 = vmatprep.subr.mxu0 0.0
        %5097 = vmatpush2.msra.mxu0 0.0
        %5098 = vmatprep.subr.mxu0 0.0
        %5099 = vmatpush2.msra.mxu0 0.0
        %5100 = vmatprep.subr.mxu0 0.0
        %5101 = vmatpush2.msra.mxu0 0.0
        %5102 = vmatprep.subr.mxu0 0.0
        %5103 = vmatpush2.msra.mxu0 0.0
        %5104 = vmatprep.subr.mxu0 0.0
        %5105 = vmatpush2.msra.mxu0 0.0
        %5106 = vmatprep.subr.mxu0 0.0
        %5107 = vmatpush2.msra.mxu0 0.0
        %5108 = vmatprep.subr.mxu0 0.0
        %5109 = vmatpush2.msra.mxu0 0.0
        %5110 = vmatprep.subr.mxu0 0.0
        %5111 = vmatpush2.msra.mxu0 0.0
        %5112 = vmatprep.subr.mxu0 0.0
        %5113 = vmatpush2.msra.mxu0 0.0
        %5114 = vmatprep.subr.mxu0 0.0
        %5115 = vmatpush2.msra.mxu0 0.0
        %5116 = vmatprep.subr.mxu0 0.0
        %5117 = vmatpush2.msra.mxu0 0.0
        %5118 = vmatprep.mubr.f32.mxu0 0.0
        %5119 = vmatmul.mubr.f32.gmra.mxu0 %v4975
        %v5120 = vpop.f32.mrf.mxu0
        %v5121 = vadd.f32 0.0, %v5120
        %v5122 = vpop.f32.mrf.mxu0
        %5123 = vdwg.mxu0
        %5127 = vrot.lane.b32.xlu0 %v4957, 109
        %v5128 = vpop.permute.xlu0 %5127
        %5129 = vrot.lane.b32.xlu0 %v4958, 109
        %v5130 = vpop.permute.xlu0 %5129
        %5131 = vrot.lane.b32.xlu0 %v4959, 109
        %v5132 = vpop.permute.xlu0 %5131
        %v5133 = vsel %vm1767, %v5128, %v5130
        %v5134 = vsel %vm1767, %v5130, %v5132
        %v5139 = vsel %vm608, %v4956, 0
        %5141 = vmatprep.subr.mxu0 0.0
        %5142 = vmatpush1.msra.mxu0 0.0
        %5143 = vmatprep.subr.mxu0 0.0
        %5144 = vmatpush1.msra.mxu0 0.0
        %5145 = vmatprep.subr.mxu0 0.0
        %5146 = vmatpush1.msra.mxu0 0.0
        %5147 = vmatprep.subr.mxu0 0.0
        %5148 = vmatpush1.msra.mxu0 0.0
        %5149 = vmatprep.subr.mxu0 0.0
        %5150 = vmatpush1.msra.mxu0 0.0
        %5151 = vmatprep.subr.mxu0 0.0
        %5152 = vmatpush1.msra.mxu0 0.0
        %5153 = vmatprep.subr.mxu0 0.0
        %5154 = vmatpush1.msra.mxu0 0.0
        %5155 = vmatprep.subr.mxu0 0.0
        %5156 = vmatpush1.msra.mxu0 0.0
        %5157 = vmatprep.subr.mxu0 0.0
        %5158 = vmatpush1.msra.mxu0 0.0
        %5159 = vmatprep.subr.mxu0 0.0
        %5160 = vmatpush1.msra.mxu0 0.0
        %5161 = vmatprep.subr.mxu0 0.0
        %5162 = vmatpush1.msra.mxu0 0.0
        %5163 = vmatprep.subr.mxu0 0.0
        %5164 = vmatpush1.msra.mxu0 0.0
        %5165 = vmatprep.subr.mxu0 0.0
        %5166 = vmatpush1.msra.mxu0 0.0
        %5167 = vmatprep.subr.mxu0 0.0
        %5168 = vmatpush1.msra.mxu0 0.0
        %5169 = vmatprep.subr.mxu0 0.0
        %5170 = vmatpush1.msra.mxu0 0.0
        %5171 = vmatprep.subr.mxu0 %v5134
        %5172 = vmatpush1.msra.mxu0 %v5133
        %5173 = vmatprep.subr.mxu0 0.0
        %5174 = vmatpush2.msra.mxu0 0.0
        %5175 = vmatprep.subr.mxu0 0.0
        %5176 = vmatpush2.msra.mxu0 0.0
        %5177 = vmatprep.subr.mxu0 0.0
        %5178 = vmatpush2.msra.mxu0 0.0
        %5179 = vmatprep.subr.mxu0 0.0
        %5180 = vmatpush2.msra.mxu0 0.0
        %5181 = vmatprep.subr.mxu0 0.0
        %5182 = vmatpush2.msra.mxu0 0.0
        %5183 = vmatprep.subr.mxu0 0.0
        %5184 = vmatpush2.msra.mxu0 0.0
        %5185 = vmatprep.subr.mxu0 0.0
        %5186 = vmatpush2.msra.mxu0 0.0
        %5187 = vmatprep.subr.mxu0 0.0
        %5188 = vmatpush2.msra.mxu0 0.0
        %5189 = vmatprep.subr.mxu0 0.0
        %5190 = vmatpush2.msra.mxu0 0.0
        %5191 = vmatprep.subr.mxu0 0.0
        %5192 = vmatpush2.msra.mxu0 0.0
        %5193 = vmatprep.subr.mxu0 0.0
        %5194 = vmatpush2.msra.mxu0 0.0
        %5195 = vmatprep.subr.mxu0 0.0
        %5196 = vmatpush2.msra.mxu0 0.0
        %5197 = vmatprep.subr.mxu0 0.0
        %5198 = vmatpush2.msra.mxu0 0.0
        %5199 = vmatprep.subr.mxu0 0.0
        %5200 = vmatpush2.msra.mxu0 0.0
        %5201 = vmatprep.subr.mxu0 0.0
        %5202 = vmatpush2.msra.mxu0 0.0
        %5203 = vmatprep.subr.mxu0 0.0
        %5204 = vmatpush2.msra.mxu0 0.0
        %5205 = vmatprep.mubr.f32.mxu0 0.0
        %5206 = vmatmul.mubr.f32.gmra.mxu0 %v5139
        %v5207 = vpop.f32.mrf.mxu0
        %v5208 = vadd.f32 %v5050, %v5207
        %v5209 = vpop.f32.mrf.mxu0
        %v5210 = vadd.f32 %v5052, %v5209
        %5211 = vdwg.mxu0
        %5212 = vmatprep.subr.mxu0 0.0
        %5213 = vmatpush1.msra.mxu0 0.0
        %5214 = vmatprep.subr.mxu0 0.0
        %5215 = vmatpush1.msra.mxu0 0.0
        %5216 = vmatprep.subr.mxu0 0.0
        %5217 = vmatpush1.msra.mxu0 0.0
        %5218 = vmatprep.subr.mxu0 0.0
        %5219 = vmatpush1.msra.mxu0 0.0
        %5220 = vmatprep.subr.mxu0 0.0
        %5221 = vmatpush1.msra.mxu0 0.0
        %5222 = vmatprep.subr.mxu0 0.0
        %5223 = vmatpush1.msra.mxu0 0.0
        %5224 = vmatprep.subr.mxu0 0.0
        %5225 = vmatpush1.msra.mxu0 0.0
        %5226 = vmatprep.subr.mxu0 0.0
        %5227 = vmatpush1.msra.mxu0 0.0
        %5228 = vmatprep.subr.mxu0 0.0
        %5229 = vmatpush1.msra.mxu0 0.0
        %5230 = vmatprep.subr.mxu0 0.0
        %5231 = vmatpush1.msra.mxu0 0.0
        %5232 = vmatprep.subr.mxu0 0.0
        %5233 = vmatpush1.msra.mxu0 0.0
        %5234 = vmatprep.subr.mxu0 0.0
        %5235 = vmatpush1.msra.mxu0 0.0
        %5236 = vmatprep.subr.mxu0 0.0
        %5237 = vmatpush1.msra.mxu0 0.0
        %5238 = vmatprep.subr.mxu0 0.0
        %5239 = vmatpush1.msra.mxu0 0.0
        %5240 = vmatprep.subr.mxu0 0.0
        %5241 = vmatpush1.msra.mxu0 0.0
        %5242 = vmatprep.subr.mxu0 0.0
        %5243 = vmatpush1.msra.mxu0 %v5132
        %5244 = vmatprep.subr.mxu0 0.0
        %5245 = vmatpush2.msra.mxu0 0.0
        %5246 = vmatprep.subr.mxu0 0.0
        %5247 = vmatpush2.msra.mxu0 0.0
        %5248 = vmatprep.subr.mxu0 0.0
        %5249 = vmatpush2.msra.mxu0 0.0
        %5250 = vmatprep.subr.mxu0 0.0
        %5251 = vmatpush2.msra.mxu0 0.0
        %5252 = vmatprep.subr.mxu0 0.0
        %5253 = vmatpush2.msra.mxu0 0.0
        %5254 = vmatprep.subr.mxu0 0.0
        %5255 = vmatpush2.msra.mxu0 0.0
        %5256 = vmatprep.subr.mxu0 0.0
        %5257 = vmatpush2.msra.mxu0 0.0
        %5258 = vmatprep.subr.mxu0 0.0
        %5259 = vmatpush2.msra.mxu0 0.0
        %5260 = vmatprep.subr.mxu0 0.0
        %5261 = vmatpush2.msra.mxu0 0.0
        %5262 = vmatprep.subr.mxu0 0.0
        %5263 = vmatpush2.msra.mxu0 0.0
        %5264 = vmatprep.subr.mxu0 0.0
        %5265 = vmatpush2.msra.mxu0 0.0
        %5266 = vmatprep.subr.mxu0 0.0
        %5267 = vmatpush2.msra.mxu0 0.0
        %5268 = vmatprep.subr.mxu0 0.0
        %5269 = vmatpush2.msra.mxu0 0.0
        %5270 = vmatprep.subr.mxu0 0.0
        %5271 = vmatpush2.msra.mxu0 0.0
        %5272 = vmatprep.subr.mxu0 0.0
        %5273 = vmatpush2.msra.mxu0 0.0
        %5274 = vmatprep.subr.mxu0 0.0
        %5275 = vmatpush2.msra.mxu0 0.0
        %5276 = vmatprep.mubr.f32.mxu0 0.0
        %5277 = vmatmul.mubr.f32.gmra.mxu0 %v5139
        %v5278 = vpop.f32.mrf.mxu0
        %v5279 = vadd.f32 %v5121, %v5278
        %v5280 = vpop.f32.mrf.mxu0
        %5281 = vdwg.mxu0
        %v5282 = vld [vmem:[%s6] sm:$0xf]
        %5284 = vset.pattern.permute.xlu0 0
        %5285 = vperm.xlu0 %5284, %v5282
        %v5286 = vpop.permute.xlu0 %5285
        %v5288 = vadd.f32 %v4953, %v5286
        %v5289 = vadd.f32 %v4954, %v5286
        %v5290 = vadd.f32 %v4955, %v5286
        %v5291 = vadd.f32 %v5288, %v5208
        %v5292 = vadd.f32 %v5289, %v5210
        %v5293 = vadd.f32 %v5290, %v5279
        %v5294 = vmax.f32 %v5291, 0.0
        %v5295 = vmax.f32 %v5292, 0.0
        %v5296 = vmax.f32 %v5293, 0.0
        %v5297 = vmul.f32 %v5294, %v3425
        %v5298 = vmul.f32 %v5295, %v3429
        %v5299 = vmul.f32 %v5296, %v3433
        %5300 = vst.msk [vmem:[%s422] sm:$0xf] %vm3440, 0.0
        %5301 = vst.msk [vmem:[%s422 + $0x8] sm:$0xf] %vm3442, 0.0
        %v5305 = vcombine.low %v5297, %v5298
        %5306 = vrot.lane.b32.xlu0 %v5305, 19
        %v5307 = vpop.permute.xlu0 %5306
        %5308 = vrot.lane.b32.xlu0 %v5299, 19
        %v5309 = vpop.permute.xlu0 %5308
        %v5310 = vrot.slane %v5307, 4
        %v5311 = vsel %vm3453, %v5310, %v5307
        %v5312 = vsel %vm3453, %v5310, %v5309
        %5315 = vst.msk [vmem:[%s422] sm:$0xff] %vm3460, %v5311
        %5316 = vst.msk [vmem:[%s422 + $0x8] sm:$0xf] %vm3462, %v5312
        %v5317 = vld [vmem:[%s10] sm:$0x3]
        %v5319 = vsel %vm456, %v5317, 0
        %v5321 = vsel %vm460, %v5297, 0
        %v5323 = vsel %vm460, %v5298, 0
        %v5325 = vsel %vm460, %v5299, 0
        %5327 = vmatprep.subr.mxu0 0.0
        %5328 = vmatpush1.msra.mxu0 0.0
        %5329 = vmatprep.subr.mxu0 0.0
        %5330 = vmatpush1.msra.mxu0 0.0
        %5331 = vmatprep.subr.mxu0 0.0
        %5332 = vmatpush1.msra.mxu0 0.0
        %5333 = vmatprep.subr.mxu0 0.0
        %5334 = vmatpush1.msra.mxu0 0.0
        %5335 = vmatprep.subr.mxu0 0.0
        %5336 = vmatpush1.msra.mxu0 0.0
        %5337 = vmatprep.subr.mxu0 0.0
        %5338 = vmatpush1.msra.mxu0 0.0
        %5339 = vmatprep.subr.mxu0 0.0
        %5340 = vmatpush1.msra.mxu0 0.0
        %5341 = vmatprep.subr.mxu0 0.0
        %5342 = vmatpush1.msra.mxu0 0.0
        %5343 = vmatprep.subr.mxu0 0.0
        %5344 = vmatpush1.msra.mxu0 0.0
        %5345 = vmatprep.subr.mxu0 0.0
        %5346 = vmatpush1.msra.mxu0 0.0
        %5347 = vmatprep.subr.mxu0 0.0
        %5348 = vmatpush1.msra.mxu0 0.0
        %5349 = vmatprep.subr.mxu0 0.0
        %5350 = vmatpush1.msra.mxu0 0.0
        %5351 = vmatprep.subr.mxu0 0.0
        %5352 = vmatpush1.msra.mxu0 0.0
        %5353 = vmatprep.subr.mxu0 0.0
        %5354 = vmatpush1.msra.mxu0 0.0
        %5355 = vmatprep.subr.mxu0 0.0
        %5356 = vmatpush1.msra.mxu0 0.0
        %5357 = vmatprep.subr.mxu0 %v5323
        %5358 = vmatpush1.msra.mxu0 %v5321
        %5359 = vmatprep.subr.mxu0 0.0
        %5360 = vmatpush2.msra.mxu0 0.0
        %5361 = vmatprep.subr.mxu0 0.0
        %5362 = vmatpush2.msra.mxu0 0.0
        %5363 = vmatprep.subr.mxu0 0.0
        %5364 = vmatpush2.msra.mxu0 0.0
        %5365 = vmatprep.subr.mxu0 0.0
        %5366 = vmatpush2.msra.mxu0 0.0
        %5367 = vmatprep.subr.mxu0 0.0
        %5368 = vmatpush2.msra.mxu0 0.0
        %5369 = vmatprep.subr.mxu0 0.0
        %5370 = vmatpush2.msra.mxu0 0.0
        %5371 = vmatprep.subr.mxu0 0.0
        %5372 = vmatpush2.msra.mxu0 0.0
        %5373 = vmatprep.subr.mxu0 0.0
        %5374 = vmatpush2.msra.mxu0 0.0
        %5375 = vmatprep.subr.mxu0 0.0
        %5376 = vmatpush2.msra.mxu0 0.0
        %5377 = vmatprep.subr.mxu0 0.0
        %5378 = vmatpush2.msra.mxu0 0.0
        %5379 = vmatprep.subr.mxu0 0.0
        %5380 = vmatpush2.msra.mxu0 0.0
        %5381 = vmatprep.subr.mxu0 0.0
        %5382 = vmatpush2.msra.mxu0 0.0
        %5383 = vmatprep.subr.mxu0 0.0
        %5384 = vmatpush2.msra.mxu0 0.0
        %5385 = vmatprep.subr.mxu0 0.0
        %5386 = vmatpush2.msra.mxu0 0.0
        %5387 = vmatprep.subr.mxu0 0.0
        %5388 = vmatpush2.msra.mxu0 0.0
        %5389 = vmatprep.subr.mxu0 0.0
        %5390 = vmatpush2.msra.mxu0 0.0
        %5391 = vmatprep.mubr.f32.mxu0 0.0
        %5392 = vmatmul.mubr.f32.gmra.mxu0 %v5319
        %v5393 = vpop.f32.mrf.mxu0
        %v5394 = vadd.f32 0.0, %v5393
        %v5395 = vpop.f32.mrf.mxu0
        %v5396 = vadd.f32 0.0, %v5395
        %5397 = vdwg.mxu0
        %5398 = vmatprep.subr.mxu0 0.0
        %5399 = vmatpush1.msra.mxu0 0.0
        %5400 = vmatprep.subr.mxu0 0.0
        %5401 = vmatpush1.msra.mxu0 0.0
        %5402 = vmatprep.subr.mxu0 0.0
        %5403 = vmatpush1.msra.mxu0 0.0
        %5404 = vmatprep.subr.mxu0 0.0
        %5405 = vmatpush1.msra.mxu0 0.0
        %5406 = vmatprep.subr.mxu0 0.0
        %5407 = vmatpush1.msra.mxu0 0.0
        %5408 = vmatprep.subr.mxu0 0.0
        %5409 = vmatpush1.msra.mxu0 0.0
        %5410 = vmatprep.subr.mxu0 0.0
        %5411 = vmatpush1.msra.mxu0 0.0
        %5412 = vmatprep.subr.mxu0 0.0
        %5413 = vmatpush1.msra.mxu0 0.0
        %5414 = vmatprep.subr.mxu0 0.0
        %5415 = vmatpush1.msra.mxu0 0.0
        %5416 = vmatprep.subr.mxu0 0.0
        %5417 = vmatpush1.msra.mxu0 0.0
        %5418 = vmatprep.subr.mxu0 0.0
        %5419 = vmatpush1.msra.mxu0 0.0
        %5420 = vmatprep.subr.mxu0 0.0
        %5421 = vmatpush1.msra.mxu0 0.0
        %5422 = vmatprep.subr.mxu0 0.0
        %5423 = vmatpush1.msra.mxu0 0.0
        %5424 = vmatprep.subr.mxu0 0.0
        %5425 = vmatpush1.msra.mxu0 0.0
        %5426 = vmatprep.subr.mxu0 0.0
        %5427 = vmatpush1.msra.mxu0 0.0
        %5428 = vmatprep.subr.mxu0 0.0
        %5429 = vmatpush1.msra.mxu0 %v5325
        %5430 = vmatprep.subr.mxu0 0.0
        %5431 = vmatpush2.msra.mxu0 0.0
        %5432 = vmatprep.subr.mxu0 0.0
        %5433 = vmatpush2.msra.mxu0 0.0
        %5434 = vmatprep.subr.mxu0 0.0
        %5435 = vmatpush2.msra.mxu0 0.0
        %5436 = vmatprep.subr.mxu0 0.0
        %5437 = vmatpush2.msra.mxu0 0.0
        %5438 = vmatprep.subr.mxu0 0.0
        %5439 = vmatpush2.msra.mxu0 0.0
        %5440 = vmatprep.subr.mxu0 0.0
        %5441 = vmatpush2.msra.mxu0 0.0
        %5442 = vmatprep.subr.mxu0 0.0
        %5443 = vmatpush2.msra.mxu0 0.0
        %5444 = vmatprep.subr.mxu0 0.0
        %5445 = vmatpush2.msra.mxu0 0.0
        %5446 = vmatprep.subr.mxu0 0.0
        %5447 = vmatpush2.msra.mxu0 0.0
        %5448 = vmatprep.subr.mxu0 0.0
        %5449 = vmatpush2.msra.mxu0 0.0
        %5450 = vmatprep.subr.mxu0 0.0
        %5451 = vmatpush2.msra.mxu0 0.0
        %5452 = vmatprep.subr.mxu0 0.0
        %5453 = vmatpush2.msra.mxu0 0.0
        %5454 = vmatprep.subr.mxu0 0.0
        %5455 = vmatpush2.msra.mxu0 0.0
        %5456 = vmatprep.subr.mxu0 0.0
        %5457 = vmatpush2.msra.mxu0 0.0
        %5458 = vmatprep.subr.mxu0 0.0
        %5459 = vmatpush2.msra.mxu0 0.0
        %5460 = vmatprep.subr.mxu0 0.0
        %5461 = vmatpush2.msra.mxu0 0.0
        %5462 = vmatprep.mubr.f32.mxu0 0.0
        %5463 = vmatmul.mubr.f32.gmra.mxu0 %v5319
        %v5464 = vpop.f32.mrf.mxu0
        %v5465 = vadd.f32 0.0, %v5464
        %v5466 = vpop.f32.mrf.mxu0
        %5467 = vdwg.mxu0
        %v5468 = vmul.f32 %v5394, %v3425
        %v5469 = vmul.f32 %v5396, %v3429
        %v5470 = vmul.f32 %v5465, %v3433
        %vm5471 = vcmask 148480
        %5472 = vst.msk [vmem:[%s444] sm:$0x3] %vm5471, 0.0
        %vm5473 = vcmask 550280
        %5474 = vst.msk [vmem:[%s444 + $0x4] sm:$0x3] %vm5473, 0.0
        %v5478 = vcombine.low %v5468, %v5469
        %v5480 = vunpack.c.l.s4 1983009808
        %v5481 = vunpack.c.0.s8 %v5480
        %v5482 = vlaneseq
        %v5483 = vshrl.u32 %v5482, 7
        %v5484 = vsub.s32 %v5481, %v5483
        %v5485 = vrot.slane %v5478, %v5484
        %v5487 = vunpack.c.l.s4 1983009808
        %v5488 = vunpack.c.0.s8 %v5487
        %v5489 = vlaneseq
        %v5490 = vshrl.u32 %v5489, 7
        %v5491 = vsub.s32 %v5488, %v5490
        %v5492 = vrot.slane %v5470, %v5491
        %v5493 = vcombine.low %v5485, %v5492
        %5494 = vrot.lane.b32.xlu0 %v5493, 19
        %v5495 = vpop.permute.xlu0 %5494
        %v5496 = vrot.slane %v5495, 6
        %v5497 = vsel %vm3453, %v5496, %v5495
        %vm5499 = vcmask 1041560
        %vm5500 = vcmask 1043458
        %vm5501 = vmor %vm5500, %vm5499
        %vm5502 = vcmask 398340
        %vm5503 = vmor %vm5502, %vm5501
        %5504 = vst.msk [vmem:[%s444] sm:$0x3f] %vm5503, %v5497
        %s5505 = sand.u32 %s276, 1
        %s5506 = scalar_lea.sflag [#allocation4], %s5505
        %s5507 = sand.u32 %s276, 1
        %s5508 = smul.addr %s5507, 12
        %s5509 = scalar_lea.vmem [#allocation3], %s5508
        %p5510 = scmp.lt.s32.totalorder %s27, 1
        %s5511 = scalar_select %p5510, %s27, 1
        %s5512 = smul.addr %s5511, 3
        %s5513 = smul.addr %s5512, 2
        %s5514 = scalar_lea.vmem %s12, %s5513
        // Predicated region
        $region65: #{multi_scale_res_unet_decoder_forward.5} parent=63 // pred_check
          %p5515 = pneg %p286
        $region66: #{multi_scale_res_unet_decoder_forward.5} parent=63 // pred_check_branch
          %5517 = sbr.rel (%p5515) target = $region68
        $region67: #{multi_scale_res_unet_decoder_forward.5} parent=63 // pred_region
          %s5519 = ssub.s32 192, 192
          %5520 = vsyncadd %s5506, %s5519
          %s5521 = smul.addr %s27, 3
          %s5522 = smul.addr %s5521, 64
          %s5523 = scalar_lea.hbm %s11, %s5522
          %s5525 = sshll.u32 %s5509, 4
          %s5526 = int_to_ptr.vmem [resolvable:$true] %s5525
          %5528 = dma.vmem_to_hbm [thread:$0]  %s5526, 192, %s5523, %s5506
        $region68: #{multi_scale_res_unet_decoder_forward.5} parent=63 // pred_fallthru
          _
        // Predicated region
        $region69: #{multi_scale_res_unet_decoder_forward.5} parent=63 // pred_check
          %p5529 = pneg %p312
        $region70: #{multi_scale_res_unet_decoder_forward.5} parent=63 // pred_check_branch
          %5531 = sbr.rel (%p5529) target = $region72
        $region71: #{multi_scale_res_unet_decoder_forward.5} parent=63 // pred_region
          _
        $region72: #{multi_scale_res_unet_decoder_forward.5} parent=63 // pred_fallthru
          _
      $region64: #{multi_scale_res_unet_decoder_forward.5} parent=5 // pred_fallthru
        _
      %p5532 = scmp.le.s32.totalorder 2, %s22
      // Predicated region
      $region73: #{multi_scale_res_unet_decoder_forward.5} parent=5 // pred_check
        %p5533 = pneg %p5532
      $region74: #{multi_scale_res_unet_decoder_forward.5} parent=5 // pred_check_branch
        %5535 = sbr.rel (%p5533) target = $region76
      $region75: #{multi_scale_res_unet_decoder_forward.5} parent=5 // pred_region
        %s5536 = ssub.s32 %s22, 2
        // Predicated region
        $region77: #{multi_scale_res_unet_decoder_forward.5} parent=75 // pred_check
          %p5537 = pneg %p292
        $region78: #{multi_scale_res_unet_decoder_forward.5} parent=75 // pred_check_branch
          %5539 = sbr.rel (%p5537) target = $region80
        $region79: #{multi_scale_res_unet_decoder_forward.5} parent=75 // pred_region
          %s5540 = sand.u32 %s277, 1
          %s5541 = scalar_lea.sflag [#allocation4], %s5540
          %s5542 = sand.u32 %s277, 1
          %s5543 = smul.addr %s5542, 12
          %s5544 = scalar_lea.vmem [#allocation3], %s5543
          %5545 = dma.done %s5541, 192
        $region80: #{multi_scale_res_unet_decoder_forward.5} parent=75 // pred_fallthru
          _
        // Predicated region
        $region81: #{multi_scale_res_unet_decoder_forward.5} parent=75 // pred_check
          %p5546 = pneg %p318
        $region82: #{multi_scale_res_unet_decoder_forward.5} parent=75 // pred_check_branch
          %5548 = sbr.rel (%p5546) target = $region84
        $region83: #{multi_scale_res_unet_decoder_forward.5} parent=75 // pred_region
          %p5549 = scmp.lt.s32.totalorder %s28, 1
          %s5550 = scalar_select %p5549, %s28, 1
          %s5551 = smul.addr %s5550, 3
          %s5552 = smul.addr %s5551, 2
          %s5553 = scalar_lea.vmem %s12, %s5552
        $region84: #{multi_scale_res_unet_decoder_forward.5} parent=75 // pred_fallthru
          _
      $region76: #{multi_scale_res_unet_decoder_forward.5} parent=5 // pred_fallthru
        _
    $region6: #{multi_scale_res_unet_decoder_forward.5} parent=1 // loop_footer
      %s26 = sadd.s32 1, %s22
    $region7: #{multi_scale_res_unet_decoder_forward.5} parent=1 // loop_footer_branch
      %21 = sbr.rel target = $region3
    $region8: #{multi_scale_res_unet_decoder_forward.5} parent=1 // loop_exit
      _
    %5554 = vsyncpa [#allocation4], 1
    %s5555 = scalar_lea.sflag [#allocation4], 1
    %5556 = vsyncpa %s5555, 1

</llo_original>
